<compile_context>
chip_gen: v5e
topology: v5e:2x2
jax: 0.10.0
libtpu: 0.0.40
codegen_flags: <defaults>
</compile_context>

<pallas_src>
import functools
import math

import numpy as np
import jax
import jax.numpy as jnp
from jax.experimental import pallas as pl
from jax.experimental.pallas import tpu as pltpu

_BN_EPS = 1e-5


# ---------------------------------------------------------------------------
# In-kernel helper (operates on VALUES, traced inline into the fused kernel)
# ---------------------------------------------------------------------------
def _ghost_block(x, wpT, wd9, bn6, h_idx, w_idx, *, H, W, P, relu):
    """One conv_bn_relu: GhostModule (1x1 conv + BN1, 3x3 depthwise + BN2,
    channel concat) followed by the outer BN3 (folded) and optional ReLU.

    Layout: channel-major. x is (Cin, P) with P = N*H*W on the lane axis.
    """
    # Primary 1x1 conv: (C1, Cin) @ (Cin, P) -> (C1, P); output lanes = P.
    acc = jnp.dot(wpT, x, preferred_element_type=jnp.float32)
    s1, b1 = bn6[:, 0:1], bn6[:, 1:2]
    s1o, b1o = bn6[:, 2:3], bn6[:, 3:4]
    s2f, b2f = bn6[:, 4:5], bn6[:, 5:6]
    x1 = acc * s1 + b1        # BN1 (unfolded)  -> depthwise input
    out1 = acc * s1o + b1o    # BN3a o BN1      -> first oup/2 channels

    # 3x3 depthwise conv via lane rolls + border masks.  Rolling the flattened
    # (n, h, w) lane axis never mixes batches: any roll crossing an image /
    # batch boundary lands on an out-of-bounds tap, which is masked to zero.
    acc2 = jnp.zeros_like(x1)
    t = 0
    for dy in (-1, 0, 1):
        for dx in (-1, 0, 1):
            delta = dy * W + dx
            if delta == 0:
                tap = x1
            else:
                # want tap[p] = x1[p + delta] -> jnp.roll-style shift of -delta
                tap = pltpu.roll(x1, shift=(-delta) % P, axis=1)
            conds = []
            if dy < 0:
                conds.append(h_idx >= -dy)
            if dy > 0:
                conds.append(h_idx < H - dy)
            if dx < 0:
                conds.append(w_idx >= -dx)
            if dx > 0:
                conds.append(w_idx < W - dx)
            if conds:
                m = conds[0]
                for c in conds[1:]:
                    m = jnp.logical_and(m, c)
                tap = jnp.where(m, tap, 0.0)
            acc2 = acc2 + tap * wd9[:, t:t + 1]
            t += 1
    out2 = acc2 * s2f + b2f   # BN3b o BN2      -> second oup/2 channels

    # Ghost concat along channels = sublane axis (both operands lane-dense).
    out = jnp.concatenate([out1, out2], axis=0)
    if relu:
        out = jnp.maximum(out, 0.0)
    return out


# ---------------------------------------------------------------------------
# Fused Upsample_unit kernel (single pallas_call, no grid — everything VMEM)
# ---------------------------------------------------------------------------
def _upsample_unit_kernel(*refs, N, H, W, OH, OW, has_up, has_skip, has_cross):
    P = N * H * W
    it = iter(refs)
    coords_ref = next(it)
    x_ref = next(it)
    u_skip_w = (next(it), next(it), next(it))
    if has_up:
        upx_ref = next(it)
        upmat_ref = next(it)
        up_conv_w = (next(it), next(it), next(it))
    res1_w = (next(it), next(it), next(it))
    res2_w = (next(it), next(it), next(it))
    resmat_ref = next(it)
    if has_skip:
        skip1_w = (next(it), next(it), next(it))
        skip2_w = (next(it), next(it), next(it))
    if has_cross:
        cross_w = (next(it), next(it), next(it))
    out_ref = next(it)
    res_ref = next(it)
    if has_skip:
        skip1_ref = next(it)
        skip2_ref = next(it)
    if has_cross:
        cross_ref = next(it)

    h_idx = coords_ref[0:1, :]          # (1, P) int32, per-image row index
    w_idx = coords_ref[1:2, :]          # (1, P) int32, per-image col index
    x = x_ref[...]

    def ghost(v, w3, relu):
        return _ghost_block(v, w3[0][...], w3[1][...], w3[2][...],
                            h_idx, w_idx, H=H, W=W, P=P, relu=relu)

    # out = relu(u_skip(x) [+ up_conv(resize(up_x))])
    a = ghost(x, u_skip_w, relu=False)
    if has_up:
        # Bilinear resize (align_corners=True): (C, N*UH*UW) @ (N*UH*UW, P).
        up = jnp.dot(upx_ref[...], upmat_ref[...],
                     preferred_element_type=jnp.float32)
        b = ghost(up, up_conv_w, relu=False)
        out = jnp.maximum(a + b, 0.0)
    else:
        out = jnp.maximum(a, 0.0)
    out_ref[...] = out.astype(out_ref.dtype)

    # res = resize(res_conv2(res_conv1(out)), output_shape)
    r = ghost(out, res1_w, relu=True)
    r = ghost(r, res2_w, relu=False)            # (out_chl, P)
    resmat = resmat_ref[...]                    # (H*W, OH*OW)
    HiWi = H * W
    OHW = OH * OW
    for n in range(N):                          # lane slices are 128-aligned
        rb = jnp.dot(r[:, n * HiWi:(n + 1) * HiWi], resmat,
                     preferred_element_type=jnp.float32)
        res_ref[:, n * OHW:(n + 1) * OHW] = rb.astype(res_ref.dtype)

    if has_skip:
        skip1_ref[...] = ghost(x, skip1_w, relu=True).astype(skip1_ref.dtype)
        skip2_ref[...] = ghost(out, skip2_w, relu=True).astype(skip2_ref.dtype)
    if has_cross:
        cross_ref[...] = ghost(out, cross_w, relu=True).astype(cross_ref.dtype)


# ---------------------------------------------------------------------------
# Host-side constants: bilinear (align_corners=True) interpolation matrices
# ---------------------------------------------------------------------------
def _interp_matrix(out_size, in_size):
    L = np.zeros((out_size, in_size), np.float32)
    if out_size == 1:
        L[0, 0] = 1.0
        return L
    scale = (in_size - 1) / (out_size - 1)
    for i in range(out_size):
        pos = i * scale
        i0 = min(int(np.floor(pos)), in_size - 1)
        i1 = min(i0 + 1, in_size - 1)
        w = pos - i0
        L[i, i0] += 1.0 - w
        L[i, i1] += w
    return L


def _resize_matrix_T(in_hw, out_hw):
    # Channel-major form: out(C, HoWo) = x(C, HiWi) @ MT, MT = kron(Lh, Lw)^T.
    Lh = _interp_matrix(out_hw[0], in_hw[0])
    Lw = _interp_matrix(out_hw[1], in_hw[1])
    return np.kron(Lh, Lw).T.astype(np.float32)


# ---------------------------------------------------------------------------
# Parameters (BatchNorm in inference mode, folded into scale/bias)
# ---------------------------------------------------------------------------
def _make_bn(key, c):
    k1, k2, k3, k4 = jax.random.split(key, 4)
    gamma = 1.0 + 0.1 * jax.random.normal(k1, (c,), jnp.float32)
    beta = 0.1 * jax.random.normal(k2, (c,), jnp.float32)
    mean = 0.1 * jax.random.normal(k3, (c,), jnp.float32)
    var = 1.0 + 0.1 * jax.random.uniform(k4, (c,), jnp.float32)
    s = gamma / jnp.sqrt(var + _BN_EPS)
    b = beta - mean * s
    return s, b


def make_conv_bn_relu_params(key, cin, cout):
    init_c = math.ceil(cout / 2)
    # TODO(synk): odd `oup` would need the GhostModule output slice; every
    #             Upsample_unit config here uses even channel counts.
    assert cout == 2 * init_c
    ks = jax.random.split(key, 5)
    wp = 0.1 * jax.random.normal(ks[0], (cin, init_c), jnp.float32)    # 1x1
    s1, b1 = _make_bn(ks[1], init_c)                                   # BN1
    wd = 0.1 * jax.random.normal(ks[2], (init_c, 3, 3), jnp.float32)   # 3x3 dw
    s2, b2 = _make_bn(ks[3], init_c)                                   # BN2
    s3, b3 = _make_bn(ks[4], cout)                                     # outer BN
    s3a, b3a = s3[:init_c], b3[:init_c]
    s3b, b3b = s3[init_c:], b3[init_c:]
    # Columns: [s1, b1, s1o, b1o, s2f, b2f]; BN1 stays unfolded (feeds the
    # depthwise branch), BN3 is folded into both output halves.
    bn6 = jnp.stack(
        [s1, b1, s1 * s3a, b1 * s3a + b3a, s2 * s3b, b2 * s3b + b3b], axis=1)
    return dict(wpT=jnp.transpose(wp),            # (C1, Cin)
                wd9=wd.reshape(init_c, 9),        # (C1, 9) taps row-major
                bn6=bn6)                          # (C1, 6)


# ---------------------------------------------------------------------------
# Upsample_unit forward (public wrapper; NCHW in / NCHW out, like PyTorch)
# ---------------------------------------------------------------------------
@functools.partial(
    jax.jit,
    static_argnames=("ind", "up_size", "output_shape", "gen_skip",
                     "gen_cross_conv"))
def upsample_unit_forward(params, x, up_x, *, ind, up_size, output_shape,
                          gen_skip, gen_cross_conv):
    N, _, H, W = x.shape
    OH, OW = output_shape
    P = N * H * W
    has_up = ind > 0
    has_cross = (ind == 3) and gen_cross_conv

    # Host-side constants (static shapes): per-lane image coordinates for the
    # depthwise border masks and the resize matrices.
    idx = np.arange(P, dtype=np.int64)
    coords = jnp.asarray(
        np.stack([(idx // W) % H, idx % W]).astype(np.int32))      # (2, P)
    res_mat = jnp.asarray(_resize_matrix_T((H, W), (OH, OW)))      # (HW, OH*OW)

    def to_cf(t):  # NCHW -> channel-major (C, N*H*W), lane-dense
        n, c, hh, ww = t.shape
        return jnp.transpose(t, (1, 0, 2, 3)).reshape(c, n * hh * ww)

    def blk(name):
        p = params[name]
        return [p["wpT"], p["wd9"], p["bn6"]]

    args = [coords, to_cf(x)] + blk("u_skip")
    if has_up:
        assert tuple(up_size) == (H, W), "up_size must match x's spatial size"
        UH, UW = up_x.shape[2], up_x.shape[3]
        up_mat = jnp.asarray(
            np.kron(np.eye(N, dtype=np.float32),
                    _resize_matrix_T((UH, UW), (H, W))))  # (N*UH*UW, N*H*W)
        args += [to_cf(up_x), up_mat] + blk("up_conv")
    args += blk("res_conv1") + blk("res_conv2") + [res_mat]
    if gen_skip:
        args += blk("skip1") + blk("skip2")
    if has_cross:
        args += blk("cross_conv")

    chl = 2 * params["u_skip"]["wpT"].shape[0]
    out_chl = 2 * params["res_conv2"]["wpT"].shape[0]
    out_shapes = [jax.ShapeDtypeStruct((chl, P), jnp.float32),
                  jax.ShapeDtypeStruct((out_chl, N * OH * OW), jnp.float32)]
    if gen_skip:
        s1c = 2 * params["skip1"]["wpT"].shape[0]
        s2c = 2 * params["skip2"]["wpT"].shape[0]
        out_shapes += [jax.ShapeDtypeStruct((s1c, P), jnp.float32),
                       jax.ShapeDtypeStruct((s2c, P), jnp.float32)]
    if has_cross:
        cc = 2 * params["cross_conv"]["wpT"].shape[0]
        out_shapes += [jax.ShapeDtypeStruct((cc, P), jnp.float32)]

    kern = functools.partial(_upsample_unit_kernel, N=N, H=H, W=W, OH=OH,
                             OW=OW, has_up=has_up, has_skip=gen_skip,
                             has_cross=has_cross)
    # Single fused call, no grid: all (tiny) operands live whole in VMEM, all
    # intermediates stay on-chip.  (On v7x a 2-way core split of independent
    # branches is possible but washes out at these sub-microsecond sizes.)
    results = pl.pallas_call(kern, out_shape=tuple(out_shapes))(*args)

    def to_nchw(v, c, hh, ww):  # (C, N*h*w) -> NCHW
        return jnp.transpose(v.reshape(c, N, hh, ww), (1, 0, 2, 3))

    out = to_nchw(results[0], chl, H, W)
    res = to_nchw(results[1], out_chl, OH, OW)
    k = 2
    skip1 = skip2 = cross_conv = None
    if gen_skip:
        skip1 = to_nchw(results[k], s1c, H, W)
        skip2 = to_nchw(results[k + 1], s2c, H, W)
        k += 2
    if has_cross:
        cross_conv = to_nchw(results[k], cc, H, W)
    return out, res, skip1, skip2, cross_conv


# ---------------------------------------------------------------------------
# Demo
# ---------------------------------------------------------------------------
if __name__ == "__main__":
    key = jax.random.PRNGKey(0)
    N = 2
    in_planes = 8
    chl_num = 16
    H = W = 16
    up_H = up_W = 8
    output_chl_num = 8
    output_shape = (32, 32)
    up_size = (H, W)
    ind = 3
    gen_skip = True
    gen_cross_conv = True

    ks = jax.random.split(key, 9)
    params = {
        "u_skip": make_conv_bn_relu_params(ks[0], in_planes, chl_num),
        "up_conv": make_conv_bn_relu_params(ks[1], chl_num, chl_num),
        "skip1": make_conv_bn_relu_params(ks[2], in_planes, in_planes),
        "skip2": make_conv_bn_relu_params(ks[3], chl_num, in_planes),
        "cross_conv": make_conv_bn_relu_params(ks[4], chl_num, 64),
        "res_conv1": make_conv_bn_relu_params(ks[5], chl_num, chl_num),
        "res_conv2": make_conv_bn_relu_params(ks[6], chl_num, output_chl_num),
    }

    # NCHW inputs, exactly as the PyTorch module would receive them.
    x = jax.random.normal(ks[7], (N, in_planes, H, W), jnp.float32)
    up_x = jax.random.normal(ks[8], (N, chl_num, up_H, up_W), jnp.float32)

    out, res, skip1, skip2, cross_conv = upsample_unit_forward(
        params, x, up_x,
        ind=ind, up_size=up_size, output_shape=output_shape,
        gen_skip=gen_skip, gen_cross_conv=gen_cross_conv)

    jax.block_until_ready((out, res, skip1, skip2, cross_conv))
    assert out.shape == (N, chl_num, H, W)
    assert res.shape == (N, output_chl_num, output_shape[0], output_shape[1])
    assert skip1.shape == (N, in_planes, H, W)
    assert skip2.shape == (N, in_planes, H, W)
    assert cross_conv.shape == (N, 64, H, W)
    print("KERNEL_OK")
</pallas_src>

<mosaic_0001>
module attributes {stable_mosaic.version = 11 : i64} {
  func.func @_upsample_unit_kernel(%arg0: memref<2x512xi32, #tpu.memory_space<vmem>>, %arg1: memref<8x512xf32, #tpu.memory_space<vmem>>, %arg2: memref<8x8xf32, #tpu.memory_space<vmem>>, %arg3: memref<8x9xf32, #tpu.memory_space<vmem>>, %arg4: memref<8x6xf32, #tpu.memory_space<vmem>>, %arg5: memref<16x128xf32, #tpu.memory_space<vmem>>, %arg6: memref<128x512xf32, #tpu.memory_space<vmem>>, %arg7: memref<8x16xf32, #tpu.memory_space<vmem>>, %arg8: memref<8x9xf32, #tpu.memory_space<vmem>>, %arg9: memref<8x6xf32, #tpu.memory_space<vmem>>, %arg10: memref<8x16xf32, #tpu.memory_space<vmem>>, %arg11: memref<8x9xf32, #tpu.memory_space<vmem>>, %arg12: memref<8x6xf32, #tpu.memory_space<vmem>>, %arg13: memref<4x16xf32, #tpu.memory_space<vmem>>, %arg14: memref<4x9xf32, #tpu.memory_space<vmem>>, %arg15: memref<4x6xf32, #tpu.memory_space<vmem>>, %arg16: memref<256x1024xf32, #tpu.memory_space<vmem>>, %arg17: memref<4x8xf32, #tpu.memory_space<vmem>>, %arg18: memref<4x9xf32, #tpu.memory_space<vmem>>, %arg19: memref<4x6xf32, #tpu.memory_space<vmem>>, %arg20: memref<4x16xf32, #tpu.memory_space<vmem>>, %arg21: memref<4x9xf32, #tpu.memory_space<vmem>>, %arg22: memref<4x6xf32, #tpu.memory_space<vmem>>, %arg23: memref<32x16xf32, #tpu.memory_space<vmem>>, %arg24: memref<32x9xf32, #tpu.memory_space<vmem>>, %arg25: memref<32x6xf32, #tpu.memory_space<vmem>>, %arg26: memref<16x512xf32, #tpu.memory_space<vmem>>, %arg27: memref<8x2048xf32, #tpu.memory_space<vmem>>, %arg28: memref<8x512xf32, #tpu.memory_space<vmem>>, %arg29: memref<8x512xf32, #tpu.memory_space<vmem>>, %arg30: memref<64x512xf32, #tpu.memory_space<vmem>>) attributes {dimension_semantics = [], scalar_prefetch = 0 : i64, scratch_operands = 0 : i64, tpu.core_type = #tpu.core_type<tc>} {
    %c0 = arith.constant 0 : index
    %c0_0 = arith.constant 0 : index
    %0 = vector.load %arg0[%c0, %c0_0] : memref<2x512xi32, #tpu.memory_space<vmem>>, vector<1x512xi32>
    %c1 = arith.constant 1 : index
    %c0_1 = arith.constant 0 : index
    %1 = vector.load %arg0[%c1, %c0_1] : memref<2x512xi32, #tpu.memory_space<vmem>>, vector<1x512xi32>
    %c0_2 = arith.constant 0 : index
    %c0_3 = arith.constant 0 : index
    %2 = vector.load %arg1[%c0_2, %c0_3] : memref<8x512xf32, #tpu.memory_space<vmem>>, vector<8x512xf32>
    %c0_4 = arith.constant 0 : index
    %c0_5 = arith.constant 0 : index
    %3 = vector.load %arg2[%c0_4, %c0_5] : memref<8x8xf32, #tpu.memory_space<vmem>>, vector<8x8xf32>
    %c0_6 = arith.constant 0 : index
    %c0_7 = arith.constant 0 : index
    %4 = vector.load %arg3[%c0_6, %c0_7] : memref<8x9xf32, #tpu.memory_space<vmem>>, vector<8x9xf32>
    %c0_8 = arith.constant 0 : index
    %c0_9 = arith.constant 0 : index
    %5 = vector.load %arg4[%c0_8, %c0_9] : memref<8x6xf32, #tpu.memory_space<vmem>>, vector<8x6xf32>
    %cst = arith.constant dense<0.000000e+00> : vector<8x512xf32>
    %6 = tpu.matmul %3, %2, %cst {dimension_numbers = #tpu.dot_dimension_numbers<[1], [0], [0], [1], [0, 0, 1, 1], [], []>} : vector<8x8xf32>, vector<8x512xf32>, vector<8x512xf32> -> vector<8x512xf32>
    %7 = vector.extract_strided_slice %5 {offsets = [0, 0], sizes = [8, 1], strides = [1, 1]} : vector<8x6xf32> to vector<8x1xf32>
    %8 = vector.extract_strided_slice %5 {offsets = [0, 1], sizes = [8, 1], strides = [1, 1]} : vector<8x6xf32> to vector<8x1xf32>
    %9 = vector.extract_strided_slice %5 {offsets = [0, 2], sizes = [8, 1], strides = [1, 1]} : vector<8x6xf32> to vector<8x1xf32>
    %10 = vector.extract_strided_slice %5 {offsets = [0, 3], sizes = [8, 1], strides = [1, 1]} : vector<8x6xf32> to vector<8x1xf32>
    %11 = vector.extract_strided_slice %5 {offsets = [0, 4], sizes = [8, 1], strides = [1, 1]} : vector<8x6xf32> to vector<8x1xf32>
    %12 = vector.extract_strided_slice %5 {offsets = [0, 5], sizes = [8, 1], strides = [1, 1]} : vector<8x6xf32> to vector<8x1xf32>
    %13 = vector.broadcast %7 : vector<8x1xf32> to vector<8x512xf32>
    %14 = arith.mulf %6, %13 : vector<8x512xf32>
    %15 = vector.broadcast %8 : vector<8x1xf32> to vector<8x512xf32>
    %16 = arith.addf %14, %15 : vector<8x512xf32>
    %17 = vector.broadcast %9 : vector<8x1xf32> to vector<8x512xf32>
    %18 = arith.mulf %6, %17 : vector<8x512xf32>
    %19 = vector.broadcast %10 : vector<8x1xf32> to vector<8x512xf32>
    %20 = arith.addf %18, %19 : vector<8x512xf32>
    %cst_10 = arith.constant 0.000000e+00 : f32
    %21 = vector.broadcast %cst_10 : f32 to vector<8x512xf32>
    %c17_i32 = arith.constant 17 : i32
    %22 = tpu.dynamic_rotate %16 by %c17_i32 dim 1 : vector<8x512xf32>, i32 -> vector<8x512xf32>
    %c1_i32 = arith.constant 1 : i32
    %23 = vector.broadcast %c1_i32 : i32 to vector<1x512xi32>
    %24 = arith.cmpi sge, %0, %23 : vector<1x512xi32>
    %c1_i32_11 = arith.constant 1 : i32
    %25 = vector.broadcast %c1_i32_11 : i32 to vector<1x512xi32>
    %26 = arith.cmpi sge, %1, %25 : vector<1x512xi32>
    %27 = arith.andi %24, %26 : vector<1x512xi1>
    %cst_12 = arith.constant 0.000000e+00 : f32
    %28 = vector.shape_cast %27 : vector<1x512xi1> to vector<1x512xi1>
    %29 = vector.broadcast %28 : vector<1x512xi1> to vector<8x512xi1>
    %30 = vector.broadcast %cst_12 : f32 to vector<8x512xf32>
    %31 = arith.select %29, %22, %30 : vector<8x512xi1>, vector<8x512xf32>
    %32 = vector.extract_strided_slice %4 {offsets = [0, 0], sizes = [8, 1], strides = [1, 1]} : vector<8x9xf32> to vector<8x1xf32>
    %33 = vector.broadcast %32 : vector<8x1xf32> to vector<8x512xf32>
    %34 = arith.mulf %31, %33 : vector<8x512xf32>
    %35 = arith.addf %21, %34 : vector<8x512xf32>
    %c16_i32 = arith.constant 16 : i32
    %36 = tpu.dynamic_rotate %16 by %c16_i32 dim 1 : vector<8x512xf32>, i32 -> vector<8x512xf32>
    %c1_i32_13 = arith.constant 1 : i32
    %37 = vector.broadcast %c1_i32_13 : i32 to vector<1x512xi32>
    %38 = arith.cmpi sge, %0, %37 : vector<1x512xi32>
    %cst_14 = arith.constant 0.000000e+00 : f32
    %39 = vector.shape_cast %38 : vector<1x512xi1> to vector<1x512xi1>
    %40 = vector.broadcast %39 : vector<1x512xi1> to vector<8x512xi1>
    %41 = vector.broadcast %cst_14 : f32 to vector<8x512xf32>
    %42 = arith.select %40, %36, %41 : vector<8x512xi1>, vector<8x512xf32>
    %43 = vector.extract_strided_slice %4 {offsets = [0, 1], sizes = [8, 1], strides = [1, 1]} : vector<8x9xf32> to vector<8x1xf32>
    %44 = vector.broadcast %43 : vector<8x1xf32> to vector<8x512xf32>
    %45 = arith.mulf %42, %44 : vector<8x512xf32>
    %46 = arith.addf %35, %45 : vector<8x512xf32>
    %c15_i32 = arith.constant 15 : i32
    %47 = tpu.dynamic_rotate %16 by %c15_i32 dim 1 : vector<8x512xf32>, i32 -> vector<8x512xf32>
    %c1_i32_15 = arith.constant 1 : i32
    %48 = vector.broadcast %c1_i32_15 : i32 to vector<1x512xi32>
    %49 = arith.cmpi sge, %0, %48 : vector<1x512xi32>
    %c15_i32_16 = arith.constant 15 : i32
    %50 = vector.broadcast %c15_i32_16 : i32 to vector<1x512xi32>
    %51 = arith.cmpi slt, %1, %50 : vector<1x512xi32>
    %52 = arith.andi %49, %51 : vector<1x512xi1>
    %cst_17 = arith.constant 0.000000e+00 : f32
    %53 = vector.shape_cast %52 : vector<1x512xi1> to vector<1x512xi1>
    %54 = vector.broadcast %53 : vector<1x512xi1> to vector<8x512xi1>
    %55 = vector.broadcast %cst_17 : f32 to vector<8x512xf32>
    %56 = arith.select %54, %47, %55 : vector<8x512xi1>, vector<8x512xf32>
    %57 = vector.extract_strided_slice %4 {offsets = [0, 2], sizes = [8, 1], strides = [1, 1]} : vector<8x9xf32> to vector<8x1xf32>
    %58 = vector.broadcast %57 : vector<8x1xf32> to vector<8x512xf32>
    %59 = arith.mulf %56, %58 : vector<8x512xf32>
    %60 = arith.addf %46, %59 : vector<8x512xf32>
    %c1_i32_18 = arith.constant 1 : i32
    %61 = tpu.dynamic_rotate %16 by %c1_i32_18 dim 1 : vector<8x512xf32>, i32 -> vector<8x512xf32>
    %c1_i32_19 = arith.constant 1 : i32
    %62 = vector.broadcast %c1_i32_19 : i32 to vector<1x512xi32>
    %63 = arith.cmpi sge, %1, %62 : vector<1x512xi32>
    %cst_20 = arith.constant 0.000000e+00 : f32
    %64 = vector.shape_cast %63 : vector<1x512xi1> to vector<1x512xi1>
    %65 = vector.broadcast %64 : vector<1x512xi1> to vector<8x512xi1>
    %66 = vector.broadcast %cst_20 : f32 to vector<8x512xf32>
    %67 = arith.select %65, %61, %66 : vector<8x512xi1>, vector<8x512xf32>
    %68 = vector.extract_strided_slice %4 {offsets = [0, 3], sizes = [8, 1], strides = [1, 1]} : vector<8x9xf32> to vector<8x1xf32>
    %69 = vector.broadcast %68 : vector<8x1xf32> to vector<8x512xf32>
    %70 = arith.mulf %67, %69 : vector<8x512xf32>
    %71 = arith.addf %60, %70 : vector<8x512xf32>
    %72 = vector.extract_strided_slice %4 {offsets = [0, 4], sizes = [8, 1], strides = [1, 1]} : vector<8x9xf32> to vector<8x1xf32>
    %73 = vector.broadcast %72 : vector<8x1xf32> to vector<8x512xf32>
    %74 = arith.mulf %16, %73 : vector<8x512xf32>
    %75 = arith.addf %71, %74 : vector<8x512xf32>
    %c511_i32 = arith.constant 511 : i32
    %76 = tpu.dynamic_rotate %16 by %c511_i32 dim 1 : vector<8x512xf32>, i32 -> vector<8x512xf32>
    %c15_i32_21 = arith.constant 15 : i32
    %77 = vector.broadcast %c15_i32_21 : i32 to vector<1x512xi32>
    %78 = arith.cmpi slt, %1, %77 : vector<1x512xi32>
    %cst_22 = arith.constant 0.000000e+00 : f32
    %79 = vector.shape_cast %78 : vector<1x512xi1> to vector<1x512xi1>
    %80 = vector.broadcast %79 : vector<1x512xi1> to vector<8x512xi1>
    %81 = vector.broadcast %cst_22 : f32 to vector<8x512xf32>
    %82 = arith.select %80, %76, %81 : vector<8x512xi1>, vector<8x512xf32>
    %83 = vector.extract_strided_slice %4 {offsets = [0, 5], sizes = [8, 1], strides = [1, 1]} : vector<8x9xf32> to vector<8x1xf32>
    %84 = vector.broadcast %83 : vector<8x1xf32> to vector<8x512xf32>
    %85 = arith.mulf %82, %84 : vector<8x512xf32>
    %86 = arith.addf %75, %85 : vector<8x512xf32>
    %c497_i32 = arith.constant 497 : i32
    %87 = tpu.dynamic_rotate %16 by %c497_i32 dim 1 : vector<8x512xf32>, i32 -> vector<8x512xf32>
    %c15_i32_23 = arith.constant 15 : i32
    %88 = vector.broadcast %c15_i32_23 : i32 to vector<1x512xi32>
    %89 = arith.cmpi slt, %0, %88 : vector<1x512xi32>
    %c1_i32_24 = arith.constant 1 : i32
    %90 = vector.broadcast %c1_i32_24 : i32 to vector<1x512xi32>
    %91 = arith.cmpi sge, %1, %90 : vector<1x512xi32>
    %92 = arith.andi %89, %91 : vector<1x512xi1>
    %cst_25 = arith.constant 0.000000e+00 : f32
    %93 = vector.shape_cast %92 : vector<1x512xi1> to vector<1x512xi1>
    %94 = vector.broadcast %93 : vector<1x512xi1> to vector<8x512xi1>
    %95 = vector.broadcast %cst_25 : f32 to vector<8x512xf32>
    %96 = arith.select %94, %87, %95 : vector<8x512xi1>, vector<8x512xf32>
    %97 = vector.extract_strided_slice %4 {offsets = [0, 6], sizes = [8, 1], strides = [1, 1]} : vector<8x9xf32> to vector<8x1xf32>
    %98 = vector.broadcast %97 : vector<8x1xf32> to vector<8x512xf32>
    %99 = arith.mulf %96, %98 : vector<8x512xf32>
    %100 = arith.addf %86, %99 : vector<8x512xf32>
    %c496_i32 = arith.constant 496 : i32
    %101 = tpu.dynamic_rotate %16 by %c496_i32 dim 1 : vector<8x512xf32>, i32 -> vector<8x512xf32>
    %c15_i32_26 = arith.constant 15 : i32
    %102 = vector.broadcast %c15_i32_26 : i32 to vector<1x512xi32>
    %103 = arith.cmpi slt, %0, %102 : vector<1x512xi32>
    %cst_27 = arith.constant 0.000000e+00 : f32
    %104 = vector.shape_cast %103 : vector<1x512xi1> to vector<1x512xi1>
    %105 = vector.broadcast %104 : vector<1x512xi1> to vector<8x512xi1>
    %106 = vector.broadcast %cst_27 : f32 to vector<8x512xf32>
    %107 = arith.select %105, %101, %106 : vector<8x512xi1>, vector<8x512xf32>
    %108 = vector.extract_strided_slice %4 {offsets = [0, 7], sizes = [8, 1], strides = [1, 1]} : vector<8x9xf32> to vector<8x1xf32>
    %109 = vector.broadcast %108 : vector<8x1xf32> to vector<8x512xf32>
    %110 = arith.mulf %107, %109 : vector<8x512xf32>
    %111 = arith.addf %100, %110 : vector<8x512xf32>
    %c495_i32 = arith.constant 495 : i32
    %112 = tpu.dynamic_rotate %16 by %c495_i32 dim 1 : vector<8x512xf32>, i32 -> vector<8x512xf32>
    %c15_i32_28 = arith.constant 15 : i32
    %113 = vector.broadcast %c15_i32_28 : i32 to vector<1x512xi32>
    %114 = arith.cmpi slt, %0, %113 : vector<1x512xi32>
    %c15_i32_29 = arith.constant 15 : i32
    %115 = vector.broadcast %c15_i32_29 : i32 to vector<1x512xi32>
    %116 = arith.cmpi slt, %1, %115 : vector<1x512xi32>
    %117 = arith.andi %114, %116 : vector<1x512xi1>
    %cst_30 = arith.constant 0.000000e+00 : f32
    %118 = vector.shape_cast %117 : vector<1x512xi1> to vector<1x512xi1>
    %119 = vector.broadcast %118 : vector<1x512xi1> to vector<8x512xi1>
    %120 = vector.broadcast %cst_30 : f32 to vector<8x512xf32>
    %121 = arith.select %119, %112, %120 : vector<8x512xi1>, vector<8x512xf32>
    %122 = vector.extract_strided_slice %4 {offsets = [0, 8], sizes = [8, 1], strides = [1, 1]} : vector<8x9xf32> to vector<8x1xf32>
    %123 = vector.broadcast %122 : vector<8x1xf32> to vector<8x512xf32>
    %124 = arith.mulf %121, %123 : vector<8x512xf32>
    %125 = arith.addf %111, %124 : vector<8x512xf32>
    %126 = vector.broadcast %11 : vector<8x1xf32> to vector<8x512xf32>
    %127 = arith.mulf %125, %126 : vector<8x512xf32>
    %128 = vector.broadcast %12 : vector<8x1xf32> to vector<8x512xf32>
    %129 = arith.addf %127, %128 : vector<8x512xf32>
    %130 = tpu.concatenate %20, %129 in 0 : vector<8x512xf32>, vector<8x512xf32> -> vector<16x512xf32>
    %c0_31 = arith.constant 0 : index
    %c0_32 = arith.constant 0 : index
    %131 = vector.load %arg5[%c0_31, %c0_32] : memref<16x128xf32, #tpu.memory_space<vmem>>, vector<16x128xf32>
    %c0_33 = arith.constant 0 : index
    %c0_34 = arith.constant 0 : index
    %132 = vector.load %arg6[%c0_33, %c0_34] : memref<128x512xf32, #tpu.memory_space<vmem>>, vector<128x512xf32>
    %cst_35 = arith.constant dense<0.000000e+00> : vector<16x512xf32>
    %133 = tpu.matmul %131, %132, %cst_35 {dimension_numbers = #tpu.dot_dimension_numbers<[1], [0], [0], [1], [0, 0, 1, 1], [], []>} : vector<16x128xf32>, vector<128x512xf32>, vector<16x512xf32> -> vector<16x512xf32>
    %c0_36 = arith.constant 0 : index
    %c0_37 = arith.constant 0 : index
    %134 = vector.load %arg7[%c0_36, %c0_37] : memref<8x16xf32, #tpu.memory_space<vmem>>, vector<8x16xf32>
    %c0_38 = arith.constant 0 : index
    %c0_39 = arith.constant 0 : index
    %135 = vector.load %arg8[%c0_38, %c0_39] : memref<8x9xf32, #tpu.memory_space<vmem>>, vector<8x9xf32>
    %c0_40 = arith.constant 0 : index
    %c0_41 = arith.constant 0 : index
    %136 = vector.load %arg9[%c0_40, %c0_41] : memref<8x6xf32, #tpu.memory_space<vmem>>, vector<8x6xf32>
    %cst_42 = arith.constant dense<0.000000e+00> : vector<8x512xf32>
    %137 = tpu.matmul %134, %133, %cst_42 {dimension_numbers = #tpu.dot_dimension_numbers<[1], [0], [0], [1], [0, 0, 1, 1], [], []>} : vector<8x16xf32>, vector<16x512xf32>, vector<8x512xf32> -> vector<8x512xf32>
    %138 = vector.extract_strided_slice %136 {offsets = [0, 0], sizes = [8, 1], strides = [1, 1]} : vector<8x6xf32> to vector<8x1xf32>
    %139 = vector.extract_strided_slice %136 {offsets = [0, 1], sizes = [8, 1], strides = [1, 1]} : vector<8x6xf32> to vector<8x1xf32>
    %140 = vector.extract_strided_slice %136 {offsets = [0, 2], sizes = [8, 1], strides = [1, 1]} : vector<8x6xf32> to vector<8x1xf32>
    %141 = vector.extract_strided_slice %136 {offsets = [0, 3], sizes = [8, 1], strides = [1, 1]} : vector<8x6xf32> to vector<8x1xf32>
    %142 = vector.extract_strided_slice %136 {offsets = [0, 4], sizes = [8, 1], strides = [1, 1]} : vector<8x6xf32> to vector<8x1xf32>
    %143 = vector.extract_strided_slice %136 {offsets = [0, 5], sizes = [8, 1], strides = [1, 1]} : vector<8x6xf32> to vector<8x1xf32>
    %144 = vector.broadcast %138 : vector<8x1xf32> to vector<8x512xf32>
    %145 = arith.mulf %137, %144 : vector<8x512xf32>
    %146 = vector.broadcast %139 : vector<8x1xf32> to vector<8x512xf32>
    %147 = arith.addf %145, %146 : vector<8x512xf32>
    %148 = vector.broadcast %140 : vector<8x1xf32> to vector<8x512xf32>
    %149 = arith.mulf %137, %148 : vector<8x512xf32>
    %150 = vector.broadcast %141 : vector<8x1xf32> to vector<8x512xf32>
    %151 = arith.addf %149, %150 : vector<8x512xf32>
    %cst_43 = arith.constant 0.000000e+00 : f32
    %152 = vector.broadcast %cst_43 : f32 to vector<8x512xf32>
    %c17_i32_44 = arith.constant 17 : i32
    %153 = tpu.dynamic_rotate %147 by %c17_i32_44 dim 1 : vector<8x512xf32>, i32 -> vector<8x512xf32>
    %c1_i32_45 = arith.constant 1 : i32
    %154 = vector.broadcast %c1_i32_45 : i32 to vector<1x512xi32>
    %155 = arith.cmpi sge, %0, %154 : vector<1x512xi32>
    %c1_i32_46 = arith.constant 1 : i32
    %156 = vector.broadcast %c1_i32_46 : i32 to vector<1x512xi32>
    %157 = arith.cmpi sge, %1, %156 : vector<1x512xi32>
    %158 = arith.andi %155, %157 : vector<1x512xi1>
    %cst_47 = arith.constant 0.000000e+00 : f32
    %159 = vector.shape_cast %158 : vector<1x512xi1> to vector<1x512xi1>
    %160 = vector.broadcast %159 : vector<1x512xi1> to vector<8x512xi1>
    %161 = vector.broadcast %cst_47 : f32 to vector<8x512xf32>
    %162 = arith.select %160, %153, %161 : vector<8x512xi1>, vector<8x512xf32>
    %163 = vector.extract_strided_slice %135 {offsets = [0, 0], sizes = [8, 1], strides = [1, 1]} : vector<8x9xf32> to vector<8x1xf32>
    %164 = vector.broadcast %163 : vector<8x1xf32> to vector<8x512xf32>
    %165 = arith.mulf %162, %164 : vector<8x512xf32>
    %166 = arith.addf %152, %165 : vector<8x512xf32>
    %c16_i32_48 = arith.constant 16 : i32
    %167 = tpu.dynamic_rotate %147 by %c16_i32_48 dim 1 : vector<8x512xf32>, i32 -> vector<8x512xf32>
    %c1_i32_49 = arith.constant 1 : i32
    %168 = vector.broadcast %c1_i32_49 : i32 to vector<1x512xi32>
    %169 = arith.cmpi sge, %0, %168 : vector<1x512xi32>
    %cst_50 = arith.constant 0.000000e+00 : f32
    %170 = vector.shape_cast %169 : vector<1x512xi1> to vector<1x512xi1>
    %171 = vector.broadcast %170 : vector<1x512xi1> to vector<8x512xi1>
    %172 = vector.broadcast %cst_50 : f32 to vector<8x512xf32>
    %173 = arith.select %171, %167, %172 : vector<8x512xi1>, vector<8x512xf32>
    %174 = vector.extract_strided_slice %135 {offsets = [0, 1], sizes = [8, 1], strides = [1, 1]} : vector<8x9xf32> to vector<8x1xf32>
    %175 = vector.broadcast %174 : vector<8x1xf32> to vector<8x512xf32>
    %176 = arith.mulf %173, %175 : vector<8x512xf32>
    %177 = arith.addf %166, %176 : vector<8x512xf32>
    %c15_i32_51 = arith.constant 15 : i32
    %178 = tpu.dynamic_rotate %147 by %c15_i32_51 dim 1 : vector<8x512xf32>, i32 -> vector<8x512xf32>
    %c1_i32_52 = arith.constant 1 : i32
    %179 = vector.broadcast %c1_i32_52 : i32 to vector<1x512xi32>
    %180 = arith.cmpi sge, %0, %179 : vector<1x512xi32>
    %c15_i32_53 = arith.constant 15 : i32
    %181 = vector.broadcast %c15_i32_53 : i32 to vector<1x512xi32>
    %182 = arith.cmpi slt, %1, %181 : vector<1x512xi32>
    %183 = arith.andi %180, %182 : vector<1x512xi1>
    %cst_54 = arith.constant 0.000000e+00 : f32
    %184 = vector.shape_cast %183 : vector<1x512xi1> to vector<1x512xi1>
    %185 = vector.broadcast %184 : vector<1x512xi1> to vector<8x512xi1>
    %186 = vector.broadcast %cst_54 : f32 to vector<8x512xf32>
    %187 = arith.select %185, %178, %186 : vector<8x512xi1>, vector<8x512xf32>
    %188 = vector.extract_strided_slice %135 {offsets = [0, 2], sizes = [8, 1], strides = [1, 1]} : vector<8x9xf32> to vector<8x1xf32>
    %189 = vector.broadcast %188 : vector<8x1xf32> to vector<8x512xf32>
    %190 = arith.mulf %187, %189 : vector<8x512xf32>
    %191 = arith.addf %177, %190 : vector<8x512xf32>
    %c1_i32_55 = arith.constant 1 : i32
    %192 = tpu.dynamic_rotate %147 by %c1_i32_55 dim 1 : vector<8x512xf32>, i32 -> vector<8x512xf32>
    %c1_i32_56 = arith.constant 1 : i32
    %193 = vector.broadcast %c1_i32_56 : i32 to vector<1x512xi32>
    %194 = arith.cmpi sge, %1, %193 : vector<1x512xi32>
    %cst_57 = arith.constant 0.000000e+00 : f32
    %195 = vector.shape_cast %194 : vector<1x512xi1> to vector<1x512xi1>
    %196 = vector.broadcast %195 : vector<1x512xi1> to vector<8x512xi1>
    %197 = vector.broadcast %cst_57 : f32 to vector<8x512xf32>
    %198 = arith.select %196, %192, %197 : vector<8x512xi1>, vector<8x512xf32>
    %199 = vector.extract_strided_slice %135 {offsets = [0, 3], sizes = [8, 1], strides = [1, 1]} : vector<8x9xf32> to vector<8x1xf32>
    %200 = vector.broadcast %199 : vector<8x1xf32> to vector<8x512xf32>
    %201 = arith.mulf %198, %200 : vector<8x512xf32>
    %202 = arith.addf %191, %201 : vector<8x512xf32>
    %203 = vector.extract_strided_slice %135 {offsets = [0, 4], sizes = [8, 1], strides = [1, 1]} : vector<8x9xf32> to vector<8x1xf32>
    %204 = vector.broadcast %203 : vector<8x1xf32> to vector<8x512xf32>
    %205 = arith.mulf %147, %204 : vector<8x512xf32>
    %206 = arith.addf %202, %205 : vector<8x512xf32>
    %c511_i32_58 = arith.constant 511 : i32
    %207 = tpu.dynamic_rotate %147 by %c511_i32_58 dim 1 : vector<8x512xf32>, i32 -> vector<8x512xf32>
    %c15_i32_59 = arith.constant 15 : i32
    %208 = vector.broadcast %c15_i32_59 : i32 to vector<1x512xi32>
    %209 = arith.cmpi slt, %1, %208 : vector<1x512xi32>
    %cst_60 = arith.constant 0.000000e+00 : f32
    %210 = vector.shape_cast %209 : vector<1x512xi1> to vector<1x512xi1>
    %211 = vector.broadcast %210 : vector<1x512xi1> to vector<8x512xi1>
    %212 = vector.broadcast %cst_60 : f32 to vector<8x512xf32>
    %213 = arith.select %211, %207, %212 : vector<8x512xi1>, vector<8x512xf32>
    %214 = vector.extract_strided_slice %135 {offsets = [0, 5], sizes = [8, 1], strides = [1, 1]} : vector<8x9xf32> to vector<8x1xf32>
    %215 = vector.broadcast %214 : vector<8x1xf32> to vector<8x512xf32>
    %216 = arith.mulf %213, %215 : vector<8x512xf32>
    %217 = arith.addf %206, %216 : vector<8x512xf32>
    %c497_i32_61 = arith.constant 497 : i32
    %218 = tpu.dynamic_rotate %147 by %c497_i32_61 dim 1 : vector<8x512xf32>, i32 -> vector<8x512xf32>
    %c15_i32_62 = arith.constant 15 : i32
    %219 = vector.broadcast %c15_i32_62 : i32 to vector<1x512xi32>
    %220 = arith.cmpi slt, %0, %219 : vector<1x512xi32>
    %c1_i32_63 = arith.constant 1 : i32
    %221 = vector.broadcast %c1_i32_63 : i32 to vector<1x512xi32>
    %222 = arith.cmpi sge, %1, %221 : vector<1x512xi32>
    %223 = arith.andi %220, %222 : vector<1x512xi1>
    %cst_64 = arith.constant 0.000000e+00 : f32
    %224 = vector.shape_cast %223 : vector<1x512xi1> to vector<1x512xi1>
    %225 = vector.broadcast %224 : vector<1x512xi1> to vector<8x512xi1>
    %226 = vector.broadcast %cst_64 : f32 to vector<8x512xf32>
    %227 = arith.select %225, %218, %226 : vector<8x512xi1>, vector<8x512xf32>
    %228 = vector.extract_strided_slice %135 {offsets = [0, 6], sizes = [8, 1], strides = [1, 1]} : vector<8x9xf32> to vector<8x1xf32>
    %229 = vector.broadcast %228 : vector<8x1xf32> to vector<8x512xf32>
    %230 = arith.mulf %227, %229 : vector<8x512xf32>
    %231 = arith.addf %217, %230 : vector<8x512xf32>
    %c496_i32_65 = arith.constant 496 : i32
    %232 = tpu.dynamic_rotate %147 by %c496_i32_65 dim 1 : vector<8x512xf32>, i32 -> vector<8x512xf32>
    %c15_i32_66 = arith.constant 15 : i32
    %233 = vector.broadcast %c15_i32_66 : i32 to vector<1x512xi32>
    %234 = arith.cmpi slt, %0, %233 : vector<1x512xi32>
    %cst_67 = arith.constant 0.000000e+00 : f32
    %235 = vector.shape_cast %234 : vector<1x512xi1> to vector<1x512xi1>
    %236 = vector.broadcast %235 : vector<1x512xi1> to vector<8x512xi1>
    %237 = vector.broadcast %cst_67 : f32 to vector<8x512xf32>
    %238 = arith.select %236, %232, %237 : vector<8x512xi1>, vector<8x512xf32>
    %239 = vector.extract_strided_slice %135 {offsets = [0, 7], sizes = [8, 1], strides = [1, 1]} : vector<8x9xf32> to vector<8x1xf32>
    %240 = vector.broadcast %239 : vector<8x1xf32> to vector<8x512xf32>
    %241 = arith.mulf %238, %240 : vector<8x512xf32>
    %242 = arith.addf %231, %241 : vector<8x512xf32>
    %c495_i32_68 = arith.constant 495 : i32
    %243 = tpu.dynamic_rotate %147 by %c495_i32_68 dim 1 : vector<8x512xf32>, i32 -> vector<8x512xf32>
    %c15_i32_69 = arith.constant 15 : i32
    %244 = vector.broadcast %c15_i32_69 : i32 to vector<1x512xi32>
    %245 = arith.cmpi slt, %0, %244 : vector<1x512xi32>
    %c15_i32_70 = arith.constant 15 : i32
    %246 = vector.broadcast %c15_i32_70 : i32 to vector<1x512xi32>
    %247 = arith.cmpi slt, %1, %246 : vector<1x512xi32>
    %248 = arith.andi %245, %247 : vector<1x512xi1>
    %cst_71 = arith.constant 0.000000e+00 : f32
    %249 = vector.shape_cast %248 : vector<1x512xi1> to vector<1x512xi1>
    %250 = vector.broadcast %249 : vector<1x512xi1> to vector<8x512xi1>
    %251 = vector.broadcast %cst_71 : f32 to vector<8x512xf32>
    %252 = arith.select %250, %243, %251 : vector<8x512xi1>, vector<8x512xf32>
    %253 = vector.extract_strided_slice %135 {offsets = [0, 8], sizes = [8, 1], strides = [1, 1]} : vector<8x9xf32> to vector<8x1xf32>
    %254 = vector.broadcast %253 : vector<8x1xf32> to vector<8x512xf32>
    %255 = arith.mulf %252, %254 : vector<8x512xf32>
    %256 = arith.addf %242, %255 : vector<8x512xf32>
    %257 = vector.broadcast %142 : vector<8x1xf32> to vector<8x512xf32>
    %258 = arith.mulf %256, %257 : vector<8x512xf32>
    %259 = vector.broadcast %143 : vector<8x1xf32> to vector<8x512xf32>
    %260 = arith.addf %258, %259 : vector<8x512xf32>
    %261 = tpu.concatenate %151, %260 in 0 : vector<8x512xf32>, vector<8x512xf32> -> vector<16x512xf32>
    %262 = arith.addf %130, %261 : vector<16x512xf32>
    %cst_72 = arith.constant 0.000000e+00 : f32
    %263 = vector.broadcast %cst_72 : f32 to vector<16x512xf32>
    %264 = arith.maximumf %262, %263 : vector<16x512xf32>
    %c0_73 = arith.constant 0 : index
    %c0_74 = arith.constant 0 : index
    %265 = vector.load %arg26[%c0_73, %c0_74] : memref<16x512xf32, #tpu.memory_space<vmem>>, vector<16x512xf32>
    tpu.vector_store %arg26[%c0_73, %c0_74], %264 {strides = array<i32>} : memref<16x512xf32, #tpu.memory_space<vmem>>, vector<16x512xf32>,
    %c0_75 = arith.constant 0 : index
    %c0_76 = arith.constant 0 : index
    %266 = vector.load %arg10[%c0_75, %c0_76] : memref<8x16xf32, #tpu.memory_space<vmem>>, vector<8x16xf32>
    %c0_77 = arith.constant 0 : index
    %c0_78 = arith.constant 0 : index
    %267 = vector.load %arg11[%c0_77, %c0_78] : memref<8x9xf32, #tpu.memory_space<vmem>>, vector<8x9xf32>
    %c0_79 = arith.constant 0 : index
    %c0_80 = arith.constant 0 : index
    %268 = vector.load %arg12[%c0_79, %c0_80] : memref<8x6xf32, #tpu.memory_space<vmem>>, vector<8x6xf32>
    %cst_81 = arith.constant dense<0.000000e+00> : vector<8x512xf32>
    %269 = tpu.matmul %266, %264, %cst_81 {dimension_numbers = #tpu.dot_dimension_numbers<[1], [0], [0], [1], [0, 0, 1, 1], [], []>} : vector<8x16xf32>, vector<16x512xf32>, vector<8x512xf32> -> vector<8x512xf32>
    %270 = vector.extract_strided_slice %268 {offsets = [0, 0], sizes = [8, 1], strides = [1, 1]} : vector<8x6xf32> to vector<8x1xf32>
    %271 = vector.extract_strided_slice %268 {offsets = [0, 1], sizes = [8, 1], strides = [1, 1]} : vector<8x6xf32> to vector<8x1xf32>
    %272 = vector.extract_strided_slice %268 {offsets = [0, 2], sizes = [8, 1], strides = [1, 1]} : vector<8x6xf32> to vector<8x1xf32>
    %273 = vector.extract_strided_slice %268 {offsets = [0, 3], sizes = [8, 1], strides = [1, 1]} : vector<8x6xf32> to vector<8x1xf32>
    %274 = vector.extract_strided_slice %268 {offsets = [0, 4], sizes = [8, 1], strides = [1, 1]} : vector<8x6xf32> to vector<8x1xf32>
    %275 = vector.extract_strided_slice %268 {offsets = [0, 5], sizes = [8, 1], strides = [1, 1]} : vector<8x6xf32> to vector<8x1xf32>
    %276 = vector.broadcast %270 : vector<8x1xf32> to vector<8x512xf32>
    %277 = arith.mulf %269, %276 : vector<8x512xf32>
    %278 = vector.broadcast %271 : vector<8x1xf32> to vector<8x512xf32>
    %279 = arith.addf %277, %278 : vector<8x512xf32>
    %280 = vector.broadcast %272 : vector<8x1xf32> to vector<8x512xf32>
    %281 = arith.mulf %269, %280 : vector<8x512xf32>
    %282 = vector.broadcast %273 : vector<8x1xf32> to vector<8x512xf32>
    %283 = arith.addf %281, %282 : vector<8x512xf32>
    %cst_82 = arith.constant 0.000000e+00 : f32
    %284 = vector.broadcast %cst_82 : f32 to vector<8x512xf32>
    %c17_i32_83 = arith.constant 17 : i32
    %285 = tpu.dynamic_rotate %279 by %c17_i32_83 dim 1 : vector<8x512xf32>, i32 -> vector<8x512xf32>
    %c1_i32_84 = arith.constant 1 : i32
    %286 = vector.broadcast %c1_i32_84 : i32 to vector<1x512xi32>
    %287 = arith.cmpi sge, %0, %286 : vector<1x512xi32>
    %c1_i32_85 = arith.constant 1 : i32
    %288 = vector.broadcast %c1_i32_85 : i32 to vector<1x512xi32>
    %289 = arith.cmpi sge, %1, %288 : vector<1x512xi32>
    %290 = arith.andi %287, %289 : vector<1x512xi1>
    %cst_86 = arith.constant 0.000000e+00 : f32
    %291 = vector.shape_cast %290 : vector<1x512xi1> to vector<1x512xi1>
    %292 = vector.broadcast %291 : vector<1x512xi1> to vector<8x512xi1>
    %293 = vector.broadcast %cst_86 : f32 to vector<8x512xf32>
    %294 = arith.select %292, %285, %293 : vector<8x512xi1>, vector<8x512xf32>
    %295 = vector.extract_strided_slice %267 {offsets = [0, 0], sizes = [8, 1], strides = [1, 1]} : vector<8x9xf32> to vector<8x1xf32>
    %296 = vector.broadcast %295 : vector<8x1xf32> to vector<8x512xf32>
    %297 = arith.mulf %294, %296 : vector<8x512xf32>
    %298 = arith.addf %284, %297 : vector<8x512xf32>
    %c16_i32_87 = arith.constant 16 : i32
    %299 = tpu.dynamic_rotate %279 by %c16_i32_87 dim 1 : vector<8x512xf32>, i32 -> vector<8x512xf32>
    %c1_i32_88 = arith.constant 1 : i32
    %300 = vector.broadcast %c1_i32_88 : i32 to vector<1x512xi32>
    %301 = arith.cmpi sge, %0, %300 : vector<1x512xi32>
    %cst_89 = arith.constant 0.000000e+00 : f32
    %302 = vector.shape_cast %301 : vector<1x512xi1> to vector<1x512xi1>
    %303 = vector.broadcast %302 : vector<1x512xi1> to vector<8x512xi1>
    %304 = vector.broadcast %cst_89 : f32 to vector<8x512xf32>
    %305 = arith.select %303, %299, %304 : vector<8x512xi1>, vector<8x512xf32>
    %306 = vector.extract_strided_slice %267 {offsets = [0, 1], sizes = [8, 1], strides = [1, 1]} : vector<8x9xf32> to vector<8x1xf32>
    %307 = vector.broadcast %306 : vector<8x1xf32> to vector<8x512xf32>
    %308 = arith.mulf %305, %307 : vector<8x512xf32>
    %309 = arith.addf %298, %308 : vector<8x512xf32>
    %c15_i32_90 = arith.constant 15 : i32
    %310 = tpu.dynamic_rotate %279 by %c15_i32_90 dim 1 : vector<8x512xf32>, i32 -> vector<8x512xf32>
    %c1_i32_91 = arith.constant 1 : i32
    %311 = vector.broadcast %c1_i32_91 : i32 to vector<1x512xi32>
    %312 = arith.cmpi sge, %0, %311 : vector<1x512xi32>
    %c15_i32_92 = arith.constant 15 : i32
    %313 = vector.broadcast %c15_i32_92 : i32 to vector<1x512xi32>
    %314 = arith.cmpi slt, %1, %313 : vector<1x512xi32>
    %315 = arith.andi %312, %314 : vector<1x512xi1>
    %cst_93 = arith.constant 0.000000e+00 : f32
    %316 = vector.shape_cast %315 : vector<1x512xi1> to vector<1x512xi1>
    %317 = vector.broadcast %316 : vector<1x512xi1> to vector<8x512xi1>
    %318 = vector.broadcast %cst_93 : f32 to vector<8x512xf32>
    %319 = arith.select %317, %310, %318 : vector<8x512xi1>, vector<8x512xf32>
    %320 = vector.extract_strided_slice %267 {offsets = [0, 2], sizes = [8, 1], strides = [1, 1]} : vector<8x9xf32> to vector<8x1xf32>
    %321 = vector.broadcast %320 : vector<8x1xf32> to vector<8x512xf32>
    %322 = arith.mulf %319, %321 : vector<8x512xf32>
    %323 = arith.addf %309, %322 : vector<8x512xf32>
    %c1_i32_94 = arith.constant 1 : i32
    %324 = tpu.dynamic_rotate %279 by %c1_i32_94 dim 1 : vector<8x512xf32>, i32 -> vector<8x512xf32>
    %c1_i32_95 = arith.constant 1 : i32
    %325 = vector.broadcast %c1_i32_95 : i32 to vector<1x512xi32>
    %326 = arith.cmpi sge, %1, %325 : vector<1x512xi32>
    %cst_96 = arith.constant 0.000000e+00 : f32
    %327 = vector.shape_cast %326 : vector<1x512xi1> to vector<1x512xi1>
    %328 = vector.broadcast %327 : vector<1x512xi1> to vector<8x512xi1>
    %329 = vector.broadcast %cst_96 : f32 to vector<8x512xf32>
    %330 = arith.select %328, %324, %329 : vector<8x512xi1>, vector<8x512xf32>
    %331 = vector.extract_strided_slice %267 {offsets = [0, 3], sizes = [8, 1], strides = [1, 1]} : vector<8x9xf32> to vector<8x1xf32>
    %332 = vector.broadcast %331 : vector<8x1xf32> to vector<8x512xf32>
    %333 = arith.mulf %330, %332 : vector<8x512xf32>
    %334 = arith.addf %323, %333 : vector<8x512xf32>
    %335 = vector.extract_strided_slice %267 {offsets = [0, 4], sizes = [8, 1], strides = [1, 1]} : vector<8x9xf32> to vector<8x1xf32>
    %336 = vector.broadcast %335 : vector<8x1xf32> to vector<8x512xf32>
    %337 = arith.mulf %279, %336 : vector<8x512xf32>
    %338 = arith.addf %334, %337 : vector<8x512xf32>
    %c511_i32_97 = arith.constant 511 : i32
    %339 = tpu.dynamic_rotate %279 by %c511_i32_97 dim 1 : vector<8x512xf32>, i32 -> vector<8x512xf32>
    %c15_i32_98 = arith.constant 15 : i32
    %340 = vector.broadcast %c15_i32_98 : i32 to vector<1x512xi32>
    %341 = arith.cmpi slt, %1, %340 : vector<1x512xi32>
    %cst_99 = arith.constant 0.000000e+00 : f32
    %342 = vector.shape_cast %341 : vector<1x512xi1> to vector<1x512xi1>
    %343 = vector.broadcast %342 : vector<1x512xi1> to vector<8x512xi1>
    %344 = vector.broadcast %cst_99 : f32 to vector<8x512xf32>
    %345 = arith.select %343, %339, %344 : vector<8x512xi1>, vector<8x512xf32>
    %346 = vector.extract_strided_slice %267 {offsets = [0, 5], sizes = [8, 1], strides = [1, 1]} : vector<8x9xf32> to vector<8x1xf32>
    %347 = vector.broadcast %346 : vector<8x1xf32> to vector<8x512xf32>
    %348 = arith.mulf %345, %347 : vector<8x512xf32>
    %349 = arith.addf %338, %348 : vector<8x512xf32>
    %c497_i32_100 = arith.constant 497 : i32
    %350 = tpu.dynamic_rotate %279 by %c497_i32_100 dim 1 : vector<8x512xf32>, i32 -> vector<8x512xf32>
    %c15_i32_101 = arith.constant 15 : i32
    %351 = vector.broadcast %c15_i32_101 : i32 to vector<1x512xi32>
    %352 = arith.cmpi slt, %0, %351 : vector<1x512xi32>
    %c1_i32_102 = arith.constant 1 : i32
    %353 = vector.broadcast %c1_i32_102 : i32 to vector<1x512xi32>
    %354 = arith.cmpi sge, %1, %353 : vector<1x512xi32>
    %355 = arith.andi %352, %354 : vector<1x512xi1>
    %cst_103 = arith.constant 0.000000e+00 : f32
    %356 = vector.shape_cast %355 : vector<1x512xi1> to vector<1x512xi1>
    %357 = vector.broadcast %356 : vector<1x512xi1> to vector<8x512xi1>
    %358 = vector.broadcast %cst_103 : f32 to vector<8x512xf32>
    %359 = arith.select %357, %350, %358 : vector<8x512xi1>, vector<8x512xf32>
    %360 = vector.extract_strided_slice %267 {offsets = [0, 6], sizes = [8, 1], strides = [1, 1]} : vector<8x9xf32> to vector<8x1xf32>
    %361 = vector.broadcast %360 : vector<8x1xf32> to vector<8x512xf32>
    %362 = arith.mulf %359, %361 : vector<8x512xf32>
    %363 = arith.addf %349, %362 : vector<8x512xf32>
    %c496_i32_104 = arith.constant 496 : i32
    %364 = tpu.dynamic_rotate %279 by %c496_i32_104 dim 1 : vector<8x512xf32>, i32 -> vector<8x512xf32>
    %c15_i32_105 = arith.constant 15 : i32
    %365 = vector.broadcast %c15_i32_105 : i32 to vector<1x512xi32>
    %366 = arith.cmpi slt, %0, %365 : vector<1x512xi32>
    %cst_106 = arith.constant 0.000000e+00 : f32
    %367 = vector.shape_cast %366 : vector<1x512xi1> to vector<1x512xi1>
    %368 = vector.broadcast %367 : vector<1x512xi1> to vector<8x512xi1>
    %369 = vector.broadcast %cst_106 : f32 to vector<8x512xf32>
    %370 = arith.select %368, %364, %369 : vector<8x512xi1>, vector<8x512xf32>
    %371 = vector.extract_strided_slice %267 {offsets = [0, 7], sizes = [8, 1], strides = [1, 1]} : vector<8x9xf32> to vector<8x1xf32>
    %372 = vector.broadcast %371 : vector<8x1xf32> to vector<8x512xf32>
    %373 = arith.mulf %370, %372 : vector<8x512xf32>
    %374 = arith.addf %363, %373 : vector<8x512xf32>
    %c495_i32_107 = arith.constant 495 : i32
    %375 = tpu.dynamic_rotate %279 by %c495_i32_107 dim 1 : vector<8x512xf32>, i32 -> vector<8x512xf32>
    %c15_i32_108 = arith.constant 15 : i32
    %376 = vector.broadcast %c15_i32_108 : i32 to vector<1x512xi32>
    %377 = arith.cmpi slt, %0, %376 : vector<1x512xi32>
    %c15_i32_109 = arith.constant 15 : i32
    %378 = vector.broadcast %c15_i32_109 : i32 to vector<1x512xi32>
    %379 = arith.cmpi slt, %1, %378 : vector<1x512xi32>
    %380 = arith.andi %377, %379 : vector<1x512xi1>
    %cst_110 = arith.constant 0.000000e+00 : f32
    %381 = vector.shape_cast %380 : vector<1x512xi1> to vector<1x512xi1>
    %382 = vector.broadcast %381 : vector<1x512xi1> to vector<8x512xi1>
    %383 = vector.broadcast %cst_110 : f32 to vector<8x512xf32>
    %384 = arith.select %382, %375, %383 : vector<8x512xi1>, vector<8x512xf32>
    %385 = vector.extract_strided_slice %267 {offsets = [0, 8], sizes = [8, 1], strides = [1, 1]} : vector<8x9xf32> to vector<8x1xf32>
    %386 = vector.broadcast %385 : vector<8x1xf32> to vector<8x512xf32>
    %387 = arith.mulf %384, %386 : vector<8x512xf32>
    %388 = arith.addf %374, %387 : vector<8x512xf32>
    %389 = vector.broadcast %274 : vector<8x1xf32> to vector<8x512xf32>
    %390 = arith.mulf %388, %389 : vector<8x512xf32>
    %391 = vector.broadcast %275 : vector<8x1xf32> to vector<8x512xf32>
    %392 = arith.addf %390, %391 : vector<8x512xf32>
    %393 = tpu.concatenate %283, %392 in 0 : vector<8x512xf32>, vector<8x512xf32> -> vector<16x512xf32>
    %cst_111 = arith.constant 0.000000e+00 : f32
    %394 = vector.broadcast %cst_111 : f32 to vector<16x512xf32>
    %395 = arith.maximumf %393, %394 : vector<16x512xf32>
    %c0_112 = arith.constant 0 : index
    %c0_113 = arith.constant 0 : index
    %396 = vector.load %arg13[%c0_112, %c0_113] : memref<4x16xf32, #tpu.memory_space<vmem>>, vector<4x16xf32>
    %c0_114 = arith.constant 0 : index
    %c0_115 = arith.constant 0 : index
    %397 = vector.load %arg14[%c0_114, %c0_115] : memref<4x9xf32, #tpu.memory_space<vmem>>, vector<4x9xf32>
    %c0_116 = arith.constant 0 : index
    %c0_117 = arith.constant 0 : index
    %398 = vector.load %arg15[%c0_116, %c0_117] : memref<4x6xf32, #tpu.memory_space<vmem>>, vector<4x6xf32>
    %cst_118 = arith.constant dense<0.000000e+00> : vector<4x512xf32>
    %399 = tpu.matmul %396, %395, %cst_118 {dimension_numbers = #tpu.dot_dimension_numbers<[1], [0], [0], [1], [0, 0, 1, 1], [], []>} : vector<4x16xf32>, vector<16x512xf32>, vector<4x512xf32> -> vector<4x512xf32>
    %400 = vector.extract_strided_slice %398 {offsets = [0, 0], sizes = [4, 1], strides = [1, 1]} : vector<4x6xf32> to vector<4x1xf32>
    %401 = vector.extract_strided_slice %398 {offsets = [0, 1], sizes = [4, 1], strides = [1, 1]} : vector<4x6xf32> to vector<4x1xf32>
    %402 = vector.extract_strided_slice %398 {offsets = [0, 2], sizes = [4, 1], strides = [1, 1]} : vector<4x6xf32> to vector<4x1xf32>
    %403 = vector.extract_strided_slice %398 {offsets = [0, 3], sizes = [4, 1], strides = [1, 1]} : vector<4x6xf32> to vector<4x1xf32>
    %404 = vector.extract_strided_slice %398 {offsets = [0, 4], sizes = [4, 1], strides = [1, 1]} : vector<4x6xf32> to vector<4x1xf32>
    %405 = vector.extract_strided_slice %398 {offsets = [0, 5], sizes = [4, 1], strides = [1, 1]} : vector<4x6xf32> to vector<4x1xf32>
    %406 = vector.broadcast %400 : vector<4x1xf32> to vector<4x512xf32>
    %407 = arith.mulf %399, %406 : vector<4x512xf32>
    %408 = vector.broadcast %401 : vector<4x1xf32> to vector<4x512xf32>
    %409 = arith.addf %407, %408 : vector<4x512xf32>
    %410 = vector.broadcast %402 : vector<4x1xf32> to vector<4x512xf32>
    %411 = arith.mulf %399, %410 : vector<4x512xf32>
    %412 = vector.broadcast %403 : vector<4x1xf32> to vector<4x512xf32>
    %413 = arith.addf %411, %412 : vector<4x512xf32>
    %cst_119 = arith.constant 0.000000e+00 : f32
    %414 = vector.broadcast %cst_119 : f32 to vector<4x512xf32>
    %c17_i32_120 = arith.constant 17 : i32
    %415 = tpu.dynamic_rotate %409 by %c17_i32_120 dim 1 : vector<4x512xf32>, i32 -> vector<4x512xf32>
    %c1_i32_121 = arith.constant 1 : i32
    %416 = vector.broadcast %c1_i32_121 : i32 to vector<1x512xi32>
    %417 = arith.cmpi sge, %0, %416 : vector<1x512xi32>
    %c1_i32_122 = arith.constant 1 : i32
    %418 = vector.broadcast %c1_i32_122 : i32 to vector<1x512xi32>
    %419 = arith.cmpi sge, %1, %418 : vector<1x512xi32>
    %420 = arith.andi %417, %419 : vector<1x512xi1>
    %cst_123 = arith.constant 0.000000e+00 : f32
    %421 = vector.shape_cast %420 : vector<1x512xi1> to vector<1x512xi1>
    %422 = vector.broadcast %421 : vector<1x512xi1> to vector<4x512xi1>
    %423 = vector.broadcast %cst_123 : f32 to vector<4x512xf32>
    %424 = arith.select %422, %415, %423 : vector<4x512xi1>, vector<4x512xf32>
    %425 = vector.extract_strided_slice %397 {offsets = [0, 0], sizes = [4, 1], strides = [1, 1]} : vector<4x9xf32> to vector<4x1xf32>
    %426 = vector.broadcast %425 : vector<4x1xf32> to vector<4x512xf32>
    %427 = arith.mulf %424, %426 : vector<4x512xf32>
    %428 = arith.addf %414, %427 : vector<4x512xf32>
    %c16_i32_124 = arith.constant 16 : i32
    %429 = tpu.dynamic_rotate %409 by %c16_i32_124 dim 1 : vector<4x512xf32>, i32 -> vector<4x512xf32>
    %c1_i32_125 = arith.constant 1 : i32
    %430 = vector.broadcast %c1_i32_125 : i32 to vector<1x512xi32>
    %431 = arith.cmpi sge, %0, %430 : vector<1x512xi32>
    %cst_126 = arith.constant 0.000000e+00 : f32
    %432 = vector.shape_cast %431 : vector<1x512xi1> to vector<1x512xi1>
    %433 = vector.broadcast %432 : vector<1x512xi1> to vector<4x512xi1>
    %434 = vector.broadcast %cst_126 : f32 to vector<4x512xf32>
    %435 = arith.select %433, %429, %434 : vector<4x512xi1>, vector<4x512xf32>
    %436 = vector.extract_strided_slice %397 {offsets = [0, 1], sizes = [4, 1], strides = [1, 1]} : vector<4x9xf32> to vector<4x1xf32>
    %437 = vector.broadcast %436 : vector<4x1xf32> to vector<4x512xf32>
    %438 = arith.mulf %435, %437 : vector<4x512xf32>
    %439 = arith.addf %428, %438 : vector<4x512xf32>
    %c15_i32_127 = arith.constant 15 : i32
    %440 = tpu.dynamic_rotate %409 by %c15_i32_127 dim 1 : vector<4x512xf32>, i32 -> vector<4x512xf32>
    %c1_i32_128 = arith.constant 1 : i32
    %441 = vector.broadcast %c1_i32_128 : i32 to vector<1x512xi32>
    %442 = arith.cmpi sge, %0, %441 : vector<1x512xi32>
    %c15_i32_129 = arith.constant 15 : i32
    %443 = vector.broadcast %c15_i32_129 : i32 to vector<1x512xi32>
    %444 = arith.cmpi slt, %1, %443 : vector<1x512xi32>
    %445 = arith.andi %442, %444 : vector<1x512xi1>
    %cst_130 = arith.constant 0.000000e+00 : f32
    %446 = vector.shape_cast %445 : vector<1x512xi1> to vector<1x512xi1>
    %447 = vector.broadcast %446 : vector<1x512xi1> to vector<4x512xi1>
    %448 = vector.broadcast %cst_130 : f32 to vector<4x512xf32>
    %449 = arith.select %447, %440, %448 : vector<4x512xi1>, vector<4x512xf32>
    %450 = vector.extract_strided_slice %397 {offsets = [0, 2], sizes = [4, 1], strides = [1, 1]} : vector<4x9xf32> to vector<4x1xf32>
    %451 = vector.broadcast %450 : vector<4x1xf32> to vector<4x512xf32>
    %452 = arith.mulf %449, %451 : vector<4x512xf32>
    %453 = arith.addf %439, %452 : vector<4x512xf32>
    %c1_i32_131 = arith.constant 1 : i32
    %454 = tpu.dynamic_rotate %409 by %c1_i32_131 dim 1 : vector<4x512xf32>, i32 -> vector<4x512xf32>
    %c1_i32_132 = arith.constant 1 : i32
    %455 = vector.broadcast %c1_i32_132 : i32 to vector<1x512xi32>
    %456 = arith.cmpi sge, %1, %455 : vector<1x512xi32>
    %cst_133 = arith.constant 0.000000e+00 : f32
    %457 = vector.shape_cast %456 : vector<1x512xi1> to vector<1x512xi1>
    %458 = vector.broadcast %457 : vector<1x512xi1> to vector<4x512xi1>
    %459 = vector.broadcast %cst_133 : f32 to vector<4x512xf32>
    %460 = arith.select %458, %454, %459 : vector<4x512xi1>, vector<4x512xf32>
    %461 = vector.extract_strided_slice %397 {offsets = [0, 3], sizes = [4, 1], strides = [1, 1]} : vector<4x9xf32> to vector<4x1xf32>
    %462 = vector.broadcast %461 : vector<4x1xf32> to vector<4x512xf32>
    %463 = arith.mulf %460, %462 : vector<4x512xf32>
    %464 = arith.addf %453, %463 : vector<4x512xf32>
    %465 = vector.extract_strided_slice %397 {offsets = [0, 4], sizes = [4, 1], strides = [1, 1]} : vector<4x9xf32> to vector<4x1xf32>
    %466 = vector.broadcast %465 : vector<4x1xf32> to vector<4x512xf32>
    %467 = arith.mulf %409, %466 : vector<4x512xf32>
    %468 = arith.addf %464, %467 : vector<4x512xf32>
    %c511_i32_134 = arith.constant 511 : i32
    %469 = tpu.dynamic_rotate %409 by %c511_i32_134 dim 1 : vector<4x512xf32>, i32 -> vector<4x512xf32>
    %c15_i32_135 = arith.constant 15 : i32
    %470 = vector.broadcast %c15_i32_135 : i32 to vector<1x512xi32>
    %471 = arith.cmpi slt, %1, %470 : vector<1x512xi32>
    %cst_136 = arith.constant 0.000000e+00 : f32
    %472 = vector.shape_cast %471 : vector<1x512xi1> to vector<1x512xi1>
    %473 = vector.broadcast %472 : vector<1x512xi1> to vector<4x512xi1>
    %474 = vector.broadcast %cst_136 : f32 to vector<4x512xf32>
    %475 = arith.select %473, %469, %474 : vector<4x512xi1>, vector<4x512xf32>
    %476 = vector.extract_strided_slice %397 {offsets = [0, 5], sizes = [4, 1], strides = [1, 1]} : vector<4x9xf32> to vector<4x1xf32>
    %477 = vector.broadcast %476 : vector<4x1xf32> to vector<4x512xf32>
    %478 = arith.mulf %475, %477 : vector<4x512xf32>
    %479 = arith.addf %468, %478 : vector<4x512xf32>
    %c497_i32_137 = arith.constant 497 : i32
    %480 = tpu.dynamic_rotate %409 by %c497_i32_137 dim 1 : vector<4x512xf32>, i32 -> vector<4x512xf32>
    %c15_i32_138 = arith.constant 15 : i32
    %481 = vector.broadcast %c15_i32_138 : i32 to vector<1x512xi32>
    %482 = arith.cmpi slt, %0, %481 : vector<1x512xi32>
    %c1_i32_139 = arith.constant 1 : i32
    %483 = vector.broadcast %c1_i32_139 : i32 to vector<1x512xi32>
    %484 = arith.cmpi sge, %1, %483 : vector<1x512xi32>
    %485 = arith.andi %482, %484 : vector<1x512xi1>
    %cst_140 = arith.constant 0.000000e+00 : f32
    %486 = vector.shape_cast %485 : vector<1x512xi1> to vector<1x512xi1>
    %487 = vector.broadcast %486 : vector<1x512xi1> to vector<4x512xi1>
    %488 = vector.broadcast %cst_140 : f32 to vector<4x512xf32>
    %489 = arith.select %487, %480, %488 : vector<4x512xi1>, vector<4x512xf32>
    %490 = vector.extract_strided_slice %397 {offsets = [0, 6], sizes = [4, 1], strides = [1, 1]} : vector<4x9xf32> to vector<4x1xf32>
    %491 = vector.broadcast %490 : vector<4x1xf32> to vector<4x512xf32>
    %492 = arith.mulf %489, %491 : vector<4x512xf32>
    %493 = arith.addf %479, %492 : vector<4x512xf32>
    %c496_i32_141 = arith.constant 496 : i32
    %494 = tpu.dynamic_rotate %409 by %c496_i32_141 dim 1 : vector<4x512xf32>, i32 -> vector<4x512xf32>
    %c15_i32_142 = arith.constant 15 : i32
    %495 = vector.broadcast %c15_i32_142 : i32 to vector<1x512xi32>
    %496 = arith.cmpi slt, %0, %495 : vector<1x512xi32>
    %cst_143 = arith.constant 0.000000e+00 : f32
    %497 = vector.shape_cast %496 : vector<1x512xi1> to vector<1x512xi1>
    %498 = vector.broadcast %497 : vector<1x512xi1> to vector<4x512xi1>
    %499 = vector.broadcast %cst_143 : f32 to vector<4x512xf32>
    %500 = arith.select %498, %494, %499 : vector<4x512xi1>, vector<4x512xf32>
    %501 = vector.extract_strided_slice %397 {offsets = [0, 7], sizes = [4, 1], strides = [1, 1]} : vector<4x9xf32> to vector<4x1xf32>
    %502 = vector.broadcast %501 : vector<4x1xf32> to vector<4x512xf32>
    %503 = arith.mulf %500, %502 : vector<4x512xf32>
    %504 = arith.addf %493, %503 : vector<4x512xf32>
    %c495_i32_144 = arith.constant 495 : i32
    %505 = tpu.dynamic_rotate %409 by %c495_i32_144 dim 1 : vector<4x512xf32>, i32 -> vector<4x512xf32>
    %c15_i32_145 = arith.constant 15 : i32
    %506 = vector.broadcast %c15_i32_145 : i32 to vector<1x512xi32>
    %507 = arith.cmpi slt, %0, %506 : vector<1x512xi32>
    %c15_i32_146 = arith.constant 15 : i32
    %508 = vector.broadcast %c15_i32_146 : i32 to vector<1x512xi32>
    %509 = arith.cmpi slt, %1, %508 : vector<1x512xi32>
    %510 = arith.andi %507, %509 : vector<1x512xi1>
    %cst_147 = arith.constant 0.000000e+00 : f32
    %511 = vector.shape_cast %510 : vector<1x512xi1> to vector<1x512xi1>
    %512 = vector.broadcast %511 : vector<1x512xi1> to vector<4x512xi1>
    %513 = vector.broadcast %cst_147 : f32 to vector<4x512xf32>
    %514 = arith.select %512, %505, %513 : vector<4x512xi1>, vector<4x512xf32>
    %515 = vector.extract_strided_slice %397 {offsets = [0, 8], sizes = [4, 1], strides = [1, 1]} : vector<4x9xf32> to vector<4x1xf32>
    %516 = vector.broadcast %515 : vector<4x1xf32> to vector<4x512xf32>
    %517 = arith.mulf %514, %516 : vector<4x512xf32>
    %518 = arith.addf %504, %517 : vector<4x512xf32>
    %519 = vector.broadcast %404 : vector<4x1xf32> to vector<4x512xf32>
    %520 = arith.mulf %518, %519 : vector<4x512xf32>
    %521 = vector.broadcast %405 : vector<4x1xf32> to vector<4x512xf32>
    %522 = arith.addf %520, %521 : vector<4x512xf32>
    %523 = tpu.concatenate %413, %522 in 0 : vector<4x512xf32>, vector<4x512xf32> -> vector<8x512xf32>
    %c0_148 = arith.constant 0 : index
    %c0_149 = arith.constant 0 : index
    %524 = vector.load %arg16[%c0_148, %c0_149] : memref<256x1024xf32, #tpu.memory_space<vmem>>, vector<256x1024xf32>
    %525 = vector.extract_strided_slice %523 {offsets = [0, 0], sizes = [8, 256], strides = [1, 1]} : vector<8x512xf32> to vector<8x256xf32>
    %cst_150 = arith.constant dense<0.000000e+00> : vector<8x1024xf32>
    %526 = tpu.matmul %525, %524, %cst_150 {dimension_numbers = #tpu.dot_dimension_numbers<[1], [0], [0], [1], [0, 0, 1, 1], [], []>} : vector<8x256xf32>, vector<256x1024xf32>, vector<8x1024xf32> -> vector<8x1024xf32>
    %c0_151 = arith.constant 0 : index
    %c0_152 = arith.constant 0 : index
    %527 = vector.load %arg27[%c0_151, %c0_152] : memref<8x2048xf32, #tpu.memory_space<vmem>>, vector<8x1024xf32>
    tpu.vector_store %arg27[%c0_151, %c0_152], %526 {strides = array<i32>} : memref<8x2048xf32, #tpu.memory_space<vmem>>, vector<8x1024xf32>,
    %528 = vector.extract_strided_slice %523 {offsets = [0, 256], sizes = [8, 256], strides = [1, 1]} : vector<8x512xf32> to vector<8x256xf32>
    %cst_153 = arith.constant dense<0.000000e+00> : vector<8x1024xf32>
    %529 = tpu.matmul %528, %524, %cst_153 {dimension_numbers = #tpu.dot_dimension_numbers<[1], [0], [0], [1], [0, 0, 1, 1], [], []>} : vector<8x256xf32>, vector<256x1024xf32>, vector<8x1024xf32> -> vector<8x1024xf32>
    %c0_154 = arith.constant 0 : index
    %c1024 = arith.constant 1024 : index
    %530 = vector.load %arg27[%c0_154, %c1024] : memref<8x2048xf32, #tpu.memory_space<vmem>>, vector<8x1024xf32>
    tpu.vector_store %arg27[%c0_154, %c1024], %529 {strides = array<i32>} : memref<8x2048xf32, #tpu.memory_space<vmem>>, vector<8x1024xf32>,
    %c0_155 = arith.constant 0 : index
    %c0_156 = arith.constant 0 : index
    %531 = vector.load %arg17[%c0_155, %c0_156] : memref<4x8xf32, #tpu.memory_space<vmem>>, vector<4x8xf32>
    %c0_157 = arith.constant 0 : index
    %c0_158 = arith.constant 0 : index
    %532 = vector.load %arg18[%c0_157, %c0_158] : memref<4x9xf32, #tpu.memory_space<vmem>>, vector<4x9xf32>
    %c0_159 = arith.constant 0 : index
    %c0_160 = arith.constant 0 : index
    %533 = vector.load %arg19[%c0_159, %c0_160] : memref<4x6xf32, #tpu.memory_space<vmem>>, vector<4x6xf32>
    %cst_161 = arith.constant dense<0.000000e+00> : vector<4x512xf32>
    %534 = tpu.matmul %531, %2, %cst_161 {dimension_numbers = #tpu.dot_dimension_numbers<[1], [0], [0], [1], [0, 0, 1, 1], [], []>} : vector<4x8xf32>, vector<8x512xf32>, vector<4x512xf32> -> vector<4x512xf32>
    %535 = vector.extract_strided_slice %533 {offsets = [0, 0], sizes = [4, 1], strides = [1, 1]} : vector<4x6xf32> to vector<4x1xf32>
    %536 = vector.extract_strided_slice %533 {offsets = [0, 1], sizes = [4, 1], strides = [1, 1]} : vector<4x6xf32> to vector<4x1xf32>
    %537 = vector.extract_strided_slice %533 {offsets = [0, 2], sizes = [4, 1], strides = [1, 1]} : vector<4x6xf32> to vector<4x1xf32>
    %538 = vector.extract_strided_slice %533 {offsets = [0, 3], sizes = [4, 1], strides = [1, 1]} : vector<4x6xf32> to vector<4x1xf32>
    %539 = vector.extract_strided_slice %533 {offsets = [0, 4], sizes = [4, 1], strides = [1, 1]} : vector<4x6xf32> to vector<4x1xf32>
    %540 = vector.extract_strided_slice %533 {offsets = [0, 5], sizes = [4, 1], strides = [1, 1]} : vector<4x6xf32> to vector<4x1xf32>
    %541 = vector.broadcast %535 : vector<4x1xf32> to vector<4x512xf32>
    %542 = arith.mulf %534, %541 : vector<4x512xf32>
    %543 = vector.broadcast %536 : vector<4x1xf32> to vector<4x512xf32>
    %544 = arith.addf %542, %543 : vector<4x512xf32>
    %545 = vector.broadcast %537 : vector<4x1xf32> to vector<4x512xf32>
    %546 = arith.mulf %534, %545 : vector<4x512xf32>
    %547 = vector.broadcast %538 : vector<4x1xf32> to vector<4x512xf32>
    %548 = arith.addf %546, %547 : vector<4x512xf32>
    %cst_162 = arith.constant 0.000000e+00 : f32
    %549 = vector.broadcast %cst_162 : f32 to vector<4x512xf32>
    %c17_i32_163 = arith.constant 17 : i32
    %550 = tpu.dynamic_rotate %544 by %c17_i32_163 dim 1 : vector<4x512xf32>, i32 -> vector<4x512xf32>
    %c1_i32_164 = arith.constant 1 : i32
    %551 = vector.broadcast %c1_i32_164 : i32 to vector<1x512xi32>
    %552 = arith.cmpi sge, %0, %551 : vector<1x512xi32>
    %c1_i32_165 = arith.constant 1 : i32
    %553 = vector.broadcast %c1_i32_165 : i32 to vector<1x512xi32>
    %554 = arith.cmpi sge, %1, %553 : vector<1x512xi32>
    %555 = arith.andi %552, %554 : vector<1x512xi1>
    %cst_166 = arith.constant 0.000000e+00 : f32
    %556 = vector.shape_cast %555 : vector<1x512xi1> to vector<1x512xi1>
    %557 = vector.broadcast %556 : vector<1x512xi1> to vector<4x512xi1>
    %558 = vector.broadcast %cst_166 : f32 to vector<4x512xf32>
    %559 = arith.select %557, %550, %558 : vector<4x512xi1>, vector<4x512xf32>
    %560 = vector.extract_strided_slice %532 {offsets = [0, 0], sizes = [4, 1], strides = [1, 1]} : vector<4x9xf32> to vector<4x1xf32>
    %561 = vector.broadcast %560 : vector<4x1xf32> to vector<4x512xf32>
    %562 = arith.mulf %559, %561 : vector<4x512xf32>
    %563 = arith.addf %549, %562 : vector<4x512xf32>
    %c16_i32_167 = arith.constant 16 : i32
    %564 = tpu.dynamic_rotate %544 by %c16_i32_167 dim 1 : vector<4x512xf32>, i32 -> vector<4x512xf32>
    %c1_i32_168 = arith.constant 1 : i32
    %565 = vector.broadcast %c1_i32_168 : i32 to vector<1x512xi32>
    %566 = arith.cmpi sge, %0, %565 : vector<1x512xi32>
    %cst_169 = arith.constant 0.000000e+00 : f32
    %567 = vector.shape_cast %566 : vector<1x512xi1> to vector<1x512xi1>
    %568 = vector.broadcast %567 : vector<1x512xi1> to vector<4x512xi1>
    %569 = vector.broadcast %cst_169 : f32 to vector<4x512xf32>
    %570 = arith.select %568, %564, %569 : vector<4x512xi1>, vector<4x512xf32>
    %571 = vector.extract_strided_slice %532 {offsets = [0, 1], sizes = [4, 1], strides = [1, 1]} : vector<4x9xf32> to vector<4x1xf32>
    %572 = vector.broadcast %571 : vector<4x1xf32> to vector<4x512xf32>
    %573 = arith.mulf %570, %572 : vector<4x512xf32>
    %574 = arith.addf %563, %573 : vector<4x512xf32>
    %c15_i32_170 = arith.constant 15 : i32
    %575 = tpu.dynamic_rotate %544 by %c15_i32_170 dim 1 : vector<4x512xf32>, i32 -> vector<4x512xf32>
    %c1_i32_171 = arith.constant 1 : i32
    %576 = vector.broadcast %c1_i32_171 : i32 to vector<1x512xi32>
    %577 = arith.cmpi sge, %0, %576 : vector<1x512xi32>
    %c15_i32_172 = arith.constant 15 : i32
    %578 = vector.broadcast %c15_i32_172 : i32 to vector<1x512xi32>
    %579 = arith.cmpi slt, %1, %578 : vector<1x512xi32>
    %580 = arith.andi %577, %579 : vector<1x512xi1>
    %cst_173 = arith.constant 0.000000e+00 : f32
    %581 = vector.shape_cast %580 : vector<1x512xi1> to vector<1x512xi1>
    %582 = vector.broadcast %581 : vector<1x512xi1> to vector<4x512xi1>
    %583 = vector.broadcast %cst_173 : f32 to vector<4x512xf32>
    %584 = arith.select %582, %575, %583 : vector<4x512xi1>, vector<4x512xf32>
    %585 = vector.extract_strided_slice %532 {offsets = [0, 2], sizes = [4, 1], strides = [1, 1]} : vector<4x9xf32> to vector<4x1xf32>
    %586 = vector.broadcast %585 : vector<4x1xf32> to vector<4x512xf32>
    %587 = arith.mulf %584, %586 : vector<4x512xf32>
    %588 = arith.addf %574, %587 : vector<4x512xf32>
    %c1_i32_174 = arith.constant 1 : i32
    %589 = tpu.dynamic_rotate %544 by %c1_i32_174 dim 1 : vector<4x512xf32>, i32 -> vector<4x512xf32>
    %c1_i32_175 = arith.constant 1 : i32
    %590 = vector.broadcast %c1_i32_175 : i32 to vector<1x512xi32>
    %591 = arith.cmpi sge, %1, %590 : vector<1x512xi32>
    %cst_176 = arith.constant 0.000000e+00 : f32
    %592 = vector.shape_cast %591 : vector<1x512xi1> to vector<1x512xi1>
    %593 = vector.broadcast %592 : vector<1x512xi1> to vector<4x512xi1>
    %594 = vector.broadcast %cst_176 : f32 to vector<4x512xf32>
    %595 = arith.select %593, %589, %594 : vector<4x512xi1>, vector<4x512xf32>
    %596 = vector.extract_strided_slice %532 {offsets = [0, 3], sizes = [4, 1], strides = [1, 1]} : vector<4x9xf32> to vector<4x1xf32>
    %597 = vector.broadcast %596 : vector<4x1xf32> to vector<4x512xf32>
    %598 = arith.mulf %595, %597 : vector<4x512xf32>
    %599 = arith.addf %588, %598 : vector<4x512xf32>
    %600 = vector.extract_strided_slice %532 {offsets = [0, 4], sizes = [4, 1], strides = [1, 1]} : vector<4x9xf32> to vector<4x1xf32>
    %601 = vector.broadcast %600 : vector<4x1xf32> to vector<4x512xf32>
    %602 = arith.mulf %544, %601 : vector<4x512xf32>
    %603 = arith.addf %599, %602 : vector<4x512xf32>
    %c511_i32_177 = arith.constant 511 : i32
    %604 = tpu.dynamic_rotate %544 by %c511_i32_177 dim 1 : vector<4x512xf32>, i32 -> vector<4x512xf32>
    %c15_i32_178 = arith.constant 15 : i32
    %605 = vector.broadcast %c15_i32_178 : i32 to vector<1x512xi32>
    %606 = arith.cmpi slt, %1, %605 : vector<1x512xi32>
    %cst_179 = arith.constant 0.000000e+00 : f32
    %607 = vector.shape_cast %606 : vector<1x512xi1> to vector<1x512xi1>
    %608 = vector.broadcast %607 : vector<1x512xi1> to vector<4x512xi1>
    %609 = vector.broadcast %cst_179 : f32 to vector<4x512xf32>
    %610 = arith.select %608, %604, %609 : vector<4x512xi1>, vector<4x512xf32>
    %611 = vector.extract_strided_slice %532 {offsets = [0, 5], sizes = [4, 1], strides = [1, 1]} : vector<4x9xf32> to vector<4x1xf32>
    %612 = vector.broadcast %611 : vector<4x1xf32> to vector<4x512xf32>
    %613 = arith.mulf %610, %612 : vector<4x512xf32>
    %614 = arith.addf %603, %613 : vector<4x512xf32>
    %c497_i32_180 = arith.constant 497 : i32
    %615 = tpu.dynamic_rotate %544 by %c497_i32_180 dim 1 : vector<4x512xf32>, i32 -> vector<4x512xf32>
    %c15_i32_181 = arith.constant 15 : i32
    %616 = vector.broadcast %c15_i32_181 : i32 to vector<1x512xi32>
    %617 = arith.cmpi slt, %0, %616 : vector<1x512xi32>
    %c1_i32_182 = arith.constant 1 : i32
    %618 = vector.broadcast %c1_i32_182 : i32 to vector<1x512xi32>
    %619 = arith.cmpi sge, %1, %618 : vector<1x512xi32>
    %620 = arith.andi %617, %619 : vector<1x512xi1>
    %cst_183 = arith.constant 0.000000e+00 : f32
    %621 = vector.shape_cast %620 : vector<1x512xi1> to vector<1x512xi1>
    %622 = vector.broadcast %621 : vector<1x512xi1> to vector<4x512xi1>
    %623 = vector.broadcast %cst_183 : f32 to vector<4x512xf32>
    %624 = arith.select %622, %615, %623 : vector<4x512xi1>, vector<4x512xf32>
    %625 = vector.extract_strided_slice %532 {offsets = [0, 6], sizes = [4, 1], strides = [1, 1]} : vector<4x9xf32> to vector<4x1xf32>
    %626 = vector.broadcast %625 : vector<4x1xf32> to vector<4x512xf32>
    %627 = arith.mulf %624, %626 : vector<4x512xf32>
    %628 = arith.addf %614, %627 : vector<4x512xf32>
    %c496_i32_184 = arith.constant 496 : i32
    %629 = tpu.dynamic_rotate %544 by %c496_i32_184 dim 1 : vector<4x512xf32>, i32 -> vector<4x512xf32>
    %c15_i32_185 = arith.constant 15 : i32
    %630 = vector.broadcast %c15_i32_185 : i32 to vector<1x512xi32>
    %631 = arith.cmpi slt, %0, %630 : vector<1x512xi32>
    %cst_186 = arith.constant 0.000000e+00 : f32
    %632 = vector.shape_cast %631 : vector<1x512xi1> to vector<1x512xi1>
    %633 = vector.broadcast %632 : vector<1x512xi1> to vector<4x512xi1>
    %634 = vector.broadcast %cst_186 : f32 to vector<4x512xf32>
    %635 = arith.select %633, %629, %634 : vector<4x512xi1>, vector<4x512xf32>
    %636 = vector.extract_strided_slice %532 {offsets = [0, 7], sizes = [4, 1], strides = [1, 1]} : vector<4x9xf32> to vector<4x1xf32>
    %637 = vector.broadcast %636 : vector<4x1xf32> to vector<4x512xf32>
    %638 = arith.mulf %635, %637 : vector<4x512xf32>
    %639 = arith.addf %628, %638 : vector<4x512xf32>
    %c495_i32_187 = arith.constant 495 : i32
    %640 = tpu.dynamic_rotate %544 by %c495_i32_187 dim 1 : vector<4x512xf32>, i32 -> vector<4x512xf32>
    %c15_i32_188 = arith.constant 15 : i32
    %641 = vector.broadcast %c15_i32_188 : i32 to vector<1x512xi32>
    %642 = arith.cmpi slt, %0, %641 : vector<1x512xi32>
    %c15_i32_189 = arith.constant 15 : i32
    %643 = vector.broadcast %c15_i32_189 : i32 to vector<1x512xi32>
    %644 = arith.cmpi slt, %1, %643 : vector<1x512xi32>
    %645 = arith.andi %642, %644 : vector<1x512xi1>
    %cst_190 = arith.constant 0.000000e+00 : f32
    %646 = vector.shape_cast %645 : vector<1x512xi1> to vector<1x512xi1>
    %647 = vector.broadcast %646 : vector<1x512xi1> to vector<4x512xi1>
    %648 = vector.broadcast %cst_190 : f32 to vector<4x512xf32>
    %649 = arith.select %647, %640, %648 : vector<4x512xi1>, vector<4x512xf32>
    %650 = vector.extract_strided_slice %532 {offsets = [0, 8], sizes = [4, 1], strides = [1, 1]} : vector<4x9xf32> to vector<4x1xf32>
    %651 = vector.broadcast %650 : vector<4x1xf32> to vector<4x512xf32>
    %652 = arith.mulf %649, %651 : vector<4x512xf32>
    %653 = arith.addf %639, %652 : vector<4x512xf32>
    %654 = vector.broadcast %539 : vector<4x1xf32> to vector<4x512xf32>
    %655 = arith.mulf %653, %654 : vector<4x512xf32>
    %656 = vector.broadcast %540 : vector<4x1xf32> to vector<4x512xf32>
    %657 = arith.addf %655, %656 : vector<4x512xf32>
    %658 = tpu.concatenate %548, %657 in 0 : vector<4x512xf32>, vector<4x512xf32> -> vector<8x512xf32>
    %cst_191 = arith.constant 0.000000e+00 : f32
    %659 = vector.broadcast %cst_191 : f32 to vector<8x512xf32>
    %660 = arith.maximumf %658, %659 : vector<8x512xf32>
    %c0_192 = arith.constant 0 : index
    %c0_193 = arith.constant 0 : index
    %661 = vector.load %arg28[%c0_192, %c0_193] : memref<8x512xf32, #tpu.memory_space<vmem>>, vector<8x512xf32>
    tpu.vector_store %arg28[%c0_192, %c0_193], %660 {strides = array<i32>} : memref<8x512xf32, #tpu.memory_space<vmem>>, vector<8x512xf32>,
    %c0_194 = arith.constant 0 : index
    %c0_195 = arith.constant 0 : index
    %662 = vector.load %arg20[%c0_194, %c0_195] : memref<4x16xf32, #tpu.memory_space<vmem>>, vector<4x16xf32>
    %c0_196 = arith.constant 0 : index
    %c0_197 = arith.constant 0 : index
    %663 = vector.load %arg21[%c0_196, %c0_197] : memref<4x9xf32, #tpu.memory_space<vmem>>, vector<4x9xf32>
    %c0_198 = arith.constant 0 : index
    %c0_199 = arith.constant 0 : index
    %664 = vector.load %arg22[%c0_198, %c0_199] : memref<4x6xf32, #tpu.memory_space<vmem>>, vector<4x6xf32>
    %cst_200 = arith.constant dense<0.000000e+00> : vector<4x512xf32>
    %665 = tpu.matmul %662, %264, %cst_200 {dimension_numbers = #tpu.dot_dimension_numbers<[1], [0], [0], [1], [0, 0, 1, 1], [], []>} : vector<4x16xf32>, vector<16x512xf32>, vector<4x512xf32> -> vector<4x512xf32>
    %666 = vector.extract_strided_slice %664 {offsets = [0, 0], sizes = [4, 1], strides = [1, 1]} : vector<4x6xf32> to vector<4x1xf32>
    %667 = vector.extract_strided_slice %664 {offsets = [0, 1], sizes = [4, 1], strides = [1, 1]} : vector<4x6xf32> to vector<4x1xf32>
    %668 = vector.extract_strided_slice %664 {offsets = [0, 2], sizes = [4, 1], strides = [1, 1]} : vector<4x6xf32> to vector<4x1xf32>
    %669 = vector.extract_strided_slice %664 {offsets = [0, 3], sizes = [4, 1], strides = [1, 1]} : vector<4x6xf32> to vector<4x1xf32>
    %670 = vector.extract_strided_slice %664 {offsets = [0, 4], sizes = [4, 1], strides = [1, 1]} : vector<4x6xf32> to vector<4x1xf32>
    %671 = vector.extract_strided_slice %664 {offsets = [0, 5], sizes = [4, 1], strides = [1, 1]} : vector<4x6xf32> to vector<4x1xf32>
    %672 = vector.broadcast %666 : vector<4x1xf32> to vector<4x512xf32>
    %673 = arith.mulf %665, %672 : vector<4x512xf32>
    %674 = vector.broadcast %667 : vector<4x1xf32> to vector<4x512xf32>
    %675 = arith.addf %673, %674 : vector<4x512xf32>
    %676 = vector.broadcast %668 : vector<4x1xf32> to vector<4x512xf32>
    %677 = arith.mulf %665, %676 : vector<4x512xf32>
    %678 = vector.broadcast %669 : vector<4x1xf32> to vector<4x512xf32>
    %679 = arith.addf %677, %678 : vector<4x512xf32>
    %cst_201 = arith.constant 0.000000e+00 : f32
    %680 = vector.broadcast %cst_201 : f32 to vector<4x512xf32>
    %c17_i32_202 = arith.constant 17 : i32
    %681 = tpu.dynamic_rotate %675 by %c17_i32_202 dim 1 : vector<4x512xf32>, i32 -> vector<4x512xf32>
    %c1_i32_203 = arith.constant 1 : i32
    %682 = vector.broadcast %c1_i32_203 : i32 to vector<1x512xi32>
    %683 = arith.cmpi sge, %0, %682 : vector<1x512xi32>
    %c1_i32_204 = arith.constant 1 : i32
    %684 = vector.broadcast %c1_i32_204 : i32 to vector<1x512xi32>
    %685 = arith.cmpi sge, %1, %684 : vector<1x512xi32>
    %686 = arith.andi %683, %685 : vector<1x512xi1>
    %cst_205 = arith.constant 0.000000e+00 : f32
    %687 = vector.shape_cast %686 : vector<1x512xi1> to vector<1x512xi1>
    %688 = vector.broadcast %687 : vector<1x512xi1> to vector<4x512xi1>
    %689 = vector.broadcast %cst_205 : f32 to vector<4x512xf32>
    %690 = arith.select %688, %681, %689 : vector<4x512xi1>, vector<4x512xf32>
    %691 = vector.extract_strided_slice %663 {offsets = [0, 0], sizes = [4, 1], strides = [1, 1]} : vector<4x9xf32> to vector<4x1xf32>
    %692 = vector.broadcast %691 : vector<4x1xf32> to vector<4x512xf32>
    %693 = arith.mulf %690, %692 : vector<4x512xf32>
    %694 = arith.addf %680, %693 : vector<4x512xf32>
    %c16_i32_206 = arith.constant 16 : i32
    %695 = tpu.dynamic_rotate %675 by %c16_i32_206 dim 1 : vector<4x512xf32>, i32 -> vector<4x512xf32>
    %c1_i32_207 = arith.constant 1 : i32
    %696 = vector.broadcast %c1_i32_207 : i32 to vector<1x512xi32>
    %697 = arith.cmpi sge, %0, %696 : vector<1x512xi32>
    %cst_208 = arith.constant 0.000000e+00 : f32
    %698 = vector.shape_cast %697 : vector<1x512xi1> to vector<1x512xi1>
    %699 = vector.broadcast %698 : vector<1x512xi1> to vector<4x512xi1>
    %700 = vector.broadcast %cst_208 : f32 to vector<4x512xf32>
    %701 = arith.select %699, %695, %700 : vector<4x512xi1>, vector<4x512xf32>
    %702 = vector.extract_strided_slice %663 {offsets = [0, 1], sizes = [4, 1], strides = [1, 1]} : vector<4x9xf32> to vector<4x1xf32>
    %703 = vector.broadcast %702 : vector<4x1xf32> to vector<4x512xf32>
    %704 = arith.mulf %701, %703 : vector<4x512xf32>
    %705 = arith.addf %694, %704 : vector<4x512xf32>
    %c15_i32_209 = arith.constant 15 : i32
    %706 = tpu.dynamic_rotate %675 by %c15_i32_209 dim 1 : vector<4x512xf32>, i32 -> vector<4x512xf32>
    %c1_i32_210 = arith.constant 1 : i32
    %707 = vector.broadcast %c1_i32_210 : i32 to vector<1x512xi32>
    %708 = arith.cmpi sge, %0, %707 : vector<1x512xi32>
    %c15_i32_211 = arith.constant 15 : i32
    %709 = vector.broadcast %c15_i32_211 : i32 to vector<1x512xi32>
    %710 = arith.cmpi slt, %1, %709 : vector<1x512xi32>
    %711 = arith.andi %708, %710 : vector<1x512xi1>
    %cst_212 = arith.constant 0.000000e+00 : f32
    %712 = vector.shape_cast %711 : vector<1x512xi1> to vector<1x512xi1>
    %713 = vector.broadcast %712 : vector<1x512xi1> to vector<4x512xi1>
    %714 = vector.broadcast %cst_212 : f32 to vector<4x512xf32>
    %715 = arith.select %713, %706, %714 : vector<4x512xi1>, vector<4x512xf32>
    %716 = vector.extract_strided_slice %663 {offsets = [0, 2], sizes = [4, 1], strides = [1, 1]} : vector<4x9xf32> to vector<4x1xf32>
    %717 = vector.broadcast %716 : vector<4x1xf32> to vector<4x512xf32>
    %718 = arith.mulf %715, %717 : vector<4x512xf32>
    %719 = arith.addf %705, %718 : vector<4x512xf32>
    %c1_i32_213 = arith.constant 1 : i32
    %720 = tpu.dynamic_rotate %675 by %c1_i32_213 dim 1 : vector<4x512xf32>, i32 -> vector<4x512xf32>
    %c1_i32_214 = arith.constant 1 : i32
    %721 = vector.broadcast %c1_i32_214 : i32 to vector<1x512xi32>
    %722 = arith.cmpi sge, %1, %721 : vector<1x512xi32>
    %cst_215 = arith.constant 0.000000e+00 : f32
    %723 = vector.shape_cast %722 : vector<1x512xi1> to vector<1x512xi1>
    %724 = vector.broadcast %723 : vector<1x512xi1> to vector<4x512xi1>
    %725 = vector.broadcast %cst_215 : f32 to vector<4x512xf32>
    %726 = arith.select %724, %720, %725 : vector<4x512xi1>, vector<4x512xf32>
    %727 = vector.extract_strided_slice %663 {offsets = [0, 3], sizes = [4, 1], strides = [1, 1]} : vector<4x9xf32> to vector<4x1xf32>
    %728 = vector.broadcast %727 : vector<4x1xf32> to vector<4x512xf32>
    %729 = arith.mulf %726, %728 : vector<4x512xf32>
    %730 = arith.addf %719, %729 : vector<4x512xf32>
    %731 = vector.extract_strided_slice %663 {offsets = [0, 4], sizes = [4, 1], strides = [1, 1]} : vector<4x9xf32> to vector<4x1xf32>
    %732 = vector.broadcast %731 : vector<4x1xf32> to vector<4x512xf32>
    %733 = arith.mulf %675, %732 : vector<4x512xf32>
    %734 = arith.addf %730, %733 : vector<4x512xf32>
    %c511_i32_216 = arith.constant 511 : i32
    %735 = tpu.dynamic_rotate %675 by %c511_i32_216 dim 1 : vector<4x512xf32>, i32 -> vector<4x512xf32>
    %c15_i32_217 = arith.constant 15 : i32
    %736 = vector.broadcast %c15_i32_217 : i32 to vector<1x512xi32>
    %737 = arith.cmpi slt, %1, %736 : vector<1x512xi32>
    %cst_218 = arith.constant 0.000000e+00 : f32
    %738 = vector.shape_cast %737 : vector<1x512xi1> to vector<1x512xi1>
    %739 = vector.broadcast %738 : vector<1x512xi1> to vector<4x512xi1>
    %740 = vector.broadcast %cst_218 : f32 to vector<4x512xf32>
    %741 = arith.select %739, %735, %740 : vector<4x512xi1>, vector<4x512xf32>
    %742 = vector.extract_strided_slice %663 {offsets = [0, 5], sizes = [4, 1], strides = [1, 1]} : vector<4x9xf32> to vector<4x1xf32>
    %743 = vector.broadcast %742 : vector<4x1xf32> to vector<4x512xf32>
    %744 = arith.mulf %741, %743 : vector<4x512xf32>
    %745 = arith.addf %734, %744 : vector<4x512xf32>
    %c497_i32_219 = arith.constant 497 : i32
    %746 = tpu.dynamic_rotate %675 by %c497_i32_219 dim 1 : vector<4x512xf32>, i32 -> vector<4x512xf32>
    %c15_i32_220 = arith.constant 15 : i32
    %747 = vector.broadcast %c15_i32_220 : i32 to vector<1x512xi32>
    %748 = arith.cmpi slt, %0, %747 : vector<1x512xi32>
    %c1_i32_221 = arith.constant 1 : i32
    %749 = vector.broadcast %c1_i32_221 : i32 to vector<1x512xi32>
    %750 = arith.cmpi sge, %1, %749 : vector<1x512xi32>
    %751 = arith.andi %748, %750 : vector<1x512xi1>
    %cst_222 = arith.constant 0.000000e+00 : f32
    %752 = vector.shape_cast %751 : vector<1x512xi1> to vector<1x512xi1>
    %753 = vector.broadcast %752 : vector<1x512xi1> to vector<4x512xi1>
    %754 = vector.broadcast %cst_222 : f32 to vector<4x512xf32>
    %755 = arith.select %753, %746, %754 : vector<4x512xi1>, vector<4x512xf32>
    %756 = vector.extract_strided_slice %663 {offsets = [0, 6], sizes = [4, 1], strides = [1, 1]} : vector<4x9xf32> to vector<4x1xf32>
    %757 = vector.broadcast %756 : vector<4x1xf32> to vector<4x512xf32>
    %758 = arith.mulf %755, %757 : vector<4x512xf32>
    %759 = arith.addf %745, %758 : vector<4x512xf32>
    %c496_i32_223 = arith.constant 496 : i32
    %760 = tpu.dynamic_rotate %675 by %c496_i32_223 dim 1 : vector<4x512xf32>, i32 -> vector<4x512xf32>
    %c15_i32_224 = arith.constant 15 : i32
    %761 = vector.broadcast %c15_i32_224 : i32 to vector<1x512xi32>
    %762 = arith.cmpi slt, %0, %761 : vector<1x512xi32>
    %cst_225 = arith.constant 0.000000e+00 : f32
    %763 = vector.shape_cast %762 : vector<1x512xi1> to vector<1x512xi1>
    %764 = vector.broadcast %763 : vector<1x512xi1> to vector<4x512xi1>
    %765 = vector.broadcast %cst_225 : f32 to vector<4x512xf32>
    %766 = arith.select %764, %760, %765 : vector<4x512xi1>, vector<4x512xf32>
    %767 = vector.extract_strided_slice %663 {offsets = [0, 7], sizes = [4, 1], strides = [1, 1]} : vector<4x9xf32> to vector<4x1xf32>
    %768 = vector.broadcast %767 : vector<4x1xf32> to vector<4x512xf32>
    %769 = arith.mulf %766, %768 : vector<4x512xf32>
    %770 = arith.addf %759, %769 : vector<4x512xf32>
    %c495_i32_226 = arith.constant 495 : i32
    %771 = tpu.dynamic_rotate %675 by %c495_i32_226 dim 1 : vector<4x512xf32>, i32 -> vector<4x512xf32>
    %c15_i32_227 = arith.constant 15 : i32
    %772 = vector.broadcast %c15_i32_227 : i32 to vector<1x512xi32>
    %773 = arith.cmpi slt, %0, %772 : vector<1x512xi32>
    %c15_i32_228 = arith.constant 15 : i32
    %774 = vector.broadcast %c15_i32_228 : i32 to vector<1x512xi32>
    %775 = arith.cmpi slt, %1, %774 : vector<1x512xi32>
    %776 = arith.andi %773, %775 : vector<1x512xi1>
    %cst_229 = arith.constant 0.000000e+00 : f32
    %777 = vector.shape_cast %776 : vector<1x512xi1> to vector<1x512xi1>
    %778 = vector.broadcast %777 : vector<1x512xi1> to vector<4x512xi1>
    %779 = vector.broadcast %cst_229 : f32 to vector<4x512xf32>
    %780 = arith.select %778, %771, %779 : vector<4x512xi1>, vector<4x512xf32>
    %781 = vector.extract_strided_slice %663 {offsets = [0, 8], sizes = [4, 1], strides = [1, 1]} : vector<4x9xf32> to vector<4x1xf32>
    %782 = vector.broadcast %781 : vector<4x1xf32> to vector<4x512xf32>
    %783 = arith.mulf %780, %782 : vector<4x512xf32>
    %784 = arith.addf %770, %783 : vector<4x512xf32>
    %785 = vector.broadcast %670 : vector<4x1xf32> to vector<4x512xf32>
    %786 = arith.mulf %784, %785 : vector<4x512xf32>
    %787 = vector.broadcast %671 : vector<4x1xf32> to vector<4x512xf32>
    %788 = arith.addf %786, %787 : vector<4x512xf32>
    %789 = tpu.concatenate %679, %788 in 0 : vector<4x512xf32>, vector<4x512xf32> -> vector<8x512xf32>
    %cst_230 = arith.constant 0.000000e+00 : f32
    %790 = vector.broadcast %cst_230 : f32 to vector<8x512xf32>
    %791 = arith.maximumf %789, %790 : vector<8x512xf32>
    %c0_231 = arith.constant 0 : index
    %c0_232 = arith.constant 0 : index
    %792 = vector.load %arg29[%c0_231, %c0_232] : memref<8x512xf32, #tpu.memory_space<vmem>>, vector<8x512xf32>
    tpu.vector_store %arg29[%c0_231, %c0_232], %791 {strides = array<i32>} : memref<8x512xf32, #tpu.memory_space<vmem>>, vector<8x512xf32>,
    %c0_233 = arith.constant 0 : index
    %c0_234 = arith.constant 0 : index
    %793 = vector.load %arg23[%c0_233, %c0_234] : memref<32x16xf32, #tpu.memory_space<vmem>>, vector<32x16xf32>
    %c0_235 = arith.constant 0 : index
    %c0_236 = arith.constant 0 : index
    %794 = vector.load %arg24[%c0_235, %c0_236] : memref<32x9xf32, #tpu.memory_space<vmem>>, vector<32x9xf32>
    %c0_237 = arith.constant 0 : index
    %c0_238 = arith.constant 0 : index
    %795 = vector.load %arg25[%c0_237, %c0_238] : memref<32x6xf32, #tpu.memory_space<vmem>>, vector<32x6xf32>
    %cst_239 = arith.constant dense<0.000000e+00> : vector<32x512xf32>
    %796 = tpu.matmul %793, %264, %cst_239 {dimension_numbers = #tpu.dot_dimension_numbers<[1], [0], [0], [1], [0, 0, 1, 1], [], []>} : vector<32x16xf32>, vector<16x512xf32>, vector<32x512xf32> -> vector<32x512xf32>
    %797 = vector.extract_strided_slice %795 {offsets = [0, 0], sizes = [32, 1], strides = [1, 1]} : vector<32x6xf32> to vector<32x1xf32>
    %798 = vector.extract_strided_slice %795 {offsets = [0, 1], sizes = [32, 1], strides = [1, 1]} : vector<32x6xf32> to vector<32x1xf32>
    %799 = vector.extract_strided_slice %795 {offsets = [0, 2], sizes = [32, 1], strides = [1, 1]} : vector<32x6xf32> to vector<32x1xf32>
    %800 = vector.extract_strided_slice %795 {offsets = [0, 3], sizes = [32, 1], strides = [1, 1]} : vector<32x6xf32> to vector<32x1xf32>
    %801 = vector.extract_strided_slice %795 {offsets = [0, 4], sizes = [32, 1], strides = [1, 1]} : vector<32x6xf32> to vector<32x1xf32>
    %802 = vector.extract_strided_slice %795 {offsets = [0, 5], sizes = [32, 1], strides = [1, 1]} : vector<32x6xf32> to vector<32x1xf32>
    %803 = vector.broadcast %797 : vector<32x1xf32> to vector<32x512xf32>
    %804 = arith.mulf %796, %803 : vector<32x512xf32>
    %805 = vector.broadcast %798 : vector<32x1xf32> to vector<32x512xf32>
    %806 = arith.addf %804, %805 : vector<32x512xf32>
    %807 = vector.broadcast %799 : vector<32x1xf32> to vector<32x512xf32>
    %808 = arith.mulf %796, %807 : vector<32x512xf32>
    %809 = vector.broadcast %800 : vector<32x1xf32> to vector<32x512xf32>
    %810 = arith.addf %808, %809 : vector<32x512xf32>
    %cst_240 = arith.constant 0.000000e+00 : f32
    %811 = vector.broadcast %cst_240 : f32 to vector<32x512xf32>
    %c17_i32_241 = arith.constant 17 : i32
    %812 = tpu.dynamic_rotate %806 by %c17_i32_241 dim 1 : vector<32x512xf32>, i32 -> vector<32x512xf32>
    %c1_i32_242 = arith.constant 1 : i32
    %813 = vector.broadcast %c1_i32_242 : i32 to vector<1x512xi32>
    %814 = arith.cmpi sge, %0, %813 : vector<1x512xi32>
    %c1_i32_243 = arith.constant 1 : i32
    %815 = vector.broadcast %c1_i32_243 : i32 to vector<1x512xi32>
    %816 = arith.cmpi sge, %1, %815 : vector<1x512xi32>
    %817 = arith.andi %814, %816 : vector<1x512xi1>
    %cst_244 = arith.constant 0.000000e+00 : f32
    %818 = vector.shape_cast %817 : vector<1x512xi1> to vector<1x512xi1>
    %819 = vector.broadcast %818 : vector<1x512xi1> to vector<32x512xi1>
    %820 = vector.broadcast %cst_244 : f32 to vector<32x512xf32>
    %821 = arith.select %819, %812, %820 : vector<32x512xi1>, vector<32x512xf32>
    %822 = vector.extract_strided_slice %794 {offsets = [0, 0], sizes = [32, 1], strides = [1, 1]} : vector<32x9xf32> to vector<32x1xf32>
    %823 = vector.broadcast %822 : vector<32x1xf32> to vector<32x512xf32>
    %824 = arith.mulf %821, %823 : vector<32x512xf32>
    %825 = arith.addf %811, %824 : vector<32x512xf32>
    %c16_i32_245 = arith.constant 16 : i32
    %826 = tpu.dynamic_rotate %806 by %c16_i32_245 dim 1 : vector<32x512xf32>, i32 -> vector<32x512xf32>
    %c1_i32_246 = arith.constant 1 : i32
    %827 = vector.broadcast %c1_i32_246 : i32 to vector<1x512xi32>
    %828 = arith.cmpi sge, %0, %827 : vector<1x512xi32>
    %cst_247 = arith.constant 0.000000e+00 : f32
    %829 = vector.shape_cast %828 : vector<1x512xi1> to vector<1x512xi1>
    %830 = vector.broadcast %829 : vector<1x512xi1> to vector<32x512xi1>
    %831 = vector.broadcast %cst_247 : f32 to vector<32x512xf32>
    %832 = arith.select %830, %826, %831 : vector<32x512xi1>, vector<32x512xf32>
    %833 = vector.extract_strided_slice %794 {offsets = [0, 1], sizes = [32, 1], strides = [1, 1]} : vector<32x9xf32> to vector<32x1xf32>
    %834 = vector.broadcast %833 : vector<32x1xf32> to vector<32x512xf32>
    %835 = arith.mulf %832, %834 : vector<32x512xf32>
    %836 = arith.addf %825, %835 : vector<32x512xf32>
    %c15_i32_248 = arith.constant 15 : i32
    %837 = tpu.dynamic_rotate %806 by %c15_i32_248 dim 1 : vector<32x512xf32>, i32 -> vector<32x512xf32>
    %c1_i32_249 = arith.constant 1 : i32
    %838 = vector.broadcast %c1_i32_249 : i32 to vector<1x512xi32>
    %839 = arith.cmpi sge, %0, %838 : vector<1x512xi32>
    %c15_i32_250 = arith.constant 15 : i32
    %840 = vector.broadcast %c15_i32_250 : i32 to vector<1x512xi32>
    %841 = arith.cmpi slt, %1, %840 : vector<1x512xi32>
    %842 = arith.andi %839, %841 : vector<1x512xi1>
    %cst_251 = arith.constant 0.000000e+00 : f32
    %843 = vector.shape_cast %842 : vector<1x512xi1> to vector<1x512xi1>
    %844 = vector.broadcast %843 : vector<1x512xi1> to vector<32x512xi1>
    %845 = vector.broadcast %cst_251 : f32 to vector<32x512xf32>
    %846 = arith.select %844, %837, %845 : vector<32x512xi1>, vector<32x512xf32>
    %847 = vector.extract_strided_slice %794 {offsets = [0, 2], sizes = [32, 1], strides = [1, 1]} : vector<32x9xf32> to vector<32x1xf32>
    %848 = vector.broadcast %847 : vector<32x1xf32> to vector<32x512xf32>
    %849 = arith.mulf %846, %848 : vector<32x512xf32>
    %850 = arith.addf %836, %849 : vector<32x512xf32>
    %c1_i32_252 = arith.constant 1 : i32
    %851 = tpu.dynamic_rotate %806 by %c1_i32_252 dim 1 : vector<32x512xf32>, i32 -> vector<32x512xf32>
    %c1_i32_253 = arith.constant 1 : i32
    %852 = vector.broadcast %c1_i32_253 : i32 to vector<1x512xi32>
    %853 = arith.cmpi sge, %1, %852 : vector<1x512xi32>
    %cst_254 = arith.constant 0.000000e+00 : f32
    %854 = vector.shape_cast %853 : vector<1x512xi1> to vector<1x512xi1>
    %855 = vector.broadcast %854 : vector<1x512xi1> to vector<32x512xi1>
    %856 = vector.broadcast %cst_254 : f32 to vector<32x512xf32>
    %857 = arith.select %855, %851, %856 : vector<32x512xi1>, vector<32x512xf32>
    %858 = vector.extract_strided_slice %794 {offsets = [0, 3], sizes = [32, 1], strides = [1, 1]} : vector<32x9xf32> to vector<32x1xf32>
    %859 = vector.broadcast %858 : vector<32x1xf32> to vector<32x512xf32>
    %860 = arith.mulf %857, %859 : vector<32x512xf32>
    %861 = arith.addf %850, %860 : vector<32x512xf32>
    %862 = vector.extract_strided_slice %794 {offsets = [0, 4], sizes = [32, 1], strides = [1, 1]} : vector<32x9xf32> to vector<32x1xf32>
    %863 = vector.broadcast %862 : vector<32x1xf32> to vector<32x512xf32>
    %864 = arith.mulf %806, %863 : vector<32x512xf32>
    %865 = arith.addf %861, %864 : vector<32x512xf32>
    %c511_i32_255 = arith.constant 511 : i32
    %866 = tpu.dynamic_rotate %806 by %c511_i32_255 dim 1 : vector<32x512xf32>, i32 -> vector<32x512xf32>
    %c15_i32_256 = arith.constant 15 : i32
    %867 = vector.broadcast %c15_i32_256 : i32 to vector<1x512xi32>
    %868 = arith.cmpi slt, %1, %867 : vector<1x512xi32>
    %cst_257 = arith.constant 0.000000e+00 : f32
    %869 = vector.shape_cast %868 : vector<1x512xi1> to vector<1x512xi1>
    %870 = vector.broadcast %869 : vector<1x512xi1> to vector<32x512xi1>
    %871 = vector.broadcast %cst_257 : f32 to vector<32x512xf32>
    %872 = arith.select %870, %866, %871 : vector<32x512xi1>, vector<32x512xf32>
    %873 = vector.extract_strided_slice %794 {offsets = [0, 5], sizes = [32, 1], strides = [1, 1]} : vector<32x9xf32> to vector<32x1xf32>
    %874 = vector.broadcast %873 : vector<32x1xf32> to vector<32x512xf32>
    %875 = arith.mulf %872, %874 : vector<32x512xf32>
    %876 = arith.addf %865, %875 : vector<32x512xf32>
    %c497_i32_258 = arith.constant 497 : i32
    %877 = tpu.dynamic_rotate %806 by %c497_i32_258 dim 1 : vector<32x512xf32>, i32 -> vector<32x512xf32>
    %c15_i32_259 = arith.constant 15 : i32
    %878 = vector.broadcast %c15_i32_259 : i32 to vector<1x512xi32>
    %879 = arith.cmpi slt, %0, %878 : vector<1x512xi32>
    %c1_i32_260 = arith.constant 1 : i32
    %880 = vector.broadcast %c1_i32_260 : i32 to vector<1x512xi32>
    %881 = arith.cmpi sge, %1, %880 : vector<1x512xi32>
    %882 = arith.andi %879, %881 : vector<1x512xi1>
    %cst_261 = arith.constant 0.000000e+00 : f32
    %883 = vector.shape_cast %882 : vector<1x512xi1> to vector<1x512xi1>
    %884 = vector.broadcast %883 : vector<1x512xi1> to vector<32x512xi1>
    %885 = vector.broadcast %cst_261 : f32 to vector<32x512xf32>
    %886 = arith.select %884, %877, %885 : vector<32x512xi1>, vector<32x512xf32>
    %887 = vector.extract_strided_slice %794 {offsets = [0, 6], sizes = [32, 1], strides = [1, 1]} : vector<32x9xf32> to vector<32x1xf32>
    %888 = vector.broadcast %887 : vector<32x1xf32> to vector<32x512xf32>
    %889 = arith.mulf %886, %888 : vector<32x512xf32>
    %890 = arith.addf %876, %889 : vector<32x512xf32>
    %c496_i32_262 = arith.constant 496 : i32
    %891 = tpu.dynamic_rotate %806 by %c496_i32_262 dim 1 : vector<32x512xf32>, i32 -> vector<32x512xf32>
    %c15_i32_263 = arith.constant 15 : i32
    %892 = vector.broadcast %c15_i32_263 : i32 to vector<1x512xi32>
    %893 = arith.cmpi slt, %0, %892 : vector<1x512xi32>
    %cst_264 = arith.constant 0.000000e+00 : f32
    %894 = vector.shape_cast %893 : vector<1x512xi1> to vector<1x512xi1>
    %895 = vector.broadcast %894 : vector<1x512xi1> to vector<32x512xi1>
    %896 = vector.broadcast %cst_264 : f32 to vector<32x512xf32>
    %897 = arith.select %895, %891, %896 : vector<32x512xi1>, vector<32x512xf32>
    %898 = vector.extract_strided_slice %794 {offsets = [0, 7], sizes = [32, 1], strides = [1, 1]} : vector<32x9xf32> to vector<32x1xf32>
    %899 = vector.broadcast %898 : vector<32x1xf32> to vector<32x512xf32>
    %900 = arith.mulf %897, %899 : vector<32x512xf32>
    %901 = arith.addf %890, %900 : vector<32x512xf32>
    %c495_i32_265 = arith.constant 495 : i32
    %902 = tpu.dynamic_rotate %806 by %c495_i32_265 dim 1 : vector<32x512xf32>, i32 -> vector<32x512xf32>
    %c15_i32_266 = arith.constant 15 : i32
    %903 = vector.broadcast %c15_i32_266 : i32 to vector<1x512xi32>
    %904 = arith.cmpi slt, %0, %903 : vector<1x512xi32>
    %c15_i32_267 = arith.constant 15 : i32
    %905 = vector.broadcast %c15_i32_267 : i32 to vector<1x512xi32>
    %906 = arith.cmpi slt, %1, %905 : vector<1x512xi32>
    %907 = arith.andi %904, %906 : vector<1x512xi1>
    %cst_268 = arith.constant 0.000000e+00 : f32
    %908 = vector.shape_cast %907 : vector<1x512xi1> to vector<1x512xi1>
    %909 = vector.broadcast %908 : vector<1x512xi1> to vector<32x512xi1>
    %910 = vector.broadcast %cst_268 : f32 to vector<32x512xf32>
    %911 = arith.select %909, %902, %910 : vector<32x512xi1>, vector<32x512xf32>
    %912 = vector.extract_strided_slice %794 {offsets = [0, 8], sizes = [32, 1], strides = [1, 1]} : vector<32x9xf32> to vector<32x1xf32>
    %913 = vector.broadcast %912 : vector<32x1xf32> to vector<32x512xf32>
    %914 = arith.mulf %911, %913 : vector<32x512xf32>
    %915 = arith.addf %901, %914 : vector<32x512xf32>
    %916 = vector.broadcast %801 : vector<32x1xf32> to vector<32x512xf32>
    %917 = arith.mulf %915, %916 : vector<32x512xf32>
    %918 = vector.broadcast %802 : vector<32x1xf32> to vector<32x512xf32>
    %919 = arith.addf %917, %918 : vector<32x512xf32>
    %920 = tpu.concatenate %810, %919 in 0 : vector<32x512xf32>, vector<32x512xf32> -> vector<64x512xf32>
    %cst_269 = arith.constant 0.000000e+00 : f32
    %921 = vector.broadcast %cst_269 : f32 to vector<64x512xf32>
    %922 = arith.maximumf %920, %921 : vector<64x512xf32>
    %c0_270 = arith.constant 0 : index
    %c0_271 = arith.constant 0 : index
    %923 = vector.load %arg30[%c0_270, %c0_271] : memref<64x512xf32, #tpu.memory_space<vmem>>, vector<64x512xf32>
    tpu.vector_store %arg30[%c0_270, %c0_271], %922 {strides = array<i32>} : memref<64x512xf32, #tpu.memory_space<vmem>>, vector<64x512xf32>,
    return
  }
}

</mosaic_0001>

<llo_original>
// kernel: upsample_unit_forward.1
$region0: #{upsample_unit_forward.1}
  #allocation0 [shape = 'u32[]', space=smem, size = 0x4, offset = 0x4, fixed_abs, tag = 'smem constant byte address 0x4 - core index']
  #allocation1 [shape = 'u32[72,128]{1,0:T(1,128)}', space=vmem, size = 0x9000, scoped, tag = 'internal scratch']
  %s0 = inlined_call_operand.smem [shape: u32[31], index: -1, kind: input, shape index: {}]
  %s1 = sld [smem:[%s0]]
  %s2 = scalar_lea.smem %s0, 1
  %s3 = sld [smem:[%s2]]
  %s4 = scalar_lea.smem %s0, 2
  %s5 = sld [smem:[%s4]]
  %s6 = scalar_lea.smem %s0, 3
  %s7 = sld [smem:[%s6]]
  %s8 = scalar_lea.smem %s0, 4
  %s9 = sld [smem:[%s8]]
  %s10 = scalar_lea.smem %s0, 5
  %s11 = sld [smem:[%s10]]
  %s12 = scalar_lea.smem %s0, 6
  %s13 = sld [smem:[%s12]]
  %s14 = scalar_lea.smem %s0, 7
  %s15 = sld [smem:[%s14]]
  %s16 = scalar_lea.smem %s0, 8
  %s17 = sld [smem:[%s16]]
  %s18 = scalar_lea.smem %s0, 9
  %s19 = sld [smem:[%s18]]
  %s20 = scalar_lea.smem %s0, 10
  %s21 = sld [smem:[%s20]]
  %s22 = scalar_lea.smem %s0, 11
  %s23 = sld [smem:[%s22]]
  %s24 = scalar_lea.smem %s0, 12
  %s25 = sld [smem:[%s24]]
  %s26 = scalar_lea.smem %s0, 13
  %s27 = sld [smem:[%s26]]
  %s28 = scalar_lea.smem %s0, 14
  %s29 = sld [smem:[%s28]]
  %s30 = scalar_lea.smem %s0, 15
  %s31 = sld [smem:[%s30]]
  %s32 = scalar_lea.smem %s0, 16
  %s33 = sld [smem:[%s32]]
  %s34 = scalar_lea.smem %s0, 17
  %s35 = sld [smem:[%s34]]
  %s36 = scalar_lea.smem %s0, 18
  %s37 = sld [smem:[%s36]]
  %s38 = scalar_lea.smem %s0, 19
  %s39 = sld [smem:[%s38]]
  %s40 = scalar_lea.smem %s0, 20
  %s41 = sld [smem:[%s40]]
  %s42 = scalar_lea.smem %s0, 21
  %s43 = sld [smem:[%s42]]
  %s44 = scalar_lea.smem %s0, 22
  %s45 = sld [smem:[%s44]]
  %s46 = scalar_lea.smem %s0, 23
  %s47 = sld [smem:[%s46]]
  %s48 = scalar_lea.smem %s0, 24
  %s49 = sld [smem:[%s48]]
  %s50 = scalar_lea.smem %s0, 25
  %s51 = sld [smem:[%s50]]
  %s52 = scalar_lea.smem %s0, 26
  %s53 = sld [smem:[%s52]]
  %s54 = scalar_lea.smem %s0, 27
  %s55 = sld [smem:[%s54]]
  %s56 = scalar_lea.smem %s0, 28
  %s57 = sld [smem:[%s56]]
  %s58 = scalar_lea.smem %s0, 29
  %s59 = sld [smem:[%s58]]
  %s60 = scalar_lea.smem %s0, 30
  %s61 = sld [smem:[%s60]]
  %62 = xla_tuple %s53, %s55, %s57, %s59, %s61
  %s63 = sld [smem:[#allocation0]]
  $region150: #{upsample_unit_forward.1} parent=0
    _
  %s65 = ssub.s32 1, %s63
  %s66 = scalar_select 0, %s65, %s63
  $region1: #{upsample_unit_forward.1} parent=0
    #allocation2 [shape = 'u8[1048576]{0}', space=vmem, size = 0x100000, scoped, tag = 'input window, operand 16, single buffered']
    #allocation3 [shape = 's32[1]{0}', space=sflag, size = 0x4, scoped, tag = 'scoped memory for upsample_unit_forward.1']
    %67 = vsyncpa [#allocation3], 0
    // Predicated region
    $region2: #{upsample_unit_forward.1} parent=1 // pred_check
      _
    $region3: #{upsample_unit_forward.1} parent=1 // pred_check_branch
      %69 = sbr.rel (0) target = $region5
    $region4: #{upsample_unit_forward.1} parent=1 // pred_region
      _
    $region5: #{upsample_unit_forward.1} parent=1 // pred_fallthru
      _
    // Predicated region
    $region6: #{upsample_unit_forward.1} parent=1 // pred_check
      _
    $region7: #{upsample_unit_forward.1} parent=1 // pred_check_branch
      %71 = sbr.rel (0) target = $region9
    $region8: #{upsample_unit_forward.1} parent=1 // pred_region
      _
    $region9: #{upsample_unit_forward.1} parent=1 // pred_fallthru
      _
    // Predicated region
    $region10: #{upsample_unit_forward.1} parent=1 // pred_check
      _
    $region11: #{upsample_unit_forward.1} parent=1 // pred_check_branch
      %73 = sbr.rel (0) target = $region13
    $region12: #{upsample_unit_forward.1} parent=1 // pred_region
      _
    $region13: #{upsample_unit_forward.1} parent=1 // pred_fallthru
      _
    // Predicated region
    $region14: #{upsample_unit_forward.1} parent=1 // pred_check
      _
    $region15: #{upsample_unit_forward.1} parent=1 // pred_check_branch
      %75 = sbr.rel (0) target = $region17
    $region16: #{upsample_unit_forward.1} parent=1 // pred_region
      _
    $region17: #{upsample_unit_forward.1} parent=1 // pred_fallthru
      _
    // Predicated region
    $region18: #{upsample_unit_forward.1} parent=1 // pred_check
      _
    $region19: #{upsample_unit_forward.1} parent=1 // pred_check_branch
      %77 = sbr.rel (0) target = $region21
    $region20: #{upsample_unit_forward.1} parent=1 // pred_region
      _
    $region21: #{upsample_unit_forward.1} parent=1 // pred_fallthru
      _
    // Predicated region
    $region22: #{upsample_unit_forward.1} parent=1 // pred_check
      _
    $region23: #{upsample_unit_forward.1} parent=1 // pred_check_branch
      %79 = sbr.rel (0) target = $region25
    $region24: #{upsample_unit_forward.1} parent=1 // pred_region
      _
    $region25: #{upsample_unit_forward.1} parent=1 // pred_fallthru
      _
    // Predicated region
    $region26: #{upsample_unit_forward.1} parent=1 // pred_check
      _
    $region27: #{upsample_unit_forward.1} parent=1 // pred_check_branch
      %81 = sbr.rel (0) target = $region29
    $region28: #{upsample_unit_forward.1} parent=1 // pred_region
      _
    $region29: #{upsample_unit_forward.1} parent=1 // pred_fallthru
      _
    // Predicated region
    $region30: #{upsample_unit_forward.1} parent=1 // pred_check
      _
    $region31: #{upsample_unit_forward.1} parent=1 // pred_check_branch
      %83 = sbr.rel (0) target = $region33
    $region32: #{upsample_unit_forward.1} parent=1 // pred_region
      _
    $region33: #{upsample_unit_forward.1} parent=1 // pred_fallthru
      _
    // Predicated region
    $region34: #{upsample_unit_forward.1} parent=1 // pred_check
      _
    $region35: #{upsample_unit_forward.1} parent=1 // pred_check_branch
      %85 = sbr.rel (0) target = $region37
    $region36: #{upsample_unit_forward.1} parent=1 // pred_region
      _
    $region37: #{upsample_unit_forward.1} parent=1 // pred_fallthru
      _
    // Predicated region
    $region38: #{upsample_unit_forward.1} parent=1 // pred_check
      _
    $region39: #{upsample_unit_forward.1} parent=1 // pred_check_branch
      %87 = sbr.rel (0) target = $region41
    $region40: #{upsample_unit_forward.1} parent=1 // pred_region
      _
    $region41: #{upsample_unit_forward.1} parent=1 // pred_fallthru
      _
    // Predicated region
    $region42: #{upsample_unit_forward.1} parent=1 // pred_check
      _
    $region43: #{upsample_unit_forward.1} parent=1 // pred_check_branch
      %89 = sbr.rel (0) target = $region45
    $region44: #{upsample_unit_forward.1} parent=1 // pred_region
      _
    $region45: #{upsample_unit_forward.1} parent=1 // pred_fallthru
      _
    // Predicated region
    $region46: #{upsample_unit_forward.1} parent=1 // pred_check
      _
    $region47: #{upsample_unit_forward.1} parent=1 // pred_check_branch
      %91 = sbr.rel (0) target = $region49
    $region48: #{upsample_unit_forward.1} parent=1 // pred_region
      _
    $region49: #{upsample_unit_forward.1} parent=1 // pred_fallthru
      _
    // Predicated region
    $region50: #{upsample_unit_forward.1} parent=1 // pred_check
      _
    $region51: #{upsample_unit_forward.1} parent=1 // pred_check_branch
      %93 = sbr.rel (0) target = $region53
    $region52: #{upsample_unit_forward.1} parent=1 // pred_region
      _
    $region53: #{upsample_unit_forward.1} parent=1 // pred_fallthru
      _
    // Predicated region
    $region54: #{upsample_unit_forward.1} parent=1 // pred_check
      _
    $region55: #{upsample_unit_forward.1} parent=1 // pred_check_branch
      %95 = sbr.rel (0) target = $region57
    $region56: #{upsample_unit_forward.1} parent=1 // pred_region
      _
    $region57: #{upsample_unit_forward.1} parent=1 // pred_fallthru
      _
    // Predicated region
    $region58: #{upsample_unit_forward.1} parent=1 // pred_check
      _
    $region59: #{upsample_unit_forward.1} parent=1 // pred_check_branch
      %97 = sbr.rel (0) target = $region61
    $region60: #{upsample_unit_forward.1} parent=1 // pred_region
      _
    $region61: #{upsample_unit_forward.1} parent=1 // pred_fallthru
      _
    // Predicated region
    $region62: #{upsample_unit_forward.1} parent=1 // pred_check
      _
    $region63: #{upsample_unit_forward.1} parent=1 // pred_check_branch
      %99 = sbr.rel (0) target = $region65
    $region64: #{upsample_unit_forward.1} parent=1 // pred_region
      _
    $region65: #{upsample_unit_forward.1} parent=1 // pred_fallthru
      _
    // Predicated region
    $region66: #{upsample_unit_forward.1} parent=1 // pred_check
      _
    $region67: #{upsample_unit_forward.1} parent=1 // pred_check_branch
      %101 = sbr.rel (0) target = $region69
    $region68: #{upsample_unit_forward.1} parent=1 // pred_region
      %103 = vsyncadd [#allocation3], 0
      %s104 = sshll.u32 %s33, 4
      %s105 = int_to_ptr.hbm [resolvable:$true] %s104
      %s106 = sshll.u32 [#allocation2], 4
      %s107 = int_to_ptr.vmem [resolvable:$true] %s106
      %112 = dma.hbm_to_vmem [thread:$0]  %s105, 32768, %s107, [#allocation3], 1024, 1024, 64
    $region69: #{upsample_unit_forward.1} parent=1 // pred_fallthru
      _
    // Predicated region
    $region70: #{upsample_unit_forward.1} parent=1 // pred_check
      _
    $region71: #{upsample_unit_forward.1} parent=1 // pred_check_branch
      %114 = sbr.rel (0) target = $region73
    $region72: #{upsample_unit_forward.1} parent=1 // pred_region
      _
    $region73: #{upsample_unit_forward.1} parent=1 // pred_fallthru
      _
    // Predicated region
    $region74: #{upsample_unit_forward.1} parent=1 // pred_check
      _
    $region75: #{upsample_unit_forward.1} parent=1 // pred_check_branch
      %116 = sbr.rel (0) target = $region77
    $region76: #{upsample_unit_forward.1} parent=1 // pred_region
      _
    $region77: #{upsample_unit_forward.1} parent=1 // pred_fallthru
      _
    // Predicated region
    $region78: #{upsample_unit_forward.1} parent=1 // pred_check
      _
    $region79: #{upsample_unit_forward.1} parent=1 // pred_check_branch
      %118 = sbr.rel (0) target = $region81
    $region80: #{upsample_unit_forward.1} parent=1 // pred_region
      _
    $region81: #{upsample_unit_forward.1} parent=1 // pred_fallthru
      _
    // Predicated region
    $region82: #{upsample_unit_forward.1} parent=1 // pred_check
      _
    $region83: #{upsample_unit_forward.1} parent=1 // pred_check_branch
      %120 = sbr.rel (0) target = $region85
    $region84: #{upsample_unit_forward.1} parent=1 // pred_region
      _
    $region85: #{upsample_unit_forward.1} parent=1 // pred_fallthru
      _
    // Predicated region
    $region86: #{upsample_unit_forward.1} parent=1 // pred_check
      _
    $region87: #{upsample_unit_forward.1} parent=1 // pred_check_branch
      %122 = sbr.rel (0) target = $region89
    $region88: #{upsample_unit_forward.1} parent=1 // pred_region
      _
    $region89: #{upsample_unit_forward.1} parent=1 // pred_fallthru
      _
    // Predicated region
    $region90: #{upsample_unit_forward.1} parent=1 // pred_check
      _
    $region91: #{upsample_unit_forward.1} parent=1 // pred_check_branch
      %124 = sbr.rel (0) target = $region93
    $region92: #{upsample_unit_forward.1} parent=1 // pred_region
      _
    $region93: #{upsample_unit_forward.1} parent=1 // pred_fallthru
      _
    // Predicated region
    $region94: #{upsample_unit_forward.1} parent=1 // pred_check
      _
    $region95: #{upsample_unit_forward.1} parent=1 // pred_check_branch
      %126 = sbr.rel (0) target = $region97
    $region96: #{upsample_unit_forward.1} parent=1 // pred_region
      _
    $region97: #{upsample_unit_forward.1} parent=1 // pred_fallthru
      _
    // Predicated region
    $region98: #{upsample_unit_forward.1} parent=1 // pred_check
      _
    $region99: #{upsample_unit_forward.1} parent=1 // pred_check_branch
      %128 = sbr.rel (0) target = $region101
    $region100: #{upsample_unit_forward.1} parent=1 // pred_region
      _
    $region101: #{upsample_unit_forward.1} parent=1 // pred_fallthru
      _
    // Predicated region
    $region102: #{upsample_unit_forward.1} parent=1 // pred_check
      _
    $region103: #{upsample_unit_forward.1} parent=1 // pred_check_branch
      %130 = sbr.rel (0) target = $region105
    $region104: #{upsample_unit_forward.1} parent=1 // pred_region
      _
    $region105: #{upsample_unit_forward.1} parent=1 // pred_fallthru
      _
    // Predicated region
    $region106: #{upsample_unit_forward.1} parent=1 // pred_check
      _
    $region107: #{upsample_unit_forward.1} parent=1 // pred_check_branch
      %132 = sbr.rel (0) target = $region109
    $region108: #{upsample_unit_forward.1} parent=1 // pred_region
      %134 = dma.done [#allocation3], 32768
    $region109: #{upsample_unit_forward.1} parent=1 // pred_fallthru
      _
    %v135 = vld [vmem:[%s1] ss:$2 sm:$0xf]
    %s136 = scalar_lea.vmem %s1, 1
    %v137 = vld [vmem:[%s136] ss:$2 sm:$0xf]
    %v138 = vld [vmem:[%s3] sm:$0xff]
    %v139 = vld [vmem:[%s3 + $0x8] sm:$0xff]
    %v140 = vld [vmem:[%s3 + $0x10] sm:$0xff]
    %v141 = vld [vmem:[%s3 + $0x18] sm:$0xff]
    %v142 = vld [vmem:[%s5] sm:$0xff]
    %v143 = vld [vmem:[%s7] sm:$0xff]
    %v144 = vld [vmem:[%s9] sm:$0xff]
    %vm145 = vcmask 64512
    %v147 = vsel %vm145, %v142, 0
    %149 = vmatpush.msra.mxu0 0.0
    %150 = vmatpush.msra.mxu0 0.0
    %151 = vmatpush.msra.mxu0 0.0
    %152 = vmatpush.msra.mxu0 0.0
    %153 = vmatpush.msra.mxu0 0.0
    %154 = vmatpush.msra.mxu0 0.0
    %155 = vmatpush.msra.mxu0 0.0
    %156 = vmatpush.msra.mxu0 0.0
    %157 = vmatpush.msra.mxu0 0.0
    %158 = vmatpush.msra.mxu0 0.0
    %159 = vmatpush.msra.mxu0 0.0
    %160 = vmatpush.msra.mxu0 0.0
    %161 = vmatpush.msra.mxu0 0.0
    %162 = vmatpush.msra.mxu0 0.0
    %163 = vmatpush.msra.mxu0 0.0
    %164 = vmatpush.msra.mxu0 %v138
    %165 = vmatmul.f32.gmra.mxu0 %v147
    %v166 = vpop.f32.mrf.mxu0
    %v167 = vadd.f32 0.0, %v166
    %168 = vdwg.mxu0
    %169 = vmatpush.msra.mxu0 0.0
    %170 = vmatpush.msra.mxu0 0.0
    %171 = vmatpush.msra.mxu0 0.0
    %172 = vmatpush.msra.mxu0 0.0
    %173 = vmatpush.msra.mxu0 0.0
    %174 = vmatpush.msra.mxu0 0.0
    %175 = vmatpush.msra.mxu0 0.0
    %176 = vmatpush.msra.mxu0 0.0
    %177 = vmatpush.msra.mxu0 0.0
    %178 = vmatpush.msra.mxu0 0.0
    %179 = vmatpush.msra.mxu0 0.0
    %180 = vmatpush.msra.mxu0 0.0
    %181 = vmatpush.msra.mxu0 0.0
    %182 = vmatpush.msra.mxu0 0.0
    %183 = vmatpush.msra.mxu0 0.0
    %184 = vmatpush.msra.mxu0 %v139
    %185 = vmatmul.f32.gmra.mxu0 %v147
    %v186 = vpop.f32.mrf.mxu0
    %v187 = vadd.f32 0.0, %v186
    %188 = vdwg.mxu0
    %189 = vmatpush.msra.mxu0 0.0
    %190 = vmatpush.msra.mxu0 0.0
    %191 = vmatpush.msra.mxu0 0.0
    %192 = vmatpush.msra.mxu0 0.0
    %193 = vmatpush.msra.mxu0 0.0
    %194 = vmatpush.msra.mxu0 0.0
    %195 = vmatpush.msra.mxu0 0.0
    %196 = vmatpush.msra.mxu0 0.0
    %197 = vmatpush.msra.mxu0 0.0
    %198 = vmatpush.msra.mxu0 0.0
    %199 = vmatpush.msra.mxu0 0.0
    %200 = vmatpush.msra.mxu0 0.0
    %201 = vmatpush.msra.mxu0 0.0
    %202 = vmatpush.msra.mxu0 0.0
    %203 = vmatpush.msra.mxu0 0.0
    %204 = vmatpush.msra.mxu0 %v140
    %205 = vmatmul.f32.gmra.mxu0 %v147
    %v206 = vpop.f32.mrf.mxu0
    %v207 = vadd.f32 0.0, %v206
    %208 = vdwg.mxu0
    %209 = vmatpush.msra.mxu0 0.0
    %210 = vmatpush.msra.mxu0 0.0
    %211 = vmatpush.msra.mxu0 0.0
    %212 = vmatpush.msra.mxu0 0.0
    %213 = vmatpush.msra.mxu0 0.0
    %214 = vmatpush.msra.mxu0 0.0
    %215 = vmatpush.msra.mxu0 0.0
    %216 = vmatpush.msra.mxu0 0.0
    %217 = vmatpush.msra.mxu0 0.0
    %218 = vmatpush.msra.mxu0 0.0
    %219 = vmatpush.msra.mxu0 0.0
    %220 = vmatpush.msra.mxu0 0.0
    %221 = vmatpush.msra.mxu0 0.0
    %222 = vmatpush.msra.mxu0 0.0
    %223 = vmatpush.msra.mxu0 0.0
    %224 = vmatpush.msra.mxu0 %v141
    %225 = vmatmul.f32.gmra.mxu0 %v147
    %v226 = vpop.f32.mrf.mxu0
    %v227 = vadd.f32 0.0, %v226
    %228 = vdwg.mxu0
    %230 = vset.pattern.permute.xlu0 0
    %231 = vperm.xlu0 %230, %v144
    %v232 = vpop.permute.xlu0 %231
    %v234 = vmul.f32 %v167, %v232
    %v235 = vmul.f32 %v187, %v232
    %v236 = vmul.f32 %v207, %v232
    %v237 = vmul.f32 %v227, %v232
    %238 = vset.pattern.permute.xlu0 1
    %239 = vperm.xlu0 %238, %v144
    %v240 = vpop.permute.xlu0 %239
    %v242 = vadd.f32 %v234, %v240
    %v243 = vadd.f32 %v235, %v240
    %v244 = vadd.f32 %v236, %v240
    %v245 = vadd.f32 %v237, %v240
    %246 = vset.pattern.permute.xlu0 2
    %247 = vperm.xlu0 %246, %v144
    %v248 = vpop.permute.xlu0 %247
    %v250 = vmul.f32 %v167, %v248
    %v251 = vmul.f32 %v187, %v248
    %v252 = vmul.f32 %v207, %v248
    %v253 = vmul.f32 %v227, %v248
    %254 = vset.pattern.permute.xlu0 3
    %255 = vperm.xlu0 %254, %v144
    %v256 = vpop.permute.xlu0 %255
    %v258 = vadd.f32 %v250, %v256
    %v259 = vadd.f32 %v251, %v256
    %v260 = vadd.f32 %v252, %v256
    %v261 = vadd.f32 %v253, %v256
    %262 = vrot.lane.b32.xlu0 %v242, 17
    %v263 = vpop.permute.xlu0 %262
    %264 = vrot.lane.b32.xlu0 %v243, 17
    %v265 = vpop.permute.xlu0 %264
    %266 = vrot.lane.b32.xlu0 %v244, 17
    %v267 = vpop.permute.xlu0 %266
    %268 = vrot.lane.b32.xlu0 %v245, 17
    %v269 = vpop.permute.xlu0 %268
    %v270 = vlaneseq
    %v271 = vand.u32 %v270, 127
    %vm272 = vcmp.lt.s32.totalorder %v271, 17
    %v273 = vsel %vm272, %v267, %v269
    %v274 = vsel %vm272, %v265, %v267
    %v275 = vsel %vm272, %v263, %v265
    %v276 = vsel %vm272, %v269, %v263
    %vm277 = vcmp.ge.s32.totalorder %v135, 1
    %vm278 = vcmp.ge.s32.totalorder %v137, 1
    %vm279 = vmand %vm277, %vm278
    %v280 = vsel %vm279, 1, 0
    %v281 = vperm.slane %v280, 0
    %v282 = vperm.slane %v280, 1
    %v283 = vperm.slane %v280, 2
    %v284 = vperm.slane %v280, 3
    %vm285 = vcmp.eq.s32.totalorder %v281, 1
    %vm286 = vcmp.eq.s32.totalorder %v282, 1
    %vm287 = vcmp.eq.s32.totalorder %v283, 1
    %vm288 = vcmp.eq.s32.totalorder %v284, 1
    %v289 = vsel %vm285, %v276, 0.0
    %v290 = vsel %vm286, %v275, 0.0
    %v291 = vsel %vm287, %v274, 0.0
    %v292 = vsel %vm288, %v273, 0.0
    %294 = vset.pattern.permute.xlu0 0
    %295 = vperm.xlu0 %294, %v143
    %v296 = vpop.permute.xlu0 %295
    %v298 = vmul.f32 %v289, %v296
    %v299 = vmul.f32 %v290, %v296
    %v300 = vmul.f32 %v291, %v296
    %v301 = vmul.f32 %v292, %v296
    %v302 = vadd.f32 %v298, 0.0
    %v303 = vadd.f32 %v299, 0.0
    %v304 = vadd.f32 %v300, 0.0
    %v305 = vadd.f32 %v301, 0.0
    %306 = vrot.lane.b32.xlu0 %v242, 16
    %v307 = vpop.permute.xlu0 %306
    %308 = vrot.lane.b32.xlu0 %v243, 16
    %v309 = vpop.permute.xlu0 %308
    %310 = vrot.lane.b32.xlu0 %v244, 16
    %v311 = vpop.permute.xlu0 %310
    %312 = vrot.lane.b32.xlu0 %v245, 16
    %v313 = vpop.permute.xlu0 %312
    %vm314 = vcmp.lt.s32.totalorder %v271, 16
    %v315 = vsel %vm314, %v311, %v313
    %v316 = vsel %vm314, %v309, %v311
    %v317 = vsel %vm314, %v307, %v309
    %v318 = vsel %vm314, %v313, %v307
    %v319 = vsel %vm277, 1, 0
    %v320 = vperm.slane %v319, 0
    %v321 = vperm.slane %v319, 1
    %v322 = vperm.slane %v319, 2
    %v323 = vperm.slane %v319, 3
    %vm324 = vcmp.eq.s32.totalorder %v320, 1
    %vm325 = vcmp.eq.s32.totalorder %v321, 1
    %vm326 = vcmp.eq.s32.totalorder %v322, 1
    %vm327 = vcmp.eq.s32.totalorder %v323, 1
    %v328 = vsel %vm324, %v318, 0.0
    %v329 = vsel %vm325, %v317, 0.0
    %v330 = vsel %vm326, %v316, 0.0
    %v331 = vsel %vm327, %v315, 0.0
    %332 = vset.pattern.permute.xlu0 1
    %333 = vperm.xlu0 %332, %v143
    %v334 = vpop.permute.xlu0 %333
    %v336 = vmul.f32 %v328, %v334
    %v337 = vmul.f32 %v329, %v334
    %v338 = vmul.f32 %v330, %v334
    %v339 = vmul.f32 %v331, %v334
    %v340 = vadd.f32 %v302, %v336
    %v341 = vadd.f32 %v303, %v337
    %v342 = vadd.f32 %v304, %v338
    %v343 = vadd.f32 %v305, %v339
    %344 = vrot.lane.b32.xlu0 %v242, 15
    %v345 = vpop.permute.xlu0 %344
    %346 = vrot.lane.b32.xlu0 %v243, 15
    %v347 = vpop.permute.xlu0 %346
    %348 = vrot.lane.b32.xlu0 %v244, 15
    %v349 = vpop.permute.xlu0 %348
    %350 = vrot.lane.b32.xlu0 %v245, 15
    %v351 = vpop.permute.xlu0 %350
    %vm352 = vcmp.lt.s32.totalorder %v271, 15
    %v353 = vsel %vm352, %v349, %v351
    %v354 = vsel %vm352, %v347, %v349
    %v355 = vsel %vm352, %v345, %v347
    %v356 = vsel %vm352, %v351, %v345
    %vm357 = vcmp.lt.s32.totalorder %v137, 15
    %vm358 = vmand %vm277, %vm357
    %v359 = vsel %vm358, 1, 0
    %v360 = vperm.slane %v359, 0
    %v361 = vperm.slane %v359, 1
    %v362 = vperm.slane %v359, 2
    %v363 = vperm.slane %v359, 3
    %vm364 = vcmp.eq.s32.totalorder %v360, 1
    %vm365 = vcmp.eq.s32.totalorder %v361, 1
    %vm366 = vcmp.eq.s32.totalorder %v362, 1
    %vm367 = vcmp.eq.s32.totalorder %v363, 1
    %v368 = vsel %vm364, %v356, 0.0
    %v369 = vsel %vm365, %v355, 0.0
    %v370 = vsel %vm366, %v354, 0.0
    %v371 = vsel %vm367, %v353, 0.0
    %372 = vset.pattern.permute.xlu0 2
    %373 = vperm.xlu0 %372, %v143
    %v374 = vpop.permute.xlu0 %373
    %v376 = vmul.f32 %v368, %v374
    %v377 = vmul.f32 %v369, %v374
    %v378 = vmul.f32 %v370, %v374
    %v379 = vmul.f32 %v371, %v374
    %v380 = vadd.f32 %v340, %v376
    %v381 = vadd.f32 %v341, %v377
    %v382 = vadd.f32 %v342, %v378
    %v383 = vadd.f32 %v343, %v379
    %384 = vrot.lane.b32.xlu0 %v242, 1
    %v385 = vpop.permute.xlu0 %384
    %386 = vrot.lane.b32.xlu0 %v243, 1
    %v387 = vpop.permute.xlu0 %386
    %388 = vrot.lane.b32.xlu0 %v244, 1
    %v389 = vpop.permute.xlu0 %388
    %390 = vrot.lane.b32.xlu0 %v245, 1
    %v391 = vpop.permute.xlu0 %390
    %vm392 = vcmp.lt.s32.totalorder %v271, 1
    %v393 = vsel %vm392, %v389, %v391
    %v394 = vsel %vm392, %v387, %v389
    %v395 = vsel %vm392, %v385, %v387
    %v396 = vsel %vm392, %v391, %v385
    %v397 = vsel %vm278, 1, 0
    %v398 = vperm.slane %v397, 0
    %v399 = vperm.slane %v397, 1
    %v400 = vperm.slane %v397, 2
    %v401 = vperm.slane %v397, 3
    %vm402 = vcmp.eq.s32.totalorder %v398, 1
    %vm403 = vcmp.eq.s32.totalorder %v399, 1
    %vm404 = vcmp.eq.s32.totalorder %v400, 1
    %vm405 = vcmp.eq.s32.totalorder %v401, 1
    %v406 = vsel %vm402, %v396, 0.0
    %v407 = vsel %vm403, %v395, 0.0
    %v408 = vsel %vm404, %v394, 0.0
    %v409 = vsel %vm405, %v393, 0.0
    %410 = vset.pattern.permute.xlu0 3
    %411 = vperm.xlu0 %410, %v143
    %v412 = vpop.permute.xlu0 %411
    %v414 = vmul.f32 %v406, %v412
    %v415 = vmul.f32 %v407, %v412
    %v416 = vmul.f32 %v408, %v412
    %v417 = vmul.f32 %v409, %v412
    %v418 = vadd.f32 %v380, %v414
    %v419 = vadd.f32 %v381, %v415
    %v420 = vadd.f32 %v382, %v416
    %v421 = vadd.f32 %v383, %v417
    %422 = vset.pattern.permute.xlu0 4
    %423 = vperm.xlu0 %422, %v143
    %v424 = vpop.permute.xlu0 %423
    %v426 = vmul.f32 %v242, %v424
    %v427 = vmul.f32 %v243, %v424
    %v428 = vmul.f32 %v244, %v424
    %v429 = vmul.f32 %v245, %v424
    %v430 = vadd.f32 %v418, %v426
    %v431 = vadd.f32 %v419, %v427
    %v432 = vadd.f32 %v420, %v428
    %v433 = vadd.f32 %v421, %v429
    %434 = vrot.lane.b32.xlu0 %v242, 127
    %v435 = vpop.permute.xlu0 %434
    %436 = vrot.lane.b32.xlu0 %v243, 127
    %v437 = vpop.permute.xlu0 %436
    %438 = vrot.lane.b32.xlu0 %v244, 127
    %v439 = vpop.permute.xlu0 %438
    %440 = vrot.lane.b32.xlu0 %v245, 127
    %v441 = vpop.permute.xlu0 %440
    %vm442 = vcmp.lt.s32.totalorder %v271, 127
    %v443 = vsel %vm442, %v439, %v441
    %v444 = vsel %vm442, %v437, %v439
    %v445 = vsel %vm442, %v435, %v437
    %v446 = vsel %vm442, %v441, %v435
    %v447 = vsel %vm357, 1, 0
    %v448 = vperm.slane %v447, 0
    %v449 = vperm.slane %v447, 1
    %v450 = vperm.slane %v447, 2
    %v451 = vperm.slane %v447, 3
    %vm452 = vcmp.eq.s32.totalorder %v448, 1
    %vm453 = vcmp.eq.s32.totalorder %v449, 1
    %vm454 = vcmp.eq.s32.totalorder %v450, 1
    %vm455 = vcmp.eq.s32.totalorder %v451, 1
    %v456 = vsel %vm452, %v445, 0.0
    %v457 = vsel %vm453, %v444, 0.0
    %v458 = vsel %vm454, %v443, 0.0
    %v459 = vsel %vm455, %v446, 0.0
    %460 = vset.pattern.permute.xlu0 5
    %461 = vperm.xlu0 %460, %v143
    %v462 = vpop.permute.xlu0 %461
    %v464 = vmul.f32 %v456, %v462
    %v465 = vmul.f32 %v457, %v462
    %v466 = vmul.f32 %v458, %v462
    %v467 = vmul.f32 %v459, %v462
    %v468 = vadd.f32 %v430, %v464
    %v469 = vadd.f32 %v431, %v465
    %v470 = vadd.f32 %v432, %v466
    %v471 = vadd.f32 %v433, %v467
    %472 = vrot.lane.b32.xlu0 %v242, 113
    %v473 = vpop.permute.xlu0 %472
    %474 = vrot.lane.b32.xlu0 %v243, 113
    %v475 = vpop.permute.xlu0 %474
    %476 = vrot.lane.b32.xlu0 %v244, 113
    %v477 = vpop.permute.xlu0 %476
    %478 = vrot.lane.b32.xlu0 %v245, 113
    %v479 = vpop.permute.xlu0 %478
    %vm480 = vcmp.lt.s32.totalorder %v271, 113
    %v481 = vsel %vm480, %v477, %v479
    %v482 = vsel %vm480, %v475, %v477
    %v483 = vsel %vm480, %v473, %v475
    %v484 = vsel %vm480, %v479, %v473
    %vm485 = vcmp.lt.s32.totalorder %v135, 15
    %vm486 = vmand %vm485, %vm278
    %v487 = vsel %vm486, 1, 0
    %v488 = vperm.slane %v487, 0
    %v489 = vperm.slane %v487, 1
    %v490 = vperm.slane %v487, 2
    %v491 = vperm.slane %v487, 3
    %vm492 = vcmp.eq.s32.totalorder %v488, 1
    %vm493 = vcmp.eq.s32.totalorder %v489, 1
    %vm494 = vcmp.eq.s32.totalorder %v490, 1
    %vm495 = vcmp.eq.s32.totalorder %v491, 1
    %v496 = vsel %vm492, %v483, 0.0
    %v497 = vsel %vm493, %v482, 0.0
    %v498 = vsel %vm494, %v481, 0.0
    %v499 = vsel %vm495, %v484, 0.0
    %500 = vset.pattern.permute.xlu0 6
    %501 = vperm.xlu0 %500, %v143
    %v502 = vpop.permute.xlu0 %501
    %v504 = vmul.f32 %v496, %v502
    %v505 = vmul.f32 %v497, %v502
    %v506 = vmul.f32 %v498, %v502
    %v507 = vmul.f32 %v499, %v502
    %v508 = vadd.f32 %v468, %v504
    %v509 = vadd.f32 %v469, %v505
    %v510 = vadd.f32 %v470, %v506
    %v511 = vadd.f32 %v471, %v507
    %512 = vrot.lane.b32.xlu0 %v242, 112
    %v513 = vpop.permute.xlu0 %512
    %514 = vrot.lane.b32.xlu0 %v243, 112
    %v515 = vpop.permute.xlu0 %514
    %516 = vrot.lane.b32.xlu0 %v244, 112
    %v517 = vpop.permute.xlu0 %516
    %518 = vrot.lane.b32.xlu0 %v245, 112
    %v519 = vpop.permute.xlu0 %518
    %vm520 = vcmp.lt.s32.totalorder %v271, 112
    %v521 = vsel %vm520, %v517, %v519
    %v522 = vsel %vm520, %v515, %v517
    %v523 = vsel %vm520, %v513, %v515
    %v524 = vsel %vm520, %v519, %v513
    %v525 = vsel %vm485, 1, 0
    %v526 = vperm.slane %v525, 0
    %v527 = vperm.slane %v525, 1
    %v528 = vperm.slane %v525, 2
    %v529 = vperm.slane %v525, 3
    %vm530 = vcmp.eq.s32.totalorder %v526, 1
    %vm531 = vcmp.eq.s32.totalorder %v527, 1
    %vm532 = vcmp.eq.s32.totalorder %v528, 1
    %vm533 = vcmp.eq.s32.totalorder %v529, 1
    %v534 = vsel %vm530, %v523, 0.0
    %v535 = vsel %vm531, %v522, 0.0
    %v536 = vsel %vm532, %v521, 0.0
    %v537 = vsel %vm533, %v524, 0.0
    %538 = vset.pattern.permute.xlu0 7
    %539 = vperm.xlu0 %538, %v143
    %v540 = vpop.permute.xlu0 %539
    %v542 = vmul.f32 %v534, %v540
    %v543 = vmul.f32 %v535, %v540
    %v544 = vmul.f32 %v536, %v540
    %v545 = vmul.f32 %v537, %v540
    %v546 = vadd.f32 %v508, %v542
    %v547 = vadd.f32 %v509, %v543
    %v548 = vadd.f32 %v510, %v544
    %v549 = vadd.f32 %v511, %v545
    %550 = vrot.lane.b32.xlu0 %v242, 111
    %v551 = vpop.permute.xlu0 %550
    %552 = vrot.lane.b32.xlu0 %v243, 111
    %v553 = vpop.permute.xlu0 %552
    %554 = vrot.lane.b32.xlu0 %v244, 111
    %v555 = vpop.permute.xlu0 %554
    %556 = vrot.lane.b32.xlu0 %v245, 111
    %v557 = vpop.permute.xlu0 %556
    %vm558 = vcmp.lt.s32.totalorder %v271, 111
    %v559 = vsel %vm558, %v555, %v557
    %v560 = vsel %vm558, %v553, %v555
    %v561 = vsel %vm558, %v551, %v553
    %v562 = vsel %vm558, %v557, %v551
    %vm563 = vmand %vm485, %vm357
    %v564 = vsel %vm563, 1, 0
    %v565 = vperm.slane %v564, 0
    %v566 = vperm.slane %v564, 1
    %v567 = vperm.slane %v564, 2
    %v568 = vperm.slane %v564, 3
    %vm569 = vcmp.eq.s32.totalorder %v565, 1
    %vm570 = vcmp.eq.s32.totalorder %v566, 1
    %vm571 = vcmp.eq.s32.totalorder %v567, 1
    %vm572 = vcmp.eq.s32.totalorder %v568, 1
    %v573 = vsel %vm569, %v561, 0.0
    %v574 = vsel %vm570, %v560, 0.0
    %v575 = vsel %vm571, %v559, 0.0
    %v576 = vsel %vm572, %v562, 0.0
    %577 = vset.pattern.permute.xlu0 8
    %578 = vperm.xlu0 %577, %v143
    %v579 = vpop.permute.xlu0 %578
    %v581 = vmul.f32 %v573, %v579
    %v582 = vmul.f32 %v574, %v579
    %v583 = vmul.f32 %v575, %v579
    %v584 = vmul.f32 %v576, %v579
    %v585 = vadd.f32 %v546, %v581
    %v586 = vadd.f32 %v547, %v582
    %v587 = vadd.f32 %v548, %v583
    %v588 = vadd.f32 %v549, %v584
    %589 = vset.pattern.permute.xlu0 4
    %590 = vperm.xlu0 %589, %v144
    %v591 = vpop.permute.xlu0 %590
    %v593 = vmul.f32 %v585, %v591
    %v594 = vmul.f32 %v586, %v591
    %v595 = vmul.f32 %v587, %v591
    %v596 = vmul.f32 %v588, %v591
    %597 = vset.pattern.permute.xlu0 5
    %598 = vperm.xlu0 %597, %v144
    %v599 = vpop.permute.xlu0 %598
    %v601 = vadd.f32 %v593, %v599
    %v602 = vadd.f32 %v594, %v599
    %v603 = vadd.f32 %v595, %v599
    %v604 = vadd.f32 %v596, %v599
    %v605 = vld [vmem:[%s11] sm:$0xff]
    %v606 = vld [vmem:[%s11 + $0x8] sm:$0xff]
    %v607 = vld [vmem:[%s13] sm:$0xff]
    %v608 = vld [vmem:[%s13 + $0x8] sm:$0xff]
    %v609 = vld [vmem:[%s13 + $0x10] sm:$0xff]
    %v610 = vld [vmem:[%s13 + $0x18] sm:$0xff]
    %v611 = vld [vmem:[%s13 + $0x20] sm:$0xff]
    %v612 = vld [vmem:[%s13 + $0x28] sm:$0xff]
    %v613 = vld [vmem:[%s13 + $0x30] sm:$0xff]
    %v614 = vld [vmem:[%s13 + $0x38] sm:$0xff]
    %v615 = vld [vmem:[%s13 + $0x40] sm:$0xff]
    %v616 = vld [vmem:[%s13 + $0x48] sm:$0xff]
    %v617 = vld [vmem:[%s13 + $0x50] sm:$0xff]
    %v618 = vld [vmem:[%s13 + $0x58] sm:$0xff]
    %v619 = vld [vmem:[%s13 + $0x60] sm:$0xff]
    %v620 = vld [vmem:[%s13 + $0x68] sm:$0xff]
    %v621 = vld [vmem:[%s13 + $0x70] sm:$0xff]
    %v622 = vld [vmem:[%s13 + $0x78] sm:$0xff]
    %v623 = vld [vmem:[%s13 + $0x80] sm:$0xff]
    %v624 = vld [vmem:[%s13 + $0x88] sm:$0xff]
    %v625 = vld [vmem:[%s13 + $0x90] sm:$0xff]
    %v626 = vld [vmem:[%s13 + $0x98] sm:$0xff]
    %v627 = vld [vmem:[%s13 + $0xa0] sm:$0xff]
    %v628 = vld [vmem:[%s13 + $0xa8] sm:$0xff]
    %v629 = vld [vmem:[%s13 + $0xb0] sm:$0xff]
    %v630 = vld [vmem:[%s13 + $0xb8] sm:$0xff]
    %v631 = vld [vmem:[%s13 + $0xc0] sm:$0xff]
    %v632 = vld [vmem:[%s13 + $0xc8] sm:$0xff]
    %v633 = vld [vmem:[%s13 + $0xd0] sm:$0xff]
    %v634 = vld [vmem:[%s13 + $0xd8] sm:$0xff]
    %v635 = vld [vmem:[%s13 + $0xe0] sm:$0xff]
    %v636 = vld [vmem:[%s13 + $0xe8] sm:$0xff]
    %v637 = vld [vmem:[%s13 + $0xf0] sm:$0xff]
    %v638 = vld [vmem:[%s13 + $0xf8] sm:$0xff]
    %v639 = vld [vmem:[%s13 + $0x100] sm:$0xff]
    %v640 = vld [vmem:[%s13 + $0x108] sm:$0xff]
    %v641 = vld [vmem:[%s13 + $0x110] sm:$0xff]
    %v642 = vld [vmem:[%s13 + $0x118] sm:$0xff]
    %v643 = vld [vmem:[%s13 + $0x120] sm:$0xff]
    %v644 = vld [vmem:[%s13 + $0x128] sm:$0xff]
    %v645 = vld [vmem:[%s13 + $0x130] sm:$0xff]
    %v646 = vld [vmem:[%s13 + $0x138] sm:$0xff]
    %v647 = vld [vmem:[%s13 + $0x140] sm:$0xff]
    %v648 = vld [vmem:[%s13 + $0x148] sm:$0xff]
    %v649 = vld [vmem:[%s13 + $0x150] sm:$0xff]
    %v650 = vld [vmem:[%s13 + $0x158] sm:$0xff]
    %v651 = vld [vmem:[%s13 + $0x160] sm:$0xff]
    %v652 = vld [vmem:[%s13 + $0x168] sm:$0xff]
    %v653 = vld [vmem:[%s13 + $0x170] sm:$0xff]
    %v654 = vld [vmem:[%s13 + $0x178] sm:$0xff]
    %v655 = vld [vmem:[%s13 + $0x180] sm:$0xff]
    %v656 = vld [vmem:[%s13 + $0x188] sm:$0xff]
    %v657 = vld [vmem:[%s13 + $0x190] sm:$0xff]
    %v658 = vld [vmem:[%s13 + $0x198] sm:$0xff]
    %v659 = vld [vmem:[%s13 + $0x1a0] sm:$0xff]
    %v660 = vld [vmem:[%s13 + $0x1a8] sm:$0xff]
    %v661 = vld [vmem:[%s13 + $0x1b0] sm:$0xff]
    %v662 = vld [vmem:[%s13 + $0x1b8] sm:$0xff]
    %v663 = vld [vmem:[%s13 + $0x1c0] sm:$0xff]
    %v664 = vld [vmem:[%s13 + $0x1c8] sm:$0xff]
    %v665 = vld [vmem:[%s13 + $0x1d0] sm:$0xff]
    %v666 = vld [vmem:[%s13 + $0x1d8] sm:$0xff]
    %v667 = vld [vmem:[%s13 + $0x1e0] sm:$0xff]
    %v668 = vld [vmem:[%s13 + $0x1e8] sm:$0xff]
    %v669 = vld [vmem:[%s13 + $0x1f0] sm:$0xff]
    %v670 = vld [vmem:[%s13 + $0x1f8] sm:$0xff]
    %671 = vmatpush.msra.mxu0 %v667
    %672 = vmatpush.msra.mxu0 %v663
    %673 = vmatpush.msra.mxu0 %v659
    %674 = vmatpush.msra.mxu0 %v655
    %675 = vmatpush.msra.mxu0 %v651
    %676 = vmatpush.msra.mxu0 %v647
    %677 = vmatpush.msra.mxu0 %v643
    %678 = vmatpush.msra.mxu0 %v639
    %679 = vmatpush.msra.mxu0 %v635
    %680 = vmatpush.msra.mxu0 %v631
    %681 = vmatpush.msra.mxu0 %v627
    %682 = vmatpush.msra.mxu0 %v623
    %683 = vmatpush.msra.mxu0 %v619
    %684 = vmatpush.msra.mxu0 %v615
    %685 = vmatpush.msra.mxu0 %v611
    %686 = vmatpush.msra.mxu0 %v607
    %687 = vmatmul.f32.gmra.mxu0 %v605
    %v688 = vpop.f32.mrf.mxu0
    %v689 = vadd.f32 0.0, %v688
    %690 = vmatmul.f32.gmra.mxu0 %v606
    %v691 = vpop.f32.mrf.mxu0
    %v692 = vadd.f32 0.0, %v691
    %693 = vdwg.mxu0
    %694 = vmatpush.msra.mxu0 %v668
    %695 = vmatpush.msra.mxu0 %v664
    %696 = vmatpush.msra.mxu0 %v660
    %697 = vmatpush.msra.mxu0 %v656
    %698 = vmatpush.msra.mxu0 %v652
    %699 = vmatpush.msra.mxu0 %v648
    %700 = vmatpush.msra.mxu0 %v644
    %701 = vmatpush.msra.mxu0 %v640
    %702 = vmatpush.msra.mxu0 %v636
    %703 = vmatpush.msra.mxu0 %v632
    %704 = vmatpush.msra.mxu0 %v628
    %705 = vmatpush.msra.mxu0 %v624
    %706 = vmatpush.msra.mxu0 %v620
    %707 = vmatpush.msra.mxu0 %v616
    %708 = vmatpush.msra.mxu0 %v612
    %709 = vmatpush.msra.mxu0 %v608
    %710 = vmatmul.f32.gmra.mxu0 %v605
    %v711 = vpop.f32.mrf.mxu0
    %v712 = vadd.f32 0.0, %v711
    %713 = vmatmul.f32.gmra.mxu0 %v606
    %v714 = vpop.f32.mrf.mxu0
    %v715 = vadd.f32 0.0, %v714
    %716 = vdwg.mxu0
    %717 = vmatpush.msra.mxu0 %v669
    %718 = vmatpush.msra.mxu0 %v665
    %719 = vmatpush.msra.mxu0 %v661
    %720 = vmatpush.msra.mxu0 %v657
    %721 = vmatpush.msra.mxu0 %v653
    %722 = vmatpush.msra.mxu0 %v649
    %723 = vmatpush.msra.mxu0 %v645
    %724 = vmatpush.msra.mxu0 %v641
    %725 = vmatpush.msra.mxu0 %v637
    %726 = vmatpush.msra.mxu0 %v633
    %727 = vmatpush.msra.mxu0 %v629
    %728 = vmatpush.msra.mxu0 %v625
    %729 = vmatpush.msra.mxu0 %v621
    %730 = vmatpush.msra.mxu0 %v617
    %731 = vmatpush.msra.mxu0 %v613
    %732 = vmatpush.msra.mxu0 %v609
    %733 = vmatmul.f32.gmra.mxu0 %v605
    %v734 = vpop.f32.mrf.mxu0
    %v735 = vadd.f32 0.0, %v734
    %736 = vmatmul.f32.gmra.mxu0 %v606
    %v737 = vpop.f32.mrf.mxu0
    %v738 = vadd.f32 0.0, %v737
    %739 = vdwg.mxu0
    %740 = vmatpush.msra.mxu0 %v670
    %741 = vmatpush.msra.mxu0 %v666
    %742 = vmatpush.msra.mxu0 %v662
    %743 = vmatpush.msra.mxu0 %v658
    %744 = vmatpush.msra.mxu0 %v654
    %745 = vmatpush.msra.mxu0 %v650
    %746 = vmatpush.msra.mxu0 %v646
    %747 = vmatpush.msra.mxu0 %v642
    %748 = vmatpush.msra.mxu0 %v638
    %749 = vmatpush.msra.mxu0 %v634
    %750 = vmatpush.msra.mxu0 %v630
    %751 = vmatpush.msra.mxu0 %v626
    %752 = vmatpush.msra.mxu0 %v622
    %753 = vmatpush.msra.mxu0 %v618
    %754 = vmatpush.msra.mxu0 %v614
    %755 = vmatpush.msra.mxu0 %v610
    %756 = vmatmul.f32.gmra.mxu0 %v605
    %v757 = vpop.f32.mrf.mxu0
    %v758 = vadd.f32 0.0, %v757
    %759 = vmatmul.f32.gmra.mxu0 %v606
    %v760 = vpop.f32.mrf.mxu0
    %v761 = vadd.f32 0.0, %v760
    %762 = vdwg.mxu0
    %v763 = vld [vmem:[%s15] sm:$0xff]
    %v764 = vld [vmem:[%s17] sm:$0xff]
    %v765 = vld [vmem:[%s19] sm:$0xff]
    %vm766 = vcmask 130048
    %v768 = vsel %vm766, %v763, 0
    %770 = vmatpush.msra.mxu0 0.0
    %771 = vmatpush.msra.mxu0 0.0
    %772 = vmatpush.msra.mxu0 0.0
    %773 = vmatpush.msra.mxu0 0.0
    %774 = vmatpush.msra.mxu0 0.0
    %775 = vmatpush.msra.mxu0 0.0
    %776 = vmatpush.msra.mxu0 0.0
    %777 = vmatpush.msra.mxu0 0.0
    %778 = vmatpush.msra.mxu0 0.0
    %779 = vmatpush.msra.mxu0 0.0
    %780 = vmatpush.msra.mxu0 0.0
    %781 = vmatpush.msra.mxu0 0.0
    %782 = vmatpush.msra.mxu0 0.0
    %783 = vmatpush.msra.mxu0 0.0
    %784 = vmatpush.msra.mxu0 %v692
    %785 = vmatpush.msra.mxu0 %v689
    %786 = vmatmul.f32.gmra.mxu0 %v768
    %v787 = vpop.f32.mrf.mxu0
    %v788 = vadd.f32 0.0, %v787
    %789 = vdwg.mxu0
    %790 = vmatpush.msra.mxu0 0.0
    %791 = vmatpush.msra.mxu0 0.0
    %792 = vmatpush.msra.mxu0 0.0
    %793 = vmatpush.msra.mxu0 0.0
    %794 = vmatpush.msra.mxu0 0.0
    %795 = vmatpush.msra.mxu0 0.0
    %796 = vmatpush.msra.mxu0 0.0
    %797 = vmatpush.msra.mxu0 0.0
    %798 = vmatpush.msra.mxu0 0.0
    %799 = vmatpush.msra.mxu0 0.0
    %800 = vmatpush.msra.mxu0 0.0
    %801 = vmatpush.msra.mxu0 0.0
    %802 = vmatpush.msra.mxu0 0.0
    %803 = vmatpush.msra.mxu0 0.0
    %804 = vmatpush.msra.mxu0 %v715
    %805 = vmatpush.msra.mxu0 %v712
    %806 = vmatmul.f32.gmra.mxu0 %v768
    %v807 = vpop.f32.mrf.mxu0
    %v808 = vadd.f32 0.0, %v807
    %809 = vdwg.mxu0
    %810 = vmatpush.msra.mxu0 0.0
    %811 = vmatpush.msra.mxu0 0.0
    %812 = vmatpush.msra.mxu0 0.0
    %813 = vmatpush.msra.mxu0 0.0
    %814 = vmatpush.msra.mxu0 0.0
    %815 = vmatpush.msra.mxu0 0.0
    %816 = vmatpush.msra.mxu0 0.0
    %817 = vmatpush.msra.mxu0 0.0
    %818 = vmatpush.msra.mxu0 0.0
    %819 = vmatpush.msra.mxu0 0.0
    %820 = vmatpush.msra.mxu0 0.0
    %821 = vmatpush.msra.mxu0 0.0
    %822 = vmatpush.msra.mxu0 0.0
    %823 = vmatpush.msra.mxu0 0.0
    %824 = vmatpush.msra.mxu0 %v738
    %825 = vmatpush.msra.mxu0 %v735
    %826 = vmatmul.f32.gmra.mxu0 %v768
    %v827 = vpop.f32.mrf.mxu0
    %v828 = vadd.f32 0.0, %v827
    %829 = vdwg.mxu0
    %830 = vmatpush.msra.mxu0 0.0
    %831 = vmatpush.msra.mxu0 0.0
    %832 = vmatpush.msra.mxu0 0.0
    %833 = vmatpush.msra.mxu0 0.0
    %834 = vmatpush.msra.mxu0 0.0
    %835 = vmatpush.msra.mxu0 0.0
    %836 = vmatpush.msra.mxu0 0.0
    %837 = vmatpush.msra.mxu0 0.0
    %838 = vmatpush.msra.mxu0 0.0
    %839 = vmatpush.msra.mxu0 0.0
    %840 = vmatpush.msra.mxu0 0.0
    %841 = vmatpush.msra.mxu0 0.0
    %842 = vmatpush.msra.mxu0 0.0
    %843 = vmatpush.msra.mxu0 0.0
    %844 = vmatpush.msra.mxu0 %v761
    %845 = vmatpush.msra.mxu0 %v758
    %846 = vmatmul.f32.gmra.mxu0 %v768
    %v847 = vpop.f32.mrf.mxu0
    %v848 = vadd.f32 0.0, %v847
    %849 = vdwg.mxu0
    %851 = vset.pattern.permute.xlu0 0
    %852 = vperm.xlu0 %851, %v765
    %v853 = vpop.permute.xlu0 %852
    %v855 = vmul.f32 %v788, %v853
    %v856 = vmul.f32 %v808, %v853
    %v857 = vmul.f32 %v828, %v853
    %v858 = vmul.f32 %v848, %v853
    %859 = vset.pattern.permute.xlu0 1
    %860 = vperm.xlu0 %859, %v765
    %v861 = vpop.permute.xlu0 %860
    %v863 = vadd.f32 %v855, %v861
    %v864 = vadd.f32 %v856, %v861
    %v865 = vadd.f32 %v857, %v861
    %v866 = vadd.f32 %v858, %v861
    %867 = vset.pattern.permute.xlu0 2
    %868 = vperm.xlu0 %867, %v765
    %v869 = vpop.permute.xlu0 %868
    %v871 = vmul.f32 %v788, %v869
    %v872 = vmul.f32 %v808, %v869
    %v873 = vmul.f32 %v828, %v869
    %v874 = vmul.f32 %v848, %v869
    %875 = vset.pattern.permute.xlu0 3
    %876 = vperm.xlu0 %875, %v765
    %v877 = vpop.permute.xlu0 %876
    %v879 = vadd.f32 %v871, %v877
    %v880 = vadd.f32 %v872, %v877
    %v881 = vadd.f32 %v873, %v877
    %v882 = vadd.f32 %v874, %v877
    %883 = vrot.lane.b32.xlu0 %v863, 17
    %v884 = vpop.permute.xlu0 %883
    %885 = vrot.lane.b32.xlu0 %v864, 17
    %v886 = vpop.permute.xlu0 %885
    %887 = vrot.lane.b32.xlu0 %v865, 17
    %v888 = vpop.permute.xlu0 %887
    %889 = vrot.lane.b32.xlu0 %v866, 17
    %v890 = vpop.permute.xlu0 %889
    %v891 = vsel %vm272, %v888, %v890
    %v892 = vsel %vm272, %v886, %v888
    %v893 = vsel %vm272, %v884, %v886
    %v894 = vsel %vm272, %v890, %v884
    %v895 = vsel %vm285, %v894, 0.0
    %v896 = vsel %vm286, %v893, 0.0
    %v897 = vsel %vm287, %v892, 0.0
    %v898 = vsel %vm288, %v891, 0.0
    %900 = vset.pattern.permute.xlu0 0
    %901 = vperm.xlu0 %900, %v764
    %v902 = vpop.permute.xlu0 %901
    %v904 = vmul.f32 %v895, %v902
    %v905 = vmul.f32 %v896, %v902
    %v906 = vmul.f32 %v897, %v902
    %v907 = vmul.f32 %v898, %v902
    %v908 = vadd.f32 %v904, 0.0
    %v909 = vadd.f32 %v905, 0.0
    %v910 = vadd.f32 %v906, 0.0
    %v911 = vadd.f32 %v907, 0.0
    %912 = vrot.lane.b32.xlu0 %v863, 16
    %v913 = vpop.permute.xlu0 %912
    %914 = vrot.lane.b32.xlu0 %v864, 16
    %v915 = vpop.permute.xlu0 %914
    %916 = vrot.lane.b32.xlu0 %v865, 16
    %v917 = vpop.permute.xlu0 %916
    %918 = vrot.lane.b32.xlu0 %v866, 16
    %v919 = vpop.permute.xlu0 %918
    %v920 = vsel %vm314, %v917, %v919
    %v921 = vsel %vm314, %v915, %v917
    %v922 = vsel %vm314, %v913, %v915
    %v923 = vsel %vm314, %v919, %v913
    %v924 = vsel %vm324, %v923, 0.0
    %v925 = vsel %vm325, %v922, 0.0
    %v926 = vsel %vm326, %v921, 0.0
    %v927 = vsel %vm327, %v920, 0.0
    %928 = vset.pattern.permute.xlu0 1
    %929 = vperm.xlu0 %928, %v764
    %v930 = vpop.permute.xlu0 %929
    %v932 = vmul.f32 %v924, %v930
    %v933 = vmul.f32 %v925, %v930
    %v934 = vmul.f32 %v926, %v930
    %v935 = vmul.f32 %v927, %v930
    %v936 = vadd.f32 %v908, %v932
    %v937 = vadd.f32 %v909, %v933
    %v938 = vadd.f32 %v910, %v934
    %v939 = vadd.f32 %v911, %v935
    %940 = vrot.lane.b32.xlu0 %v863, 15
    %v941 = vpop.permute.xlu0 %940
    %942 = vrot.lane.b32.xlu0 %v864, 15
    %v943 = vpop.permute.xlu0 %942
    %944 = vrot.lane.b32.xlu0 %v865, 15
    %v945 = vpop.permute.xlu0 %944
    %946 = vrot.lane.b32.xlu0 %v866, 15
    %v947 = vpop.permute.xlu0 %946
    %v948 = vsel %vm352, %v945, %v947
    %v949 = vsel %vm352, %v943, %v945
    %v950 = vsel %vm352, %v941, %v943
    %v951 = vsel %vm352, %v947, %v941
    %v952 = vsel %vm364, %v951, 0.0
    %v953 = vsel %vm365, %v950, 0.0
    %v954 = vsel %vm366, %v949, 0.0
    %v955 = vsel %vm367, %v948, 0.0
    %956 = vset.pattern.permute.xlu0 2
    %957 = vperm.xlu0 %956, %v764
    %v958 = vpop.permute.xlu0 %957
    %v960 = vmul.f32 %v952, %v958
    %v961 = vmul.f32 %v953, %v958
    %v962 = vmul.f32 %v954, %v958
    %v963 = vmul.f32 %v955, %v958
    %v964 = vadd.f32 %v936, %v960
    %v965 = vadd.f32 %v937, %v961
    %v966 = vadd.f32 %v938, %v962
    %v967 = vadd.f32 %v939, %v963
    %968 = vrot.lane.b32.xlu0 %v863, 1
    %v969 = vpop.permute.xlu0 %968
    %970 = vrot.lane.b32.xlu0 %v864, 1
    %v971 = vpop.permute.xlu0 %970
    %972 = vrot.lane.b32.xlu0 %v865, 1
    %v973 = vpop.permute.xlu0 %972
    %974 = vrot.lane.b32.xlu0 %v866, 1
    %v975 = vpop.permute.xlu0 %974
    %v976 = vsel %vm392, %v973, %v975
    %v977 = vsel %vm392, %v971, %v973
    %v978 = vsel %vm392, %v969, %v971
    %v979 = vsel %vm392, %v975, %v969
    %v980 = vsel %vm402, %v979, 0.0
    %v981 = vsel %vm403, %v978, 0.0
    %v982 = vsel %vm404, %v977, 0.0
    %v983 = vsel %vm405, %v976, 0.0
    %984 = vset.pattern.permute.xlu0 3
    %985 = vperm.xlu0 %984, %v764
    %v986 = vpop.permute.xlu0 %985
    %v988 = vmul.f32 %v980, %v986
    %v989 = vmul.f32 %v981, %v986
    %v990 = vmul.f32 %v982, %v986
    %v991 = vmul.f32 %v983, %v986
    %v992 = vadd.f32 %v964, %v988
    %v993 = vadd.f32 %v965, %v989
    %v994 = vadd.f32 %v966, %v990
    %v995 = vadd.f32 %v967, %v991
    %996 = vset.pattern.permute.xlu0 4
    %997 = vperm.xlu0 %996, %v764
    %v998 = vpop.permute.xlu0 %997
    %v1000 = vmul.f32 %v863, %v998
    %v1001 = vmul.f32 %v864, %v998
    %v1002 = vmul.f32 %v865, %v998
    %v1003 = vmul.f32 %v866, %v998
    %v1004 = vadd.f32 %v992, %v1000
    %v1005 = vadd.f32 %v993, %v1001
    %v1006 = vadd.f32 %v994, %v1002
    %v1007 = vadd.f32 %v995, %v1003
    %1008 = vrot.lane.b32.xlu0 %v863, 127
    %v1009 = vpop.permute.xlu0 %1008
    %1010 = vrot.lane.b32.xlu0 %v864, 127
    %v1011 = vpop.permute.xlu0 %1010
    %1012 = vrot.lane.b32.xlu0 %v865, 127
    %v1013 = vpop.permute.xlu0 %1012
    %1014 = vrot.lane.b32.xlu0 %v866, 127
    %v1015 = vpop.permute.xlu0 %1014
    %v1016 = vsel %vm442, %v1013, %v1015
    %v1017 = vsel %vm442, %v1011, %v1013
    %v1018 = vsel %vm442, %v1009, %v1011
    %v1019 = vsel %vm442, %v1015, %v1009
    %v1020 = vsel %vm452, %v1018, 0.0
    %v1021 = vsel %vm453, %v1017, 0.0
    %v1022 = vsel %vm454, %v1016, 0.0
    %v1023 = vsel %vm455, %v1019, 0.0
    %1024 = vset.pattern.permute.xlu0 5
    %1025 = vperm.xlu0 %1024, %v764
    %v1026 = vpop.permute.xlu0 %1025
    %v1028 = vmul.f32 %v1020, %v1026
    %v1029 = vmul.f32 %v1021, %v1026
    %v1030 = vmul.f32 %v1022, %v1026
    %v1031 = vmul.f32 %v1023, %v1026
    %v1032 = vadd.f32 %v1004, %v1028
    %v1033 = vadd.f32 %v1005, %v1029
    %v1034 = vadd.f32 %v1006, %v1030
    %v1035 = vadd.f32 %v1007, %v1031
    %1036 = vrot.lane.b32.xlu0 %v863, 113
    %v1037 = vpop.permute.xlu0 %1036
    %1038 = vrot.lane.b32.xlu0 %v864, 113
    %v1039 = vpop.permute.xlu0 %1038
    %1040 = vrot.lane.b32.xlu0 %v865, 113
    %v1041 = vpop.permute.xlu0 %1040
    %1042 = vrot.lane.b32.xlu0 %v866, 113
    %v1043 = vpop.permute.xlu0 %1042
    %v1044 = vsel %vm480, %v1041, %v1043
    %v1045 = vsel %vm480, %v1039, %v1041
    %v1046 = vsel %vm480, %v1037, %v1039
    %v1047 = vsel %vm480, %v1043, %v1037
    %v1048 = vsel %vm492, %v1046, 0.0
    %v1049 = vsel %vm493, %v1045, 0.0
    %v1050 = vsel %vm494, %v1044, 0.0
    %v1051 = vsel %vm495, %v1047, 0.0
    %1052 = vset.pattern.permute.xlu0 6
    %1053 = vperm.xlu0 %1052, %v764
    %v1054 = vpop.permute.xlu0 %1053
    %v1056 = vmul.f32 %v1048, %v1054
    %v1057 = vmul.f32 %v1049, %v1054
    %v1058 = vmul.f32 %v1050, %v1054
    %v1059 = vmul.f32 %v1051, %v1054
    %v1060 = vadd.f32 %v1032, %v1056
    %v1061 = vadd.f32 %v1033, %v1057
    %v1062 = vadd.f32 %v1034, %v1058
    %v1063 = vadd.f32 %v1035, %v1059
    %1064 = vrot.lane.b32.xlu0 %v863, 112
    %v1065 = vpop.permute.xlu0 %1064
    %1066 = vrot.lane.b32.xlu0 %v864, 112
    %v1067 = vpop.permute.xlu0 %1066
    %1068 = vrot.lane.b32.xlu0 %v865, 112
    %v1069 = vpop.permute.xlu0 %1068
    %1070 = vrot.lane.b32.xlu0 %v866, 112
    %v1071 = vpop.permute.xlu0 %1070
    %v1072 = vsel %vm520, %v1069, %v1071
    %v1073 = vsel %vm520, %v1067, %v1069
    %v1074 = vsel %vm520, %v1065, %v1067
    %v1075 = vsel %vm520, %v1071, %v1065
    %v1076 = vsel %vm530, %v1074, 0.0
    %v1077 = vsel %vm531, %v1073, 0.0
    %v1078 = vsel %vm532, %v1072, 0.0
    %v1079 = vsel %vm533, %v1075, 0.0
    %1080 = vset.pattern.permute.xlu0 7
    %1081 = vperm.xlu0 %1080, %v764
    %v1082 = vpop.permute.xlu0 %1081
    %v1084 = vmul.f32 %v1076, %v1082
    %v1085 = vmul.f32 %v1077, %v1082
    %v1086 = vmul.f32 %v1078, %v1082
    %v1087 = vmul.f32 %v1079, %v1082
    %v1088 = vadd.f32 %v1060, %v1084
    %v1089 = vadd.f32 %v1061, %v1085
    %v1090 = vadd.f32 %v1062, %v1086
    %v1091 = vadd.f32 %v1063, %v1087
    %1092 = vrot.lane.b32.xlu0 %v863, 111
    %v1093 = vpop.permute.xlu0 %1092
    %1094 = vrot.lane.b32.xlu0 %v864, 111
    %v1095 = vpop.permute.xlu0 %1094
    %1096 = vrot.lane.b32.xlu0 %v865, 111
    %v1097 = vpop.permute.xlu0 %1096
    %1098 = vrot.lane.b32.xlu0 %v866, 111
    %v1099 = vpop.permute.xlu0 %1098
    %v1100 = vsel %vm558, %v1097, %v1099
    %v1101 = vsel %vm558, %v1095, %v1097
    %v1102 = vsel %vm558, %v1093, %v1095
    %v1103 = vsel %vm558, %v1099, %v1093
    %v1104 = vsel %vm569, %v1102, 0.0
    %v1105 = vsel %vm570, %v1101, 0.0
    %v1106 = vsel %vm571, %v1100, 0.0
    %v1107 = vsel %vm572, %v1103, 0.0
    %1108 = vset.pattern.permute.xlu0 8
    %1109 = vperm.xlu0 %1108, %v764
    %v1110 = vpop.permute.xlu0 %1109
    %v1112 = vmul.f32 %v1104, %v1110
    %v1113 = vmul.f32 %v1105, %v1110
    %v1114 = vmul.f32 %v1106, %v1110
    %v1115 = vmul.f32 %v1107, %v1110
    %v1116 = vadd.f32 %v1088, %v1112
    %v1117 = vadd.f32 %v1089, %v1113
    %v1118 = vadd.f32 %v1090, %v1114
    %v1119 = vadd.f32 %v1091, %v1115
    %1120 = vset.pattern.permute.xlu0 4
    %1121 = vperm.xlu0 %1120, %v765
    %v1122 = vpop.permute.xlu0 %1121
    %v1124 = vmul.f32 %v1116, %v1122
    %v1125 = vmul.f32 %v1117, %v1122
    %v1126 = vmul.f32 %v1118, %v1122
    %v1127 = vmul.f32 %v1119, %v1122
    %1128 = vset.pattern.permute.xlu0 5
    %1129 = vperm.xlu0 %1128, %v765
    %v1130 = vpop.permute.xlu0 %1129
    %v1132 = vadd.f32 %v1124, %v1130
    %v1133 = vadd.f32 %v1125, %v1130
    %v1134 = vadd.f32 %v1126, %v1130
    %v1135 = vadd.f32 %v1127, %v1130
    %v1136 = vadd.f32 %v258, %v879
    %v1137 = vadd.f32 %v259, %v880
    %v1138 = vadd.f32 %v260, %v881
    %v1139 = vadd.f32 %v261, %v882
    %v1140 = vadd.f32 %v601, %v1132
    %v1141 = vadd.f32 %v602, %v1133
    %v1142 = vadd.f32 %v603, %v1134
    %v1143 = vadd.f32 %v604, %v1135
    %v1144 = vmax.f32 %v1136, 0.0
    %v1145 = vmax.f32 %v1137, 0.0
    %v1146 = vmax.f32 %v1138, 0.0
    %v1147 = vmax.f32 %v1139, 0.0
    %v1148 = vmax.f32 %v1140, 0.0
    %v1149 = vmax.f32 %v1141, 0.0
    %v1150 = vmax.f32 %v1142, 0.0
    %v1151 = vmax.f32 %v1143, 0.0
    %1152 = vst [vmem:[%s53] sm:$0xff] %v1144
    %1153 = vst [vmem:[%s53 + $0x8] sm:$0xff] %v1145
    %1154 = vst [vmem:[%s53 + $0x10] sm:$0xff] %v1146
    %1155 = vst [vmem:[%s53 + $0x18] sm:$0xff] %v1147
    %1156 = vst [vmem:[%s53 + $0x20] sm:$0xff] %v1148
    %1157 = vst [vmem:[%s53 + $0x28] sm:$0xff] %v1149
    %1158 = vst [vmem:[%s53 + $0x30] sm:$0xff] %v1150
    %1159 = vst [vmem:[%s53 + $0x38] sm:$0xff] %v1151
    %v1160 = vld [vmem:[%s21] sm:$0xff]
    %v1161 = vld [vmem:[%s23] sm:$0xff]
    %v1162 = vld [vmem:[%s25] sm:$0xff]
    %v1164 = vsel %vm766, %v1160, 0
    %1166 = vmatpush.msra.mxu0 0.0
    %1167 = vmatpush.msra.mxu0 0.0
    %1168 = vmatpush.msra.mxu0 0.0
    %1169 = vmatpush.msra.mxu0 0.0
    %1170 = vmatpush.msra.mxu0 0.0
    %1171 = vmatpush.msra.mxu0 0.0
    %1172 = vmatpush.msra.mxu0 0.0
    %1173 = vmatpush.msra.mxu0 0.0
    %1174 = vmatpush.msra.mxu0 0.0
    %1175 = vmatpush.msra.mxu0 0.0
    %1176 = vmatpush.msra.mxu0 0.0
    %1177 = vmatpush.msra.mxu0 0.0
    %1178 = vmatpush.msra.mxu0 0.0
    %1179 = vmatpush.msra.mxu0 0.0
    %1180 = vmatpush.msra.mxu0 %v1148
    %1181 = vmatpush.msra.mxu0 %v1144
    %1182 = vmatmul.f32.gmra.mxu0 %v1164
    %v1183 = vpop.f32.mrf.mxu0
    %v1184 = vadd.f32 0.0, %v1183
    %1185 = vdwg.mxu0
    %1186 = vmatpush.msra.mxu0 0.0
    %1187 = vmatpush.msra.mxu0 0.0
    %1188 = vmatpush.msra.mxu0 0.0
    %1189 = vmatpush.msra.mxu0 0.0
    %1190 = vmatpush.msra.mxu0 0.0
    %1191 = vmatpush.msra.mxu0 0.0
    %1192 = vmatpush.msra.mxu0 0.0
    %1193 = vmatpush.msra.mxu0 0.0
    %1194 = vmatpush.msra.mxu0 0.0
    %1195 = vmatpush.msra.mxu0 0.0
    %1196 = vmatpush.msra.mxu0 0.0
    %1197 = vmatpush.msra.mxu0 0.0
    %1198 = vmatpush.msra.mxu0 0.0
    %1199 = vmatpush.msra.mxu0 0.0
    %1200 = vmatpush.msra.mxu0 %v1149
    %1201 = vmatpush.msra.mxu0 %v1145
    %1202 = vmatmul.f32.gmra.mxu0 %v1164
    %v1203 = vpop.f32.mrf.mxu0
    %v1204 = vadd.f32 0.0, %v1203
    %1205 = vdwg.mxu0
    %1206 = vmatpush.msra.mxu0 0.0
    %1207 = vmatpush.msra.mxu0 0.0
    %1208 = vmatpush.msra.mxu0 0.0
    %1209 = vmatpush.msra.mxu0 0.0
    %1210 = vmatpush.msra.mxu0 0.0
    %1211 = vmatpush.msra.mxu0 0.0
    %1212 = vmatpush.msra.mxu0 0.0
    %1213 = vmatpush.msra.mxu0 0.0
    %1214 = vmatpush.msra.mxu0 0.0
    %1215 = vmatpush.msra.mxu0 0.0
    %1216 = vmatpush.msra.mxu0 0.0
    %1217 = vmatpush.msra.mxu0 0.0
    %1218 = vmatpush.msra.mxu0 0.0
    %1219 = vmatpush.msra.mxu0 0.0
    %1220 = vmatpush.msra.mxu0 %v1150
    %1221 = vmatpush.msra.mxu0 %v1146
    %1222 = vmatmul.f32.gmra.mxu0 %v1164
    %v1223 = vpop.f32.mrf.mxu0
    %v1224 = vadd.f32 0.0, %v1223
    %1225 = vdwg.mxu0
    %1226 = vmatpush.msra.mxu0 0.0
    %1227 = vmatpush.msra.mxu0 0.0
    %1228 = vmatpush.msra.mxu0 0.0
    %1229 = vmatpush.msra.mxu0 0.0
    %1230 = vmatpush.msra.mxu0 0.0
    %1231 = vmatpush.msra.mxu0 0.0
    %1232 = vmatpush.msra.mxu0 0.0
    %1233 = vmatpush.msra.mxu0 0.0
    %1234 = vmatpush.msra.mxu0 0.0
    %1235 = vmatpush.msra.mxu0 0.0
    %1236 = vmatpush.msra.mxu0 0.0
    %1237 = vmatpush.msra.mxu0 0.0
    %1238 = vmatpush.msra.mxu0 0.0
    %1239 = vmatpush.msra.mxu0 0.0
    %1240 = vmatpush.msra.mxu0 %v1151
    %1241 = vmatpush.msra.mxu0 %v1147
    %1242 = vmatmul.f32.gmra.mxu0 %v1164
    %v1243 = vpop.f32.mrf.mxu0
    %v1244 = vadd.f32 0.0, %v1243
    %1245 = vdwg.mxu0
    %1247 = vset.pattern.permute.xlu0 0
    %1248 = vperm.xlu0 %1247, %v1162
    %v1249 = vpop.permute.xlu0 %1248
    %v1251 = vmul.f32 %v1184, %v1249
    %v1252 = vmul.f32 %v1204, %v1249
    %v1253 = vmul.f32 %v1224, %v1249
    %v1254 = vmul.f32 %v1244, %v1249
    %1255 = vset.pattern.permute.xlu0 1
    %1256 = vperm.xlu0 %1255, %v1162
    %v1257 = vpop.permute.xlu0 %1256
    %v1259 = vadd.f32 %v1251, %v1257
    %v1260 = vadd.f32 %v1252, %v1257
    %v1261 = vadd.f32 %v1253, %v1257
    %v1262 = vadd.f32 %v1254, %v1257
    %1263 = vset.pattern.permute.xlu0 2
    %1264 = vperm.xlu0 %1263, %v1162
    %v1265 = vpop.permute.xlu0 %1264
    %v1267 = vmul.f32 %v1184, %v1265
    %v1268 = vmul.f32 %v1204, %v1265
    %v1269 = vmul.f32 %v1224, %v1265
    %v1270 = vmul.f32 %v1244, %v1265
    %1271 = vset.pattern.permute.xlu0 3
    %1272 = vperm.xlu0 %1271, %v1162
    %v1273 = vpop.permute.xlu0 %1272
    %v1275 = vadd.f32 %v1267, %v1273
    %v1276 = vadd.f32 %v1268, %v1273
    %v1277 = vadd.f32 %v1269, %v1273
    %v1278 = vadd.f32 %v1270, %v1273
    %1279 = vrot.lane.b32.xlu0 %v1259, 17
    %v1280 = vpop.permute.xlu0 %1279
    %1281 = vrot.lane.b32.xlu0 %v1260, 17
    %v1282 = vpop.permute.xlu0 %1281
    %1283 = vrot.lane.b32.xlu0 %v1261, 17
    %v1284 = vpop.permute.xlu0 %1283
    %1285 = vrot.lane.b32.xlu0 %v1262, 17
    %v1286 = vpop.permute.xlu0 %1285
    %v1287 = vsel %vm272, %v1284, %v1286
    %v1288 = vsel %vm272, %v1282, %v1284
    %v1289 = vsel %vm272, %v1280, %v1282
    %v1290 = vsel %vm272, %v1286, %v1280
    %v1291 = vsel %vm285, %v1290, 0.0
    %v1292 = vsel %vm286, %v1289, 0.0
    %v1293 = vsel %vm287, %v1288, 0.0
    %v1294 = vsel %vm288, %v1287, 0.0
    %1296 = vset.pattern.permute.xlu0 0
    %1297 = vperm.xlu0 %1296, %v1161
    %v1298 = vpop.permute.xlu0 %1297
    %v1300 = vmul.f32 %v1291, %v1298
    %v1301 = vmul.f32 %v1292, %v1298
    %v1302 = vmul.f32 %v1293, %v1298
    %v1303 = vmul.f32 %v1294, %v1298
    %v1304 = vadd.f32 %v1300, 0.0
    %v1305 = vadd.f32 %v1301, 0.0
    %v1306 = vadd.f32 %v1302, 0.0
    %v1307 = vadd.f32 %v1303, 0.0
    %1308 = vrot.lane.b32.xlu0 %v1259, 16
    %v1309 = vpop.permute.xlu0 %1308
    %1310 = vrot.lane.b32.xlu0 %v1260, 16
    %v1311 = vpop.permute.xlu0 %1310
    %1312 = vrot.lane.b32.xlu0 %v1261, 16
    %v1313 = vpop.permute.xlu0 %1312
    %1314 = vrot.lane.b32.xlu0 %v1262, 16
    %v1315 = vpop.permute.xlu0 %1314
    %v1316 = vsel %vm314, %v1313, %v1315
    %v1317 = vsel %vm314, %v1311, %v1313
    %v1318 = vsel %vm314, %v1309, %v1311
    %v1319 = vsel %vm314, %v1315, %v1309
    %v1320 = vsel %vm324, %v1319, 0.0
    %v1321 = vsel %vm325, %v1318, 0.0
    %v1322 = vsel %vm326, %v1317, 0.0
    %v1323 = vsel %vm327, %v1316, 0.0
    %1324 = vset.pattern.permute.xlu0 1
    %1325 = vperm.xlu0 %1324, %v1161
    %v1326 = vpop.permute.xlu0 %1325
    %v1328 = vmul.f32 %v1320, %v1326
    %v1329 = vmul.f32 %v1321, %v1326
    %v1330 = vmul.f32 %v1322, %v1326
    %v1331 = vmul.f32 %v1323, %v1326
    %v1332 = vadd.f32 %v1304, %v1328
    %v1333 = vadd.f32 %v1305, %v1329
    %v1334 = vadd.f32 %v1306, %v1330
    %v1335 = vadd.f32 %v1307, %v1331
    %1336 = vrot.lane.b32.xlu0 %v1259, 15
    %v1337 = vpop.permute.xlu0 %1336
    %1338 = vrot.lane.b32.xlu0 %v1260, 15
    %v1339 = vpop.permute.xlu0 %1338
    %1340 = vrot.lane.b32.xlu0 %v1261, 15
    %v1341 = vpop.permute.xlu0 %1340
    %1342 = vrot.lane.b32.xlu0 %v1262, 15
    %v1343 = vpop.permute.xlu0 %1342
    %v1344 = vsel %vm352, %v1341, %v1343
    %v1345 = vsel %vm352, %v1339, %v1341
    %v1346 = vsel %vm352, %v1337, %v1339
    %v1347 = vsel %vm352, %v1343, %v1337
    %v1348 = vsel %vm364, %v1347, 0.0
    %v1349 = vsel %vm365, %v1346, 0.0
    %v1350 = vsel %vm366, %v1345, 0.0
    %v1351 = vsel %vm367, %v1344, 0.0
    %1352 = vset.pattern.permute.xlu0 2
    %1353 = vperm.xlu0 %1352, %v1161
    %v1354 = vpop.permute.xlu0 %1353
    %v1356 = vmul.f32 %v1348, %v1354
    %v1357 = vmul.f32 %v1349, %v1354
    %v1358 = vmul.f32 %v1350, %v1354
    %v1359 = vmul.f32 %v1351, %v1354
    %v1360 = vadd.f32 %v1332, %v1356
    %v1361 = vadd.f32 %v1333, %v1357
    %v1362 = vadd.f32 %v1334, %v1358
    %v1363 = vadd.f32 %v1335, %v1359
    %1364 = vrot.lane.b32.xlu0 %v1259, 1
    %v1365 = vpop.permute.xlu0 %1364
    %1366 = vrot.lane.b32.xlu0 %v1260, 1
    %v1367 = vpop.permute.xlu0 %1366
    %1368 = vrot.lane.b32.xlu0 %v1261, 1
    %v1369 = vpop.permute.xlu0 %1368
    %1370 = vrot.lane.b32.xlu0 %v1262, 1
    %v1371 = vpop.permute.xlu0 %1370
    %v1372 = vsel %vm392, %v1369, %v1371
    %v1373 = vsel %vm392, %v1367, %v1369
    %v1374 = vsel %vm392, %v1365, %v1367
    %v1375 = vsel %vm392, %v1371, %v1365
    %v1376 = vsel %vm402, %v1375, 0.0
    %v1377 = vsel %vm403, %v1374, 0.0
    %v1378 = vsel %vm404, %v1373, 0.0
    %v1379 = vsel %vm405, %v1372, 0.0
    %1380 = vset.pattern.permute.xlu0 3
    %1381 = vperm.xlu0 %1380, %v1161
    %v1382 = vpop.permute.xlu0 %1381
    %v1384 = vmul.f32 %v1376, %v1382
    %v1385 = vmul.f32 %v1377, %v1382
    %v1386 = vmul.f32 %v1378, %v1382
    %v1387 = vmul.f32 %v1379, %v1382
    %v1388 = vadd.f32 %v1360, %v1384
    %v1389 = vadd.f32 %v1361, %v1385
    %v1390 = vadd.f32 %v1362, %v1386
    %v1391 = vadd.f32 %v1363, %v1387
    %1392 = vset.pattern.permute.xlu0 4
    %1393 = vperm.xlu0 %1392, %v1161
    %v1394 = vpop.permute.xlu0 %1393
    %v1396 = vmul.f32 %v1259, %v1394
    %v1397 = vmul.f32 %v1260, %v1394
    %v1398 = vmul.f32 %v1261, %v1394
    %v1399 = vmul.f32 %v1262, %v1394
    %v1400 = vadd.f32 %v1388, %v1396
    %v1401 = vadd.f32 %v1389, %v1397
    %v1402 = vadd.f32 %v1390, %v1398
    %v1403 = vadd.f32 %v1391, %v1399
    %1404 = vrot.lane.b32.xlu0 %v1259, 127
    %v1405 = vpop.permute.xlu0 %1404
    %1406 = vrot.lane.b32.xlu0 %v1260, 127
    %v1407 = vpop.permute.xlu0 %1406
    %1408 = vrot.lane.b32.xlu0 %v1261, 127
    %v1409 = vpop.permute.xlu0 %1408
    %1410 = vrot.lane.b32.xlu0 %v1262, 127
    %v1411 = vpop.permute.xlu0 %1410
    %v1412 = vsel %vm442, %v1409, %v1411
    %v1413 = vsel %vm442, %v1407, %v1409
    %v1414 = vsel %vm442, %v1405, %v1407
    %v1415 = vsel %vm442, %v1411, %v1405
    %v1416 = vsel %vm452, %v1414, 0.0
    %v1417 = vsel %vm453, %v1413, 0.0
    %v1418 = vsel %vm454, %v1412, 0.0
    %v1419 = vsel %vm455, %v1415, 0.0
    %1420 = vset.pattern.permute.xlu0 5
    %1421 = vperm.xlu0 %1420, %v1161
    %v1422 = vpop.permute.xlu0 %1421
    %v1424 = vmul.f32 %v1416, %v1422
    %v1425 = vmul.f32 %v1417, %v1422
    %v1426 = vmul.f32 %v1418, %v1422
    %v1427 = vmul.f32 %v1419, %v1422
    %v1428 = vadd.f32 %v1400, %v1424
    %v1429 = vadd.f32 %v1401, %v1425
    %v1430 = vadd.f32 %v1402, %v1426
    %v1431 = vadd.f32 %v1403, %v1427
    %1432 = vrot.lane.b32.xlu0 %v1259, 113
    %v1433 = vpop.permute.xlu0 %1432
    %1434 = vrot.lane.b32.xlu0 %v1260, 113
    %v1435 = vpop.permute.xlu0 %1434
    %1436 = vrot.lane.b32.xlu0 %v1261, 113
    %v1437 = vpop.permute.xlu0 %1436
    %1438 = vrot.lane.b32.xlu0 %v1262, 113
    %v1439 = vpop.permute.xlu0 %1438
    %v1440 = vsel %vm480, %v1437, %v1439
    %v1441 = vsel %vm480, %v1435, %v1437
    %v1442 = vsel %vm480, %v1433, %v1435
    %v1443 = vsel %vm480, %v1439, %v1433
    %v1444 = vsel %vm492, %v1442, 0.0
    %v1445 = vsel %vm493, %v1441, 0.0
    %v1446 = vsel %vm494, %v1440, 0.0
    %v1447 = vsel %vm495, %v1443, 0.0
    %1448 = vset.pattern.permute.xlu0 6
    %1449 = vperm.xlu0 %1448, %v1161
    %v1450 = vpop.permute.xlu0 %1449
    %v1452 = vmul.f32 %v1444, %v1450
    %v1453 = vmul.f32 %v1445, %v1450
    %v1454 = vmul.f32 %v1446, %v1450
    %v1455 = vmul.f32 %v1447, %v1450
    %v1456 = vadd.f32 %v1428, %v1452
    %v1457 = vadd.f32 %v1429, %v1453
    %v1458 = vadd.f32 %v1430, %v1454
    %v1459 = vadd.f32 %v1431, %v1455
    %1460 = vrot.lane.b32.xlu0 %v1259, 112
    %v1461 = vpop.permute.xlu0 %1460
    %1462 = vrot.lane.b32.xlu0 %v1260, 112
    %v1463 = vpop.permute.xlu0 %1462
    %1464 = vrot.lane.b32.xlu0 %v1261, 112
    %v1465 = vpop.permute.xlu0 %1464
    %1466 = vrot.lane.b32.xlu0 %v1262, 112
    %v1467 = vpop.permute.xlu0 %1466
    %v1468 = vsel %vm520, %v1465, %v1467
    %v1469 = vsel %vm520, %v1463, %v1465
    %v1470 = vsel %vm520, %v1461, %v1463
    %v1471 = vsel %vm520, %v1467, %v1461
    %v1472 = vsel %vm530, %v1470, 0.0
    %v1473 = vsel %vm531, %v1469, 0.0
    %v1474 = vsel %vm532, %v1468, 0.0
    %v1475 = vsel %vm533, %v1471, 0.0
    %1476 = vset.pattern.permute.xlu0 7
    %1477 = vperm.xlu0 %1476, %v1161
    %v1478 = vpop.permute.xlu0 %1477
    %v1480 = vmul.f32 %v1472, %v1478
    %v1481 = vmul.f32 %v1473, %v1478
    %v1482 = vmul.f32 %v1474, %v1478
    %v1483 = vmul.f32 %v1475, %v1478
    %v1484 = vadd.f32 %v1456, %v1480
    %v1485 = vadd.f32 %v1457, %v1481
    %v1486 = vadd.f32 %v1458, %v1482
    %v1487 = vadd.f32 %v1459, %v1483
    %1488 = vrot.lane.b32.xlu0 %v1259, 111
    %v1489 = vpop.permute.xlu0 %1488
    %1490 = vrot.lane.b32.xlu0 %v1260, 111
    %v1491 = vpop.permute.xlu0 %1490
    %1492 = vrot.lane.b32.xlu0 %v1261, 111
    %v1493 = vpop.permute.xlu0 %1492
    %1494 = vrot.lane.b32.xlu0 %v1262, 111
    %v1495 = vpop.permute.xlu0 %1494
    %v1496 = vsel %vm558, %v1493, %v1495
    %v1497 = vsel %vm558, %v1491, %v1493
    %v1498 = vsel %vm558, %v1489, %v1491
    %v1499 = vsel %vm558, %v1495, %v1489
    %v1500 = vsel %vm569, %v1498, 0.0
    %v1501 = vsel %vm570, %v1497, 0.0
    %v1502 = vsel %vm571, %v1496, 0.0
    %v1503 = vsel %vm572, %v1499, 0.0
    %1504 = vset.pattern.permute.xlu0 8
    %1505 = vperm.xlu0 %1504, %v1161
    %v1506 = vpop.permute.xlu0 %1505
    %v1508 = vmul.f32 %v1500, %v1506
    %v1509 = vmul.f32 %v1501, %v1506
    %v1510 = vmul.f32 %v1502, %v1506
    %v1511 = vmul.f32 %v1503, %v1506
    %v1512 = vadd.f32 %v1484, %v1508
    %v1513 = vadd.f32 %v1485, %v1509
    %v1514 = vadd.f32 %v1486, %v1510
    %v1515 = vadd.f32 %v1487, %v1511
    %1516 = vset.pattern.permute.xlu0 4
    %1517 = vperm.xlu0 %1516, %v1162
    %v1518 = vpop.permute.xlu0 %1517
    %v1520 = vmul.f32 %v1512, %v1518
    %v1521 = vmul.f32 %v1513, %v1518
    %v1522 = vmul.f32 %v1514, %v1518
    %v1523 = vmul.f32 %v1515, %v1518
    %1524 = vset.pattern.permute.xlu0 5
    %1525 = vperm.xlu0 %1524, %v1162
    %v1526 = vpop.permute.xlu0 %1525
    %v1528 = vadd.f32 %v1520, %v1526
    %v1529 = vadd.f32 %v1521, %v1526
    %v1530 = vadd.f32 %v1522, %v1526
    %v1531 = vadd.f32 %v1523, %v1526
    %v1532 = vmax.f32 %v1275, 0.0
    %v1533 = vmax.f32 %v1276, 0.0
    %v1534 = vmax.f32 %v1277, 0.0
    %v1535 = vmax.f32 %v1278, 0.0
    %v1536 = vmax.f32 %v1528, 0.0
    %v1537 = vmax.f32 %v1529, 0.0
    %v1538 = vmax.f32 %v1530, 0.0
    %v1539 = vmax.f32 %v1531, 0.0
    %v1540 = vld [vmem:[%s27] sm:$0xf]
    %v1541 = vld [vmem:[%s29] sm:$0xf]
    %v1542 = vld [vmem:[%s31] sm:$0xf]
    %v1544 = vsel %vm766, %v1540, 0
    %1546 = vmatpush.msra.mxu0 0.0
    %1547 = vmatpush.msra.mxu0 0.0
    %1548 = vmatpush.msra.mxu0 0.0
    %1549 = vmatpush.msra.mxu0 0.0
    %1550 = vmatpush.msra.mxu0 0.0
    %1551 = vmatpush.msra.mxu0 0.0
    %1552 = vmatpush.msra.mxu0 0.0
    %1553 = vmatpush.msra.mxu0 0.0
    %1554 = vmatpush.msra.mxu0 0.0
    %1555 = vmatpush.msra.mxu0 0.0
    %1556 = vmatpush.msra.mxu0 0.0
    %1557 = vmatpush.msra.mxu0 0.0
    %1558 = vmatpush.msra.mxu0 0.0
    %1559 = vmatpush.msra.mxu0 0.0
    %1560 = vmatpush.msra.mxu0 %v1536
    %1561 = vmatpush.msra.mxu0 %v1532
    %1562 = vmatmul.f32.gmra.mxu0 %v1544
    %v1563 = vpop.f32.mrf.mxu0
    %v1564 = vadd.f32 0.0, %v1563
    %1565 = vdwg.mxu0
    %1566 = vmatpush.msra.mxu0 0.0
    %1567 = vmatpush.msra.mxu0 0.0
    %1568 = vmatpush.msra.mxu0 0.0
    %1569 = vmatpush.msra.mxu0 0.0
    %1570 = vmatpush.msra.mxu0 0.0
    %1571 = vmatpush.msra.mxu0 0.0
    %1572 = vmatpush.msra.mxu0 0.0
    %1573 = vmatpush.msra.mxu0 0.0
    %1574 = vmatpush.msra.mxu0 0.0
    %1575 = vmatpush.msra.mxu0 0.0
    %1576 = vmatpush.msra.mxu0 0.0
    %1577 = vmatpush.msra.mxu0 0.0
    %1578 = vmatpush.msra.mxu0 0.0
    %1579 = vmatpush.msra.mxu0 0.0
    %1580 = vmatpush.msra.mxu0 %v1537
    %1581 = vmatpush.msra.mxu0 %v1533
    %1582 = vmatmul.f32.gmra.mxu0 %v1544
    %v1583 = vpop.f32.mrf.mxu0
    %v1584 = vadd.f32 0.0, %v1583
    %1585 = vdwg.mxu0
    %1586 = vmatpush.msra.mxu0 0.0
    %1587 = vmatpush.msra.mxu0 0.0
    %1588 = vmatpush.msra.mxu0 0.0
    %1589 = vmatpush.msra.mxu0 0.0
    %1590 = vmatpush.msra.mxu0 0.0
    %1591 = vmatpush.msra.mxu0 0.0
    %1592 = vmatpush.msra.mxu0 0.0
    %1593 = vmatpush.msra.mxu0 0.0
    %1594 = vmatpush.msra.mxu0 0.0
    %1595 = vmatpush.msra.mxu0 0.0
    %1596 = vmatpush.msra.mxu0 0.0
    %1597 = vmatpush.msra.mxu0 0.0
    %1598 = vmatpush.msra.mxu0 0.0
    %1599 = vmatpush.msra.mxu0 0.0
    %1600 = vmatpush.msra.mxu0 %v1538
    %1601 = vmatpush.msra.mxu0 %v1534
    %1602 = vmatmul.f32.gmra.mxu0 %v1544
    %v1603 = vpop.f32.mrf.mxu0
    %v1604 = vadd.f32 0.0, %v1603
    %1605 = vdwg.mxu0
    %1606 = vmatpush.msra.mxu0 0.0
    %1607 = vmatpush.msra.mxu0 0.0
    %1608 = vmatpush.msra.mxu0 0.0
    %1609 = vmatpush.msra.mxu0 0.0
    %1610 = vmatpush.msra.mxu0 0.0
    %1611 = vmatpush.msra.mxu0 0.0
    %1612 = vmatpush.msra.mxu0 0.0
    %1613 = vmatpush.msra.mxu0 0.0
    %1614 = vmatpush.msra.mxu0 0.0
    %1615 = vmatpush.msra.mxu0 0.0
    %1616 = vmatpush.msra.mxu0 0.0
    %1617 = vmatpush.msra.mxu0 0.0
    %1618 = vmatpush.msra.mxu0 0.0
    %1619 = vmatpush.msra.mxu0 0.0
    %1620 = vmatpush.msra.mxu0 %v1539
    %1621 = vmatpush.msra.mxu0 %v1535
    %1622 = vmatmul.f32.gmra.mxu0 %v1544
    %v1623 = vpop.f32.mrf.mxu0
    %v1624 = vadd.f32 0.0, %v1623
    %1625 = vdwg.mxu0
    %1627 = vset.pattern.permute.xlu0 0
    %1628 = vperm.xlu0 %1627, %v1542
    %v1629 = vpop.permute.xlu0 %1628
    %v1631 = vmul.f32 %v1564, %v1629
    %v1632 = vmul.f32 %v1584, %v1629
    %v1633 = vmul.f32 %v1604, %v1629
    %v1634 = vmul.f32 %v1624, %v1629
    %1635 = vset.pattern.permute.xlu0 1
    %1636 = vperm.xlu0 %1635, %v1542
    %v1637 = vpop.permute.xlu0 %1636
    %v1639 = vadd.f32 %v1631, %v1637
    %v1640 = vadd.f32 %v1632, %v1637
    %v1641 = vadd.f32 %v1633, %v1637
    %v1642 = vadd.f32 %v1634, %v1637
    %1643 = vset.pattern.permute.xlu0 2
    %1644 = vperm.xlu0 %1643, %v1542
    %v1645 = vpop.permute.xlu0 %1644
    %v1647 = vmul.f32 %v1564, %v1645
    %v1648 = vmul.f32 %v1584, %v1645
    %v1649 = vmul.f32 %v1604, %v1645
    %v1650 = vmul.f32 %v1624, %v1645
    %1651 = vset.pattern.permute.xlu0 3
    %1652 = vperm.xlu0 %1651, %v1542
    %v1653 = vpop.permute.xlu0 %1652
    %v1655 = vadd.f32 %v1647, %v1653
    %v1656 = vadd.f32 %v1648, %v1653
    %v1657 = vadd.f32 %v1649, %v1653
    %v1658 = vadd.f32 %v1650, %v1653
    %1659 = vrot.lane.b32.xlu0 %v1639, 17
    %v1660 = vpop.permute.xlu0 %1659
    %1661 = vrot.lane.b32.xlu0 %v1640, 17
    %v1662 = vpop.permute.xlu0 %1661
    %1663 = vrot.lane.b32.xlu0 %v1641, 17
    %v1664 = vpop.permute.xlu0 %1663
    %1665 = vrot.lane.b32.xlu0 %v1642, 17
    %v1666 = vpop.permute.xlu0 %1665
    %v1667 = vsel %vm272, %v1664, %v1666
    %v1668 = vsel %vm272, %v1662, %v1664
    %v1669 = vsel %vm272, %v1660, %v1662
    %v1670 = vsel %vm272, %v1666, %v1660
    %v1671 = vsel %vm285, %v1670, 0.0
    %v1672 = vsel %vm286, %v1669, 0.0
    %v1673 = vsel %vm287, %v1668, 0.0
    %v1674 = vsel %vm288, %v1667, 0.0
    %1676 = vset.pattern.permute.xlu0 0
    %1677 = vperm.xlu0 %1676, %v1541
    %v1678 = vpop.permute.xlu0 %1677
    %v1680 = vmul.f32 %v1671, %v1678
    %v1681 = vmul.f32 %v1672, %v1678
    %v1682 = vmul.f32 %v1673, %v1678
    %v1683 = vmul.f32 %v1674, %v1678
    %v1684 = vadd.f32 %v1680, 0.0
    %v1685 = vadd.f32 %v1681, 0.0
    %v1686 = vadd.f32 %v1682, 0.0
    %v1687 = vadd.f32 %v1683, 0.0
    %1688 = vrot.lane.b32.xlu0 %v1639, 16
    %v1689 = vpop.permute.xlu0 %1688
    %1690 = vrot.lane.b32.xlu0 %v1640, 16
    %v1691 = vpop.permute.xlu0 %1690
    %1692 = vrot.lane.b32.xlu0 %v1641, 16
    %v1693 = vpop.permute.xlu0 %1692
    %1694 = vrot.lane.b32.xlu0 %v1642, 16
    %v1695 = vpop.permute.xlu0 %1694
    %v1696 = vsel %vm314, %v1693, %v1695
    %v1697 = vsel %vm314, %v1691, %v1693
    %v1698 = vsel %vm314, %v1689, %v1691
    %v1699 = vsel %vm314, %v1695, %v1689
    %v1700 = vsel %vm324, %v1699, 0.0
    %v1701 = vsel %vm325, %v1698, 0.0
    %v1702 = vsel %vm326, %v1697, 0.0
    %v1703 = vsel %vm327, %v1696, 0.0
    %1704 = vset.pattern.permute.xlu0 1
    %1705 = vperm.xlu0 %1704, %v1541
    %v1706 = vpop.permute.xlu0 %1705
    %v1708 = vmul.f32 %v1700, %v1706
    %v1709 = vmul.f32 %v1701, %v1706
    %v1710 = vmul.f32 %v1702, %v1706
    %v1711 = vmul.f32 %v1703, %v1706
    %v1712 = vadd.f32 %v1684, %v1708
    %v1713 = vadd.f32 %v1685, %v1709
    %v1714 = vadd.f32 %v1686, %v1710
    %v1715 = vadd.f32 %v1687, %v1711
    %1716 = vrot.lane.b32.xlu0 %v1639, 15
    %v1717 = vpop.permute.xlu0 %1716
    %1718 = vrot.lane.b32.xlu0 %v1640, 15
    %v1719 = vpop.permute.xlu0 %1718
    %1720 = vrot.lane.b32.xlu0 %v1641, 15
    %v1721 = vpop.permute.xlu0 %1720
    %1722 = vrot.lane.b32.xlu0 %v1642, 15
    %v1723 = vpop.permute.xlu0 %1722
    %v1724 = vsel %vm352, %v1721, %v1723
    %v1725 = vsel %vm352, %v1719, %v1721
    %v1726 = vsel %vm352, %v1717, %v1719
    %v1727 = vsel %vm352, %v1723, %v1717
    %v1728 = vsel %vm364, %v1727, 0.0
    %v1729 = vsel %vm365, %v1726, 0.0
    %v1730 = vsel %vm366, %v1725, 0.0
    %v1731 = vsel %vm367, %v1724, 0.0
    %1732 = vset.pattern.permute.xlu0 2
    %1733 = vperm.xlu0 %1732, %v1541
    %v1734 = vpop.permute.xlu0 %1733
    %v1736 = vmul.f32 %v1728, %v1734
    %v1737 = vmul.f32 %v1729, %v1734
    %v1738 = vmul.f32 %v1730, %v1734
    %v1739 = vmul.f32 %v1731, %v1734
    %v1740 = vadd.f32 %v1712, %v1736
    %v1741 = vadd.f32 %v1713, %v1737
    %v1742 = vadd.f32 %v1714, %v1738
    %v1743 = vadd.f32 %v1715, %v1739
    %1744 = vrot.lane.b32.xlu0 %v1639, 1
    %v1745 = vpop.permute.xlu0 %1744
    %1746 = vrot.lane.b32.xlu0 %v1640, 1
    %v1747 = vpop.permute.xlu0 %1746
    %1748 = vrot.lane.b32.xlu0 %v1641, 1
    %v1749 = vpop.permute.xlu0 %1748
    %1750 = vrot.lane.b32.xlu0 %v1642, 1
    %v1751 = vpop.permute.xlu0 %1750
    %v1752 = vsel %vm392, %v1749, %v1751
    %v1753 = vsel %vm392, %v1747, %v1749
    %v1754 = vsel %vm392, %v1745, %v1747
    %v1755 = vsel %vm392, %v1751, %v1745
    %v1756 = vsel %vm402, %v1755, 0.0
    %v1757 = vsel %vm403, %v1754, 0.0
    %v1758 = vsel %vm404, %v1753, 0.0
    %v1759 = vsel %vm405, %v1752, 0.0
    %1760 = vset.pattern.permute.xlu0 3
    %1761 = vperm.xlu0 %1760, %v1541
    %v1762 = vpop.permute.xlu0 %1761
    %v1764 = vmul.f32 %v1756, %v1762
    %v1765 = vmul.f32 %v1757, %v1762
    %v1766 = vmul.f32 %v1758, %v1762
    %v1767 = vmul.f32 %v1759, %v1762
    %v1768 = vadd.f32 %v1740, %v1764
    %v1769 = vadd.f32 %v1741, %v1765
    %v1770 = vadd.f32 %v1742, %v1766
    %v1771 = vadd.f32 %v1743, %v1767
    %1772 = vset.pattern.permute.xlu0 4
    %1773 = vperm.xlu0 %1772, %v1541
    %v1774 = vpop.permute.xlu0 %1773
    %v1776 = vmul.f32 %v1639, %v1774
    %v1777 = vmul.f32 %v1640, %v1774
    %v1778 = vmul.f32 %v1641, %v1774
    %v1779 = vmul.f32 %v1642, %v1774
    %v1780 = vadd.f32 %v1768, %v1776
    %v1781 = vadd.f32 %v1769, %v1777
    %v1782 = vadd.f32 %v1770, %v1778
    %v1783 = vadd.f32 %v1771, %v1779
    %1784 = vrot.lane.b32.xlu0 %v1639, 127
    %v1785 = vpop.permute.xlu0 %1784
    %1786 = vrot.lane.b32.xlu0 %v1640, 127
    %v1787 = vpop.permute.xlu0 %1786
    %1788 = vrot.lane.b32.xlu0 %v1641, 127
    %v1789 = vpop.permute.xlu0 %1788
    %1790 = vrot.lane.b32.xlu0 %v1642, 127
    %v1791 = vpop.permute.xlu0 %1790
    %v1792 = vsel %vm442, %v1789, %v1791
    %v1793 = vsel %vm442, %v1787, %v1789
    %v1794 = vsel %vm442, %v1785, %v1787
    %v1795 = vsel %vm442, %v1791, %v1785
    %v1796 = vsel %vm452, %v1794, 0.0
    %v1797 = vsel %vm453, %v1793, 0.0
    %v1798 = vsel %vm454, %v1792, 0.0
    %v1799 = vsel %vm455, %v1795, 0.0
    %1800 = vset.pattern.permute.xlu0 5
    %1801 = vperm.xlu0 %1800, %v1541
    %v1802 = vpop.permute.xlu0 %1801
    %v1804 = vmul.f32 %v1796, %v1802
    %v1805 = vmul.f32 %v1797, %v1802
    %v1806 = vmul.f32 %v1798, %v1802
    %v1807 = vmul.f32 %v1799, %v1802
    %v1808 = vadd.f32 %v1780, %v1804
    %v1809 = vadd.f32 %v1781, %v1805
    %v1810 = vadd.f32 %v1782, %v1806
    %v1811 = vadd.f32 %v1783, %v1807
    %1812 = vrot.lane.b32.xlu0 %v1639, 113
    %v1813 = vpop.permute.xlu0 %1812
    %1814 = vrot.lane.b32.xlu0 %v1640, 113
    %v1815 = vpop.permute.xlu0 %1814
    %1816 = vrot.lane.b32.xlu0 %v1641, 113
    %v1817 = vpop.permute.xlu0 %1816
    %1818 = vrot.lane.b32.xlu0 %v1642, 113
    %v1819 = vpop.permute.xlu0 %1818
    %v1820 = vsel %vm480, %v1817, %v1819
    %v1821 = vsel %vm480, %v1815, %v1817
    %v1822 = vsel %vm480, %v1813, %v1815
    %v1823 = vsel %vm480, %v1819, %v1813
    %v1824 = vsel %vm492, %v1822, 0.0
    %v1825 = vsel %vm493, %v1821, 0.0
    %v1826 = vsel %vm494, %v1820, 0.0
    %v1827 = vsel %vm495, %v1823, 0.0
    %1828 = vset.pattern.permute.xlu0 6
    %1829 = vperm.xlu0 %1828, %v1541
    %v1830 = vpop.permute.xlu0 %1829
    %v1832 = vmul.f32 %v1824, %v1830
    %v1833 = vmul.f32 %v1825, %v1830
    %v1834 = vmul.f32 %v1826, %v1830
    %v1835 = vmul.f32 %v1827, %v1830
    %v1836 = vadd.f32 %v1808, %v1832
    %v1837 = vadd.f32 %v1809, %v1833
    %v1838 = vadd.f32 %v1810, %v1834
    %v1839 = vadd.f32 %v1811, %v1835
    %1840 = vrot.lane.b32.xlu0 %v1639, 112
    %v1841 = vpop.permute.xlu0 %1840
    %1842 = vrot.lane.b32.xlu0 %v1640, 112
    %v1843 = vpop.permute.xlu0 %1842
    %1844 = vrot.lane.b32.xlu0 %v1641, 112
    %v1845 = vpop.permute.xlu0 %1844
    %1846 = vrot.lane.b32.xlu0 %v1642, 112
    %v1847 = vpop.permute.xlu0 %1846
    %v1848 = vsel %vm520, %v1845, %v1847
    %v1849 = vsel %vm520, %v1843, %v1845
    %v1850 = vsel %vm520, %v1841, %v1843
    %v1851 = vsel %vm520, %v1847, %v1841
    %v1852 = vsel %vm530, %v1850, 0.0
    %v1853 = vsel %vm531, %v1849, 0.0
    %v1854 = vsel %vm532, %v1848, 0.0
    %v1855 = vsel %vm533, %v1851, 0.0
    %1856 = vset.pattern.permute.xlu0 7
    %1857 = vperm.xlu0 %1856, %v1541
    %v1858 = vpop.permute.xlu0 %1857
    %v1860 = vmul.f32 %v1852, %v1858
    %v1861 = vmul.f32 %v1853, %v1858
    %v1862 = vmul.f32 %v1854, %v1858
    %v1863 = vmul.f32 %v1855, %v1858
    %v1864 = vadd.f32 %v1836, %v1860
    %v1865 = vadd.f32 %v1837, %v1861
    %v1866 = vadd.f32 %v1838, %v1862
    %v1867 = vadd.f32 %v1839, %v1863
    %1868 = vrot.lane.b32.xlu0 %v1639, 111
    %v1869 = vpop.permute.xlu0 %1868
    %1870 = vrot.lane.b32.xlu0 %v1640, 111
    %v1871 = vpop.permute.xlu0 %1870
    %1872 = vrot.lane.b32.xlu0 %v1641, 111
    %v1873 = vpop.permute.xlu0 %1872
    %1874 = vrot.lane.b32.xlu0 %v1642, 111
    %v1875 = vpop.permute.xlu0 %1874
    %v1876 = vsel %vm558, %v1873, %v1875
    %v1877 = vsel %vm558, %v1871, %v1873
    %v1878 = vsel %vm558, %v1869, %v1871
    %v1879 = vsel %vm558, %v1875, %v1869
    %v1880 = vsel %vm569, %v1878, 0.0
    %v1881 = vsel %vm570, %v1877, 0.0
    %v1882 = vsel %vm571, %v1876, 0.0
    %v1883 = vsel %vm572, %v1879, 0.0
    %1884 = vset.pattern.permute.xlu0 8
    %1885 = vperm.xlu0 %1884, %v1541
    %v1886 = vpop.permute.xlu0 %1885
    %v1888 = vmul.f32 %v1880, %v1886
    %v1889 = vmul.f32 %v1881, %v1886
    %v1890 = vmul.f32 %v1882, %v1886
    %v1891 = vmul.f32 %v1883, %v1886
    %v1892 = vadd.f32 %v1864, %v1888
    %v1893 = vadd.f32 %v1865, %v1889
    %v1894 = vadd.f32 %v1866, %v1890
    %v1895 = vadd.f32 %v1867, %v1891
    %1896 = vset.pattern.permute.xlu0 4
    %1897 = vperm.xlu0 %1896, %v1542
    %v1898 = vpop.permute.xlu0 %1897
    %v1900 = vmul.f32 %v1892, %v1898
    %v1901 = vmul.f32 %v1893, %v1898
    %v1902 = vmul.f32 %v1894, %v1898
    %v1903 = vmul.f32 %v1895, %v1898
    %1904 = vset.pattern.permute.xlu0 5
    %1905 = vperm.xlu0 %1904, %v1542
    %v1906 = vpop.permute.xlu0 %1905
    %v1908 = vadd.f32 %v1900, %v1906
    %v1909 = vadd.f32 %v1901, %v1906
    %v1910 = vadd.f32 %v1902, %v1906
    %v1911 = vadd.f32 %v1903, %v1906
    %v1916 = vrot.slane %v1908, 4
    %v1917 = vrot.slane %v1909, 4
    %v1918 = vrot.slane %v1910, 4
    %v1919 = vrot.slane %v1911, 4
    %vm1924 = vcmask 1043456
    %v1925 = vsel %vm1924, %v1655, %v1916
    %v1926 = vsel %vm1924, %v1656, %v1917
    %v1927 = vsel %vm1924, %v1657, %v1918
    %v1928 = vsel %vm1924, %v1658, %v1919
    %v1929 = vld [vmem:[#allocation2] sm:$0xff]
    %v1930 = vld [vmem:[#allocation2 + $0x8] sm:$0xff]
    %v1931 = vld [vmem:[#allocation2 + $0x10] sm:$0xff]
    %v1932 = vld [vmem:[#allocation2 + $0x18] sm:$0xff]
    %v1933 = vld [vmem:[#allocation2 + $0x20] sm:$0xff]
    %v1934 = vld [vmem:[#allocation2 + $0x28] sm:$0xff]
    %v1935 = vld [vmem:[#allocation2 + $0x30] sm:$0xff]
    %v1936 = vld [vmem:[#allocation2 + $0x38] sm:$0xff]
    %v1937 = vld [vmem:[#allocation2 + $0x40] sm:$0xff]
    %v1938 = vld [vmem:[#allocation2 + $0x48] sm:$0xff]
    %v1939 = vld [vmem:[#allocation2 + $0x50] sm:$0xff]
    %v1940 = vld [vmem:[#allocation2 + $0x58] sm:$0xff]
    %v1941 = vld [vmem:[#allocation2 + $0x60] sm:$0xff]
    %v1942 = vld [vmem:[#allocation2 + $0x68] sm:$0xff]
    %v1943 = vld [vmem:[#allocation2 + $0x70] sm:$0xff]
    %v1944 = vld [vmem:[#allocation2 + $0x78] sm:$0xff]
    %v1945 = vld [vmem:[#allocation2 + $0x80] sm:$0xff]
    %v1946 = vld [vmem:[#allocation2 + $0x88] sm:$0xff]
    %v1947 = vld [vmem:[#allocation2 + $0x90] sm:$0xff]
    %v1948 = vld [vmem:[#allocation2 + $0x98] sm:$0xff]
    %v1949 = vld [vmem:[#allocation2 + $0xa0] sm:$0xff]
    %v1950 = vld [vmem:[#allocation2 + $0xa8] sm:$0xff]
    %v1951 = vld [vmem:[#allocation2 + $0xb0] sm:$0xff]
    %v1952 = vld [vmem:[#allocation2 + $0xb8] sm:$0xff]
    %v1953 = vld [vmem:[#allocation2 + $0xc0] sm:$0xff]
    %v1954 = vld [vmem:[#allocation2 + $0xc8] sm:$0xff]
    %v1955 = vld [vmem:[#allocation2 + $0xd0] sm:$0xff]
    %v1956 = vld [vmem:[#allocation2 + $0xd8] sm:$0xff]
    %v1957 = vld [vmem:[#allocation2 + $0xe0] sm:$0xff]
    %v1958 = vld [vmem:[#allocation2 + $0xe8] sm:$0xff]
    %v1959 = vld [vmem:[#allocation2 + $0xf0] sm:$0xff]
    %v1960 = vld [vmem:[#allocation2 + $0xf8] sm:$0xff]
    %v1961 = vld [vmem:[#allocation2 + $0x100] sm:$0xff]
    %v1962 = vld [vmem:[#allocation2 + $0x108] sm:$0xff]
    %v1963 = vld [vmem:[#allocation2 + $0x110] sm:$0xff]
    %v1964 = vld [vmem:[#allocation2 + $0x118] sm:$0xff]
    %v1965 = vld [vmem:[#allocation2 + $0x120] sm:$0xff]
    %v1966 = vld [vmem:[#allocation2 + $0x128] sm:$0xff]
    %v1967 = vld [vmem:[#allocation2 + $0x130] sm:$0xff]
    %v1968 = vld [vmem:[#allocation2 + $0x138] sm:$0xff]
    %v1969 = vld [vmem:[#allocation2 + $0x140] sm:$0xff]
    %v1970 = vld [vmem:[#allocation2 + $0x148] sm:$0xff]
    %v1971 = vld [vmem:[#allocation2 + $0x150] sm:$0xff]
    %v1972 = vld [vmem:[#allocation2 + $0x158] sm:$0xff]
    %v1973 = vld [vmem:[#allocation2 + $0x160] sm:$0xff]
    %v1974 = vld [vmem:[#allocation2 + $0x168] sm:$0xff]
    %v1975 = vld [vmem:[#allocation2 + $0x170] sm:$0xff]
    %v1976 = vld [vmem:[#allocation2 + $0x178] sm:$0xff]
    %v1977 = vld [vmem:[#allocation2 + $0x180] sm:$0xff]
    %v1978 = vld [vmem:[#allocation2 + $0x188] sm:$0xff]
    %v1979 = vld [vmem:[#allocation2 + $0x190] sm:$0xff]
    %v1980 = vld [vmem:[#allocation2 + $0x198] sm:$0xff]
    %v1981 = vld [vmem:[#allocation2 + $0x1a0] sm:$0xff]
    %v1982 = vld [vmem:[#allocation2 + $0x1a8] sm:$0xff]
    %v1983 = vld [vmem:[#allocation2 + $0x1b0] sm:$0xff]
    %v1984 = vld [vmem:[#allocation2 + $0x1b8] sm:$0xff]
    %v1985 = vld [vmem:[#allocation2 + $0x1c0] sm:$0xff]
    %v1986 = vld [vmem:[#allocation2 + $0x1c8] sm:$0xff]
    %v1987 = vld [vmem:[#allocation2 + $0x1d0] sm:$0xff]
    %v1988 = vld [vmem:[#allocation2 + $0x1d8] sm:$0xff]
    %v1989 = vld [vmem:[#allocation2 + $0x1e0] sm:$0xff]
    %v1990 = vld [vmem:[#allocation2 + $0x1e8] sm:$0xff]
    %v1991 = vld [vmem:[#allocation2 + $0x1f0] sm:$0xff]
    %v1992 = vld [vmem:[#allocation2 + $0x1f8] sm:$0xff]
    %v1993 = vld [vmem:[#allocation2 + $0x200] sm:$0xff]
    %v1994 = vld [vmem:[#allocation2 + $0x208] sm:$0xff]
    %v1995 = vld [vmem:[#allocation2 + $0x210] sm:$0xff]
    %v1996 = vld [vmem:[#allocation2 + $0x218] sm:$0xff]
    %v1997 = vld [vmem:[#allocation2 + $0x220] sm:$0xff]
    %v1998 = vld [vmem:[#allocation2 + $0x228] sm:$0xff]
    %v1999 = vld [vmem:[#allocation2 + $0x230] sm:$0xff]
    %v2000 = vld [vmem:[#allocation2 + $0x238] sm:$0xff]
    %v2001 = vld [vmem:[#allocation2 + $0x240] sm:$0xff]
    %v2002 = vld [vmem:[#allocation2 + $0x248] sm:$0xff]
    %v2003 = vld [vmem:[#allocation2 + $0x250] sm:$0xff]
    %v2004 = vld [vmem:[#allocation2 + $0x258] sm:$0xff]
    %v2005 = vld [vmem:[#allocation2 + $0x260] sm:$0xff]
    %v2006 = vld [vmem:[#allocation2 + $0x268] sm:$0xff]
    %v2007 = vld [vmem:[#allocation2 + $0x270] sm:$0xff]
    %v2008 = vld [vmem:[#allocation2 + $0x278] sm:$0xff]
    %v2009 = vld [vmem:[#allocation2 + $0x280] sm:$0xff]
    %v2010 = vld [vmem:[#allocation2 + $0x288] sm:$0xff]
    %v2011 = vld [vmem:[#allocation2 + $0x290] sm:$0xff]
    %v2012 = vld [vmem:[#allocation2 + $0x298] sm:$0xff]
    %v2013 = vld [vmem:[#allocation2 + $0x2a0] sm:$0xff]
    %v2014 = vld [vmem:[#allocation2 + $0x2a8] sm:$0xff]
    %v2015 = vld [vmem:[#allocation2 + $0x2b0] sm:$0xff]
    %v2016 = vld [vmem:[#allocation2 + $0x2b8] sm:$0xff]
    %v2017 = vld [vmem:[#allocation2 + $0x2c0] sm:$0xff]
    %v2018 = vld [vmem:[#allocation2 + $0x2c8] sm:$0xff]
    %v2019 = vld [vmem:[#allocation2 + $0x2d0] sm:$0xff]
    %v2020 = vld [vmem:[#allocation2 + $0x2d8] sm:$0xff]
    %v2021 = vld [vmem:[#allocation2 + $0x2e0] sm:$0xff]
    %v2022 = vld [vmem:[#allocation2 + $0x2e8] sm:$0xff]
    %v2023 = vld [vmem:[#allocation2 + $0x2f0] sm:$0xff]
    %v2024 = vld [vmem:[#allocation2 + $0x2f8] sm:$0xff]
    %v2025 = vld [vmem:[#allocation2 + $0x300] sm:$0xff]
    %v2026 = vld [vmem:[#allocation2 + $0x308] sm:$0xff]
    %v2027 = vld [vmem:[#allocation2 + $0x310] sm:$0xff]
    %v2028 = vld [vmem:[#allocation2 + $0x318] sm:$0xff]
    %v2029 = vld [vmem:[#allocation2 + $0x320] sm:$0xff]
    %v2030 = vld [vmem:[#allocation2 + $0x328] sm:$0xff]
    %v2031 = vld [vmem:[#allocation2 + $0x330] sm:$0xff]
    %v2032 = vld [vmem:[#allocation2 + $0x338] sm:$0xff]
    %v2033 = vld [vmem:[#allocation2 + $0x340] sm:$0xff]
    %v2034 = vld [vmem:[#allocation2 + $0x348] sm:$0xff]
    %v2035 = vld [vmem:[#allocation2 + $0x350] sm:$0xff]
    %v2036 = vld [vmem:[#allocation2 + $0x358] sm:$0xff]
    %v2037 = vld [vmem:[#allocation2 + $0x360] sm:$0xff]
    %v2038 = vld [vmem:[#allocation2 + $0x368] sm:$0xff]
    %v2039 = vld [vmem:[#allocation2 + $0x370] sm:$0xff]
    %v2040 = vld [vmem:[#allocation2 + $0x378] sm:$0xff]
    %v2041 = vld [vmem:[#allocation2 + $0x380] sm:$0xff]
    %v2042 = vld [vmem:[#allocation2 + $0x388] sm:$0xff]
    %v2043 = vld [vmem:[#allocation2 + $0x390] sm:$0xff]
    %v2044 = vld [vmem:[#allocation2 + $0x398] sm:$0xff]
    %v2045 = vld [vmem:[#allocation2 + $0x3a0] sm:$0xff]
    %v2046 = vld [vmem:[#allocation2 + $0x3a8] sm:$0xff]
    %v2047 = vld [vmem:[#allocation2 + $0x3b0] sm:$0xff]
    %v2048 = vld [vmem:[#allocation2 + $0x3b8] sm:$0xff]
    %v2049 = vld [vmem:[#allocation2 + $0x3c0] sm:$0xff]
    %v2050 = vld [vmem:[#allocation2 + $0x3c8] sm:$0xff]
    %v2051 = vld [vmem:[#allocation2 + $0x3d0] sm:$0xff]
    %v2052 = vld [vmem:[#allocation2 + $0x3d8] sm:$0xff]
    %v2053 = vld [vmem:[#allocation2 + $0x3e0] sm:$0xff]
    %v2054 = vld [vmem:[#allocation2 + $0x3e8] sm:$0xff]
    %v2055 = vld [vmem:[#allocation2 + $0x3f0] sm:$0xff]
    %v2056 = vld [vmem:[#allocation2 + $0x3f8] sm:$0xff]
    %v2057 = vld [vmem:[#allocation2 + $0x400] sm:$0xff]
    %v2058 = vld [vmem:[#allocation2 + $0x408] sm:$0xff]
    %v2059 = vld [vmem:[#allocation2 + $0x410] sm:$0xff]
    %v2060 = vld [vmem:[#allocation2 + $0x418] sm:$0xff]
    %v2061 = vld [vmem:[#allocation2 + $0x420] sm:$0xff]
    %v2062 = vld [vmem:[#allocation2 + $0x428] sm:$0xff]
    %v2063 = vld [vmem:[#allocation2 + $0x430] sm:$0xff]
    %v2064 = vld [vmem:[#allocation2 + $0x438] sm:$0xff]
    %v2065 = vld [vmem:[#allocation2 + $0x440] sm:$0xff]
    %v2066 = vld [vmem:[#allocation2 + $0x448] sm:$0xff]
    %v2067 = vld [vmem:[#allocation2 + $0x450] sm:$0xff]
    %v2068 = vld [vmem:[#allocation2 + $0x458] sm:$0xff]
    %v2069 = vld [vmem:[#allocation2 + $0x460] sm:$0xff]
    %v2070 = vld [vmem:[#allocation2 + $0x468] sm:$0xff]
    %v2071 = vld [vmem:[#allocation2 + $0x470] sm:$0xff]
    %v2072 = vld [vmem:[#allocation2 + $0x478] sm:$0xff]
    %v2073 = vld [vmem:[#allocation2 + $0x480] sm:$0xff]
    %v2074 = vld [vmem:[#allocation2 + $0x488] sm:$0xff]
    %v2075 = vld [vmem:[#allocation2 + $0x490] sm:$0xff]
    %v2076 = vld [vmem:[#allocation2 + $0x498] sm:$0xff]
    %v2077 = vld [vmem:[#allocation2 + $0x4a0] sm:$0xff]
    %v2078 = vld [vmem:[#allocation2 + $0x4a8] sm:$0xff]
    %v2079 = vld [vmem:[#allocation2 + $0x4b0] sm:$0xff]
    %v2080 = vld [vmem:[#allocation2 + $0x4b8] sm:$0xff]
    %v2081 = vld [vmem:[#allocation2 + $0x4c0] sm:$0xff]
    %v2082 = vld [vmem:[#allocation2 + $0x4c8] sm:$0xff]
    %v2083 = vld [vmem:[#allocation2 + $0x4d0] sm:$0xff]
    %v2084 = vld [vmem:[#allocation2 + $0x4d8] sm:$0xff]
    %v2085 = vld [vmem:[#allocation2 + $0x4e0] sm:$0xff]
    %v2086 = vld [vmem:[#allocation2 + $0x4e8] sm:$0xff]
    %v2087 = vld [vmem:[#allocation2 + $0x4f0] sm:$0xff]
    %v2088 = vld [vmem:[#allocation2 + $0x4f8] sm:$0xff]
    %v2089 = vld [vmem:[#allocation2 + $0x500] sm:$0xff]
    %v2090 = vld [vmem:[#allocation2 + $0x508] sm:$0xff]
    %v2091 = vld [vmem:[#allocation2 + $0x510] sm:$0xff]
    %v2092 = vld [vmem:[#allocation2 + $0x518] sm:$0xff]
    %v2093 = vld [vmem:[#allocation2 + $0x520] sm:$0xff]
    %v2094 = vld [vmem:[#allocation2 + $0x528] sm:$0xff]
    %v2095 = vld [vmem:[#allocation2 + $0x530] sm:$0xff]
    %v2096 = vld [vmem:[#allocation2 + $0x538] sm:$0xff]
    %v2097 = vld [vmem:[#allocation2 + $0x540] sm:$0xff]
    %v2098 = vld [vmem:[#allocation2 + $0x548] sm:$0xff]
    %v2099 = vld [vmem:[#allocation2 + $0x550] sm:$0xff]
    %v2100 = vld [vmem:[#allocation2 + $0x558] sm:$0xff]
    %v2101 = vld [vmem:[#allocation2 + $0x560] sm:$0xff]
    %v2102 = vld [vmem:[#allocation2 + $0x568] sm:$0xff]
    %v2103 = vld [vmem:[#allocation2 + $0x570] sm:$0xff]
    %v2104 = vld [vmem:[#allocation2 + $0x578] sm:$0xff]
    %v2105 = vld [vmem:[#allocation2 + $0x580] sm:$0xff]
    %v2106 = vld [vmem:[#allocation2 + $0x588] sm:$0xff]
    %v2107 = vld [vmem:[#allocation2 + $0x590] sm:$0xff]
    %v2108 = vld [vmem:[#allocation2 + $0x598] sm:$0xff]
    %v2109 = vld [vmem:[#allocation2 + $0x5a0] sm:$0xff]
    %v2110 = vld [vmem:[#allocation2 + $0x5a8] sm:$0xff]
    %v2111 = vld [vmem:[#allocation2 + $0x5b0] sm:$0xff]
    %v2112 = vld [vmem:[#allocation2 + $0x5b8] sm:$0xff]
    %v2113 = vld [vmem:[#allocation2 + $0x5c0] sm:$0xff]
    %v2114 = vld [vmem:[#allocation2 + $0x5c8] sm:$0xff]
    %v2115 = vld [vmem:[#allocation2 + $0x5d0] sm:$0xff]
    %v2116 = vld [vmem:[#allocation2 + $0x5d8] sm:$0xff]
    %v2117 = vld [vmem:[#allocation2 + $0x5e0] sm:$0xff]
    %v2118 = vld [vmem:[#allocation2 + $0x5e8] sm:$0xff]
    %v2119 = vld [vmem:[#allocation2 + $0x5f0] sm:$0xff]
    %v2120 = vld [vmem:[#allocation2 + $0x5f8] sm:$0xff]
    %v2121 = vld [vmem:[#allocation2 + $0x600] sm:$0xff]
    %v2122 = vld [vmem:[#allocation2 + $0x608] sm:$0xff]
    %v2123 = vld [vmem:[#allocation2 + $0x610] sm:$0xff]
    %v2124 = vld [vmem:[#allocation2 + $0x618] sm:$0xff]
    %v2125 = vld [vmem:[#allocation2 + $0x620] sm:$0xff]
    %v2126 = vld [vmem:[#allocation2 + $0x628] sm:$0xff]
    %v2127 = vld [vmem:[#allocation2 + $0x630] sm:$0xff]
    %v2128 = vld [vmem:[#allocation2 + $0x638] sm:$0xff]
    %v2129 = vld [vmem:[#allocation2 + $0x640] sm:$0xff]
    %v2130 = vld [vmem:[#allocation2 + $0x648] sm:$0xff]
    %v2131 = vld [vmem:[#allocation2 + $0x650] sm:$0xff]
    %v2132 = vld [vmem:[#allocation2 + $0x658] sm:$0xff]
    %v2133 = vld [vmem:[#allocation2 + $0x660] sm:$0xff]
    %v2134 = vld [vmem:[#allocation2 + $0x668] sm:$0xff]
    %v2135 = vld [vmem:[#allocation2 + $0x670] sm:$0xff]
    %v2136 = vld [vmem:[#allocation2 + $0x678] sm:$0xff]
    %v2137 = vld [vmem:[#allocation2 + $0x680] sm:$0xff]
    %v2138 = vld [vmem:[#allocation2 + $0x688] sm:$0xff]
    %v2139 = vld [vmem:[#allocation2 + $0x690] sm:$0xff]
    %v2140 = vld [vmem:[#allocation2 + $0x698] sm:$0xff]
    %v2141 = vld [vmem:[#allocation2 + $0x6a0] sm:$0xff]
    %v2142 = vld [vmem:[#allocation2 + $0x6a8] sm:$0xff]
    %v2143 = vld [vmem:[#allocation2 + $0x6b0] sm:$0xff]
    %v2144 = vld [vmem:[#allocation2 + $0x6b8] sm:$0xff]
    %v2145 = vld [vmem:[#allocation2 + $0x6c0] sm:$0xff]
    %v2146 = vld [vmem:[#allocation2 + $0x6c8] sm:$0xff]
    %v2147 = vld [vmem:[#allocation2 + $0x6d0] sm:$0xff]
    %v2148 = vld [vmem:[#allocation2 + $0x6d8] sm:$0xff]
    %v2149 = vld [vmem:[#allocation2 + $0x6e0] sm:$0xff]
    %v2150 = vld [vmem:[#allocation2 + $0x6e8] sm:$0xff]
    %v2151 = vld [vmem:[#allocation2 + $0x6f0] sm:$0xff]
    %v2152 = vld [vmem:[#allocation2 + $0x6f8] sm:$0xff]
    %v2153 = vld [vmem:[#allocation2 + $0x700] sm:$0xff]
    %v2154 = vld [vmem:[#allocation2 + $0x708] sm:$0xff]
    %v2155 = vld [vmem:[#allocation2 + $0x710] sm:$0xff]
    %v2156 = vld [vmem:[#allocation2 + $0x718] sm:$0xff]
    %v2157 = vld [vmem:[#allocation2 + $0x720] sm:$0xff]
    %v2158 = vld [vmem:[#allocation2 + $0x728] sm:$0xff]
    %v2159 = vld [vmem:[#allocation2 + $0x730] sm:$0xff]
    %v2160 = vld [vmem:[#allocation2 + $0x738] sm:$0xff]
    %v2161 = vld [vmem:[#allocation2 + $0x740] sm:$0xff]
    %v2162 = vld [vmem:[#allocation2 + $0x748] sm:$0xff]
    %v2163 = vld [vmem:[#allocation2 + $0x750] sm:$0xff]
    %v2164 = vld [vmem:[#allocation2 + $0x758] sm:$0xff]
    %v2165 = vld [vmem:[#allocation2 + $0x760] sm:$0xff]
    %v2166 = vld [vmem:[#allocation2 + $0x768] sm:$0xff]
    %v2167 = vld [vmem:[#allocation2 + $0x770] sm:$0xff]
    %v2168 = vld [vmem:[#allocation2 + $0x778] sm:$0xff]
    %v2169 = vld [vmem:[#allocation2 + $0x780] sm:$0xff]
    %v2170 = vld [vmem:[#allocation2 + $0x788] sm:$0xff]
    %v2171 = vld [vmem:[#allocation2 + $0x790] sm:$0xff]
    %v2172 = vld [vmem:[#allocation2 + $0x798] sm:$0xff]
    %v2173 = vld [vmem:[#allocation2 + $0x7a0] sm:$0xff]
    %v2174 = vld [vmem:[#allocation2 + $0x7a8] sm:$0xff]
    %v2175 = vld [vmem:[#allocation2 + $0x7b0] sm:$0xff]
    %v2176 = vld [vmem:[#allocation2 + $0x7b8] sm:$0xff]
    %v2177 = vld [vmem:[#allocation2 + $0x7c0] sm:$0xff]
    %v2178 = vld [vmem:[#allocation2 + $0x7c8] sm:$0xff]
    %v2179 = vld [vmem:[#allocation2 + $0x7d0] sm:$0xff]
    %v2180 = vld [vmem:[#allocation2 + $0x7d8] sm:$0xff]
    %v2181 = vld [vmem:[#allocation2 + $0x7e0] sm:$0xff]
    %v2182 = vld [vmem:[#allocation2 + $0x7e8] sm:$0xff]
    %v2183 = vld [vmem:[#allocation2 + $0x7f0] sm:$0xff]
    %v2184 = vld [vmem:[#allocation2 + $0x7f8] sm:$0xff]
    %2185 = vmatpush.msra.mxu0 %v2049
    %2186 = vmatpush.msra.mxu0 %v2041
    %2187 = vmatpush.msra.mxu0 %v2033
    %2188 = vmatpush.msra.mxu0 %v2025
    %2189 = vmatpush.msra.mxu0 %v2017
    %2190 = vmatpush.msra.mxu0 %v2009
    %2191 = vmatpush.msra.mxu0 %v2001
    %2192 = vmatpush.msra.mxu0 %v1993
    %2193 = vmatpush.msra.mxu0 %v1985
    %2194 = vmatpush.msra.mxu0 %v1977
    %2195 = vmatpush.msra.mxu0 %v1969
    %2196 = vmatpush.msra.mxu0 %v1961
    %2197 = vmatpush.msra.mxu0 %v1953
    %2198 = vmatpush.msra.mxu0 %v1945
    %2199 = vmatpush.msra.mxu0 %v1937
    %2200 = vmatpush.msra.mxu0 %v1929
    %2201 = vmatmul.f32.gmra.mxu0 %v1925
    %v2202 = vpop.f32.mrf.mxu0
    %v2203 = vadd.f32 0.0, %v2202
    %2204 = vdwg.mxu0
    %2205 = vmatpush.msra.mxu0 %v2177
    %2206 = vmatpush.msra.mxu0 %v2169
    %2207 = vmatpush.msra.mxu0 %v2161
    %2208 = vmatpush.msra.mxu0 %v2153
    %2209 = vmatpush.msra.mxu0 %v2145
    %2210 = vmatpush.msra.mxu0 %v2137
    %2211 = vmatpush.msra.mxu0 %v2129
    %2212 = vmatpush.msra.mxu0 %v2121
    %2213 = vmatpush.msra.mxu0 %v2113
    %2214 = vmatpush.msra.mxu0 %v2105
    %2215 = vmatpush.msra.mxu0 %v2097
    %2216 = vmatpush.msra.mxu0 %v2089
    %2217 = vmatpush.msra.mxu0 %v2081
    %2218 = vmatpush.msra.mxu0 %v2073
    %2219 = vmatpush.msra.mxu0 %v2065
    %2220 = vmatpush.msra.mxu0 %v2057
    %2221 = vmatmul.f32.gmra.mxu0 %v1926
    %v2222 = vpop.f32.mrf.mxu0
    %v2223 = vadd.f32 %v2203, %v2222
    %2224 = vdwg.mxu0
    %2225 = vmatpush.msra.mxu0 %v2050
    %2226 = vmatpush.msra.mxu0 %v2042
    %2227 = vmatpush.msra.mxu0 %v2034
    %2228 = vmatpush.msra.mxu0 %v2026
    %2229 = vmatpush.msra.mxu0 %v2018
    %2230 = vmatpush.msra.mxu0 %v2010
    %2231 = vmatpush.msra.mxu0 %v2002
    %2232 = vmatpush.msra.mxu0 %v1994
    %2233 = vmatpush.msra.mxu0 %v1986
    %2234 = vmatpush.msra.mxu0 %v1978
    %2235 = vmatpush.msra.mxu0 %v1970
    %2236 = vmatpush.msra.mxu0 %v1962
    %2237 = vmatpush.msra.mxu0 %v1954
    %2238 = vmatpush.msra.mxu0 %v1946
    %2239 = vmatpush.msra.mxu0 %v1938
    %2240 = vmatpush.msra.mxu0 %v1930
    %2241 = vmatmul.f32.gmra.mxu0 %v1925
    %v2242 = vpop.f32.mrf.mxu0
    %v2243 = vadd.f32 0.0, %v2242
    %2244 = vdwg.mxu0
    %2245 = vmatpush.msra.mxu0 %v2178
    %2246 = vmatpush.msra.mxu0 %v2170
    %2247 = vmatpush.msra.mxu0 %v2162
    %2248 = vmatpush.msra.mxu0 %v2154
    %2249 = vmatpush.msra.mxu0 %v2146
    %2250 = vmatpush.msra.mxu0 %v2138
    %2251 = vmatpush.msra.mxu0 %v2130
    %2252 = vmatpush.msra.mxu0 %v2122
    %2253 = vmatpush.msra.mxu0 %v2114
    %2254 = vmatpush.msra.mxu0 %v2106
    %2255 = vmatpush.msra.mxu0 %v2098
    %2256 = vmatpush.msra.mxu0 %v2090
    %2257 = vmatpush.msra.mxu0 %v2082
    %2258 = vmatpush.msra.mxu0 %v2074
    %2259 = vmatpush.msra.mxu0 %v2066
    %2260 = vmatpush.msra.mxu0 %v2058
    %2261 = vmatmul.f32.gmra.mxu0 %v1926
    %v2262 = vpop.f32.mrf.mxu0
    %v2263 = vadd.f32 %v2243, %v2262
    %2264 = vdwg.mxu0
    %2265 = vmatpush.msra.mxu0 %v2051
    %2266 = vmatpush.msra.mxu0 %v2043
    %2267 = vmatpush.msra.mxu0 %v2035
    %2268 = vmatpush.msra.mxu0 %v2027
    %2269 = vmatpush.msra.mxu0 %v2019
    %2270 = vmatpush.msra.mxu0 %v2011
    %2271 = vmatpush.msra.mxu0 %v2003
    %2272 = vmatpush.msra.mxu0 %v1995
    %2273 = vmatpush.msra.mxu0 %v1987
    %2274 = vmatpush.msra.mxu0 %v1979
    %2275 = vmatpush.msra.mxu0 %v1971
    %2276 = vmatpush.msra.mxu0 %v1963
    %2277 = vmatpush.msra.mxu0 %v1955
    %2278 = vmatpush.msra.mxu0 %v1947
    %2279 = vmatpush.msra.mxu0 %v1939
    %2280 = vmatpush.msra.mxu0 %v1931
    %2281 = vmatmul.f32.gmra.mxu0 %v1925
    %v2282 = vpop.f32.mrf.mxu0
    %v2283 = vadd.f32 0.0, %v2282
    %2284 = vdwg.mxu0
    %2285 = vmatpush.msra.mxu0 %v2179
    %2286 = vmatpush.msra.mxu0 %v2171
    %2287 = vmatpush.msra.mxu0 %v2163
    %2288 = vmatpush.msra.mxu0 %v2155
    %2289 = vmatpush.msra.mxu0 %v2147
    %2290 = vmatpush.msra.mxu0 %v2139
    %2291 = vmatpush.msra.mxu0 %v2131
    %2292 = vmatpush.msra.mxu0 %v2123
    %2293 = vmatpush.msra.mxu0 %v2115
    %2294 = vmatpush.msra.mxu0 %v2107
    %2295 = vmatpush.msra.mxu0 %v2099
    %2296 = vmatpush.msra.mxu0 %v2091
    %2297 = vmatpush.msra.mxu0 %v2083
    %2298 = vmatpush.msra.mxu0 %v2075
    %2299 = vmatpush.msra.mxu0 %v2067
    %2300 = vmatpush.msra.mxu0 %v2059
    %2301 = vmatmul.f32.gmra.mxu0 %v1926
    %v2302 = vpop.f32.mrf.mxu0
    %v2303 = vadd.f32 %v2283, %v2302
    %2304 = vdwg.mxu0
    %2305 = vmatpush.msra.mxu0 %v2052
    %2306 = vmatpush.msra.mxu0 %v2044
    %2307 = vmatpush.msra.mxu0 %v2036
    %2308 = vmatpush.msra.mxu0 %v2028
    %2309 = vmatpush.msra.mxu0 %v2020
    %2310 = vmatpush.msra.mxu0 %v2012
    %2311 = vmatpush.msra.mxu0 %v2004
    %2312 = vmatpush.msra.mxu0 %v1996
    %2313 = vmatpush.msra.mxu0 %v1988
    %2314 = vmatpush.msra.mxu0 %v1980
    %2315 = vmatpush.msra.mxu0 %v1972
    %2316 = vmatpush.msra.mxu0 %v1964
    %2317 = vmatpush.msra.mxu0 %v1956
    %2318 = vmatpush.msra.mxu0 %v1948
    %2319 = vmatpush.msra.mxu0 %v1940
    %2320 = vmatpush.msra.mxu0 %v1932
    %2321 = vmatmul.f32.gmra.mxu0 %v1925
    %v2322 = vpop.f32.mrf.mxu0
    %v2323 = vadd.f32 0.0, %v2322
    %2324 = vdwg.mxu0
    %2325 = vmatpush.msra.mxu0 %v2180
    %2326 = vmatpush.msra.mxu0 %v2172
    %2327 = vmatpush.msra.mxu0 %v2164
    %2328 = vmatpush.msra.mxu0 %v2156
    %2329 = vmatpush.msra.mxu0 %v2148
    %2330 = vmatpush.msra.mxu0 %v2140
    %2331 = vmatpush.msra.mxu0 %v2132
    %2332 = vmatpush.msra.mxu0 %v2124
    %2333 = vmatpush.msra.mxu0 %v2116
    %2334 = vmatpush.msra.mxu0 %v2108
    %2335 = vmatpush.msra.mxu0 %v2100
    %2336 = vmatpush.msra.mxu0 %v2092
    %2337 = vmatpush.msra.mxu0 %v2084
    %2338 = vmatpush.msra.mxu0 %v2076
    %2339 = vmatpush.msra.mxu0 %v2068
    %2340 = vmatpush.msra.mxu0 %v2060
    %2341 = vmatmul.f32.gmra.mxu0 %v1926
    %v2342 = vpop.f32.mrf.mxu0
    %v2343 = vadd.f32 %v2323, %v2342
    %2344 = vdwg.mxu0
    %2345 = vmatpush.msra.mxu0 %v2053
    %2346 = vmatpush.msra.mxu0 %v2045
    %2347 = vmatpush.msra.mxu0 %v2037
    %2348 = vmatpush.msra.mxu0 %v2029
    %2349 = vmatpush.msra.mxu0 %v2021
    %2350 = vmatpush.msra.mxu0 %v2013
    %2351 = vmatpush.msra.mxu0 %v2005
    %2352 = vmatpush.msra.mxu0 %v1997
    %2353 = vmatpush.msra.mxu0 %v1989
    %2354 = vmatpush.msra.mxu0 %v1981
    %2355 = vmatpush.msra.mxu0 %v1973
    %2356 = vmatpush.msra.mxu0 %v1965
    %2357 = vmatpush.msra.mxu0 %v1957
    %2358 = vmatpush.msra.mxu0 %v1949
    %2359 = vmatpush.msra.mxu0 %v1941
    %2360 = vmatpush.msra.mxu0 %v1933
    %2361 = vmatmul.f32.gmra.mxu0 %v1925
    %v2362 = vpop.f32.mrf.mxu0
    %v2363 = vadd.f32 0.0, %v2362
    %2364 = vdwg.mxu0
    %2365 = vmatpush.msra.mxu0 %v2181
    %2366 = vmatpush.msra.mxu0 %v2173
    %2367 = vmatpush.msra.mxu0 %v2165
    %2368 = vmatpush.msra.mxu0 %v2157
    %2369 = vmatpush.msra.mxu0 %v2149
    %2370 = vmatpush.msra.mxu0 %v2141
    %2371 = vmatpush.msra.mxu0 %v2133
    %2372 = vmatpush.msra.mxu0 %v2125
    %2373 = vmatpush.msra.mxu0 %v2117
    %2374 = vmatpush.msra.mxu0 %v2109
    %2375 = vmatpush.msra.mxu0 %v2101
    %2376 = vmatpush.msra.mxu0 %v2093
    %2377 = vmatpush.msra.mxu0 %v2085
    %2378 = vmatpush.msra.mxu0 %v2077
    %2379 = vmatpush.msra.mxu0 %v2069
    %2380 = vmatpush.msra.mxu0 %v2061
    %2381 = vmatmul.f32.gmra.mxu0 %v1926
    %v2382 = vpop.f32.mrf.mxu0
    %v2383 = vadd.f32 %v2363, %v2382
    %2384 = vdwg.mxu0
    %2385 = vmatpush.msra.mxu0 %v2054
    %2386 = vmatpush.msra.mxu0 %v2046
    %2387 = vmatpush.msra.mxu0 %v2038
    %2388 = vmatpush.msra.mxu0 %v2030
    %2389 = vmatpush.msra.mxu0 %v2022
    %2390 = vmatpush.msra.mxu0 %v2014
    %2391 = vmatpush.msra.mxu0 %v2006
    %2392 = vmatpush.msra.mxu0 %v1998
    %2393 = vmatpush.msra.mxu0 %v1990
    %2394 = vmatpush.msra.mxu0 %v1982
    %2395 = vmatpush.msra.mxu0 %v1974
    %2396 = vmatpush.msra.mxu0 %v1966
    %2397 = vmatpush.msra.mxu0 %v1958
    %2398 = vmatpush.msra.mxu0 %v1950
    %2399 = vmatpush.msra.mxu0 %v1942
    %2400 = vmatpush.msra.mxu0 %v1934
    %2401 = vmatmul.f32.gmra.mxu0 %v1925
    %v2402 = vpop.f32.mrf.mxu0
    %v2403 = vadd.f32 0.0, %v2402
    %2404 = vdwg.mxu0
    %2405 = vmatpush.msra.mxu0 %v2182
    %2406 = vmatpush.msra.mxu0 %v2174
    %2407 = vmatpush.msra.mxu0 %v2166
    %2408 = vmatpush.msra.mxu0 %v2158
    %2409 = vmatpush.msra.mxu0 %v2150
    %2410 = vmatpush.msra.mxu0 %v2142
    %2411 = vmatpush.msra.mxu0 %v2134
    %2412 = vmatpush.msra.mxu0 %v2126
    %2413 = vmatpush.msra.mxu0 %v2118
    %2414 = vmatpush.msra.mxu0 %v2110
    %2415 = vmatpush.msra.mxu0 %v2102
    %2416 = vmatpush.msra.mxu0 %v2094
    %2417 = vmatpush.msra.mxu0 %v2086
    %2418 = vmatpush.msra.mxu0 %v2078
    %2419 = vmatpush.msra.mxu0 %v2070
    %2420 = vmatpush.msra.mxu0 %v2062
    %2421 = vmatmul.f32.gmra.mxu0 %v1926
    %v2422 = vpop.f32.mrf.mxu0
    %v2423 = vadd.f32 %v2403, %v2422
    %2424 = vdwg.mxu0
    %2425 = vmatpush.msra.mxu0 %v2055
    %2426 = vmatpush.msra.mxu0 %v2047
    %2427 = vmatpush.msra.mxu0 %v2039
    %2428 = vmatpush.msra.mxu0 %v2031
    %2429 = vmatpush.msra.mxu0 %v2023
    %2430 = vmatpush.msra.mxu0 %v2015
    %2431 = vmatpush.msra.mxu0 %v2007
    %2432 = vmatpush.msra.mxu0 %v1999
    %2433 = vmatpush.msra.mxu0 %v1991
    %2434 = vmatpush.msra.mxu0 %v1983
    %2435 = vmatpush.msra.mxu0 %v1975
    %2436 = vmatpush.msra.mxu0 %v1967
    %2437 = vmatpush.msra.mxu0 %v1959
    %2438 = vmatpush.msra.mxu0 %v1951
    %2439 = vmatpush.msra.mxu0 %v1943
    %2440 = vmatpush.msra.mxu0 %v1935
    %2441 = vmatmul.f32.gmra.mxu0 %v1925
    %v2442 = vpop.f32.mrf.mxu0
    %v2443 = vadd.f32 0.0, %v2442
    %2444 = vdwg.mxu0
    %2445 = vmatpush.msra.mxu0 %v2183
    %2446 = vmatpush.msra.mxu0 %v2175
    %2447 = vmatpush.msra.mxu0 %v2167
    %2448 = vmatpush.msra.mxu0 %v2159
    %2449 = vmatpush.msra.mxu0 %v2151
    %2450 = vmatpush.msra.mxu0 %v2143
    %2451 = vmatpush.msra.mxu0 %v2135
    %2452 = vmatpush.msra.mxu0 %v2127
    %2453 = vmatpush.msra.mxu0 %v2119
    %2454 = vmatpush.msra.mxu0 %v2111
    %2455 = vmatpush.msra.mxu0 %v2103
    %2456 = vmatpush.msra.mxu0 %v2095
    %2457 = vmatpush.msra.mxu0 %v2087
    %2458 = vmatpush.msra.mxu0 %v2079
    %2459 = vmatpush.msra.mxu0 %v2071
    %2460 = vmatpush.msra.mxu0 %v2063
    %2461 = vmatmul.f32.gmra.mxu0 %v1926
    %v2462 = vpop.f32.mrf.mxu0
    %v2463 = vadd.f32 %v2443, %v2462
    %2464 = vdwg.mxu0
    %2465 = vmatpush.msra.mxu0 %v2056
    %2466 = vmatpush.msra.mxu0 %v2048
    %2467 = vmatpush.msra.mxu0 %v2040
    %2468 = vmatpush.msra.mxu0 %v2032
    %2469 = vmatpush.msra.mxu0 %v2024
    %2470 = vmatpush.msra.mxu0 %v2016
    %2471 = vmatpush.msra.mxu0 %v2008
    %2472 = vmatpush.msra.mxu0 %v2000
    %2473 = vmatpush.msra.mxu0 %v1992
    %2474 = vmatpush.msra.mxu0 %v1984
    %2475 = vmatpush.msra.mxu0 %v1976
    %2476 = vmatpush.msra.mxu0 %v1968
    %2477 = vmatpush.msra.mxu0 %v1960
    %2478 = vmatpush.msra.mxu0 %v1952
    %2479 = vmatpush.msra.mxu0 %v1944
    %2480 = vmatpush.msra.mxu0 %v1936
    %2481 = vmatmul.f32.gmra.mxu0 %v1925
    %v2482 = vpop.f32.mrf.mxu0
    %v2483 = vadd.f32 0.0, %v2482
    %2484 = vdwg.mxu0
    %2485 = vmatpush.msra.mxu0 %v2184
    %2486 = vmatpush.msra.mxu0 %v2176
    %2487 = vmatpush.msra.mxu0 %v2168
    %2488 = vmatpush.msra.mxu0 %v2160
    %2489 = vmatpush.msra.mxu0 %v2152
    %2490 = vmatpush.msra.mxu0 %v2144
    %2491 = vmatpush.msra.mxu0 %v2136
    %2492 = vmatpush.msra.mxu0 %v2128
    %2493 = vmatpush.msra.mxu0 %v2120
    %2494 = vmatpush.msra.mxu0 %v2112
    %2495 = vmatpush.msra.mxu0 %v2104
    %2496 = vmatpush.msra.mxu0 %v2096
    %2497 = vmatpush.msra.mxu0 %v2088
    %2498 = vmatpush.msra.mxu0 %v2080
    %2499 = vmatpush.msra.mxu0 %v2072
    %2500 = vmatpush.msra.mxu0 %v2064
    %2501 = vmatmul.f32.gmra.mxu0 %v1926
    %v2502 = vpop.f32.mrf.mxu0
    %v2503 = vadd.f32 %v2483, %v2502
    %2504 = vdwg.mxu0
    %2505 = vst [vmem:[%s55] sm:$0xff] %v2223
    %2506 = vst [vmem:[%s55 + $0x8] sm:$0xff] %v2263
    %2507 = vst [vmem:[%s55 + $0x10] sm:$0xff] %v2303
    %2508 = vst [vmem:[%s55 + $0x18] sm:$0xff] %v2343
    %2509 = vst [vmem:[%s55 + $0x20] sm:$0xff] %v2383
    %2510 = vst [vmem:[%s55 + $0x28] sm:$0xff] %v2423
    %2511 = vst [vmem:[%s55 + $0x30] sm:$0xff] %v2463
    %2512 = vst [vmem:[%s55 + $0x38] sm:$0xff] %v2503
    %2513 = vmatpush.msra.mxu0 %v2049
    %2514 = vmatpush.msra.mxu0 %v2041
    %2515 = vmatpush.msra.mxu0 %v2033
    %2516 = vmatpush.msra.mxu0 %v2025
    %2517 = vmatpush.msra.mxu0 %v2017
    %2518 = vmatpush.msra.mxu0 %v2009
    %2519 = vmatpush.msra.mxu0 %v2001
    %2520 = vmatpush.msra.mxu0 %v1993
    %2521 = vmatpush.msra.mxu0 %v1985
    %2522 = vmatpush.msra.mxu0 %v1977
    %2523 = vmatpush.msra.mxu0 %v1969
    %2524 = vmatpush.msra.mxu0 %v1961
    %2525 = vmatpush.msra.mxu0 %v1953
    %2526 = vmatpush.msra.mxu0 %v1945
    %2527 = vmatpush.msra.mxu0 %v1937
    %2528 = vmatpush.msra.mxu0 %v1929
    %2529 = vmatmul.f32.gmra.mxu0 %v1927
    %v2530 = vpop.f32.mrf.mxu0
    %v2531 = vadd.f32 0.0, %v2530
    %2532 = vdwg.mxu0
    %2533 = vmatpush.msra.mxu0 %v2177
    %2534 = vmatpush.msra.mxu0 %v2169
    %2535 = vmatpush.msra.mxu0 %v2161
    %2536 = vmatpush.msra.mxu0 %v2153
    %2537 = vmatpush.msra.mxu0 %v2145
    %2538 = vmatpush.msra.mxu0 %v2137
    %2539 = vmatpush.msra.mxu0 %v2129
    %2540 = vmatpush.msra.mxu0 %v2121
    %2541 = vmatpush.msra.mxu0 %v2113
    %2542 = vmatpush.msra.mxu0 %v2105
    %2543 = vmatpush.msra.mxu0 %v2097
    %2544 = vmatpush.msra.mxu0 %v2089
    %2545 = vmatpush.msra.mxu0 %v2081
    %2546 = vmatpush.msra.mxu0 %v2073
    %2547 = vmatpush.msra.mxu0 %v2065
    %2548 = vmatpush.msra.mxu0 %v2057
    %2549 = vmatmul.f32.gmra.mxu0 %v1928
    %v2550 = vpop.f32.mrf.mxu0
    %v2551 = vadd.f32 %v2531, %v2550
    %2552 = vdwg.mxu0
    %2553 = vmatpush.msra.mxu0 %v2050
    %2554 = vmatpush.msra.mxu0 %v2042
    %2555 = vmatpush.msra.mxu0 %v2034
    %2556 = vmatpush.msra.mxu0 %v2026
    %2557 = vmatpush.msra.mxu0 %v2018
    %2558 = vmatpush.msra.mxu0 %v2010
    %2559 = vmatpush.msra.mxu0 %v2002
    %2560 = vmatpush.msra.mxu0 %v1994
    %2561 = vmatpush.msra.mxu0 %v1986
    %2562 = vmatpush.msra.mxu0 %v1978
    %2563 = vmatpush.msra.mxu0 %v1970
    %2564 = vmatpush.msra.mxu0 %v1962
    %2565 = vmatpush.msra.mxu0 %v1954
    %2566 = vmatpush.msra.mxu0 %v1946
    %2567 = vmatpush.msra.mxu0 %v1938
    %2568 = vmatpush.msra.mxu0 %v1930
    %2569 = vmatmul.f32.gmra.mxu0 %v1927
    %v2570 = vpop.f32.mrf.mxu0
    %v2571 = vadd.f32 0.0, %v2570
    %2572 = vdwg.mxu0
    %2573 = vmatpush.msra.mxu0 %v2178
    %2574 = vmatpush.msra.mxu0 %v2170
    %2575 = vmatpush.msra.mxu0 %v2162
    %2576 = vmatpush.msra.mxu0 %v2154
    %2577 = vmatpush.msra.mxu0 %v2146
    %2578 = vmatpush.msra.mxu0 %v2138
    %2579 = vmatpush.msra.mxu0 %v2130
    %2580 = vmatpush.msra.mxu0 %v2122
    %2581 = vmatpush.msra.mxu0 %v2114
    %2582 = vmatpush.msra.mxu0 %v2106
    %2583 = vmatpush.msra.mxu0 %v2098
    %2584 = vmatpush.msra.mxu0 %v2090
    %2585 = vmatpush.msra.mxu0 %v2082
    %2586 = vmatpush.msra.mxu0 %v2074
    %2587 = vmatpush.msra.mxu0 %v2066
    %2588 = vmatpush.msra.mxu0 %v2058
    %2589 = vmatmul.f32.gmra.mxu0 %v1928
    %v2590 = vpop.f32.mrf.mxu0
    %v2591 = vadd.f32 %v2571, %v2590
    %2592 = vdwg.mxu0
    %2593 = vmatpush.msra.mxu0 %v2051
    %2594 = vmatpush.msra.mxu0 %v2043
    %2595 = vmatpush.msra.mxu0 %v2035
    %2596 = vmatpush.msra.mxu0 %v2027
    %2597 = vmatpush.msra.mxu0 %v2019
    %2598 = vmatpush.msra.mxu0 %v2011
    %2599 = vmatpush.msra.mxu0 %v2003
    %2600 = vmatpush.msra.mxu0 %v1995
    %2601 = vmatpush.msra.mxu0 %v1987
    %2602 = vmatpush.msra.mxu0 %v1979
    %2603 = vmatpush.msra.mxu0 %v1971
    %2604 = vmatpush.msra.mxu0 %v1963
    %2605 = vmatpush.msra.mxu0 %v1955
    %2606 = vmatpush.msra.mxu0 %v1947
    %2607 = vmatpush.msra.mxu0 %v1939
    %2608 = vmatpush.msra.mxu0 %v1931
    %2609 = vmatmul.f32.gmra.mxu0 %v1927
    %v2610 = vpop.f32.mrf.mxu0
    %v2611 = vadd.f32 0.0, %v2610
    %2612 = vdwg.mxu0
    %2613 = vmatpush.msra.mxu0 %v2179
    %2614 = vmatpush.msra.mxu0 %v2171
    %2615 = vmatpush.msra.mxu0 %v2163
    %2616 = vmatpush.msra.mxu0 %v2155
    %2617 = vmatpush.msra.mxu0 %v2147
    %2618 = vmatpush.msra.mxu0 %v2139
    %2619 = vmatpush.msra.mxu0 %v2131
    %2620 = vmatpush.msra.mxu0 %v2123
    %2621 = vmatpush.msra.mxu0 %v2115
    %2622 = vmatpush.msra.mxu0 %v2107
    %2623 = vmatpush.msra.mxu0 %v2099
    %2624 = vmatpush.msra.mxu0 %v2091
    %2625 = vmatpush.msra.mxu0 %v2083
    %2626 = vmatpush.msra.mxu0 %v2075
    %2627 = vmatpush.msra.mxu0 %v2067
    %2628 = vmatpush.msra.mxu0 %v2059
    %2629 = vmatmul.f32.gmra.mxu0 %v1928
    %v2630 = vpop.f32.mrf.mxu0
    %v2631 = vadd.f32 %v2611, %v2630
    %2632 = vdwg.mxu0
    %2633 = vmatpush.msra.mxu0 %v2052
    %2634 = vmatpush.msra.mxu0 %v2044
    %2635 = vmatpush.msra.mxu0 %v2036
    %2636 = vmatpush.msra.mxu0 %v2028
    %2637 = vmatpush.msra.mxu0 %v2020
    %2638 = vmatpush.msra.mxu0 %v2012
    %2639 = vmatpush.msra.mxu0 %v2004
    %2640 = vmatpush.msra.mxu0 %v1996
    %2641 = vmatpush.msra.mxu0 %v1988
    %2642 = vmatpush.msra.mxu0 %v1980
    %2643 = vmatpush.msra.mxu0 %v1972
    %2644 = vmatpush.msra.mxu0 %v1964
    %2645 = vmatpush.msra.mxu0 %v1956
    %2646 = vmatpush.msra.mxu0 %v1948
    %2647 = vmatpush.msra.mxu0 %v1940
    %2648 = vmatpush.msra.mxu0 %v1932
    %2649 = vmatmul.f32.gmra.mxu0 %v1927
    %v2650 = vpop.f32.mrf.mxu0
    %v2651 = vadd.f32 0.0, %v2650
    %2652 = vdwg.mxu0
    %2653 = vmatpush.msra.mxu0 %v2180
    %2654 = vmatpush.msra.mxu0 %v2172
    %2655 = vmatpush.msra.mxu0 %v2164
    %2656 = vmatpush.msra.mxu0 %v2156
    %2657 = vmatpush.msra.mxu0 %v2148
    %2658 = vmatpush.msra.mxu0 %v2140
    %2659 = vmatpush.msra.mxu0 %v2132
    %2660 = vmatpush.msra.mxu0 %v2124
    %2661 = vmatpush.msra.mxu0 %v2116
    %2662 = vmatpush.msra.mxu0 %v2108
    %2663 = vmatpush.msra.mxu0 %v2100
    %2664 = vmatpush.msra.mxu0 %v2092
    %2665 = vmatpush.msra.mxu0 %v2084
    %2666 = vmatpush.msra.mxu0 %v2076
    %2667 = vmatpush.msra.mxu0 %v2068
    %2668 = vmatpush.msra.mxu0 %v2060
    %2669 = vmatmul.f32.gmra.mxu0 %v1928
    %v2670 = vpop.f32.mrf.mxu0
    %v2671 = vadd.f32 %v2651, %v2670
    %2672 = vdwg.mxu0
    %2673 = vmatpush.msra.mxu0 %v2053
    %2674 = vmatpush.msra.mxu0 %v2045
    %2675 = vmatpush.msra.mxu0 %v2037
    %2676 = vmatpush.msra.mxu0 %v2029
    %2677 = vmatpush.msra.mxu0 %v2021
    %2678 = vmatpush.msra.mxu0 %v2013
    %2679 = vmatpush.msra.mxu0 %v2005
    %2680 = vmatpush.msra.mxu0 %v1997
    %2681 = vmatpush.msra.mxu0 %v1989
    %2682 = vmatpush.msra.mxu0 %v1981
    %2683 = vmatpush.msra.mxu0 %v1973
    %2684 = vmatpush.msra.mxu0 %v1965
    %2685 = vmatpush.msra.mxu0 %v1957
    %2686 = vmatpush.msra.mxu0 %v1949
    %2687 = vmatpush.msra.mxu0 %v1941
    %2688 = vmatpush.msra.mxu0 %v1933
    %2689 = vmatmul.f32.gmra.mxu0 %v1927
    %v2690 = vpop.f32.mrf.mxu0
    %v2691 = vadd.f32 0.0, %v2690
    %2692 = vdwg.mxu0
    %2693 = vmatpush.msra.mxu0 %v2181
    %2694 = vmatpush.msra.mxu0 %v2173
    %2695 = vmatpush.msra.mxu0 %v2165
    %2696 = vmatpush.msra.mxu0 %v2157
    %2697 = vmatpush.msra.mxu0 %v2149
    %2698 = vmatpush.msra.mxu0 %v2141
    %2699 = vmatpush.msra.mxu0 %v2133
    %2700 = vmatpush.msra.mxu0 %v2125
    %2701 = vmatpush.msra.mxu0 %v2117
    %2702 = vmatpush.msra.mxu0 %v2109
    %2703 = vmatpush.msra.mxu0 %v2101
    %2704 = vmatpush.msra.mxu0 %v2093
    %2705 = vmatpush.msra.mxu0 %v2085
    %2706 = vmatpush.msra.mxu0 %v2077
    %2707 = vmatpush.msra.mxu0 %v2069
    %2708 = vmatpush.msra.mxu0 %v2061
    %2709 = vmatmul.f32.gmra.mxu0 %v1928
    %v2710 = vpop.f32.mrf.mxu0
    %v2711 = vadd.f32 %v2691, %v2710
    %2712 = vdwg.mxu0
    %2713 = vmatpush.msra.mxu0 %v2054
    %2714 = vmatpush.msra.mxu0 %v2046
    %2715 = vmatpush.msra.mxu0 %v2038
    %2716 = vmatpush.msra.mxu0 %v2030
    %2717 = vmatpush.msra.mxu0 %v2022
    %2718 = vmatpush.msra.mxu0 %v2014
    %2719 = vmatpush.msra.mxu0 %v2006
    %2720 = vmatpush.msra.mxu0 %v1998
    %2721 = vmatpush.msra.mxu0 %v1990
    %2722 = vmatpush.msra.mxu0 %v1982
    %2723 = vmatpush.msra.mxu0 %v1974
    %2724 = vmatpush.msra.mxu0 %v1966
    %2725 = vmatpush.msra.mxu0 %v1958
    %2726 = vmatpush.msra.mxu0 %v1950
    %2727 = vmatpush.msra.mxu0 %v1942
    %2728 = vmatpush.msra.mxu0 %v1934
    %2729 = vmatmul.f32.gmra.mxu0 %v1927
    %v2730 = vpop.f32.mrf.mxu0
    %v2731 = vadd.f32 0.0, %v2730
    %2732 = vdwg.mxu0
    %2733 = vmatpush.msra.mxu0 %v2182
    %2734 = vmatpush.msra.mxu0 %v2174
    %2735 = vmatpush.msra.mxu0 %v2166
    %2736 = vmatpush.msra.mxu0 %v2158
    %2737 = vmatpush.msra.mxu0 %v2150
    %2738 = vmatpush.msra.mxu0 %v2142
    %2739 = vmatpush.msra.mxu0 %v2134
    %2740 = vmatpush.msra.mxu0 %v2126
    %2741 = vmatpush.msra.mxu0 %v2118
    %2742 = vmatpush.msra.mxu0 %v2110
    %2743 = vmatpush.msra.mxu0 %v2102
    %2744 = vmatpush.msra.mxu0 %v2094
    %2745 = vmatpush.msra.mxu0 %v2086
    %2746 = vmatpush.msra.mxu0 %v2078
    %2747 = vmatpush.msra.mxu0 %v2070
    %2748 = vmatpush.msra.mxu0 %v2062
    %2749 = vmatmul.f32.gmra.mxu0 %v1928
    %v2750 = vpop.f32.mrf.mxu0
    %v2751 = vadd.f32 %v2731, %v2750
    %2752 = vdwg.mxu0
    %2753 = vmatpush.msra.mxu0 %v2055
    %2754 = vmatpush.msra.mxu0 %v2047
    %2755 = vmatpush.msra.mxu0 %v2039
    %2756 = vmatpush.msra.mxu0 %v2031
    %2757 = vmatpush.msra.mxu0 %v2023
    %2758 = vmatpush.msra.mxu0 %v2015
    %2759 = vmatpush.msra.mxu0 %v2007
    %2760 = vmatpush.msra.mxu0 %v1999
    %2761 = vmatpush.msra.mxu0 %v1991
    %2762 = vmatpush.msra.mxu0 %v1983
    %2763 = vmatpush.msra.mxu0 %v1975
    %2764 = vmatpush.msra.mxu0 %v1967
    %2765 = vmatpush.msra.mxu0 %v1959
    %2766 = vmatpush.msra.mxu0 %v1951
    %2767 = vmatpush.msra.mxu0 %v1943
    %2768 = vmatpush.msra.mxu0 %v1935
    %2769 = vmatmul.f32.gmra.mxu0 %v1927
    %v2770 = vpop.f32.mrf.mxu0
    %v2771 = vadd.f32 0.0, %v2770
    %2772 = vdwg.mxu0
    %2773 = vmatpush.msra.mxu0 %v2183
    %2774 = vmatpush.msra.mxu0 %v2175
    %2775 = vmatpush.msra.mxu0 %v2167
    %2776 = vmatpush.msra.mxu0 %v2159
    %2777 = vmatpush.msra.mxu0 %v2151
    %2778 = vmatpush.msra.mxu0 %v2143
    %2779 = vmatpush.msra.mxu0 %v2135
    %2780 = vmatpush.msra.mxu0 %v2127
    %2781 = vmatpush.msra.mxu0 %v2119
    %2782 = vmatpush.msra.mxu0 %v2111
    %2783 = vmatpush.msra.mxu0 %v2103
    %2784 = vmatpush.msra.mxu0 %v2095
    %2785 = vmatpush.msra.mxu0 %v2087
    %2786 = vmatpush.msra.mxu0 %v2079
    %2787 = vmatpush.msra.mxu0 %v2071
    %2788 = vmatpush.msra.mxu0 %v2063
    %2789 = vmatmul.f32.gmra.mxu0 %v1928
    %v2790 = vpop.f32.mrf.mxu0
    %v2791 = vadd.f32 %v2771, %v2790
    %2792 = vdwg.mxu0
    %2793 = vmatpush.msra.mxu0 %v2056
    %2794 = vmatpush.msra.mxu0 %v2048
    %2795 = vmatpush.msra.mxu0 %v2040
    %2796 = vmatpush.msra.mxu0 %v2032
    %2797 = vmatpush.msra.mxu0 %v2024
    %2798 = vmatpush.msra.mxu0 %v2016
    %2799 = vmatpush.msra.mxu0 %v2008
    %2800 = vmatpush.msra.mxu0 %v2000
    %2801 = vmatpush.msra.mxu0 %v1992
    %2802 = vmatpush.msra.mxu0 %v1984
    %2803 = vmatpush.msra.mxu0 %v1976
    %2804 = vmatpush.msra.mxu0 %v1968
    %2805 = vmatpush.msra.mxu0 %v1960
    %2806 = vmatpush.msra.mxu0 %v1952
    %2807 = vmatpush.msra.mxu0 %v1944
    %2808 = vmatpush.msra.mxu0 %v1936
    %2809 = vmatmul.f32.gmra.mxu0 %v1927
    %v2810 = vpop.f32.mrf.mxu0
    %v2811 = vadd.f32 0.0, %v2810
    %2812 = vdwg.mxu0
    %2813 = vmatpush.msra.mxu0 %v2184
    %2814 = vmatpush.msra.mxu0 %v2176
    %2815 = vmatpush.msra.mxu0 %v2168
    %2816 = vmatpush.msra.mxu0 %v2160
    %2817 = vmatpush.msra.mxu0 %v2152
    %2818 = vmatpush.msra.mxu0 %v2144
    %2819 = vmatpush.msra.mxu0 %v2136
    %2820 = vmatpush.msra.mxu0 %v2128
    %2821 = vmatpush.msra.mxu0 %v2120
    %2822 = vmatpush.msra.mxu0 %v2112
    %2823 = vmatpush.msra.mxu0 %v2104
    %2824 = vmatpush.msra.mxu0 %v2096
    %2825 = vmatpush.msra.mxu0 %v2088
    %2826 = vmatpush.msra.mxu0 %v2080
    %2827 = vmatpush.msra.mxu0 %v2072
    %2828 = vmatpush.msra.mxu0 %v2064
    %2829 = vmatmul.f32.gmra.mxu0 %v1928
    %v2830 = vpop.f32.mrf.mxu0
    %v2831 = vadd.f32 %v2811, %v2830
    %2832 = vdwg.mxu0
    %2833 = vst [vmem:[%s55 + $0x40] sm:$0xff] %v2551
    %2834 = vst [vmem:[%s55 + $0x48] sm:$0xff] %v2591
    %2835 = vst [vmem:[%s55 + $0x50] sm:$0xff] %v2631
    %2836 = vst [vmem:[%s55 + $0x58] sm:$0xff] %v2671
    %2837 = vst [vmem:[%s55 + $0x60] sm:$0xff] %v2711
    %2838 = vst [vmem:[%s55 + $0x68] sm:$0xff] %v2751
    %2839 = vst [vmem:[%s55 + $0x70] sm:$0xff] %v2791
    %2840 = vst [vmem:[%s55 + $0x78] sm:$0xff] %v2831
    %v2841 = vld [vmem:[%s35] sm:$0xf]
    %v2842 = vld [vmem:[%s37] sm:$0xf]
    %v2843 = vld [vmem:[%s39] sm:$0xf]
    %v2845 = vsel %vm145, %v2841, 0
    %2847 = vmatpush.msra.mxu0 0.0
    %2848 = vmatpush.msra.mxu0 0.0
    %2849 = vmatpush.msra.mxu0 0.0
    %2850 = vmatpush.msra.mxu0 0.0
    %2851 = vmatpush.msra.mxu0 0.0
    %2852 = vmatpush.msra.mxu0 0.0
    %2853 = vmatpush.msra.mxu0 0.0
    %2854 = vmatpush.msra.mxu0 0.0
    %2855 = vmatpush.msra.mxu0 0.0
    %2856 = vmatpush.msra.mxu0 0.0
    %2857 = vmatpush.msra.mxu0 0.0
    %2858 = vmatpush.msra.mxu0 0.0
    %2859 = vmatpush.msra.mxu0 0.0
    %2860 = vmatpush.msra.mxu0 0.0
    %2861 = vmatpush.msra.mxu0 0.0
    %2862 = vmatpush.msra.mxu0 %v138
    %2863 = vmatmul.f32.gmra.mxu0 %v2845
    %v2864 = vpop.f32.mrf.mxu0
    %v2865 = vadd.f32 0.0, %v2864
    %2866 = vdwg.mxu0
    %2867 = vmatpush.msra.mxu0 0.0
    %2868 = vmatpush.msra.mxu0 0.0
    %2869 = vmatpush.msra.mxu0 0.0
    %2870 = vmatpush.msra.mxu0 0.0
    %2871 = vmatpush.msra.mxu0 0.0
    %2872 = vmatpush.msra.mxu0 0.0
    %2873 = vmatpush.msra.mxu0 0.0
    %2874 = vmatpush.msra.mxu0 0.0
    %2875 = vmatpush.msra.mxu0 0.0
    %2876 = vmatpush.msra.mxu0 0.0
    %2877 = vmatpush.msra.mxu0 0.0
    %2878 = vmatpush.msra.mxu0 0.0
    %2879 = vmatpush.msra.mxu0 0.0
    %2880 = vmatpush.msra.mxu0 0.0
    %2881 = vmatpush.msra.mxu0 0.0
    %2882 = vmatpush.msra.mxu0 %v139
    %2883 = vmatmul.f32.gmra.mxu0 %v2845
    %v2884 = vpop.f32.mrf.mxu0
    %v2885 = vadd.f32 0.0, %v2884
    %2886 = vdwg.mxu0
    %2887 = vmatpush.msra.mxu0 0.0
    %2888 = vmatpush.msra.mxu0 0.0
    %2889 = vmatpush.msra.mxu0 0.0
    %2890 = vmatpush.msra.mxu0 0.0
    %2891 = vmatpush.msra.mxu0 0.0
    %2892 = vmatpush.msra.mxu0 0.0
    %2893 = vmatpush.msra.mxu0 0.0
    %2894 = vmatpush.msra.mxu0 0.0
    %2895 = vmatpush.msra.mxu0 0.0
    %2896 = vmatpush.msra.mxu0 0.0
    %2897 = vmatpush.msra.mxu0 0.0
    %2898 = vmatpush.msra.mxu0 0.0
    %2899 = vmatpush.msra.mxu0 0.0
    %2900 = vmatpush.msra.mxu0 0.0
    %2901 = vmatpush.msra.mxu0 0.0
    %2902 = vmatpush.msra.mxu0 %v140
    %2903 = vmatmul.f32.gmra.mxu0 %v2845
    %v2904 = vpop.f32.mrf.mxu0
    %v2905 = vadd.f32 0.0, %v2904
    %2906 = vdwg.mxu0
    %2907 = vmatpush.msra.mxu0 0.0
    %2908 = vmatpush.msra.mxu0 0.0
    %2909 = vmatpush.msra.mxu0 0.0
    %2910 = vmatpush.msra.mxu0 0.0
    %2911 = vmatpush.msra.mxu0 0.0
    %2912 = vmatpush.msra.mxu0 0.0
    %2913 = vmatpush.msra.mxu0 0.0
    %2914 = vmatpush.msra.mxu0 0.0
    %2915 = vmatpush.msra.mxu0 0.0
    %2916 = vmatpush.msra.mxu0 0.0
    %2917 = vmatpush.msra.mxu0 0.0
    %2918 = vmatpush.msra.mxu0 0.0
    %2919 = vmatpush.msra.mxu0 0.0
    %2920 = vmatpush.msra.mxu0 0.0
    %2921 = vmatpush.msra.mxu0 0.0
    %2922 = vmatpush.msra.mxu0 %v141
    %2923 = vmatmul.f32.gmra.mxu0 %v2845
    %v2924 = vpop.f32.mrf.mxu0
    %v2925 = vadd.f32 0.0, %v2924
    %2926 = vdwg.mxu0
    %2928 = vset.pattern.permute.xlu0 0
    %2929 = vperm.xlu0 %2928, %v2843
    %v2930 = vpop.permute.xlu0 %2929
    %v2932 = vmul.f32 %v2865, %v2930
    %v2933 = vmul.f32 %v2885, %v2930
    %v2934 = vmul.f32 %v2905, %v2930
    %v2935 = vmul.f32 %v2925, %v2930
    %2936 = vset.pattern.permute.xlu0 1
    %2937 = vperm.xlu0 %2936, %v2843
    %v2938 = vpop.permute.xlu0 %2937
    %v2940 = vadd.f32 %v2932, %v2938
    %v2941 = vadd.f32 %v2933, %v2938
    %v2942 = vadd.f32 %v2934, %v2938
    %v2943 = vadd.f32 %v2935, %v2938
    %2944 = vset.pattern.permute.xlu0 2
    %2945 = vperm.xlu0 %2944, %v2843
    %v2946 = vpop.permute.xlu0 %2945
    %v2948 = vmul.f32 %v2865, %v2946
    %v2949 = vmul.f32 %v2885, %v2946
    %v2950 = vmul.f32 %v2905, %v2946
    %v2951 = vmul.f32 %v2925, %v2946
    %2952 = vset.pattern.permute.xlu0 3
    %2953 = vperm.xlu0 %2952, %v2843
    %v2954 = vpop.permute.xlu0 %2953
    %v2956 = vadd.f32 %v2948, %v2954
    %v2957 = vadd.f32 %v2949, %v2954
    %v2958 = vadd.f32 %v2950, %v2954
    %v2959 = vadd.f32 %v2951, %v2954
    %2960 = vrot.lane.b32.xlu0 %v2940, 17
    %v2961 = vpop.permute.xlu0 %2960
    %2962 = vrot.lane.b32.xlu0 %v2941, 17
    %v2963 = vpop.permute.xlu0 %2962
    %2964 = vrot.lane.b32.xlu0 %v2942, 17
    %v2965 = vpop.permute.xlu0 %2964
    %2966 = vrot.lane.b32.xlu0 %v2943, 17
    %v2967 = vpop.permute.xlu0 %2966
    %v2968 = vsel %vm272, %v2965, %v2967
    %v2969 = vsel %vm272, %v2963, %v2965
    %v2970 = vsel %vm272, %v2961, %v2963
    %v2971 = vsel %vm272, %v2967, %v2961
    %v2972 = vsel %vm285, %v2971, 0.0
    %v2973 = vsel %vm286, %v2970, 0.0
    %v2974 = vsel %vm287, %v2969, 0.0
    %v2975 = vsel %vm288, %v2968, 0.0
    %2977 = vset.pattern.permute.xlu0 0
    %2978 = vperm.xlu0 %2977, %v2842
    %v2979 = vpop.permute.xlu0 %2978
    %v2981 = vmul.f32 %v2972, %v2979
    %v2982 = vmul.f32 %v2973, %v2979
    %v2983 = vmul.f32 %v2974, %v2979
    %v2984 = vmul.f32 %v2975, %v2979
    %v2985 = vadd.f32 %v2981, 0.0
    %v2986 = vadd.f32 %v2982, 0.0
    %v2987 = vadd.f32 %v2983, 0.0
    %v2988 = vadd.f32 %v2984, 0.0
    %2989 = vrot.lane.b32.xlu0 %v2940, 16
    %v2990 = vpop.permute.xlu0 %2989
    %2991 = vrot.lane.b32.xlu0 %v2941, 16
    %v2992 = vpop.permute.xlu0 %2991
    %2993 = vrot.lane.b32.xlu0 %v2942, 16
    %v2994 = vpop.permute.xlu0 %2993
    %2995 = vrot.lane.b32.xlu0 %v2943, 16
    %v2996 = vpop.permute.xlu0 %2995
    %v2997 = vsel %vm314, %v2994, %v2996
    %v2998 = vsel %vm314, %v2992, %v2994
    %v2999 = vsel %vm314, %v2990, %v2992
    %v3000 = vsel %vm314, %v2996, %v2990
    %v3001 = vsel %vm324, %v3000, 0.0
    %v3002 = vsel %vm325, %v2999, 0.0
    %v3003 = vsel %vm326, %v2998, 0.0
    %v3004 = vsel %vm327, %v2997, 0.0
    %3005 = vset.pattern.permute.xlu0 1
    %3006 = vperm.xlu0 %3005, %v2842
    %v3007 = vpop.permute.xlu0 %3006
    %v3009 = vmul.f32 %v3001, %v3007
    %v3010 = vmul.f32 %v3002, %v3007
    %v3011 = vmul.f32 %v3003, %v3007
    %v3012 = vmul.f32 %v3004, %v3007
    %v3013 = vadd.f32 %v2985, %v3009
    %v3014 = vadd.f32 %v2986, %v3010
    %v3015 = vadd.f32 %v2987, %v3011
    %v3016 = vadd.f32 %v2988, %v3012
    %3017 = vrot.lane.b32.xlu0 %v2940, 15
    %v3018 = vpop.permute.xlu0 %3017
    %3019 = vrot.lane.b32.xlu0 %v2941, 15
    %v3020 = vpop.permute.xlu0 %3019
    %3021 = vrot.lane.b32.xlu0 %v2942, 15
    %v3022 = vpop.permute.xlu0 %3021
    %3023 = vrot.lane.b32.xlu0 %v2943, 15
    %v3024 = vpop.permute.xlu0 %3023
    %v3025 = vsel %vm352, %v3022, %v3024
    %v3026 = vsel %vm352, %v3020, %v3022
    %v3027 = vsel %vm352, %v3018, %v3020
    %v3028 = vsel %vm352, %v3024, %v3018
    %v3029 = vsel %vm364, %v3028, 0.0
    %v3030 = vsel %vm365, %v3027, 0.0
    %v3031 = vsel %vm366, %v3026, 0.0
    %v3032 = vsel %vm367, %v3025, 0.0
    %3033 = vset.pattern.permute.xlu0 2
    %3034 = vperm.xlu0 %3033, %v2842
    %v3035 = vpop.permute.xlu0 %3034
    %v3037 = vmul.f32 %v3029, %v3035
    %v3038 = vmul.f32 %v3030, %v3035
    %v3039 = vmul.f32 %v3031, %v3035
    %v3040 = vmul.f32 %v3032, %v3035
    %v3041 = vadd.f32 %v3013, %v3037
    %v3042 = vadd.f32 %v3014, %v3038
    %v3043 = vadd.f32 %v3015, %v3039
    %v3044 = vadd.f32 %v3016, %v3040
    %3045 = vrot.lane.b32.xlu0 %v2940, 1
    %v3046 = vpop.permute.xlu0 %3045
    %3047 = vrot.lane.b32.xlu0 %v2941, 1
    %v3048 = vpop.permute.xlu0 %3047
    %3049 = vrot.lane.b32.xlu0 %v2942, 1
    %v3050 = vpop.permute.xlu0 %3049
    %3051 = vrot.lane.b32.xlu0 %v2943, 1
    %v3052 = vpop.permute.xlu0 %3051
    %v3053 = vsel %vm392, %v3050, %v3052
    %v3054 = vsel %vm392, %v3048, %v3050
    %v3055 = vsel %vm392, %v3046, %v3048
    %v3056 = vsel %vm392, %v3052, %v3046
    %v3057 = vsel %vm402, %v3056, 0.0
    %v3058 = vsel %vm403, %v3055, 0.0
    %v3059 = vsel %vm404, %v3054, 0.0
    %v3060 = vsel %vm405, %v3053, 0.0
    %3061 = vset.pattern.permute.xlu0 3
    %3062 = vperm.xlu0 %3061, %v2842
    %v3063 = vpop.permute.xlu0 %3062
    %v3065 = vmul.f32 %v3057, %v3063
    %v3066 = vmul.f32 %v3058, %v3063
    %v3067 = vmul.f32 %v3059, %v3063
    %v3068 = vmul.f32 %v3060, %v3063
    %v3069 = vadd.f32 %v3041, %v3065
    %v3070 = vadd.f32 %v3042, %v3066
    %v3071 = vadd.f32 %v3043, %v3067
    %v3072 = vadd.f32 %v3044, %v3068
    %3073 = vset.pattern.permute.xlu0 4
    %3074 = vperm.xlu0 %3073, %v2842
    %v3075 = vpop.permute.xlu0 %3074
    %v3077 = vmul.f32 %v2940, %v3075
    %v3078 = vmul.f32 %v2941, %v3075
    %v3079 = vmul.f32 %v2942, %v3075
    %v3080 = vmul.f32 %v2943, %v3075
    %v3081 = vadd.f32 %v3069, %v3077
    %v3082 = vadd.f32 %v3070, %v3078
    %v3083 = vadd.f32 %v3071, %v3079
    %v3084 = vadd.f32 %v3072, %v3080
    %3085 = vrot.lane.b32.xlu0 %v2940, 127
    %v3086 = vpop.permute.xlu0 %3085
    %3087 = vrot.lane.b32.xlu0 %v2941, 127
    %v3088 = vpop.permute.xlu0 %3087
    %3089 = vrot.lane.b32.xlu0 %v2942, 127
    %v3090 = vpop.permute.xlu0 %3089
    %3091 = vrot.lane.b32.xlu0 %v2943, 127
    %v3092 = vpop.permute.xlu0 %3091
    %v3093 = vsel %vm442, %v3090, %v3092
    %v3094 = vsel %vm442, %v3088, %v3090
    %v3095 = vsel %vm442, %v3086, %v3088
    %v3096 = vsel %vm442, %v3092, %v3086
    %v3097 = vsel %vm452, %v3095, 0.0
    %v3098 = vsel %vm453, %v3094, 0.0
    %v3099 = vsel %vm454, %v3093, 0.0
    %v3100 = vsel %vm455, %v3096, 0.0
    %3101 = vset.pattern.permute.xlu0 5
    %3102 = vperm.xlu0 %3101, %v2842
    %v3103 = vpop.permute.xlu0 %3102
    %v3105 = vmul.f32 %v3097, %v3103
    %v3106 = vmul.f32 %v3098, %v3103
    %v3107 = vmul.f32 %v3099, %v3103
    %v3108 = vmul.f32 %v3100, %v3103
    %v3109 = vadd.f32 %v3081, %v3105
    %v3110 = vadd.f32 %v3082, %v3106
    %v3111 = vadd.f32 %v3083, %v3107
    %v3112 = vadd.f32 %v3084, %v3108
    %3113 = vrot.lane.b32.xlu0 %v2940, 113
    %v3114 = vpop.permute.xlu0 %3113
    %3115 = vrot.lane.b32.xlu0 %v2941, 113
    %v3116 = vpop.permute.xlu0 %3115
    %3117 = vrot.lane.b32.xlu0 %v2942, 113
    %v3118 = vpop.permute.xlu0 %3117
    %3119 = vrot.lane.b32.xlu0 %v2943, 113
    %v3120 = vpop.permute.xlu0 %3119
    %v3121 = vsel %vm480, %v3118, %v3120
    %v3122 = vsel %vm480, %v3116, %v3118
    %v3123 = vsel %vm480, %v3114, %v3116
    %v3124 = vsel %vm480, %v3120, %v3114
    %v3125 = vsel %vm492, %v3123, 0.0
    %v3126 = vsel %vm493, %v3122, 0.0
    %v3127 = vsel %vm494, %v3121, 0.0
    %v3128 = vsel %vm495, %v3124, 0.0
    %3129 = vset.pattern.permute.xlu0 6
    %3130 = vperm.xlu0 %3129, %v2842
    %v3131 = vpop.permute.xlu0 %3130
    %v3133 = vmul.f32 %v3125, %v3131
    %v3134 = vmul.f32 %v3126, %v3131
    %v3135 = vmul.f32 %v3127, %v3131
    %v3136 = vmul.f32 %v3128, %v3131
    %v3137 = vadd.f32 %v3109, %v3133
    %v3138 = vadd.f32 %v3110, %v3134
    %v3139 = vadd.f32 %v3111, %v3135
    %v3140 = vadd.f32 %v3112, %v3136
    %3141 = vrot.lane.b32.xlu0 %v2940, 112
    %v3142 = vpop.permute.xlu0 %3141
    %3143 = vrot.lane.b32.xlu0 %v2941, 112
    %v3144 = vpop.permute.xlu0 %3143
    %3145 = vrot.lane.b32.xlu0 %v2942, 112
    %v3146 = vpop.permute.xlu0 %3145
    %3147 = vrot.lane.b32.xlu0 %v2943, 112
    %v3148 = vpop.permute.xlu0 %3147
    %v3149 = vsel %vm520, %v3146, %v3148
    %v3150 = vsel %vm520, %v3144, %v3146
    %v3151 = vsel %vm520, %v3142, %v3144
    %v3152 = vsel %vm520, %v3148, %v3142
    %v3153 = vsel %vm530, %v3151, 0.0
    %v3154 = vsel %vm531, %v3150, 0.0
    %v3155 = vsel %vm532, %v3149, 0.0
    %v3156 = vsel %vm533, %v3152, 0.0
    %3157 = vset.pattern.permute.xlu0 7
    %3158 = vperm.xlu0 %3157, %v2842
    %v3159 = vpop.permute.xlu0 %3158
    %v3161 = vmul.f32 %v3153, %v3159
    %v3162 = vmul.f32 %v3154, %v3159
    %v3163 = vmul.f32 %v3155, %v3159
    %v3164 = vmul.f32 %v3156, %v3159
    %v3165 = vadd.f32 %v3137, %v3161
    %v3166 = vadd.f32 %v3138, %v3162
    %v3167 = vadd.f32 %v3139, %v3163
    %v3168 = vadd.f32 %v3140, %v3164
    %3169 = vrot.lane.b32.xlu0 %v2940, 111
    %v3170 = vpop.permute.xlu0 %3169
    %3171 = vrot.lane.b32.xlu0 %v2941, 111
    %v3172 = vpop.permute.xlu0 %3171
    %3173 = vrot.lane.b32.xlu0 %v2942, 111
    %v3174 = vpop.permute.xlu0 %3173
    %3175 = vrot.lane.b32.xlu0 %v2943, 111
    %v3176 = vpop.permute.xlu0 %3175
    %v3177 = vsel %vm558, %v3174, %v3176
    %v3178 = vsel %vm558, %v3172, %v3174
    %v3179 = vsel %vm558, %v3170, %v3172
    %v3180 = vsel %vm558, %v3176, %v3170
    %v3181 = vsel %vm569, %v3179, 0.0
    %v3182 = vsel %vm570, %v3178, 0.0
    %v3183 = vsel %vm571, %v3177, 0.0
    %v3184 = vsel %vm572, %v3180, 0.0
    %3185 = vset.pattern.permute.xlu0 8
    %3186 = vperm.xlu0 %3185, %v2842
    %v3187 = vpop.permute.xlu0 %3186
    %v3189 = vmul.f32 %v3181, %v3187
    %v3190 = vmul.f32 %v3182, %v3187
    %v3191 = vmul.f32 %v3183, %v3187
    %v3192 = vmul.f32 %v3184, %v3187
    %v3193 = vadd.f32 %v3165, %v3189
    %v3194 = vadd.f32 %v3166, %v3190
    %v3195 = vadd.f32 %v3167, %v3191
    %v3196 = vadd.f32 %v3168, %v3192
    %3197 = vset.pattern.permute.xlu0 4
    %3198 = vperm.xlu0 %3197, %v2843
    %v3199 = vpop.permute.xlu0 %3198
    %v3201 = vmul.f32 %v3193, %v3199
    %v3202 = vmul.f32 %v3194, %v3199
    %v3203 = vmul.f32 %v3195, %v3199
    %v3204 = vmul.f32 %v3196, %v3199
    %3205 = vset.pattern.permute.xlu0 5
    %3206 = vperm.xlu0 %3205, %v2843
    %v3207 = vpop.permute.xlu0 %3206
    %v3209 = vadd.f32 %v3201, %v3207
    %v3210 = vadd.f32 %v3202, %v3207
    %v3211 = vadd.f32 %v3203, %v3207
    %v3212 = vadd.f32 %v3204, %v3207
    %v3217 = vrot.slane %v3209, 4
    %v3218 = vrot.slane %v3210, 4
    %v3219 = vrot.slane %v3211, 4
    %v3220 = vrot.slane %v3212, 4
    %v3225 = vsel %vm1924, %v2956, %v3217
    %v3226 = vsel %vm1924, %v2957, %v3218
    %v3227 = vsel %vm1924, %v2958, %v3219
    %v3228 = vsel %vm1924, %v2959, %v3220
    %v3229 = vmax.f32 %v3225, 0.0
    %v3230 = vmax.f32 %v3226, 0.0
    %v3231 = vmax.f32 %v3227, 0.0
    %v3232 = vmax.f32 %v3228, 0.0
    %3233 = vst [vmem:[%s57] sm:$0xff] %v3229
    %3234 = vst [vmem:[%s57 + $0x8] sm:$0xff] %v3230
    %3235 = vst [vmem:[%s57 + $0x10] sm:$0xff] %v3231
    %3236 = vst [vmem:[%s57 + $0x18] sm:$0xff] %v3232
    %v3237 = vld [vmem:[%s41] sm:$0xf]
    %v3238 = vld [vmem:[%s43] sm:$0xf]
    %v3239 = vld [vmem:[%s45] sm:$0xf]
    %v3241 = vsel %vm766, %v3237, 0
    %3243 = vmatpush.msra.mxu0 0.0
    %3244 = vmatpush.msra.mxu0 0.0
    %3245 = vmatpush.msra.mxu0 0.0
    %3246 = vmatpush.msra.mxu0 0.0
    %3247 = vmatpush.msra.mxu0 0.0
    %3248 = vmatpush.msra.mxu0 0.0
    %3249 = vmatpush.msra.mxu0 0.0
    %3250 = vmatpush.msra.mxu0 0.0
    %3251 = vmatpush.msra.mxu0 0.0
    %3252 = vmatpush.msra.mxu0 0.0
    %3253 = vmatpush.msra.mxu0 0.0
    %3254 = vmatpush.msra.mxu0 0.0
    %3255 = vmatpush.msra.mxu0 0.0
    %3256 = vmatpush.msra.mxu0 0.0
    %3257 = vmatpush.msra.mxu0 %v1148
    %3258 = vmatpush.msra.mxu0 %v1144
    %3259 = vmatmul.f32.gmra.mxu0 %v3241
    %v3260 = vpop.f32.mrf.mxu0
    %v3261 = vadd.f32 0.0, %v3260
    %3262 = vdwg.mxu0
    %3263 = vmatpush.msra.mxu0 0.0
    %3264 = vmatpush.msra.mxu0 0.0
    %3265 = vmatpush.msra.mxu0 0.0
    %3266 = vmatpush.msra.mxu0 0.0
    %3267 = vmatpush.msra.mxu0 0.0
    %3268 = vmatpush.msra.mxu0 0.0
    %3269 = vmatpush.msra.mxu0 0.0
    %3270 = vmatpush.msra.mxu0 0.0
    %3271 = vmatpush.msra.mxu0 0.0
    %3272 = vmatpush.msra.mxu0 0.0
    %3273 = vmatpush.msra.mxu0 0.0
    %3274 = vmatpush.msra.mxu0 0.0
    %3275 = vmatpush.msra.mxu0 0.0
    %3276 = vmatpush.msra.mxu0 0.0
    %3277 = vmatpush.msra.mxu0 %v1149
    %3278 = vmatpush.msra.mxu0 %v1145
    %3279 = vmatmul.f32.gmra.mxu0 %v3241
    %v3280 = vpop.f32.mrf.mxu0
    %v3281 = vadd.f32 0.0, %v3280
    %3282 = vdwg.mxu0
    %3283 = vmatpush.msra.mxu0 0.0
    %3284 = vmatpush.msra.mxu0 0.0
    %3285 = vmatpush.msra.mxu0 0.0
    %3286 = vmatpush.msra.mxu0 0.0
    %3287 = vmatpush.msra.mxu0 0.0
    %3288 = vmatpush.msra.mxu0 0.0
    %3289 = vmatpush.msra.mxu0 0.0
    %3290 = vmatpush.msra.mxu0 0.0
    %3291 = vmatpush.msra.mxu0 0.0
    %3292 = vmatpush.msra.mxu0 0.0
    %3293 = vmatpush.msra.mxu0 0.0
    %3294 = vmatpush.msra.mxu0 0.0
    %3295 = vmatpush.msra.mxu0 0.0
    %3296 = vmatpush.msra.mxu0 0.0
    %3297 = vmatpush.msra.mxu0 %v1150
    %3298 = vmatpush.msra.mxu0 %v1146
    %3299 = vmatmul.f32.gmra.mxu0 %v3241
    %v3300 = vpop.f32.mrf.mxu0
    %v3301 = vadd.f32 0.0, %v3300
    %3302 = vdwg.mxu0
    %3303 = vmatpush.msra.mxu0 0.0
    %3304 = vmatpush.msra.mxu0 0.0
    %3305 = vmatpush.msra.mxu0 0.0
    %3306 = vmatpush.msra.mxu0 0.0
    %3307 = vmatpush.msra.mxu0 0.0
    %3308 = vmatpush.msra.mxu0 0.0
    %3309 = vmatpush.msra.mxu0 0.0
    %3310 = vmatpush.msra.mxu0 0.0
    %3311 = vmatpush.msra.mxu0 0.0
    %3312 = vmatpush.msra.mxu0 0.0
    %3313 = vmatpush.msra.mxu0 0.0
    %3314 = vmatpush.msra.mxu0 0.0
    %3315 = vmatpush.msra.mxu0 0.0
    %3316 = vmatpush.msra.mxu0 0.0
    %3317 = vmatpush.msra.mxu0 %v1151
    %3318 = vmatpush.msra.mxu0 %v1147
    %3319 = vmatmul.f32.gmra.mxu0 %v3241
    %v3320 = vpop.f32.mrf.mxu0
    %v3321 = vadd.f32 0.0, %v3320
    %3322 = vdwg.mxu0
    %3324 = vset.pattern.permute.xlu0 0
    %3325 = vperm.xlu0 %3324, %v3239
    %v3326 = vpop.permute.xlu0 %3325
    %v3328 = vmul.f32 %v3261, %v3326
    %v3329 = vmul.f32 %v3281, %v3326
    %v3330 = vmul.f32 %v3301, %v3326
    %v3331 = vmul.f32 %v3321, %v3326
    %3332 = vset.pattern.permute.xlu0 1
    %3333 = vperm.xlu0 %3332, %v3239
    %v3334 = vpop.permute.xlu0 %3333
    %v3336 = vadd.f32 %v3328, %v3334
    %v3337 = vadd.f32 %v3329, %v3334
    %v3338 = vadd.f32 %v3330, %v3334
    %v3339 = vadd.f32 %v3331, %v3334
    %3340 = vset.pattern.permute.xlu0 2
    %3341 = vperm.xlu0 %3340, %v3239
    %v3342 = vpop.permute.xlu0 %3341
    %v3344 = vmul.f32 %v3261, %v3342
    %v3345 = vmul.f32 %v3281, %v3342
    %v3346 = vmul.f32 %v3301, %v3342
    %v3347 = vmul.f32 %v3321, %v3342
    %3348 = vset.pattern.permute.xlu0 3
    %3349 = vperm.xlu0 %3348, %v3239
    %v3350 = vpop.permute.xlu0 %3349
    %v3352 = vadd.f32 %v3344, %v3350
    %v3353 = vadd.f32 %v3345, %v3350
    %v3354 = vadd.f32 %v3346, %v3350
    %v3355 = vadd.f32 %v3347, %v3350
    %3356 = vrot.lane.b32.xlu0 %v3336, 17
    %v3357 = vpop.permute.xlu0 %3356
    %3358 = vrot.lane.b32.xlu0 %v3337, 17
    %v3359 = vpop.permute.xlu0 %3358
    %3360 = vrot.lane.b32.xlu0 %v3338, 17
    %v3361 = vpop.permute.xlu0 %3360
    %3362 = vrot.lane.b32.xlu0 %v3339, 17
    %v3363 = vpop.permute.xlu0 %3362
    %v3364 = vsel %vm272, %v3361, %v3363
    %v3365 = vsel %vm272, %v3359, %v3361
    %v3366 = vsel %vm272, %v3357, %v3359
    %v3367 = vsel %vm272, %v3363, %v3357
    %v3368 = vsel %vm285, %v3367, 0.0
    %v3369 = vsel %vm286, %v3366, 0.0
    %v3370 = vsel %vm287, %v3365, 0.0
    %v3371 = vsel %vm288, %v3364, 0.0
    %3373 = vset.pattern.permute.xlu0 0
    %3374 = vperm.xlu0 %3373, %v3238
    %v3375 = vpop.permute.xlu0 %3374
    %v3377 = vmul.f32 %v3368, %v3375
    %v3378 = vmul.f32 %v3369, %v3375
    %v3379 = vmul.f32 %v3370, %v3375
    %v3380 = vmul.f32 %v3371, %v3375
    %v3381 = vadd.f32 %v3377, 0.0
    %v3382 = vadd.f32 %v3378, 0.0
    %v3383 = vadd.f32 %v3379, 0.0
    %v3384 = vadd.f32 %v3380, 0.0
    %3385 = vrot.lane.b32.xlu0 %v3336, 16
    %v3386 = vpop.permute.xlu0 %3385
    %3387 = vrot.lane.b32.xlu0 %v3337, 16
    %v3388 = vpop.permute.xlu0 %3387
    %3389 = vrot.lane.b32.xlu0 %v3338, 16
    %v3390 = vpop.permute.xlu0 %3389
    %3391 = vrot.lane.b32.xlu0 %v3339, 16
    %v3392 = vpop.permute.xlu0 %3391
    %v3393 = vsel %vm314, %v3390, %v3392
    %v3394 = vsel %vm314, %v3388, %v3390
    %v3395 = vsel %vm314, %v3386, %v3388
    %v3396 = vsel %vm314, %v3392, %v3386
    %v3397 = vsel %vm324, %v3396, 0.0
    %v3398 = vsel %vm325, %v3395, 0.0
    %v3399 = vsel %vm326, %v3394, 0.0
    %v3400 = vsel %vm327, %v3393, 0.0
    %3401 = vset.pattern.permute.xlu0 1
    %3402 = vperm.xlu0 %3401, %v3238
    %v3403 = vpop.permute.xlu0 %3402
    %v3405 = vmul.f32 %v3397, %v3403
    %v3406 = vmul.f32 %v3398, %v3403
    %v3407 = vmul.f32 %v3399, %v3403
    %v3408 = vmul.f32 %v3400, %v3403
    %v3409 = vadd.f32 %v3381, %v3405
    %v3410 = vadd.f32 %v3382, %v3406
    %v3411 = vadd.f32 %v3383, %v3407
    %v3412 = vadd.f32 %v3384, %v3408
    %3413 = vrot.lane.b32.xlu0 %v3336, 15
    %v3414 = vpop.permute.xlu0 %3413
    %3415 = vrot.lane.b32.xlu0 %v3337, 15
    %v3416 = vpop.permute.xlu0 %3415
    %3417 = vrot.lane.b32.xlu0 %v3338, 15
    %v3418 = vpop.permute.xlu0 %3417
    %3419 = vrot.lane.b32.xlu0 %v3339, 15
    %v3420 = vpop.permute.xlu0 %3419
    %v3421 = vsel %vm352, %v3418, %v3420
    %v3422 = vsel %vm352, %v3416, %v3418
    %v3423 = vsel %vm352, %v3414, %v3416
    %v3424 = vsel %vm352, %v3420, %v3414
    %v3425 = vsel %vm364, %v3424, 0.0
    %v3426 = vsel %vm365, %v3423, 0.0
    %v3427 = vsel %vm366, %v3422, 0.0
    %v3428 = vsel %vm367, %v3421, 0.0
    %3429 = vset.pattern.permute.xlu0 2
    %3430 = vperm.xlu0 %3429, %v3238
    %v3431 = vpop.permute.xlu0 %3430
    %v3433 = vmul.f32 %v3425, %v3431
    %v3434 = vmul.f32 %v3426, %v3431
    %v3435 = vmul.f32 %v3427, %v3431
    %v3436 = vmul.f32 %v3428, %v3431
    %v3437 = vadd.f32 %v3409, %v3433
    %v3438 = vadd.f32 %v3410, %v3434
    %v3439 = vadd.f32 %v3411, %v3435
    %v3440 = vadd.f32 %v3412, %v3436
    %3441 = vrot.lane.b32.xlu0 %v3336, 1
    %v3442 = vpop.permute.xlu0 %3441
    %3443 = vrot.lane.b32.xlu0 %v3337, 1
    %v3444 = vpop.permute.xlu0 %3443
    %3445 = vrot.lane.b32.xlu0 %v3338, 1
    %v3446 = vpop.permute.xlu0 %3445
    %3447 = vrot.lane.b32.xlu0 %v3339, 1
    %v3448 = vpop.permute.xlu0 %3447
    %v3449 = vsel %vm392, %v3446, %v3448
    %v3450 = vsel %vm392, %v3444, %v3446
    %v3451 = vsel %vm392, %v3442, %v3444
    %v3452 = vsel %vm392, %v3448, %v3442
    %v3453 = vsel %vm402, %v3452, 0.0
    %v3454 = vsel %vm403, %v3451, 0.0
    %v3455 = vsel %vm404, %v3450, 0.0
    %v3456 = vsel %vm405, %v3449, 0.0
    %3457 = vset.pattern.permute.xlu0 3
    %3458 = vperm.xlu0 %3457, %v3238
    %v3459 = vpop.permute.xlu0 %3458
    %v3461 = vmul.f32 %v3453, %v3459
    %v3462 = vmul.f32 %v3454, %v3459
    %v3463 = vmul.f32 %v3455, %v3459
    %v3464 = vmul.f32 %v3456, %v3459
    %v3465 = vadd.f32 %v3437, %v3461
    %v3466 = vadd.f32 %v3438, %v3462
    %v3467 = vadd.f32 %v3439, %v3463
    %v3468 = vadd.f32 %v3440, %v3464
    %3469 = vset.pattern.permute.xlu0 4
    %3470 = vperm.xlu0 %3469, %v3238
    %v3471 = vpop.permute.xlu0 %3470
    %v3473 = vmul.f32 %v3336, %v3471
    %v3474 = vmul.f32 %v3337, %v3471
    %v3475 = vmul.f32 %v3338, %v3471
    %v3476 = vmul.f32 %v3339, %v3471
    %v3477 = vadd.f32 %v3465, %v3473
    %v3478 = vadd.f32 %v3466, %v3474
    %v3479 = vadd.f32 %v3467, %v3475
    %v3480 = vadd.f32 %v3468, %v3476
    %3481 = vrot.lane.b32.xlu0 %v3336, 127
    %v3482 = vpop.permute.xlu0 %3481
    %3483 = vrot.lane.b32.xlu0 %v3337, 127
    %v3484 = vpop.permute.xlu0 %3483
    %3485 = vrot.lane.b32.xlu0 %v3338, 127
    %v3486 = vpop.permute.xlu0 %3485
    %3487 = vrot.lane.b32.xlu0 %v3339, 127
    %v3488 = vpop.permute.xlu0 %3487
    %v3489 = vsel %vm442, %v3486, %v3488
    %v3490 = vsel %vm442, %v3484, %v3486
    %v3491 = vsel %vm442, %v3482, %v3484
    %v3492 = vsel %vm442, %v3488, %v3482
    %v3493 = vsel %vm452, %v3491, 0.0
    %v3494 = vsel %vm453, %v3490, 0.0
    %v3495 = vsel %vm454, %v3489, 0.0
    %v3496 = vsel %vm455, %v3492, 0.0
    %3497 = vset.pattern.permute.xlu0 5
    %3498 = vperm.xlu0 %3497, %v3238
    %v3499 = vpop.permute.xlu0 %3498
    %v3501 = vmul.f32 %v3493, %v3499
    %v3502 = vmul.f32 %v3494, %v3499
    %v3503 = vmul.f32 %v3495, %v3499
    %v3504 = vmul.f32 %v3496, %v3499
    %v3505 = vadd.f32 %v3477, %v3501
    %v3506 = vadd.f32 %v3478, %v3502
    %v3507 = vadd.f32 %v3479, %v3503
    %v3508 = vadd.f32 %v3480, %v3504
    %3509 = vrot.lane.b32.xlu0 %v3336, 113
    %v3510 = vpop.permute.xlu0 %3509
    %3511 = vrot.lane.b32.xlu0 %v3337, 113
    %v3512 = vpop.permute.xlu0 %3511
    %3513 = vrot.lane.b32.xlu0 %v3338, 113
    %v3514 = vpop.permute.xlu0 %3513
    %3515 = vrot.lane.b32.xlu0 %v3339, 113
    %v3516 = vpop.permute.xlu0 %3515
    %v3517 = vsel %vm480, %v3514, %v3516
    %v3518 = vsel %vm480, %v3512, %v3514
    %v3519 = vsel %vm480, %v3510, %v3512
    %v3520 = vsel %vm480, %v3516, %v3510
    %v3521 = vsel %vm492, %v3519, 0.0
    %v3522 = vsel %vm493, %v3518, 0.0
    %v3523 = vsel %vm494, %v3517, 0.0
    %v3524 = vsel %vm495, %v3520, 0.0
    %3525 = vset.pattern.permute.xlu0 6
    %3526 = vperm.xlu0 %3525, %v3238
    %v3527 = vpop.permute.xlu0 %3526
    %v3529 = vmul.f32 %v3521, %v3527
    %v3530 = vmul.f32 %v3522, %v3527
    %v3531 = vmul.f32 %v3523, %v3527
    %v3532 = vmul.f32 %v3524, %v3527
    %v3533 = vadd.f32 %v3505, %v3529
    %v3534 = vadd.f32 %v3506, %v3530
    %v3535 = vadd.f32 %v3507, %v3531
    %v3536 = vadd.f32 %v3508, %v3532
    %3537 = vrot.lane.b32.xlu0 %v3336, 112
    %v3538 = vpop.permute.xlu0 %3537
    %3539 = vrot.lane.b32.xlu0 %v3337, 112
    %v3540 = vpop.permute.xlu0 %3539
    %3541 = vrot.lane.b32.xlu0 %v3338, 112
    %v3542 = vpop.permute.xlu0 %3541
    %3543 = vrot.lane.b32.xlu0 %v3339, 112
    %v3544 = vpop.permute.xlu0 %3543
    %v3545 = vsel %vm520, %v3542, %v3544
    %v3546 = vsel %vm520, %v3540, %v3542
    %v3547 = vsel %vm520, %v3538, %v3540
    %v3548 = vsel %vm520, %v3544, %v3538
    %v3549 = vsel %vm530, %v3547, 0.0
    %v3550 = vsel %vm531, %v3546, 0.0
    %v3551 = vsel %vm532, %v3545, 0.0
    %v3552 = vsel %vm533, %v3548, 0.0
    %3553 = vset.pattern.permute.xlu0 7
    %3554 = vperm.xlu0 %3553, %v3238
    %v3555 = vpop.permute.xlu0 %3554
    %v3557 = vmul.f32 %v3549, %v3555
    %v3558 = vmul.f32 %v3550, %v3555
    %v3559 = vmul.f32 %v3551, %v3555
    %v3560 = vmul.f32 %v3552, %v3555
    %v3561 = vadd.f32 %v3533, %v3557
    %v3562 = vadd.f32 %v3534, %v3558
    %v3563 = vadd.f32 %v3535, %v3559
    %v3564 = vadd.f32 %v3536, %v3560
    %3565 = vrot.lane.b32.xlu0 %v3336, 111
    %v3566 = vpop.permute.xlu0 %3565
    %3567 = vrot.lane.b32.xlu0 %v3337, 111
    %v3568 = vpop.permute.xlu0 %3567
    %3569 = vrot.lane.b32.xlu0 %v3338, 111
    %v3570 = vpop.permute.xlu0 %3569
    %3571 = vrot.lane.b32.xlu0 %v3339, 111
    %v3572 = vpop.permute.xlu0 %3571
    %v3573 = vsel %vm558, %v3570, %v3572
    %v3574 = vsel %vm558, %v3568, %v3570
    %v3575 = vsel %vm558, %v3566, %v3568
    %v3576 = vsel %vm558, %v3572, %v3566
    %v3577 = vsel %vm569, %v3575, 0.0
    %v3578 = vsel %vm570, %v3574, 0.0
    %v3579 = vsel %vm571, %v3573, 0.0
    %v3580 = vsel %vm572, %v3576, 0.0
    %3581 = vset.pattern.permute.xlu0 8
    %3582 = vperm.xlu0 %3581, %v3238
    %v3583 = vpop.permute.xlu0 %3582
    %v3585 = vmul.f32 %v3577, %v3583
    %v3586 = vmul.f32 %v3578, %v3583
    %v3587 = vmul.f32 %v3579, %v3583
    %v3588 = vmul.f32 %v3580, %v3583
    %v3589 = vadd.f32 %v3561, %v3585
    %v3590 = vadd.f32 %v3562, %v3586
    %v3591 = vadd.f32 %v3563, %v3587
    %v3592 = vadd.f32 %v3564, %v3588
    %3593 = vset.pattern.permute.xlu0 4
    %3594 = vperm.xlu0 %3593, %v3239
    %v3595 = vpop.permute.xlu0 %3594
    %v3597 = vmul.f32 %v3589, %v3595
    %v3598 = vmul.f32 %v3590, %v3595
    %v3599 = vmul.f32 %v3591, %v3595
    %v3600 = vmul.f32 %v3592, %v3595
    %3601 = vset.pattern.permute.xlu0 5
    %3602 = vperm.xlu0 %3601, %v3239
    %v3603 = vpop.permute.xlu0 %3602
    %v3605 = vadd.f32 %v3597, %v3603
    %v3606 = vadd.f32 %v3598, %v3603
    %v3607 = vadd.f32 %v3599, %v3603
    %v3608 = vadd.f32 %v3600, %v3603
    %v3613 = vrot.slane %v3605, 4
    %v3614 = vrot.slane %v3606, 4
    %v3615 = vrot.slane %v3607, 4
    %v3616 = vrot.slane %v3608, 4
    %v3621 = vsel %vm1924, %v3352, %v3613
    %v3622 = vsel %vm1924, %v3353, %v3614
    %v3623 = vsel %vm1924, %v3354, %v3615
    %v3624 = vsel %vm1924, %v3355, %v3616
    %v3625 = vmax.f32 %v3621, 0.0
    %v3626 = vmax.f32 %v3622, 0.0
    %v3627 = vmax.f32 %v3623, 0.0
    %v3628 = vmax.f32 %v3624, 0.0
    %3629 = vst [vmem:[%s59] sm:$0xff] %v3625
    %3630 = vst [vmem:[%s59 + $0x8] sm:$0xff] %v3626
    %3631 = vst [vmem:[%s59 + $0x10] sm:$0xff] %v3627
    %3632 = vst [vmem:[%s59 + $0x18] sm:$0xff] %v3628
    %v3633 = vld [vmem:[%s47] sm:$0xff]
    %v3634 = vld [vmem:[%s47 + $0x8] sm:$0xff]
    %v3635 = vld [vmem:[%s47 + $0x10] sm:$0xff]
    %v3636 = vld [vmem:[%s47 + $0x18] sm:$0xff]
    %v3637 = vld [vmem:[%s49] sm:$0xff]
    %v3638 = vld [vmem:[%s49 + $0x8] sm:$0xff]
    %v3639 = vld [vmem:[%s49 + $0x10] sm:$0xff]
    %v3640 = vld [vmem:[%s49 + $0x18] sm:$0xff]
    %v3641 = vld [vmem:[%s51] sm:$0xff]
    %v3642 = vld [vmem:[%s51 + $0x8] sm:$0xff]
    %v3643 = vld [vmem:[%s51 + $0x10] sm:$0xff]
    %v3644 = vld [vmem:[%s51 + $0x18] sm:$0xff]
    %v3646 = vsel %vm766, %v3633, 0
    %v3649 = vsel %vm766, %v3634, 0
    %v3652 = vsel %vm766, %v3635, 0
    %v3655 = vsel %vm766, %v3636, 0
    %3657 = vmatpush.msra.mxu0 0.0
    %3658 = vmatpush.msra.mxu0 0.0
    %3659 = vmatpush.msra.mxu0 0.0
    %3660 = vmatpush.msra.mxu0 0.0
    %3661 = vmatpush.msra.mxu0 0.0
    %3662 = vmatpush.msra.mxu0 0.0
    %3663 = vmatpush.msra.mxu0 0.0
    %3664 = vmatpush.msra.mxu0 0.0
    %3665 = vmatpush.msra.mxu0 0.0
    %3666 = vmatpush.msra.mxu0 0.0
    %3667 = vmatpush.msra.mxu0 0.0
    %3668 = vmatpush.msra.mxu0 0.0
    %3669 = vmatpush.msra.mxu0 0.0
    %3670 = vmatpush.msra.mxu0 0.0
    %3671 = vmatpush.msra.mxu0 %v1148
    %3672 = vmatpush.msra.mxu0 %v1144
    %3673 = vmatmul.f32.gmra.mxu0 %v3646
    %v3674 = vpop.f32.mrf.mxu0
    %v3675 = vadd.f32 0.0, %v3674
    %3676 = vmatmul.f32.gmra.mxu0 %v3649
    %v3677 = vpop.f32.mrf.mxu0
    %v3678 = vadd.f32 0.0, %v3677
    %3679 = vmatmul.f32.gmra.mxu0 %v3652
    %v3680 = vpop.f32.mrf.mxu0
    %v3681 = vadd.f32 0.0, %v3680
    %3682 = vmatmul.f32.gmra.mxu0 %v3655
    %v3683 = vpop.f32.mrf.mxu0
    %v3684 = vadd.f32 0.0, %v3683
    %3685 = vdwg.mxu0
    %3686 = vmatpush.msra.mxu0 0.0
    %3687 = vmatpush.msra.mxu0 0.0
    %3688 = vmatpush.msra.mxu0 0.0
    %3689 = vmatpush.msra.mxu0 0.0
    %3690 = vmatpush.msra.mxu0 0.0
    %3691 = vmatpush.msra.mxu0 0.0
    %3692 = vmatpush.msra.mxu0 0.0
    %3693 = vmatpush.msra.mxu0 0.0
    %3694 = vmatpush.msra.mxu0 0.0
    %3695 = vmatpush.msra.mxu0 0.0
    %3696 = vmatpush.msra.mxu0 0.0
    %3697 = vmatpush.msra.mxu0 0.0
    %3698 = vmatpush.msra.mxu0 0.0
    %3699 = vmatpush.msra.mxu0 0.0
    %3700 = vmatpush.msra.mxu0 %v1149
    %3701 = vmatpush.msra.mxu0 %v1145
    %3702 = vmatmul.f32.gmra.mxu0 %v3646
    %v3703 = vpop.f32.mrf.mxu0
    %v3704 = vadd.f32 0.0, %v3703
    %3705 = vmatmul.f32.gmra.mxu0 %v3649
    %v3706 = vpop.f32.mrf.mxu0
    %v3707 = vadd.f32 0.0, %v3706
    %3708 = vmatmul.f32.gmra.mxu0 %v3652
    %v3709 = vpop.f32.mrf.mxu0
    %v3710 = vadd.f32 0.0, %v3709
    %3711 = vmatmul.f32.gmra.mxu0 %v3655
    %v3712 = vpop.f32.mrf.mxu0
    %v3713 = vadd.f32 0.0, %v3712
    %3714 = vdwg.mxu0
    %3715 = vmatpush.msra.mxu0 0.0
    %3716 = vmatpush.msra.mxu0 0.0
    %3717 = vmatpush.msra.mxu0 0.0
    %3718 = vmatpush.msra.mxu0 0.0
    %3719 = vmatpush.msra.mxu0 0.0
    %3720 = vmatpush.msra.mxu0 0.0
    %3721 = vmatpush.msra.mxu0 0.0
    %3722 = vmatpush.msra.mxu0 0.0
    %3723 = vmatpush.msra.mxu0 0.0
    %3724 = vmatpush.msra.mxu0 0.0
    %3725 = vmatpush.msra.mxu0 0.0
    %3726 = vmatpush.msra.mxu0 0.0
    %3727 = vmatpush.msra.mxu0 0.0
    %3728 = vmatpush.msra.mxu0 0.0
    %3729 = vmatpush.msra.mxu0 %v1150
    %3730 = vmatpush.msra.mxu0 %v1146
    %3731 = vmatmul.f32.gmra.mxu0 %v3646
    %v3732 = vpop.f32.mrf.mxu0
    %v3733 = vadd.f32 0.0, %v3732
    %3734 = vmatmul.f32.gmra.mxu0 %v3649
    %v3735 = vpop.f32.mrf.mxu0
    %v3736 = vadd.f32 0.0, %v3735
    %3737 = vmatmul.f32.gmra.mxu0 %v3652
    %v3738 = vpop.f32.mrf.mxu0
    %v3739 = vadd.f32 0.0, %v3738
    %3740 = vmatmul.f32.gmra.mxu0 %v3655
    %v3741 = vpop.f32.mrf.mxu0
    %v3742 = vadd.f32 0.0, %v3741
    %3743 = vdwg.mxu0
    %3744 = vmatpush.msra.mxu0 0.0
    %3745 = vmatpush.msra.mxu0 0.0
    %3746 = vmatpush.msra.mxu0 0.0
    %3747 = vmatpush.msra.mxu0 0.0
    %3748 = vmatpush.msra.mxu0 0.0
    %3749 = vmatpush.msra.mxu0 0.0
    %3750 = vmatpush.msra.mxu0 0.0
    %3751 = vmatpush.msra.mxu0 0.0
    %3752 = vmatpush.msra.mxu0 0.0
    %3753 = vmatpush.msra.mxu0 0.0
    %3754 = vmatpush.msra.mxu0 0.0
    %3755 = vmatpush.msra.mxu0 0.0
    %3756 = vmatpush.msra.mxu0 0.0
    %3757 = vmatpush.msra.mxu0 0.0
    %3758 = vmatpush.msra.mxu0 %v1151
    %3759 = vmatpush.msra.mxu0 %v1147
    %3760 = vmatmul.f32.gmra.mxu0 %v3646
    %v3761 = vpop.f32.mrf.mxu0
    %v3762 = vadd.f32 0.0, %v3761
    %3763 = vmatmul.f32.gmra.mxu0 %v3649
    %v3764 = vpop.f32.mrf.mxu0
    %v3765 = vadd.f32 0.0, %v3764
    %3766 = vmatmul.f32.gmra.mxu0 %v3652
    %v3767 = vpop.f32.mrf.mxu0
    %v3768 = vadd.f32 0.0, %v3767
    %3769 = vmatmul.f32.gmra.mxu0 %v3655
    %v3770 = vpop.f32.mrf.mxu0
    %v3771 = vadd.f32 0.0, %v3770
    %3772 = vdwg.mxu0
    %3774 = vset.pattern.permute.xlu0 0
    %3775 = vperm.xlu0 %3774, %v3641
    %v3776 = vpop.permute.xlu0 %3775
    %3779 = vset.pattern.permute.xlu0 0
    %3780 = vperm.xlu0 %3779, %v3642
    %v3781 = vpop.permute.xlu0 %3780
    %3784 = vset.pattern.permute.xlu0 0
    %3785 = vperm.xlu0 %3784, %v3643
    %v3786 = vpop.permute.xlu0 %3785
    %3789 = vset.pattern.permute.xlu0 0
    %3790 = vperm.xlu0 %3789, %v3644
    %v3791 = vpop.permute.xlu0 %3790
    %v3793 = vmul.f32 %v3675, %v3776
    %v3794 = vmul.f32 %v3704, %v3776
    %v3795 = vmul.f32 %v3733, %v3776
    %v3796 = vmul.f32 %v3762, %v3776
    %v3797 = vmul.f32 %v3678, %v3781
    %v3798 = vmul.f32 %v3707, %v3781
    %v3799 = vmul.f32 %v3736, %v3781
    %v3800 = vmul.f32 %v3765, %v3781
    %v3801 = vmul.f32 %v3681, %v3786
    %v3802 = vmul.f32 %v3710, %v3786
    %v3803 = vmul.f32 %v3739, %v3786
    %v3804 = vmul.f32 %v3768, %v3786
    %v3805 = vmul.f32 %v3684, %v3791
    %v3806 = vmul.f32 %v3713, %v3791
    %v3807 = vmul.f32 %v3742, %v3791
    %v3808 = vmul.f32 %v3771, %v3791
    %3809 = vset.pattern.permute.xlu0 1
    %3810 = vperm.xlu0 %3809, %v3641
    %v3811 = vpop.permute.xlu0 %3810
    %3813 = vset.pattern.permute.xlu0 1
    %3814 = vperm.xlu0 %3813, %v3642
    %v3815 = vpop.permute.xlu0 %3814
    %3817 = vset.pattern.permute.xlu0 1
    %3818 = vperm.xlu0 %3817, %v3643
    %v3819 = vpop.permute.xlu0 %3818
    %3821 = vset.pattern.permute.xlu0 1
    %3822 = vperm.xlu0 %3821, %v3644
    %v3823 = vpop.permute.xlu0 %3822
    %v3825 = vadd.f32 %v3793, %v3811
    %v3826 = vadd.f32 %v3794, %v3811
    %v3827 = vadd.f32 %v3795, %v3811
    %v3828 = vadd.f32 %v3796, %v3811
    %v3829 = vadd.f32 %v3797, %v3815
    %v3830 = vadd.f32 %v3798, %v3815
    %v3831 = vadd.f32 %v3799, %v3815
    %v3832 = vadd.f32 %v3800, %v3815
    %v3833 = vadd.f32 %v3801, %v3819
    %v3834 = vadd.f32 %v3802, %v3819
    %v3835 = vadd.f32 %v3803, %v3819
    %v3836 = vadd.f32 %v3804, %v3819
    %v3837 = vadd.f32 %v3805, %v3823
    %v3838 = vadd.f32 %v3806, %v3823
    %v3839 = vadd.f32 %v3807, %v3823
    %v3840 = vadd.f32 %v3808, %v3823
    %3841 = vset.pattern.permute.xlu0 2
    %3842 = vperm.xlu0 %3841, %v3641
    %v3843 = vpop.permute.xlu0 %3842
    %3845 = vset.pattern.permute.xlu0 2
    %3846 = vperm.xlu0 %3845, %v3642
    %v3847 = vpop.permute.xlu0 %3846
    %3849 = vset.pattern.permute.xlu0 2
    %3850 = vperm.xlu0 %3849, %v3643
    %v3851 = vpop.permute.xlu0 %3850
    %3853 = vset.pattern.permute.xlu0 2
    %3854 = vperm.xlu0 %3853, %v3644
    %v3855 = vpop.permute.xlu0 %3854
    %v3857 = vmul.f32 %v3675, %v3843
    %v3858 = vmul.f32 %v3704, %v3843
    %v3859 = vmul.f32 %v3733, %v3843
    %v3860 = vmul.f32 %v3762, %v3843
    %v3861 = vmul.f32 %v3678, %v3847
    %v3862 = vmul.f32 %v3707, %v3847
    %v3863 = vmul.f32 %v3736, %v3847
    %v3864 = vmul.f32 %v3765, %v3847
    %v3865 = vmul.f32 %v3681, %v3851
    %v3866 = vmul.f32 %v3710, %v3851
    %v3867 = vmul.f32 %v3739, %v3851
    %v3868 = vmul.f32 %v3768, %v3851
    %v3869 = vmul.f32 %v3684, %v3855
    %v3870 = vmul.f32 %v3713, %v3855
    %v3871 = vmul.f32 %v3742, %v3855
    %v3872 = vmul.f32 %v3771, %v3855
    %3873 = vset.pattern.permute.xlu0 3
    %3874 = vperm.xlu0 %3873, %v3641
    %v3875 = vpop.permute.xlu0 %3874
    %3877 = vset.pattern.permute.xlu0 3
    %3878 = vperm.xlu0 %3877, %v3642
    %v3879 = vpop.permute.xlu0 %3878
    %3881 = vset.pattern.permute.xlu0 3
    %3882 = vperm.xlu0 %3881, %v3643
    %v3883 = vpop.permute.xlu0 %3882
    %3885 = vset.pattern.permute.xlu0 3
    %3886 = vperm.xlu0 %3885, %v3644
    %v3887 = vpop.permute.xlu0 %3886
    %v3889 = vadd.f32 %v3857, %v3875
    %v3890 = vadd.f32 %v3858, %v3875
    %v3891 = vadd.f32 %v3859, %v3875
    %v3892 = vadd.f32 %v3860, %v3875
    %v3893 = vadd.f32 %v3861, %v3879
    %v3894 = vadd.f32 %v3862, %v3879
    %v3895 = vadd.f32 %v3863, %v3879
    %v3896 = vadd.f32 %v3864, %v3879
    %v3897 = vadd.f32 %v3865, %v3883
    %v3898 = vadd.f32 %v3866, %v3883
    %v3899 = vadd.f32 %v3867, %v3883
    %v3900 = vadd.f32 %v3868, %v3883
    %v3901 = vadd.f32 %v3869, %v3887
    %v3902 = vadd.f32 %v3870, %v3887
    %v3903 = vadd.f32 %v3871, %v3887
    %v3904 = vadd.f32 %v3872, %v3887
    %3905 = vrot.lane.b32.xlu0 %v3825, 17
    %v3906 = vpop.permute.xlu0 %3905
    %3907 = vrot.lane.b32.xlu0 %v3829, 17
    %v3908 = vpop.permute.xlu0 %3907
    %3909 = vrot.lane.b32.xlu0 %v3833, 17
    %v3910 = vpop.permute.xlu0 %3909
    %3911 = vrot.lane.b32.xlu0 %v3837, 17
    %v3912 = vpop.permute.xlu0 %3911
    %3913 = vrot.lane.b32.xlu0 %v3826, 17
    %v3914 = vpop.permute.xlu0 %3913
    %3915 = vrot.lane.b32.xlu0 %v3830, 17
    %v3916 = vpop.permute.xlu0 %3915
    %3917 = vrot.lane.b32.xlu0 %v3834, 17
    %v3918 = vpop.permute.xlu0 %3917
    %3919 = vrot.lane.b32.xlu0 %v3838, 17
    %v3920 = vpop.permute.xlu0 %3919
    %3921 = vrot.lane.b32.xlu0 %v3827, 17
    %v3922 = vpop.permute.xlu0 %3921
    %3923 = vrot.lane.b32.xlu0 %v3831, 17
    %v3924 = vpop.permute.xlu0 %3923
    %3925 = vrot.lane.b32.xlu0 %v3835, 17
    %v3926 = vpop.permute.xlu0 %3925
    %3927 = vrot.lane.b32.xlu0 %v3839, 17
    %v3928 = vpop.permute.xlu0 %3927
    %3929 = vrot.lane.b32.xlu0 %v3828, 17
    %v3930 = vpop.permute.xlu0 %3929
    %3931 = vrot.lane.b32.xlu0 %v3832, 17
    %v3932 = vpop.permute.xlu0 %3931
    %3933 = vrot.lane.b32.xlu0 %v3836, 17
    %v3934 = vpop.permute.xlu0 %3933
    %3935 = vrot.lane.b32.xlu0 %v3840, 17
    %v3936 = vpop.permute.xlu0 %3935
    %v3937 = vsel %vm272, %v3922, %v3930
    %v3938 = vsel %vm272, %v3924, %v3932
    %v3939 = vsel %vm272, %v3926, %v3934
    %v3940 = vsel %vm272, %v3928, %v3936
    %v3941 = vsel %vm272, %v3914, %v3922
    %v3942 = vsel %vm272, %v3916, %v3924
    %v3943 = vsel %vm272, %v3918, %v3926
    %v3944 = vsel %vm272, %v3920, %v3928
    %v3945 = vsel %vm272, %v3906, %v3914
    %v3946 = vsel %vm272, %v3908, %v3916
    %v3947 = vsel %vm272, %v3910, %v3918
    %v3948 = vsel %vm272, %v3912, %v3920
    %v3949 = vsel %vm272, %v3930, %v3906
    %v3950 = vsel %vm272, %v3932, %v3908
    %v3951 = vsel %vm272, %v3934, %v3910
    %v3952 = vsel %vm272, %v3936, %v3912
    %v3953 = vsel %vm285, %v3949, 0.0
    %v3954 = vsel %vm286, %v3945, 0.0
    %v3955 = vsel %vm287, %v3941, 0.0
    %v3956 = vsel %vm288, %v3937, 0.0
    %v3957 = vsel %vm285, %v3950, 0.0
    %v3958 = vsel %vm286, %v3946, 0.0
    %v3959 = vsel %vm287, %v3942, 0.0
    %v3960 = vsel %vm288, %v3938, 0.0
    %v3961 = vsel %vm285, %v3951, 0.0
    %v3962 = vsel %vm286, %v3947, 0.0
    %v3963 = vsel %vm287, %v3943, 0.0
    %v3964 = vsel %vm288, %v3939, 0.0
    %v3965 = vsel %vm285, %v3952, 0.0
    %v3966 = vsel %vm286, %v3948, 0.0
    %v3967 = vsel %vm287, %v3944, 0.0
    %v3968 = vsel %vm288, %v3940, 0.0
    %3970 = vset.pattern.permute.xlu0 0
    %3971 = vperm.xlu0 %3970, %v3637
    %v3972 = vpop.permute.xlu0 %3971
    %3975 = vset.pattern.permute.xlu0 0
    %3976 = vperm.xlu0 %3975, %v3638
    %v3977 = vpop.permute.xlu0 %3976
    %3980 = vset.pattern.permute.xlu0 0
    %3981 = vperm.xlu0 %3980, %v3639
    %v3982 = vpop.permute.xlu0 %3981
    %3985 = vset.pattern.permute.xlu0 0
    %3986 = vperm.xlu0 %3985, %v3640
    %v3987 = vpop.permute.xlu0 %3986
    %v3989 = vmul.f32 %v3953, %v3972
    %v3990 = vmul.f32 %v3954, %v3972
    %v3991 = vmul.f32 %v3955, %v3972
    %v3992 = vmul.f32 %v3956, %v3972
    %v3993 = vmul.f32 %v3957, %v3977
    %v3994 = vmul.f32 %v3958, %v3977
    %v3995 = vmul.f32 %v3959, %v3977
    %v3996 = vmul.f32 %v3960, %v3977
    %v3997 = vmul.f32 %v3961, %v3982
    %v3998 = vmul.f32 %v3962, %v3982
    %v3999 = vmul.f32 %v3963, %v3982
    %v4000 = vmul.f32 %v3964, %v3982
    %v4001 = vmul.f32 %v3965, %v3987
    %v4002 = vmul.f32 %v3966, %v3987
    %v4003 = vmul.f32 %v3967, %v3987
    %v4004 = vmul.f32 %v3968, %v3987
    %v4005 = vadd.f32 %v3989, 0.0
    %v4006 = vadd.f32 %v3990, 0.0
    %v4007 = vadd.f32 %v3991, 0.0
    %v4008 = vadd.f32 %v3992, 0.0
    %v4009 = vadd.f32 %v3993, 0.0
    %v4010 = vadd.f32 %v3994, 0.0
    %v4011 = vadd.f32 %v3995, 0.0
    %v4012 = vadd.f32 %v3996, 0.0
    %v4013 = vadd.f32 %v3997, 0.0
    %v4014 = vadd.f32 %v3998, 0.0
    %v4015 = vadd.f32 %v3999, 0.0
    %v4016 = vadd.f32 %v4000, 0.0
    %v4017 = vadd.f32 %v4001, 0.0
    %v4018 = vadd.f32 %v4002, 0.0
    %v4019 = vadd.f32 %v4003, 0.0
    %v4020 = vadd.f32 %v4004, 0.0
    %4021 = vrot.lane.b32.xlu0 %v3825, 16
    %v4022 = vpop.permute.xlu0 %4021
    %4023 = vrot.lane.b32.xlu0 %v3829, 16
    %v4024 = vpop.permute.xlu0 %4023
    %4025 = vrot.lane.b32.xlu0 %v3833, 16
    %v4026 = vpop.permute.xlu0 %4025
    %4027 = vrot.lane.b32.xlu0 %v3837, 16
    %v4028 = vpop.permute.xlu0 %4027
    %4029 = vrot.lane.b32.xlu0 %v3826, 16
    %v4030 = vpop.permute.xlu0 %4029
    %4031 = vrot.lane.b32.xlu0 %v3830, 16
    %v4032 = vpop.permute.xlu0 %4031
    %4033 = vrot.lane.b32.xlu0 %v3834, 16
    %v4034 = vpop.permute.xlu0 %4033
    %4035 = vrot.lane.b32.xlu0 %v3838, 16
    %v4036 = vpop.permute.xlu0 %4035
    %4037 = vrot.lane.b32.xlu0 %v3827, 16
    %v4038 = vpop.permute.xlu0 %4037
    %4039 = vrot.lane.b32.xlu0 %v3831, 16
    %v4040 = vpop.permute.xlu0 %4039
    %4041 = vrot.lane.b32.xlu0 %v3835, 16
    %v4042 = vpop.permute.xlu0 %4041
    %4043 = vrot.lane.b32.xlu0 %v3839, 16
    %v4044 = vpop.permute.xlu0 %4043
    %4045 = vrot.lane.b32.xlu0 %v3828, 16
    %v4046 = vpop.permute.xlu0 %4045
    %4047 = vrot.lane.b32.xlu0 %v3832, 16
    %v4048 = vpop.permute.xlu0 %4047
    %4049 = vrot.lane.b32.xlu0 %v3836, 16
    %v4050 = vpop.permute.xlu0 %4049
    %4051 = vrot.lane.b32.xlu0 %v3840, 16
    %v4052 = vpop.permute.xlu0 %4051
    %v4053 = vsel %vm314, %v4038, %v4046
    %v4054 = vsel %vm314, %v4040, %v4048
    %v4055 = vsel %vm314, %v4042, %v4050
    %v4056 = vsel %vm314, %v4044, %v4052
    %v4057 = vsel %vm314, %v4030, %v4038
    %v4058 = vsel %vm314, %v4032, %v4040
    %v4059 = vsel %vm314, %v4034, %v4042
    %v4060 = vsel %vm314, %v4036, %v4044
    %v4061 = vsel %vm314, %v4022, %v4030
    %v4062 = vsel %vm314, %v4024, %v4032
    %v4063 = vsel %vm314, %v4026, %v4034
    %v4064 = vsel %vm314, %v4028, %v4036
    %v4065 = vsel %vm314, %v4046, %v4022
    %v4066 = vsel %vm314, %v4048, %v4024
    %v4067 = vsel %vm314, %v4050, %v4026
    %v4068 = vsel %vm314, %v4052, %v4028
    %v4069 = vsel %vm324, %v4065, 0.0
    %v4070 = vsel %vm325, %v4061, 0.0
    %v4071 = vsel %vm326, %v4057, 0.0
    %v4072 = vsel %vm327, %v4053, 0.0
    %v4073 = vsel %vm324, %v4066, 0.0
    %v4074 = vsel %vm325, %v4062, 0.0
    %v4075 = vsel %vm326, %v4058, 0.0
    %v4076 = vsel %vm327, %v4054, 0.0
    %v4077 = vsel %vm324, %v4067, 0.0
    %v4078 = vsel %vm325, %v4063, 0.0
    %v4079 = vsel %vm326, %v4059, 0.0
    %v4080 = vsel %vm327, %v4055, 0.0
    %v4081 = vsel %vm324, %v4068, 0.0
    %v4082 = vsel %vm325, %v4064, 0.0
    %v4083 = vsel %vm326, %v4060, 0.0
    %v4084 = vsel %vm327, %v4056, 0.0
    %4085 = vset.pattern.permute.xlu0 1
    %4086 = vperm.xlu0 %4085, %v3637
    %v4087 = vpop.permute.xlu0 %4086
    %4089 = vset.pattern.permute.xlu0 1
    %4090 = vperm.xlu0 %4089, %v3638
    %v4091 = vpop.permute.xlu0 %4090
    %4093 = vset.pattern.permute.xlu0 1
    %4094 = vperm.xlu0 %4093, %v3639
    %v4095 = vpop.permute.xlu0 %4094
    %4097 = vset.pattern.permute.xlu0 1
    %4098 = vperm.xlu0 %4097, %v3640
    %v4099 = vpop.permute.xlu0 %4098
    %v4101 = vmul.f32 %v4069, %v4087
    %v4102 = vmul.f32 %v4070, %v4087
    %v4103 = vmul.f32 %v4071, %v4087
    %v4104 = vmul.f32 %v4072, %v4087
    %v4105 = vmul.f32 %v4073, %v4091
    %v4106 = vmul.f32 %v4074, %v4091
    %v4107 = vmul.f32 %v4075, %v4091
    %v4108 = vmul.f32 %v4076, %v4091
    %v4109 = vmul.f32 %v4077, %v4095
    %v4110 = vmul.f32 %v4078, %v4095
    %v4111 = vmul.f32 %v4079, %v4095
    %v4112 = vmul.f32 %v4080, %v4095
    %v4113 = vmul.f32 %v4081, %v4099
    %v4114 = vmul.f32 %v4082, %v4099
    %v4115 = vmul.f32 %v4083, %v4099
    %v4116 = vmul.f32 %v4084, %v4099
    %v4117 = vadd.f32 %v4005, %v4101
    %v4118 = vadd.f32 %v4006, %v4102
    %v4119 = vadd.f32 %v4007, %v4103
    %v4120 = vadd.f32 %v4008, %v4104
    %v4121 = vadd.f32 %v4009, %v4105
    %v4122 = vadd.f32 %v4010, %v4106
    %v4123 = vadd.f32 %v4011, %v4107
    %v4124 = vadd.f32 %v4012, %v4108
    %v4125 = vadd.f32 %v4013, %v4109
    %v4126 = vadd.f32 %v4014, %v4110
    %v4127 = vadd.f32 %v4015, %v4111
    %v4128 = vadd.f32 %v4016, %v4112
    %v4129 = vadd.f32 %v4017, %v4113
    %v4130 = vadd.f32 %v4018, %v4114
    %v4131 = vadd.f32 %v4019, %v4115
    %v4132 = vadd.f32 %v4020, %v4116
    %4133 = vrot.lane.b32.xlu0 %v3825, 15
    %v4134 = vpop.permute.xlu0 %4133
    %4135 = vrot.lane.b32.xlu0 %v3829, 15
    %v4136 = vpop.permute.xlu0 %4135
    %4137 = vrot.lane.b32.xlu0 %v3833, 15
    %v4138 = vpop.permute.xlu0 %4137
    %4139 = vrot.lane.b32.xlu0 %v3837, 15
    %v4140 = vpop.permute.xlu0 %4139
    %4141 = vrot.lane.b32.xlu0 %v3826, 15
    %v4142 = vpop.permute.xlu0 %4141
    %4143 = vrot.lane.b32.xlu0 %v3830, 15
    %v4144 = vpop.permute.xlu0 %4143
    %4145 = vrot.lane.b32.xlu0 %v3834, 15
    %v4146 = vpop.permute.xlu0 %4145
    %4147 = vrot.lane.b32.xlu0 %v3838, 15
    %v4148 = vpop.permute.xlu0 %4147
    %4149 = vrot.lane.b32.xlu0 %v3827, 15
    %v4150 = vpop.permute.xlu0 %4149
    %4151 = vrot.lane.b32.xlu0 %v3831, 15
    %v4152 = vpop.permute.xlu0 %4151
    %4153 = vrot.lane.b32.xlu0 %v3835, 15
    %v4154 = vpop.permute.xlu0 %4153
    %4155 = vrot.lane.b32.xlu0 %v3839, 15
    %v4156 = vpop.permute.xlu0 %4155
    %4157 = vrot.lane.b32.xlu0 %v3828, 15
    %v4158 = vpop.permute.xlu0 %4157
    %4159 = vrot.lane.b32.xlu0 %v3832, 15
    %v4160 = vpop.permute.xlu0 %4159
    %4161 = vrot.lane.b32.xlu0 %v3836, 15
    %v4162 = vpop.permute.xlu0 %4161
    %4163 = vrot.lane.b32.xlu0 %v3840, 15
    %v4164 = vpop.permute.xlu0 %4163
    %v4165 = vsel %vm352, %v4150, %v4158
    %v4166 = vsel %vm352, %v4152, %v4160
    %v4167 = vsel %vm352, %v4154, %v4162
    %v4168 = vsel %vm352, %v4156, %v4164
    %v4169 = vsel %vm352, %v4142, %v4150
    %v4170 = vsel %vm352, %v4144, %v4152
    %v4171 = vsel %vm352, %v4146, %v4154
    %v4172 = vsel %vm352, %v4148, %v4156
    %v4173 = vsel %vm352, %v4134, %v4142
    %v4174 = vsel %vm352, %v4136, %v4144
    %v4175 = vsel %vm352, %v4138, %v4146
    %v4176 = vsel %vm352, %v4140, %v4148
    %v4177 = vsel %vm352, %v4158, %v4134
    %v4178 = vsel %vm352, %v4160, %v4136
    %v4179 = vsel %vm352, %v4162, %v4138
    %v4180 = vsel %vm352, %v4164, %v4140
    %v4181 = vsel %vm364, %v4177, 0.0
    %v4182 = vsel %vm365, %v4173, 0.0
    %v4183 = vsel %vm366, %v4169, 0.0
    %v4184 = vsel %vm367, %v4165, 0.0
    %v4185 = vsel %vm364, %v4178, 0.0
    %v4186 = vsel %vm365, %v4174, 0.0
    %v4187 = vsel %vm366, %v4170, 0.0
    %v4188 = vsel %vm367, %v4166, 0.0
    %v4189 = vsel %vm364, %v4179, 0.0
    %v4190 = vsel %vm365, %v4175, 0.0
    %v4191 = vsel %vm366, %v4171, 0.0
    %v4192 = vsel %vm367, %v4167, 0.0
    %v4193 = vsel %vm364, %v4180, 0.0
    %v4194 = vsel %vm365, %v4176, 0.0
    %v4195 = vsel %vm366, %v4172, 0.0
    %v4196 = vsel %vm367, %v4168, 0.0
    %4197 = vset.pattern.permute.xlu0 2
    %4198 = vperm.xlu0 %4197, %v3637
    %v4199 = vpop.permute.xlu0 %4198
    %4201 = vset.pattern.permute.xlu0 2
    %4202 = vperm.xlu0 %4201, %v3638
    %v4203 = vpop.permute.xlu0 %4202
    %4205 = vset.pattern.permute.xlu0 2
    %4206 = vperm.xlu0 %4205, %v3639
    %v4207 = vpop.permute.xlu0 %4206
    %4209 = vset.pattern.permute.xlu0 2
    %4210 = vperm.xlu0 %4209, %v3640
    %v4211 = vpop.permute.xlu0 %4210
    %v4213 = vmul.f32 %v4181, %v4199
    %v4214 = vmul.f32 %v4182, %v4199
    %v4215 = vmul.f32 %v4183, %v4199
    %v4216 = vmul.f32 %v4184, %v4199
    %v4217 = vmul.f32 %v4185, %v4203
    %v4218 = vmul.f32 %v4186, %v4203
    %v4219 = vmul.f32 %v4187, %v4203
    %v4220 = vmul.f32 %v4188, %v4203
    %v4221 = vmul.f32 %v4189, %v4207
    %v4222 = vmul.f32 %v4190, %v4207
    %v4223 = vmul.f32 %v4191, %v4207
    %v4224 = vmul.f32 %v4192, %v4207
    %v4225 = vmul.f32 %v4193, %v4211
    %v4226 = vmul.f32 %v4194, %v4211
    %v4227 = vmul.f32 %v4195, %v4211
    %v4228 = vmul.f32 %v4196, %v4211
    %v4229 = vadd.f32 %v4117, %v4213
    %v4230 = vadd.f32 %v4118, %v4214
    %v4231 = vadd.f32 %v4119, %v4215
    %v4232 = vadd.f32 %v4120, %v4216
    %v4233 = vadd.f32 %v4121, %v4217
    %v4234 = vadd.f32 %v4122, %v4218
    %v4235 = vadd.f32 %v4123, %v4219
    %v4236 = vadd.f32 %v4124, %v4220
    %v4237 = vadd.f32 %v4125, %v4221
    %v4238 = vadd.f32 %v4126, %v4222
    %v4239 = vadd.f32 %v4127, %v4223
    %v4240 = vadd.f32 %v4128, %v4224
    %v4241 = vadd.f32 %v4129, %v4225
    %v4242 = vadd.f32 %v4130, %v4226
    %v4243 = vadd.f32 %v4131, %v4227
    %v4244 = vadd.f32 %v4132, %v4228
    %4245 = vrot.lane.b32.xlu0 %v3825, 1
    %v4246 = vpop.permute.xlu0 %4245
    %4247 = vrot.lane.b32.xlu0 %v3829, 1
    %v4248 = vpop.permute.xlu0 %4247
    %4249 = vrot.lane.b32.xlu0 %v3833, 1
    %v4250 = vpop.permute.xlu0 %4249
    %4251 = vrot.lane.b32.xlu0 %v3837, 1
    %v4252 = vpop.permute.xlu0 %4251
    %4253 = vrot.lane.b32.xlu0 %v3826, 1
    %v4254 = vpop.permute.xlu0 %4253
    %4255 = vrot.lane.b32.xlu0 %v3830, 1
    %v4256 = vpop.permute.xlu0 %4255
    %4257 = vrot.lane.b32.xlu0 %v3834, 1
    %v4258 = vpop.permute.xlu0 %4257
    %4259 = vrot.lane.b32.xlu0 %v3838, 1
    %v4260 = vpop.permute.xlu0 %4259
    %4261 = vrot.lane.b32.xlu0 %v3827, 1
    %v4262 = vpop.permute.xlu0 %4261
    %4263 = vrot.lane.b32.xlu0 %v3831, 1
    %v4264 = vpop.permute.xlu0 %4263
    %4265 = vrot.lane.b32.xlu0 %v3835, 1
    %v4266 = vpop.permute.xlu0 %4265
    %4267 = vrot.lane.b32.xlu0 %v3839, 1
    %v4268 = vpop.permute.xlu0 %4267
    %4269 = vrot.lane.b32.xlu0 %v3828, 1
    %v4270 = vpop.permute.xlu0 %4269
    %4271 = vrot.lane.b32.xlu0 %v3832, 1
    %v4272 = vpop.permute.xlu0 %4271
    %4273 = vrot.lane.b32.xlu0 %v3836, 1
    %v4274 = vpop.permute.xlu0 %4273
    %4275 = vrot.lane.b32.xlu0 %v3840, 1
    %v4276 = vpop.permute.xlu0 %4275
    %v4277 = vsel %vm392, %v4262, %v4270
    %v4278 = vsel %vm392, %v4264, %v4272
    %v4279 = vsel %vm392, %v4266, %v4274
    %v4280 = vsel %vm392, %v4268, %v4276
    %v4281 = vsel %vm392, %v4254, %v4262
    %v4282 = vsel %vm392, %v4256, %v4264
    %v4283 = vsel %vm392, %v4258, %v4266
    %v4284 = vsel %vm392, %v4260, %v4268
    %v4285 = vsel %vm392, %v4246, %v4254
    %v4286 = vsel %vm392, %v4248, %v4256
    %v4287 = vsel %vm392, %v4250, %v4258
    %v4288 = vsel %vm392, %v4252, %v4260
    %v4289 = vsel %vm392, %v4270, %v4246
    %v4290 = vsel %vm392, %v4272, %v4248
    %v4291 = vsel %vm392, %v4274, %v4250
    %v4292 = vsel %vm392, %v4276, %v4252
    %v4293 = vsel %vm402, %v4289, 0.0
    %v4294 = vsel %vm403, %v4285, 0.0
    %v4295 = vsel %vm404, %v4281, 0.0
    %v4296 = vsel %vm405, %v4277, 0.0
    %v4297 = vsel %vm402, %v4290, 0.0
    %v4298 = vsel %vm403, %v4286, 0.0
    %v4299 = vsel %vm404, %v4282, 0.0
    %v4300 = vsel %vm405, %v4278, 0.0
    %v4301 = vsel %vm402, %v4291, 0.0
    %v4302 = vsel %vm403, %v4287, 0.0
    %v4303 = vsel %vm404, %v4283, 0.0
    %v4304 = vsel %vm405, %v4279, 0.0
    %v4305 = vsel %vm402, %v4292, 0.0
    %v4306 = vsel %vm403, %v4288, 0.0
    %v4307 = vsel %vm404, %v4284, 0.0
    %v4308 = vsel %vm405, %v4280, 0.0
    %4309 = vset.pattern.permute.xlu0 3
    %4310 = vperm.xlu0 %4309, %v3637
    %v4311 = vpop.permute.xlu0 %4310
    %4313 = vset.pattern.permute.xlu0 3
    %4314 = vperm.xlu0 %4313, %v3638
    %v4315 = vpop.permute.xlu0 %4314
    %4317 = vset.pattern.permute.xlu0 3
    %4318 = vperm.xlu0 %4317, %v3639
    %v4319 = vpop.permute.xlu0 %4318
    %4321 = vset.pattern.permute.xlu0 3
    %4322 = vperm.xlu0 %4321, %v3640
    %v4323 = vpop.permute.xlu0 %4322
    %v4325 = vmul.f32 %v4293, %v4311
    %v4326 = vmul.f32 %v4294, %v4311
    %v4327 = vmul.f32 %v4295, %v4311
    %v4328 = vmul.f32 %v4296, %v4311
    %v4329 = vmul.f32 %v4297, %v4315
    %v4330 = vmul.f32 %v4298, %v4315
    %v4331 = vmul.f32 %v4299, %v4315
    %v4332 = vmul.f32 %v4300, %v4315
    %v4333 = vmul.f32 %v4301, %v4319
    %v4334 = vmul.f32 %v4302, %v4319
    %v4335 = vmul.f32 %v4303, %v4319
    %v4336 = vmul.f32 %v4304, %v4319
    %v4337 = vmul.f32 %v4305, %v4323
    %v4338 = vmul.f32 %v4306, %v4323
    %v4339 = vmul.f32 %v4307, %v4323
    %v4340 = vmul.f32 %v4308, %v4323
    %v4341 = vadd.f32 %v4229, %v4325
    %v4342 = vadd.f32 %v4230, %v4326
    %v4343 = vadd.f32 %v4231, %v4327
    %v4344 = vadd.f32 %v4232, %v4328
    %v4345 = vadd.f32 %v4233, %v4329
    %v4346 = vadd.f32 %v4234, %v4330
    %v4347 = vadd.f32 %v4235, %v4331
    %v4348 = vadd.f32 %v4236, %v4332
    %v4349 = vadd.f32 %v4237, %v4333
    %v4350 = vadd.f32 %v4238, %v4334
    %v4351 = vadd.f32 %v4239, %v4335
    %v4352 = vadd.f32 %v4240, %v4336
    %v4353 = vadd.f32 %v4241, %v4337
    %v4354 = vadd.f32 %v4242, %v4338
    %v4355 = vadd.f32 %v4243, %v4339
    %v4356 = vadd.f32 %v4244, %v4340
    %4357 = vset.pattern.permute.xlu0 4
    %4358 = vperm.xlu0 %4357, %v3637
    %v4359 = vpop.permute.xlu0 %4358
    %4361 = vset.pattern.permute.xlu0 4
    %4362 = vperm.xlu0 %4361, %v3638
    %v4363 = vpop.permute.xlu0 %4362
    %4365 = vset.pattern.permute.xlu0 4
    %4366 = vperm.xlu0 %4365, %v3639
    %v4367 = vpop.permute.xlu0 %4366
    %4369 = vset.pattern.permute.xlu0 4
    %4370 = vperm.xlu0 %4369, %v3640
    %v4371 = vpop.permute.xlu0 %4370
    %v4373 = vmul.f32 %v3825, %v4359
    %v4374 = vmul.f32 %v3826, %v4359
    %v4375 = vmul.f32 %v3827, %v4359
    %v4376 = vmul.f32 %v3828, %v4359
    %v4377 = vmul.f32 %v3829, %v4363
    %v4378 = vmul.f32 %v3830, %v4363
    %v4379 = vmul.f32 %v3831, %v4363
    %v4380 = vmul.f32 %v3832, %v4363
    %v4381 = vmul.f32 %v3833, %v4367
    %v4382 = vmul.f32 %v3834, %v4367
    %v4383 = vmul.f32 %v3835, %v4367
    %v4384 = vmul.f32 %v3836, %v4367
    %v4385 = vmul.f32 %v3837, %v4371
    %v4386 = vmul.f32 %v3838, %v4371
    %v4387 = vmul.f32 %v3839, %v4371
    %v4388 = vmul.f32 %v3840, %v4371
    %v4389 = vadd.f32 %v4341, %v4373
    %v4390 = vadd.f32 %v4342, %v4374
    %v4391 = vadd.f32 %v4343, %v4375
    %v4392 = vadd.f32 %v4344, %v4376
    %v4393 = vadd.f32 %v4345, %v4377
    %v4394 = vadd.f32 %v4346, %v4378
    %v4395 = vadd.f32 %v4347, %v4379
    %v4396 = vadd.f32 %v4348, %v4380
    %v4397 = vadd.f32 %v4349, %v4381
    %v4398 = vadd.f32 %v4350, %v4382
    %v4399 = vadd.f32 %v4351, %v4383
    %v4400 = vadd.f32 %v4352, %v4384
    %v4401 = vadd.f32 %v4353, %v4385
    %v4402 = vadd.f32 %v4354, %v4386
    %v4403 = vadd.f32 %v4355, %v4387
    %v4404 = vadd.f32 %v4356, %v4388
    %4405 = vrot.lane.b32.xlu0 %v3825, 127
    %v4406 = vpop.permute.xlu0 %4405
    %4407 = vrot.lane.b32.xlu0 %v3829, 127
    %v4408 = vpop.permute.xlu0 %4407
    %4409 = vrot.lane.b32.xlu0 %v3833, 127
    %v4410 = vpop.permute.xlu0 %4409
    %4411 = vrot.lane.b32.xlu0 %v3837, 127
    %v4412 = vpop.permute.xlu0 %4411
    %4413 = vrot.lane.b32.xlu0 %v3826, 127
    %v4414 = vpop.permute.xlu0 %4413
    %4415 = vrot.lane.b32.xlu0 %v3830, 127
    %v4416 = vpop.permute.xlu0 %4415
    %4417 = vrot.lane.b32.xlu0 %v3834, 127
    %v4418 = vpop.permute.xlu0 %4417
    %4419 = vrot.lane.b32.xlu0 %v3838, 127
    %v4420 = vpop.permute.xlu0 %4419
    %4421 = vrot.lane.b32.xlu0 %v3827, 127
    %v4422 = vpop.permute.xlu0 %4421
    %4423 = vrot.lane.b32.xlu0 %v3831, 127
    %v4424 = vpop.permute.xlu0 %4423
    %4425 = vrot.lane.b32.xlu0 %v3835, 127
    %v4426 = vpop.permute.xlu0 %4425
    %4427 = vrot.lane.b32.xlu0 %v3839, 127
    %v4428 = vpop.permute.xlu0 %4427
    %4429 = vrot.lane.b32.xlu0 %v3828, 127
    %v4430 = vpop.permute.xlu0 %4429
    %4431 = vrot.lane.b32.xlu0 %v3832, 127
    %v4432 = vpop.permute.xlu0 %4431
    %4433 = vrot.lane.b32.xlu0 %v3836, 127
    %v4434 = vpop.permute.xlu0 %4433
    %4435 = vrot.lane.b32.xlu0 %v3840, 127
    %v4436 = vpop.permute.xlu0 %4435
    %v4437 = vsel %vm442, %v4422, %v4430
    %v4438 = vsel %vm442, %v4424, %v4432
    %v4439 = vsel %vm442, %v4426, %v4434
    %v4440 = vsel %vm442, %v4428, %v4436
    %v4441 = vsel %vm442, %v4414, %v4422
    %v4442 = vsel %vm442, %v4416, %v4424
    %v4443 = vsel %vm442, %v4418, %v4426
    %v4444 = vsel %vm442, %v4420, %v4428
    %v4445 = vsel %vm442, %v4406, %v4414
    %v4446 = vsel %vm442, %v4408, %v4416
    %v4447 = vsel %vm442, %v4410, %v4418
    %v4448 = vsel %vm442, %v4412, %v4420
    %v4449 = vsel %vm442, %v4430, %v4406
    %v4450 = vsel %vm442, %v4432, %v4408
    %v4451 = vsel %vm442, %v4434, %v4410
    %v4452 = vsel %vm442, %v4436, %v4412
    %v4453 = vsel %vm452, %v4445, 0.0
    %v4454 = vsel %vm453, %v4441, 0.0
    %v4455 = vsel %vm454, %v4437, 0.0
    %v4456 = vsel %vm455, %v4449, 0.0
    %v4457 = vsel %vm452, %v4446, 0.0
    %v4458 = vsel %vm453, %v4442, 0.0
    %v4459 = vsel %vm454, %v4438, 0.0
    %v4460 = vsel %vm455, %v4450, 0.0
    %v4461 = vsel %vm452, %v4447, 0.0
    %v4462 = vsel %vm453, %v4443, 0.0
    %v4463 = vsel %vm454, %v4439, 0.0
    %v4464 = vsel %vm455, %v4451, 0.0
    %v4465 = vsel %vm452, %v4448, 0.0
    %v4466 = vsel %vm453, %v4444, 0.0
    %v4467 = vsel %vm454, %v4440, 0.0
    %v4468 = vsel %vm455, %v4452, 0.0
    %4469 = vset.pattern.permute.xlu0 5
    %4470 = vperm.xlu0 %4469, %v3637
    %v4471 = vpop.permute.xlu0 %4470
    %4473 = vset.pattern.permute.xlu0 5
    %4474 = vperm.xlu0 %4473, %v3638
    %v4475 = vpop.permute.xlu0 %4474
    %4477 = vset.pattern.permute.xlu0 5
    %4478 = vperm.xlu0 %4477, %v3639
    %v4479 = vpop.permute.xlu0 %4478
    %4481 = vset.pattern.permute.xlu0 5
    %4482 = vperm.xlu0 %4481, %v3640
    %v4483 = vpop.permute.xlu0 %4482
    %v4485 = vmul.f32 %v4453, %v4471
    %v4486 = vmul.f32 %v4454, %v4471
    %v4487 = vmul.f32 %v4455, %v4471
    %v4488 = vmul.f32 %v4456, %v4471
    %v4489 = vmul.f32 %v4457, %v4475
    %v4490 = vmul.f32 %v4458, %v4475
    %v4491 = vmul.f32 %v4459, %v4475
    %v4492 = vmul.f32 %v4460, %v4475
    %v4493 = vmul.f32 %v4461, %v4479
    %v4494 = vmul.f32 %v4462, %v4479
    %v4495 = vmul.f32 %v4463, %v4479
    %v4496 = vmul.f32 %v4464, %v4479
    %v4497 = vmul.f32 %v4465, %v4483
    %v4498 = vmul.f32 %v4466, %v4483
    %v4499 = vmul.f32 %v4467, %v4483
    %v4500 = vmul.f32 %v4468, %v4483
    %v4501 = vadd.f32 %v4389, %v4485
    %v4502 = vadd.f32 %v4390, %v4486
    %v4503 = vadd.f32 %v4391, %v4487
    %v4504 = vadd.f32 %v4392, %v4488
    %v4505 = vadd.f32 %v4393, %v4489
    %v4506 = vadd.f32 %v4394, %v4490
    %v4507 = vadd.f32 %v4395, %v4491
    %v4508 = vadd.f32 %v4396, %v4492
    %v4509 = vadd.f32 %v4397, %v4493
    %v4510 = vadd.f32 %v4398, %v4494
    %v4511 = vadd.f32 %v4399, %v4495
    %v4512 = vadd.f32 %v4400, %v4496
    %v4513 = vadd.f32 %v4401, %v4497
    %v4514 = vadd.f32 %v4402, %v4498
    %v4515 = vadd.f32 %v4403, %v4499
    %v4516 = vadd.f32 %v4404, %v4500
    %4517 = vrot.lane.b32.xlu0 %v3825, 113
    %v4518 = vpop.permute.xlu0 %4517
    %4519 = vrot.lane.b32.xlu0 %v3829, 113
    %v4520 = vpop.permute.xlu0 %4519
    %4521 = vrot.lane.b32.xlu0 %v3833, 113
    %v4522 = vpop.permute.xlu0 %4521
    %4523 = vrot.lane.b32.xlu0 %v3837, 113
    %v4524 = vpop.permute.xlu0 %4523
    %4525 = vrot.lane.b32.xlu0 %v3826, 113
    %v4526 = vpop.permute.xlu0 %4525
    %4527 = vrot.lane.b32.xlu0 %v3830, 113
    %v4528 = vpop.permute.xlu0 %4527
    %4529 = vrot.lane.b32.xlu0 %v3834, 113
    %v4530 = vpop.permute.xlu0 %4529
    %4531 = vrot.lane.b32.xlu0 %v3838, 113
    %v4532 = vpop.permute.xlu0 %4531
    %4533 = vrot.lane.b32.xlu0 %v3827, 113
    %v4534 = vpop.permute.xlu0 %4533
    %4535 = vrot.lane.b32.xlu0 %v3831, 113
    %v4536 = vpop.permute.xlu0 %4535
    %4537 = vrot.lane.b32.xlu0 %v3835, 113
    %v4538 = vpop.permute.xlu0 %4537
    %4539 = vrot.lane.b32.xlu0 %v3839, 113
    %v4540 = vpop.permute.xlu0 %4539
    %4541 = vrot.lane.b32.xlu0 %v3828, 113
    %v4542 = vpop.permute.xlu0 %4541
    %4543 = vrot.lane.b32.xlu0 %v3832, 113
    %v4544 = vpop.permute.xlu0 %4543
    %4545 = vrot.lane.b32.xlu0 %v3836, 113
    %v4546 = vpop.permute.xlu0 %4545
    %4547 = vrot.lane.b32.xlu0 %v3840, 113
    %v4548 = vpop.permute.xlu0 %4547
    %v4549 = vsel %vm480, %v4534, %v4542
    %v4550 = vsel %vm480, %v4536, %v4544
    %v4551 = vsel %vm480, %v4538, %v4546
    %v4552 = vsel %vm480, %v4540, %v4548
    %v4553 = vsel %vm480, %v4526, %v4534
    %v4554 = vsel %vm480, %v4528, %v4536
    %v4555 = vsel %vm480, %v4530, %v4538
    %v4556 = vsel %vm480, %v4532, %v4540
    %v4557 = vsel %vm480, %v4518, %v4526
    %v4558 = vsel %vm480, %v4520, %v4528
    %v4559 = vsel %vm480, %v4522, %v4530
    %v4560 = vsel %vm480, %v4524, %v4532
    %v4561 = vsel %vm480, %v4542, %v4518
    %v4562 = vsel %vm480, %v4544, %v4520
    %v4563 = vsel %vm480, %v4546, %v4522
    %v4564 = vsel %vm480, %v4548, %v4524
    %v4565 = vsel %vm492, %v4557, 0.0
    %v4566 = vsel %vm493, %v4553, 0.0
    %v4567 = vsel %vm494, %v4549, 0.0
    %v4568 = vsel %vm495, %v4561, 0.0
    %v4569 = vsel %vm492, %v4558, 0.0
    %v4570 = vsel %vm493, %v4554, 0.0
    %v4571 = vsel %vm494, %v4550, 0.0
    %v4572 = vsel %vm495, %v4562, 0.0
    %v4573 = vsel %vm492, %v4559, 0.0
    %v4574 = vsel %vm493, %v4555, 0.0
    %v4575 = vsel %vm494, %v4551, 0.0
    %v4576 = vsel %vm495, %v4563, 0.0
    %v4577 = vsel %vm492, %v4560, 0.0
    %v4578 = vsel %vm493, %v4556, 0.0
    %v4579 = vsel %vm494, %v4552, 0.0
    %v4580 = vsel %vm495, %v4564, 0.0
    %4581 = vset.pattern.permute.xlu0 6
    %4582 = vperm.xlu0 %4581, %v3637
    %v4583 = vpop.permute.xlu0 %4582
    %4585 = vset.pattern.permute.xlu0 6
    %4586 = vperm.xlu0 %4585, %v3638
    %v4587 = vpop.permute.xlu0 %4586
    %4589 = vset.pattern.permute.xlu0 6
    %4590 = vperm.xlu0 %4589, %v3639
    %v4591 = vpop.permute.xlu0 %4590
    %4593 = vset.pattern.permute.xlu0 6
    %4594 = vperm.xlu0 %4593, %v3640
    %v4595 = vpop.permute.xlu0 %4594
    %v4597 = vmul.f32 %v4565, %v4583
    %v4598 = vmul.f32 %v4566, %v4583
    %v4599 = vmul.f32 %v4567, %v4583
    %v4600 = vmul.f32 %v4568, %v4583
    %v4601 = vmul.f32 %v4569, %v4587
    %v4602 = vmul.f32 %v4570, %v4587
    %v4603 = vmul.f32 %v4571, %v4587
    %v4604 = vmul.f32 %v4572, %v4587
    %v4605 = vmul.f32 %v4573, %v4591
    %v4606 = vmul.f32 %v4574, %v4591
    %v4607 = vmul.f32 %v4575, %v4591
    %v4608 = vmul.f32 %v4576, %v4591
    %v4609 = vmul.f32 %v4577, %v4595
    %v4610 = vmul.f32 %v4578, %v4595
    %v4611 = vmul.f32 %v4579, %v4595
    %v4612 = vmul.f32 %v4580, %v4595
    %v4613 = vadd.f32 %v4501, %v4597
    %v4614 = vadd.f32 %v4502, %v4598
    %v4615 = vadd.f32 %v4503, %v4599
    %v4616 = vadd.f32 %v4504, %v4600
    %v4617 = vadd.f32 %v4505, %v4601
    %v4618 = vadd.f32 %v4506, %v4602
    %v4619 = vadd.f32 %v4507, %v4603
    %v4620 = vadd.f32 %v4508, %v4604
    %v4621 = vadd.f32 %v4509, %v4605
    %v4622 = vadd.f32 %v4510, %v4606
    %v4623 = vadd.f32 %v4511, %v4607
    %v4624 = vadd.f32 %v4512, %v4608
    %v4625 = vadd.f32 %v4513, %v4609
    %v4626 = vadd.f32 %v4514, %v4610
    %v4627 = vadd.f32 %v4515, %v4611
    %v4628 = vadd.f32 %v4516, %v4612
    %4629 = vrot.lane.b32.xlu0 %v3825, 112
    %v4630 = vpop.permute.xlu0 %4629
    %4631 = vrot.lane.b32.xlu0 %v3829, 112
    %v4632 = vpop.permute.xlu0 %4631
    %4633 = vrot.lane.b32.xlu0 %v3833, 112
    %v4634 = vpop.permute.xlu0 %4633
    %4635 = vrot.lane.b32.xlu0 %v3837, 112
    %v4636 = vpop.permute.xlu0 %4635
    %4637 = vrot.lane.b32.xlu0 %v3826, 112
    %v4638 = vpop.permute.xlu0 %4637
    %4639 = vrot.lane.b32.xlu0 %v3830, 112
    %v4640 = vpop.permute.xlu0 %4639
    %4641 = vrot.lane.b32.xlu0 %v3834, 112
    %v4642 = vpop.permute.xlu0 %4641
    %4643 = vrot.lane.b32.xlu0 %v3838, 112
    %v4644 = vpop.permute.xlu0 %4643
    %4645 = vrot.lane.b32.xlu0 %v3827, 112
    %v4646 = vpop.permute.xlu0 %4645
    %4647 = vrot.lane.b32.xlu0 %v3831, 112
    %v4648 = vpop.permute.xlu0 %4647
    %4649 = vrot.lane.b32.xlu0 %v3835, 112
    %v4650 = vpop.permute.xlu0 %4649
    %4651 = vrot.lane.b32.xlu0 %v3839, 112
    %v4652 = vpop.permute.xlu0 %4651
    %4653 = vrot.lane.b32.xlu0 %v3828, 112
    %v4654 = vpop.permute.xlu0 %4653
    %4655 = vrot.lane.b32.xlu0 %v3832, 112
    %v4656 = vpop.permute.xlu0 %4655
    %4657 = vrot.lane.b32.xlu0 %v3836, 112
    %v4658 = vpop.permute.xlu0 %4657
    %4659 = vrot.lane.b32.xlu0 %v3840, 112
    %v4660 = vpop.permute.xlu0 %4659
    %v4661 = vsel %vm520, %v4646, %v4654
    %v4662 = vsel %vm520, %v4648, %v4656
    %v4663 = vsel %vm520, %v4650, %v4658
    %v4664 = vsel %vm520, %v4652, %v4660
    %v4665 = vsel %vm520, %v4638, %v4646
    %v4666 = vsel %vm520, %v4640, %v4648
    %v4667 = vsel %vm520, %v4642, %v4650
    %v4668 = vsel %vm520, %v4644, %v4652
    %v4669 = vsel %vm520, %v4630, %v4638
    %v4670 = vsel %vm520, %v4632, %v4640
    %v4671 = vsel %vm520, %v4634, %v4642
    %v4672 = vsel %vm520, %v4636, %v4644
    %v4673 = vsel %vm520, %v4654, %v4630
    %v4674 = vsel %vm520, %v4656, %v4632
    %v4675 = vsel %vm520, %v4658, %v4634
    %v4676 = vsel %vm520, %v4660, %v4636
    %v4677 = vsel %vm530, %v4669, 0.0
    %v4678 = vsel %vm531, %v4665, 0.0
    %v4679 = vsel %vm532, %v4661, 0.0
    %v4680 = vsel %vm533, %v4673, 0.0
    %v4681 = vsel %vm530, %v4670, 0.0
    %v4682 = vsel %vm531, %v4666, 0.0
    %v4683 = vsel %vm532, %v4662, 0.0
    %v4684 = vsel %vm533, %v4674, 0.0
    %v4685 = vsel %vm530, %v4671, 0.0
    %v4686 = vsel %vm531, %v4667, 0.0
    %v4687 = vsel %vm532, %v4663, 0.0
    %v4688 = vsel %vm533, %v4675, 0.0
    %v4689 = vsel %vm530, %v4672, 0.0
    %v4690 = vsel %vm531, %v4668, 0.0
    %v4691 = vsel %vm532, %v4664, 0.0
    %v4692 = vsel %vm533, %v4676, 0.0
    %4693 = vset.pattern.permute.xlu0 7
    %4694 = vperm.xlu0 %4693, %v3637
    %v4695 = vpop.permute.xlu0 %4694
    %4697 = vset.pattern.permute.xlu0 7
    %4698 = vperm.xlu0 %4697, %v3638
    %v4699 = vpop.permute.xlu0 %4698
    %4701 = vset.pattern.permute.xlu0 7
    %4702 = vperm.xlu0 %4701, %v3639
    %v4703 = vpop.permute.xlu0 %4702
    %4705 = vset.pattern.permute.xlu0 7
    %4706 = vperm.xlu0 %4705, %v3640
    %v4707 = vpop.permute.xlu0 %4706
    %v4709 = vmul.f32 %v4677, %v4695
    %v4710 = vmul.f32 %v4678, %v4695
    %v4711 = vmul.f32 %v4679, %v4695
    %v4712 = vmul.f32 %v4680, %v4695
    %v4713 = vmul.f32 %v4681, %v4699
    %v4714 = vmul.f32 %v4682, %v4699
    %v4715 = vmul.f32 %v4683, %v4699
    %v4716 = vmul.f32 %v4684, %v4699
    %v4717 = vmul.f32 %v4685, %v4703
    %v4718 = vmul.f32 %v4686, %v4703
    %v4719 = vmul.f32 %v4687, %v4703
    %v4720 = vmul.f32 %v4688, %v4703
    %v4721 = vmul.f32 %v4689, %v4707
    %v4722 = vmul.f32 %v4690, %v4707
    %v4723 = vmul.f32 %v4691, %v4707
    %v4724 = vmul.f32 %v4692, %v4707
    %v4725 = vadd.f32 %v4613, %v4709
    %v4726 = vadd.f32 %v4614, %v4710
    %v4727 = vadd.f32 %v4615, %v4711
    %v4728 = vadd.f32 %v4616, %v4712
    %v4729 = vadd.f32 %v4617, %v4713
    %v4730 = vadd.f32 %v4618, %v4714
    %v4731 = vadd.f32 %v4619, %v4715
    %v4732 = vadd.f32 %v4620, %v4716
    %v4733 = vadd.f32 %v4621, %v4717
    %v4734 = vadd.f32 %v4622, %v4718
    %v4735 = vadd.f32 %v4623, %v4719
    %v4736 = vadd.f32 %v4624, %v4720
    %v4737 = vadd.f32 %v4625, %v4721
    %v4738 = vadd.f32 %v4626, %v4722
    %v4739 = vadd.f32 %v4627, %v4723
    %v4740 = vadd.f32 %v4628, %v4724
    %4741 = vrot.lane.b32.xlu0 %v3825, 111
    %v4742 = vpop.permute.xlu0 %4741
    %4743 = vrot.lane.b32.xlu0 %v3829, 111
    %v4744 = vpop.permute.xlu0 %4743
    %4745 = vrot.lane.b32.xlu0 %v3833, 111
    %v4746 = vpop.permute.xlu0 %4745
    %4747 = vrot.lane.b32.xlu0 %v3837, 111
    %v4748 = vpop.permute.xlu0 %4747
    %4749 = vrot.lane.b32.xlu0 %v3826, 111
    %v4750 = vpop.permute.xlu0 %4749
    %4751 = vrot.lane.b32.xlu0 %v3830, 111
    %v4752 = vpop.permute.xlu0 %4751
    %4753 = vrot.lane.b32.xlu0 %v3834, 111
    %v4754 = vpop.permute.xlu0 %4753
    %4755 = vrot.lane.b32.xlu0 %v3838, 111
    %v4756 = vpop.permute.xlu0 %4755
    %4757 = vrot.lane.b32.xlu0 %v3827, 111
    %v4758 = vpop.permute.xlu0 %4757
    %4759 = vrot.lane.b32.xlu0 %v3831, 111
    %v4760 = vpop.permute.xlu0 %4759
    %4761 = vrot.lane.b32.xlu0 %v3835, 111
    %v4762 = vpop.permute.xlu0 %4761
    %4763 = vrot.lane.b32.xlu0 %v3839, 111
    %v4764 = vpop.permute.xlu0 %4763
    %4765 = vrot.lane.b32.xlu0 %v3828, 111
    %v4766 = vpop.permute.xlu0 %4765
    %4767 = vrot.lane.b32.xlu0 %v3832, 111
    %v4768 = vpop.permute.xlu0 %4767
    %4769 = vrot.lane.b32.xlu0 %v3836, 111
    %v4770 = vpop.permute.xlu0 %4769
    %4771 = vrot.lane.b32.xlu0 %v3840, 111
    %v4772 = vpop.permute.xlu0 %4771
    %v4773 = vsel %vm558, %v4758, %v4766
    %v4774 = vsel %vm558, %v4760, %v4768
    %v4775 = vsel %vm558, %v4762, %v4770
    %v4776 = vsel %vm558, %v4764, %v4772
    %v4777 = vsel %vm558, %v4750, %v4758
    %v4778 = vsel %vm558, %v4752, %v4760
    %v4779 = vsel %vm558, %v4754, %v4762
    %v4780 = vsel %vm558, %v4756, %v4764
    %v4781 = vsel %vm558, %v4742, %v4750
    %v4782 = vsel %vm558, %v4744, %v4752
    %v4783 = vsel %vm558, %v4746, %v4754
    %v4784 = vsel %vm558, %v4748, %v4756
    %v4785 = vsel %vm558, %v4766, %v4742
    %v4786 = vsel %vm558, %v4768, %v4744
    %v4787 = vsel %vm558, %v4770, %v4746
    %v4788 = vsel %vm558, %v4772, %v4748
    %v4789 = vsel %vm569, %v4781, 0.0
    %v4790 = vsel %vm570, %v4777, 0.0
    %v4791 = vsel %vm571, %v4773, 0.0
    %v4792 = vsel %vm572, %v4785, 0.0
    %v4793 = vsel %vm569, %v4782, 0.0
    %v4794 = vsel %vm570, %v4778, 0.0
    %v4795 = vsel %vm571, %v4774, 0.0
    %v4796 = vsel %vm572, %v4786, 0.0
    %v4797 = vsel %vm569, %v4783, 0.0
    %v4798 = vsel %vm570, %v4779, 0.0
    %v4799 = vsel %vm571, %v4775, 0.0
    %v4800 = vsel %vm572, %v4787, 0.0
    %v4801 = vsel %vm569, %v4784, 0.0
    %v4802 = vsel %vm570, %v4780, 0.0
    %v4803 = vsel %vm571, %v4776, 0.0
    %v4804 = vsel %vm572, %v4788, 0.0
    %4805 = vset.pattern.permute.xlu0 8
    %4806 = vperm.xlu0 %4805, %v3637
    %v4807 = vpop.permute.xlu0 %4806
    %4809 = vset.pattern.permute.xlu0 8
    %4810 = vperm.xlu0 %4809, %v3638
    %v4811 = vpop.permute.xlu0 %4810
    %4813 = vset.pattern.permute.xlu0 8
    %4814 = vperm.xlu0 %4813, %v3639
    %v4815 = vpop.permute.xlu0 %4814
    %4817 = vset.pattern.permute.xlu0 8
    %4818 = vperm.xlu0 %4817, %v3640
    %v4819 = vpop.permute.xlu0 %4818
    %v4821 = vmul.f32 %v4789, %v4807
    %v4822 = vmul.f32 %v4790, %v4807
    %v4823 = vmul.f32 %v4791, %v4807
    %v4824 = vmul.f32 %v4792, %v4807
    %v4825 = vmul.f32 %v4793, %v4811
    %v4826 = vmul.f32 %v4794, %v4811
    %v4827 = vmul.f32 %v4795, %v4811
    %v4828 = vmul.f32 %v4796, %v4811
    %v4829 = vmul.f32 %v4797, %v4815
    %v4830 = vmul.f32 %v4798, %v4815
    %v4831 = vmul.f32 %v4799, %v4815
    %v4832 = vmul.f32 %v4800, %v4815
    %v4833 = vmul.f32 %v4801, %v4819
    %v4834 = vmul.f32 %v4802, %v4819
    %v4835 = vmul.f32 %v4803, %v4819
    %v4836 = vmul.f32 %v4804, %v4819
    %v4837 = vadd.f32 %v4725, %v4821
    %v4838 = vadd.f32 %v4726, %v4822
    %v4839 = vadd.f32 %v4727, %v4823
    %v4840 = vadd.f32 %v4728, %v4824
    %v4841 = vadd.f32 %v4729, %v4825
    %v4842 = vadd.f32 %v4730, %v4826
    %v4843 = vadd.f32 %v4731, %v4827
    %v4844 = vadd.f32 %v4732, %v4828
    %v4845 = vadd.f32 %v4733, %v4829
    %v4846 = vadd.f32 %v4734, %v4830
    %v4847 = vadd.f32 %v4735, %v4831
    %v4848 = vadd.f32 %v4736, %v4832
    %v4849 = vadd.f32 %v4737, %v4833
    %v4850 = vadd.f32 %v4738, %v4834
    %v4851 = vadd.f32 %v4739, %v4835
    %v4852 = vadd.f32 %v4740, %v4836
    %4853 = vset.pattern.permute.xlu0 4
    %4854 = vperm.xlu0 %4853, %v3641
    %v4855 = vpop.permute.xlu0 %4854
    %4857 = vset.pattern.permute.xlu0 4
    %4858 = vperm.xlu0 %4857, %v3642
    %v4859 = vpop.permute.xlu0 %4858
    %4861 = vset.pattern.permute.xlu0 4
    %4862 = vperm.xlu0 %4861, %v3643
    %v4863 = vpop.permute.xlu0 %4862
    %4865 = vset.pattern.permute.xlu0 4
    %4866 = vperm.xlu0 %4865, %v3644
    %v4867 = vpop.permute.xlu0 %4866
    %v4869 = vmul.f32 %v4837, %v4855
    %v4870 = vmul.f32 %v4838, %v4855
    %v4871 = vmul.f32 %v4839, %v4855
    %v4872 = vmul.f32 %v4840, %v4855
    %v4873 = vmul.f32 %v4841, %v4859
    %v4874 = vmul.f32 %v4842, %v4859
    %v4875 = vmul.f32 %v4843, %v4859
    %v4876 = vmul.f32 %v4844, %v4859
    %v4877 = vmul.f32 %v4845, %v4863
    %v4878 = vmul.f32 %v4846, %v4863
    %v4879 = vmul.f32 %v4847, %v4863
    %v4880 = vmul.f32 %v4848, %v4863
    %v4881 = vmul.f32 %v4849, %v4867
    %v4882 = vmul.f32 %v4850, %v4867
    %v4883 = vmul.f32 %v4851, %v4867
    %v4884 = vmul.f32 %v4852, %v4867
    %4885 = vset.pattern.permute.xlu0 5
    %4886 = vperm.xlu0 %4885, %v3641
    %v4887 = vpop.permute.xlu0 %4886
    %4889 = vset.pattern.permute.xlu0 5
    %4890 = vperm.xlu0 %4889, %v3642
    %v4891 = vpop.permute.xlu0 %4890
    %4893 = vset.pattern.permute.xlu0 5
    %4894 = vperm.xlu0 %4893, %v3643
    %v4895 = vpop.permute.xlu0 %4894
    %4897 = vset.pattern.permute.xlu0 5
    %4898 = vperm.xlu0 %4897, %v3644
    %v4899 = vpop.permute.xlu0 %4898
    %v4901 = vadd.f32 %v4869, %v4887
    %v4902 = vadd.f32 %v4870, %v4887
    %v4903 = vadd.f32 %v4871, %v4887
    %v4904 = vadd.f32 %v4872, %v4887
    %v4905 = vadd.f32 %v4873, %v4891
    %v4906 = vadd.f32 %v4874, %v4891
    %v4907 = vadd.f32 %v4875, %v4891
    %v4908 = vadd.f32 %v4876, %v4891
    %v4909 = vadd.f32 %v4877, %v4895
    %v4910 = vadd.f32 %v4878, %v4895
    %v4911 = vadd.f32 %v4879, %v4895
    %v4912 = vadd.f32 %v4880, %v4895
    %v4913 = vadd.f32 %v4881, %v4899
    %v4914 = vadd.f32 %v4882, %v4899
    %v4915 = vadd.f32 %v4883, %v4899
    %v4916 = vadd.f32 %v4884, %v4899
    %v4917 = vmax.f32 %v3889, 0.0
    %v4918 = vmax.f32 %v3890, 0.0
    %v4919 = vmax.f32 %v3891, 0.0
    %v4920 = vmax.f32 %v3892, 0.0
    %v4921 = vmax.f32 %v3893, 0.0
    %v4922 = vmax.f32 %v3894, 0.0
    %v4923 = vmax.f32 %v3895, 0.0
    %v4924 = vmax.f32 %v3896, 0.0
    %v4925 = vmax.f32 %v3897, 0.0
    %v4926 = vmax.f32 %v3898, 0.0
    %v4927 = vmax.f32 %v3899, 0.0
    %v4928 = vmax.f32 %v3900, 0.0
    %v4929 = vmax.f32 %v3901, 0.0
    %v4930 = vmax.f32 %v3902, 0.0
    %v4931 = vmax.f32 %v3903, 0.0
    %v4932 = vmax.f32 %v3904, 0.0
    %v4933 = vmax.f32 %v4901, 0.0
    %v4934 = vmax.f32 %v4902, 0.0
    %v4935 = vmax.f32 %v4903, 0.0
    %v4936 = vmax.f32 %v4904, 0.0
    %v4937 = vmax.f32 %v4905, 0.0
    %v4938 = vmax.f32 %v4906, 0.0
    %v4939 = vmax.f32 %v4907, 0.0
    %v4940 = vmax.f32 %v4908, 0.0
    %v4941 = vmax.f32 %v4909, 0.0
    %v4942 = vmax.f32 %v4910, 0.0
    %v4943 = vmax.f32 %v4911, 0.0
    %v4944 = vmax.f32 %v4912, 0.0
    %v4945 = vmax.f32 %v4913, 0.0
    %v4946 = vmax.f32 %v4914, 0.0
    %v4947 = vmax.f32 %v4915, 0.0
    %v4948 = vmax.f32 %v4916, 0.0
    %4949 = vst [vmem:[%s61] sm:$0xff] %v4917
    %4950 = vst [vmem:[%s61 + $0x8] sm:$0xff] %v4918
    %4951 = vst [vmem:[%s61 + $0x10] sm:$0xff] %v4919
    %4952 = vst [vmem:[%s61 + $0x18] sm:$0xff] %v4920
    %4953 = vst [vmem:[%s61 + $0x20] sm:$0xff] %v4921
    %4954 = vst [vmem:[%s61 + $0x28] sm:$0xff] %v4922
    %4955 = vst [vmem:[%s61 + $0x30] sm:$0xff] %v4923
    %4956 = vst [vmem:[%s61 + $0x38] sm:$0xff] %v4924
    %4957 = vst [vmem:[%s61 + $0x40] sm:$0xff] %v4925
    %4958 = vst [vmem:[%s61 + $0x48] sm:$0xff] %v4926
    %4959 = vst [vmem:[%s61 + $0x50] sm:$0xff] %v4927
    %4960 = vst [vmem:[%s61 + $0x58] sm:$0xff] %v4928
    %4961 = vst [vmem:[%s61 + $0x60] sm:$0xff] %v4929
    %4962 = vst [vmem:[%s61 + $0x68] sm:$0xff] %v4930
    %4963 = vst [vmem:[%s61 + $0x70] sm:$0xff] %v4931
    %4964 = vst [vmem:[%s61 + $0x78] sm:$0xff] %v4932
    %4965 = vst [vmem:[%s61 + $0x80] sm:$0xff] %v4933
    %4966 = vst [vmem:[%s61 + $0x88] sm:$0xff] %v4934
    %4967 = vst [vmem:[%s61 + $0x90] sm:$0xff] %v4935
    %4968 = vst [vmem:[%s61 + $0x98] sm:$0xff] %v4936
    %4969 = vst [vmem:[%s61 + $0xa0] sm:$0xff] %v4937
    %4970 = vst [vmem:[%s61 + $0xa8] sm:$0xff] %v4938
    %4971 = vst [vmem:[%s61 + $0xb0] sm:$0xff] %v4939
    %4972 = vst [vmem:[%s61 + $0xb8] sm:$0xff] %v4940
    %4973 = vst [vmem:[%s61 + $0xc0] sm:$0xff] %v4941
    %4974 = vst [vmem:[%s61 + $0xc8] sm:$0xff] %v4942
    %4975 = vst [vmem:[%s61 + $0xd0] sm:$0xff] %v4943
    %4976 = vst [vmem:[%s61 + $0xd8] sm:$0xff] %v4944
    %4977 = vst [vmem:[%s61 + $0xe0] sm:$0xff] %v4945
    %4978 = vst [vmem:[%s61 + $0xe8] sm:$0xff] %v4946
    %4979 = vst [vmem:[%s61 + $0xf0] sm:$0xff] %v4947
    %4980 = vst [vmem:[%s61 + $0xf8] sm:$0xff] %v4948
    // Predicated region
    $region110: #{upsample_unit_forward.1} parent=1 // pred_check
      _
    $region111: #{upsample_unit_forward.1} parent=1 // pred_check_branch
      %4982 = sbr.rel (0) target = $region113
    $region112: #{upsample_unit_forward.1} parent=1 // pred_region
      _
    $region113: #{upsample_unit_forward.1} parent=1 // pred_fallthru
      _
    // Predicated region
    $region114: #{upsample_unit_forward.1} parent=1 // pred_check
      _
    $region115: #{upsample_unit_forward.1} parent=1 // pred_check_branch
      %4984 = sbr.rel (0) target = $region117
    $region116: #{upsample_unit_forward.1} parent=1 // pred_region
      _
    $region117: #{upsample_unit_forward.1} parent=1 // pred_fallthru
      _
    // Predicated region
    $region118: #{upsample_unit_forward.1} parent=1 // pred_check
      _
    $region119: #{upsample_unit_forward.1} parent=1 // pred_check_branch
      %4986 = sbr.rel (0) target = $region121
    $region120: #{upsample_unit_forward.1} parent=1 // pred_region
      _
    $region121: #{upsample_unit_forward.1} parent=1 // pred_fallthru
      _
    // Predicated region
    $region122: #{upsample_unit_forward.1} parent=1 // pred_check
      _
    $region123: #{upsample_unit_forward.1} parent=1 // pred_check_branch
      %4988 = sbr.rel (0) target = $region125
    $region124: #{upsample_unit_forward.1} parent=1 // pred_region
      _
    $region125: #{upsample_unit_forward.1} parent=1 // pred_fallthru
      _
    // Predicated region
    $region126: #{upsample_unit_forward.1} parent=1 // pred_check
      _
    $region127: #{upsample_unit_forward.1} parent=1 // pred_check_branch
      %4990 = sbr.rel (0) target = $region129
    $region128: #{upsample_unit_forward.1} parent=1 // pred_region
      _
    $region129: #{upsample_unit_forward.1} parent=1 // pred_fallthru
      _
    // Predicated region
    $region130: #{upsample_unit_forward.1} parent=1 // pred_check
      _
    $region131: #{upsample_unit_forward.1} parent=1 // pred_check_branch
      %4992 = sbr.rel (0) target = $region133
    $region132: #{upsample_unit_forward.1} parent=1 // pred_region
      _
    $region133: #{upsample_unit_forward.1} parent=1 // pred_fallthru
      _
    // Predicated region
    $region134: #{upsample_unit_forward.1} parent=1 // pred_check
      _
    $region135: #{upsample_unit_forward.1} parent=1 // pred_check_branch
      %4994 = sbr.rel (0) target = $region137
    $region136: #{upsample_unit_forward.1} parent=1 // pred_region
      _
    $region137: #{upsample_unit_forward.1} parent=1 // pred_fallthru
      _
    // Predicated region
    $region138: #{upsample_unit_forward.1} parent=1 // pred_check
      _
    $region139: #{upsample_unit_forward.1} parent=1 // pred_check_branch
      %4996 = sbr.rel (0) target = $region141
    $region140: #{upsample_unit_forward.1} parent=1 // pred_region
      _
    $region141: #{upsample_unit_forward.1} parent=1 // pred_fallthru
      _
    // Predicated region
    $region142: #{upsample_unit_forward.1} parent=1 // pred_check
      _
    $region143: #{upsample_unit_forward.1} parent=1 // pred_check_branch
      %4998 = sbr.rel (0) target = $region145
    $region144: #{upsample_unit_forward.1} parent=1 // pred_region
      _
    $region145: #{upsample_unit_forward.1} parent=1 // pred_fallthru
      _
    // Predicated region
    $region146: #{upsample_unit_forward.1} parent=1 // pred_check
      _
    $region147: #{upsample_unit_forward.1} parent=1 // pred_check_branch
      %5000 = sbr.rel (0) target = $region149
    $region148: #{upsample_unit_forward.1} parent=1 // pred_region
      _
    $region149: #{upsample_unit_forward.1} parent=1 // pred_fallthru
      _
    %5001 = vsyncpa [#allocation3], 1

</llo_original>
